<compile_context>
chip_gen: v6e
topology: v6e:2x2x1
jax: 0.10.0
libtpu: 0.0.40
codegen_flags: <defaults>
</compile_context>

<pallas_src>
import functools
import math

import jax
import jax.numpy as jnp
from jax.experimental import pallas as pl
from jax.experimental.pallas import tpu as pltpu


# ----------------------------------------------------------------------------
# Single fused kernel (one grid step = block_seqs packed sequences).
# ----------------------------------------------------------------------------
def _fused_attention_kernel(x_ref, wqk_ref, wv_ref, place_ref, w1_ref,
                            vecs_ref, o_ref, *, heads, dk, seq_len,
                            approx_recip):
    eps = 1e-5                       # torch.nn.LayerNorm default
    M, D = x_ref.shape               # M = block_seqs * seq_len packed rows
    S = seq_len
    n_seq = M // S
    g = D // S                       # fold factor of the module's head merge
    cdt = wqk_ref.dtype              # MXU operand dtype (bf16 fast / f32 exact)

    # Packed (1, D) vector params: ln1_w, ln1_b, l1_b, ln2_w, ln2_b.
    vecs = vecs_ref[...]
    ln1w, ln1b = vecs[0:1, :], vecs[1:2, :]
    l1b = vecs[2:3, :]
    ln2w, ln2b = vecs[3:4, :], vecs[4:5, :]

    x = x_ref[...]                   # (M, D) f32 -- residual & LN math stay f32
    x_c = x.astype(cdt)

    # ---- Q/K projection over all packed sequences at once (fills MXU rows).
    # The 1/sqrt(dk) softmax scale is pre-folded into the Q columns of wqk.
    qk = jnp.dot(x_c, wqk_ref[...], preferred_element_type=jnp.float32)
    qk_c = qk.astype(cdt)            # (M, 2D), hoisted cast

    # ---- V, produced directly transposed: v_t[o, m] = sum_d WV[o, d] x[m, d]
    # (one NT matmul against the torch-layout weight), so every head's output
    # can be emitted in the transposed layout with plain NN matmuls -- no
    # per-head transposes and no placement matmuls.
    v_t = jax.lax.dot_general(wv_ref[...], x_c, (((1,), (1,)), ((), ())),
                              preferred_element_type=jnp.float32)   # (D, M)
    v_t_c = v_t.astype(cdt)

    # Hoisted row-selection masks used by the head-merge relayout below.
    row_iota = jax.lax.broadcasted_iota(jnp.int32, (S, 1), 0)
    row_eq = [row_iota == r for r in range(S)]

    # merged_cols[c] collects, per packed sequence, the (S, S) block that lands
    # in lanes [c*S, (c+1)*S) of the merged activation.
    merged_cols = [[] for _ in range(g)]

    for b in range(n_seq):           # static unroll over packed sequences
        r0 = b * S

        # Per-head attention, produced directly in the transposed (dv, S)
        # layout the module's head merge consumes.  Heads are independent
        # (no accumulator chain).
        # TODO(synk): at scale, pack (sequence, head) pairs into block-diagonal
        # score/PV matmuls instead of unrolled (8x8) matmuls.
        att_t = []
        for h in range(heads):
            q_h = qk_c[r0:r0 + S, h * dk:(h + 1) * dk]              # (S, dk)
            k_h = qk_c[r0:r0 + S, D + h * dk:D + (h + 1) * dk]      # (S, dk)
            v_h = v_t_c[h * dk:(h + 1) * dk, r0:r0 + S]             # (dk, S)

            # transposed scores: s_t[t, s] = k[t] . q[s]  (NT dot, no k^T)
            s_t = jax.lax.dot_general(k_h, q_h, (((1,), (1,)), ((), ())),
                                      preferred_element_type=jnp.float32)
            s_t = s_t - jnp.max(s_t, axis=0, keepdims=True)
            e = jnp.exp(s_t)
            p_t = e * pl.reciprocal(jnp.sum(e, axis=0, keepdims=True),
                                    approx=approx_recip)            # (S, S)
            # att_t[h][d, s] = sum_t V[t, d] P[s, t]   (plain NN matmul)
            att_t.append(jnp.dot(v_h, p_t.astype(cdt),
                                 preferred_element_type=jnp.float32))  # (dk,S)

        # ---- module-faithful head merge (pure relayout, no MXU):
        # merged = att.transpose(1, 2).reshape(-1, heads*dv) is exactly the
        # row-major refold of the conceptual (D, S) buffer whose row
        # j = h*dk + d is att_t[h][d, :]:
        #     merged[r, c*S + s] = att_t_full[r*g + c, s]
        # Each target row is filled by a sublane broadcast + masked select
        # (VPU work that hides under the MXU-bound attention matmuls).
        def t_row(j):                                    # (1, S)
            return att_t[j // dk][(j % dk):(j % dk) + 1, :]

        for c in range(g):
            blk = jnp.zeros((S, S), jnp.float32)
            for r in range(S):
                blk = jnp.where(row_eq[r], t_row(r * g + c), blk)
            merged_cols[c].append(blk)

    # Stitch the per-sequence blocks (sublane-aligned concat) and drop each
    # lane-block into its final column range with one tiny 0/1 placement
    # matmul per block -- g matmuls per *grid step*, amortized over all packed
    # sequences.  Terms are independent -> no accumulator chain.
    terms = [
        jnp.dot(jnp.concatenate(merged_cols[c], axis=0).astype(cdt),  # (M, S)
                place_ref[c], preferred_element_type=jnp.float32)     # (M, D)
        for c in range(g)]
    merged = functools.reduce(lambda a, b: a + b, terms)

    # ---- +residual -> LayerNorm1 (f32 statistics)
    acc = x + merged
    mu = jnp.mean(acc, axis=-1, keepdims=True)
    var = jnp.mean(jnp.square(acc - mu), axis=-1, keepdims=True)
    h1 = (acc - mu) * jax.lax.rsqrt(var + eps) * ln1w + ln1b

    # ---- Linear l1 (packed rows -> good MXU fill) -> +residual -> LayerNorm2
    out = jnp.dot(h1.astype(cdt), w1_ref[...],
                  preferred_element_type=jnp.float32) + l1b
    z = out + h1
    mu2 = jnp.mean(z, axis=-1, keepdims=True)
    var2 = jnp.mean(jnp.square(z - mu2), axis=-1, keepdims=True)
    o_ref[...] = (z - mu2) * jax.lax.rsqrt(var2 + eps) * ln2w + ln2b


# ----------------------------------------------------------------------------
# Host wrapper: packs weights / merge constants and launches one pallas_call.
# ----------------------------------------------------------------------------
def attention_forward(x, params, heads, *, compute_dtype=jnp.bfloat16,
                      block_seqs=None):
    """Fused forward for the Attention module.  x: (S, D) or (B, S, D)."""
    squeeze = x.ndim == 2
    if squeeze:
        x = x[None]
    B, S, D = x.shape
    assert D % heads == 0
    dk = D // heads
    # TODO(synk): the head-merge refold below assumes D % S == 0 (true for this
    # module's shapes); generalize with a flat-index refold for other S.
    assert D % S == 0, "head-merge refold assumes D % S == 0"
    g = D // S

    # Pack enough sequences per grid step that the row dim of the big matmuls
    # approaches a full MXU pass (128 rows); the grid axis is "parallel".
    if block_seqs is None:
        block_seqs = max(1, min(B, 128 // S))
    while B % block_seqs:
        block_seqs -= 1
    n_blocks = B // block_seqs
    mb = block_seqs * S

    # ---- weight packing (done once at parameter-load time at scale) ----
    scale = 1.0 / math.sqrt(dk)
    wqk_t = jnp.concatenate([params["wq_t"] * scale, params["wk_t"]],
                            axis=1).astype(compute_dtype)        # (D, 2D)
    wv = params["wv_t"].T.astype(compute_dtype)                  # (D, D) torch (out,in)
    w1_t = params["l1_w_t"].astype(compute_dtype)                # (D, D)
    # 0/1 lane-placement constants for the head merge (exact in bf16).
    place = jnp.stack([jnp.eye(S, D, k=c * S) for c in range(g)]
                      ).astype(compute_dtype)                    # (g, S, D)
    # Five (1, D) vector params in one (8, D) block -> a single DMA.
    vecs = jnp.zeros((8, D), jnp.float32).at[:5].set(jnp.stack([
        params["ln1_w"].reshape(D), params["ln1_b"].reshape(D),
        params["l1_b"].reshape(D),
        params["ln2_w"].reshape(D), params["ln2_b"].reshape(D)]))

    kernel = functools.partial(
        _fused_attention_kernel, heads=heads, dk=dk, seq_len=S,
        approx_recip=(jnp.dtype(compute_dtype) != jnp.dtype(jnp.float32)))

    # TODO(synk): for large S/D switch to a gridded flash-attention layout
    # (query tiles "parallel", KV tiles "arbitrary", online-softmax scratch),
    # size tiles for v7x's 64 MiB VMEM (not v5e/v6e's 128 MiB), and emit a
    # lane-dense (multiple-of-128) output slab to avoid masked partial stores.
    out = pl.pallas_call(
        kernel,
        out_shape=jax.ShapeDtypeStruct((B * S, D), jnp.float32),
        grid=(n_blocks,),
        in_specs=[
            pl.BlockSpec((mb, D), lambda i: (i, 0)),             # packed rows
            pl.BlockSpec((D, 2 * D), lambda i: (0, 0)),          # [WQ*scale | WK]
            pl.BlockSpec((D, D), lambda i: (0, 0)),              # WV (torch layout)
            pl.BlockSpec((g, S, D), lambda i: (0, 0, 0)),        # merge placement
            pl.BlockSpec((D, D), lambda i: (0, 0)),              # l1 weight
            pl.BlockSpec((8, D), lambda i: (0, 0)),              # packed vec params
        ],
        out_specs=pl.BlockSpec((mb, D), lambda i: (i, 0)),
        compiler_params=pltpu.CompilerParams(
            dimension_semantics=("parallel",)),                  # v7x: 2 TCs
    )(x.reshape(B * S, D).astype(jnp.float32), wqk_t, wv, place, w1_t, vecs)

    out = out.reshape(B, S, D)
    return out[0] if squeeze else out


# ----------------------------------------------------------------------------
# Pure-JAX reference (mirrors the PyTorch forward exactly) for validation.
# ----------------------------------------------------------------------------
def attention_reference(x, params, heads):
    S, D = x.shape
    dk = D // heads
    q = (x @ params["wq_t"]).reshape(S, heads, dk).transpose(1, 0, 2)
    k = (x @ params["wk_t"]).reshape(S, heads, dk).transpose(1, 0, 2)
    v = (x @ params["wv_t"]).reshape(S, heads, dk).transpose(1, 0, 2)
    qk = jnp.einsum("hqd,hkd->hqk", q, k) / math.sqrt(dk)
    p = jax.nn.softmax(qk, axis=-1)
    att = jnp.einsum("hqk,hkd->hqd", p, v)
    att = jnp.transpose(att, (0, 2, 1)).reshape(-1, heads * dk)

    def ln(z, w, b):
        mu = jnp.mean(z, -1, keepdims=True)
        var = jnp.mean(jnp.square(z - mu), -1, keepdims=True)
        return (z - mu) * jax.lax.rsqrt(var + 1e-5) * w + b

    h = ln(att + x, params["ln1_w"], params["ln1_b"])
    out = h @ params["l1_w_t"] + params["l1_b"]
    return ln(out + h, params["ln2_w"], params["ln2_b"])


if __name__ == "__main__":
    B, S, D, heads = 8, 8, 32, 4  # seq=8, inputdim=32, heads=4 -> dq=dk=dv=8

    key = jax.random.PRNGKey(0)
    kq, kk, kv, kw1, kb1, kx = jax.random.split(key, 6)
    bound = 1.0 / math.sqrt(D)

    # torch-style (out, in) weights, deterministic; stored transposed like nn.Linear.
    wq = jax.random.uniform(kq, (D, D), jnp.float32, -bound, bound)
    wk = jax.random.uniform(kk, (D, D), jnp.float32, -bound, bound)
    wv = jax.random.uniform(kv, (D, D), jnp.float32, -bound, bound)
    w1 = jax.random.uniform(kw1, (D, D), jnp.float32, -bound, bound)
    b1 = jax.random.uniform(kb1, (D,), jnp.float32, -bound, bound)

    params = {
        "wq_t": wq.T, "wk_t": wk.T, "wv_t": wv.T,
        "ln1_w": jnp.ones((1, D), jnp.float32),   # LayerNorm defaults
        "ln1_b": jnp.zeros((1, D), jnp.float32),
        "l1_w_t": w1.T,
        "l1_b": b1.reshape(1, D),
        "ln2_w": jnp.ones((1, D), jnp.float32),
        "ln2_b": jnp.zeros((1, D), jnp.float32),
    }

    x = jax.random.normal(kx, (B, S, D), jnp.float32)
    y_ref = jax.vmap(lambda xb: attention_reference(xb, params, heads))(x)

    # Precision path (f32 MXU operands), multi-program "parallel" grid.
    y_f32 = jax.block_until_ready(
        attention_forward(x, params, heads, compute_dtype=jnp.float32,
                          block_seqs=4))
    assert y_f32.shape == (B, S, D)
    assert jnp.allclose(y_f32, y_ref, atol=1e-4, rtol=1e-4)

    # Fast path (bf16 MXU operands, f32 accumulation + f32 softmax/LN stats),
    # default sequence packing (all 8 sequences -> 64 packed rows, one step).
    y_bf16 = jax.block_until_ready(attention_forward(x, params, heads))
    assert y_bf16.shape == (B, S, D)
    assert jnp.allclose(y_bf16, y_ref, atol=1e-1, rtol=1e-1)

    # Single-sequence (2D, module-shaped) input path.
    y_one = jax.block_until_ready(
        attention_forward(x[0], params, heads, compute_dtype=jnp.float32))
    assert y_one.shape == (S, D)
    assert jnp.allclose(y_one, y_ref[0], atol=1e-4, rtol=1e-4)

    print("KERNEL_OK")
</pallas_src>

<mosaic_0001>
module attributes {stable_mosaic.version = 11 : i64} {
  func.func @_fused_attention_kernel(%arg0: i32, %arg1: memref<32x32xf32, #tpu.memory_space<vmem>>, %arg2: memref<32x64xf32, #tpu.memory_space<vmem>>, %arg3: memref<32x32xf32, #tpu.memory_space<vmem>>, %arg4: memref<4x8x32xf32, #tpu.memory_space<vmem>>, %arg5: memref<32x32xf32, #tpu.memory_space<vmem>>, %arg6: memref<8x32xf32, #tpu.memory_space<vmem>>, %arg7: memref<32x32xf32, #tpu.memory_space<vmem>>) attributes {dimension_semantics = [#tpu.dimension_semantics<parallel>], iteration_bounds = array<i64: 2>, scalar_prefetch = 0 : i64, scratch_operands = 0 : i64, tpu.core_type = #tpu.core_type<tc>, window_params = [{transform_indices = @transform_0, window_bounds = array<i64: 32, 32>}, {pipeline_mode = #tpu.pipeline_mode<synchronous>, transform_indices = @transform_1, window_bounds = array<i64: 32, 64>}, {pipeline_mode = #tpu.pipeline_mode<synchronous>, transform_indices = @transform_2, window_bounds = array<i64: 32, 32>}, {pipeline_mode = #tpu.pipeline_mode<synchronous>, transform_indices = @transform_3, window_bounds = array<i64: 4, 8, 32>}, {pipeline_mode = #tpu.pipeline_mode<synchronous>, transform_indices = @transform_4, window_bounds = array<i64: 32, 32>}, {pipeline_mode = #tpu.pipeline_mode<synchronous>, transform_indices = @transform_5, window_bounds = array<i64: 8, 32>}, {transform_indices = @transform_6, window_bounds = array<i64: 32, 32>}]} {
    %c0 = arith.constant 0 : index
    %c0_0 = arith.constant 0 : index
    %0 = vector.load %arg6[%c0, %c0_0] : memref<8x32xf32, #tpu.memory_space<vmem>>, vector<8x32xf32>
    %1 = vector.extract_strided_slice %0 {offsets = [0, 0], sizes = [1, 32], strides = [1, 1]} : vector<8x32xf32> to vector<1x32xf32>
    %2 = vector.extract_strided_slice %0 {offsets = [1, 0], sizes = [1, 32], strides = [1, 1]} : vector<8x32xf32> to vector<1x32xf32>
    %3 = vector.extract_strided_slice %0 {offsets = [2, 0], sizes = [1, 32], strides = [1, 1]} : vector<8x32xf32> to vector<1x32xf32>
    %4 = vector.extract_strided_slice %0 {offsets = [3, 0], sizes = [1, 32], strides = [1, 1]} : vector<8x32xf32> to vector<1x32xf32>
    %5 = vector.extract_strided_slice %0 {offsets = [4, 0], sizes = [1, 32], strides = [1, 1]} : vector<8x32xf32> to vector<1x32xf32>
    %c0_1 = arith.constant 0 : index
    %c0_2 = arith.constant 0 : index
    %6 = vector.load %arg1[%c0_1, %c0_2] : memref<32x32xf32, #tpu.memory_space<vmem>>, vector<32x32xf32>
    %c0_3 = arith.constant 0 : index
    %c0_4 = arith.constant 0 : index
    %7 = vector.load %arg2[%c0_3, %c0_4] : memref<32x64xf32, #tpu.memory_space<vmem>>, vector<32x64xf32>
    %cst = arith.constant dense<0.000000e+00> : vector<32x64xf32>
    %8 = tpu.matmul %6, %7, %cst {dimension_numbers = #tpu.dot_dimension_numbers<[1], [0], [0], [1], [0, 0, 1, 1], [], []>} : vector<32x32xf32>, vector<32x64xf32>, vector<32x64xf32> -> vector<32x64xf32>
    %c0_5 = arith.constant 0 : index
    %c0_6 = arith.constant 0 : index
    %9 = vector.load %arg3[%c0_5, %c0_6] : memref<32x32xf32, #tpu.memory_space<vmem>>, vector<32x32xf32>
    %cst_7 = arith.constant dense<0.000000e+00> : vector<32x32xf32>
    %10 = tpu.matmul %9, %6, %cst_7 {dimension_numbers = #tpu.dot_dimension_numbers<[1], [1], [0], [0], [0, 0, 1, 0], [], []>} : vector<32x32xf32>, vector<32x32xf32>, vector<32x32xf32> -> vector<32x32xf32>
    %11 = tpu.iota {dimensions = array<i32: 0>} : vector<8x1xi32>
    %c0_i32 = arith.constant 0 : i32
    %12 = vector.broadcast %c0_i32 : i32 to vector<8x1xi32>
    %13 = arith.cmpi eq, %11, %12 : vector<8x1xi32>
    %c1_i32 = arith.constant 1 : i32
    %14 = vector.broadcast %c1_i32 : i32 to vector<8x1xi32>
    %15 = arith.cmpi eq, %11, %14 : vector<8x1xi32>
    %c2_i32 = arith.constant 2 : i32
    %16 = vector.broadcast %c2_i32 : i32 to vector<8x1xi32>
    %17 = arith.cmpi eq, %11, %16 : vector<8x1xi32>
    %c3_i32 = arith.constant 3 : i32
    %18 = vector.broadcast %c3_i32 : i32 to vector<8x1xi32>
    %19 = arith.cmpi eq, %11, %18 : vector<8x1xi32>
    %c4_i32 = arith.constant 4 : i32
    %20 = vector.broadcast %c4_i32 : i32 to vector<8x1xi32>
    %21 = arith.cmpi eq, %11, %20 : vector<8x1xi32>
    %c5_i32 = arith.constant 5 : i32
    %22 = vector.broadcast %c5_i32 : i32 to vector<8x1xi32>
    %23 = arith.cmpi eq, %11, %22 : vector<8x1xi32>
    %c6_i32 = arith.constant 6 : i32
    %24 = vector.broadcast %c6_i32 : i32 to vector<8x1xi32>
    %25 = arith.cmpi eq, %11, %24 : vector<8x1xi32>
    %c7_i32 = arith.constant 7 : i32
    %26 = vector.broadcast %c7_i32 : i32 to vector<8x1xi32>
    %27 = arith.cmpi eq, %11, %26 : vector<8x1xi32>
    %28 = vector.extract_strided_slice %8 {offsets = [0, 0], sizes = [8, 8], strides = [1, 1]} : vector<32x64xf32> to vector<8x8xf32>
    %29 = vector.extract_strided_slice %8 {offsets = [0, 32], sizes = [8, 8], strides = [1, 1]} : vector<32x64xf32> to vector<8x8xf32>
    %30 = vector.extract_strided_slice %10 {offsets = [0, 0], sizes = [8, 8], strides = [1, 1]} : vector<32x32xf32> to vector<8x8xf32>
    %cst_8 = arith.constant dense<0.000000e+00> : vector<8x8xf32>
    %31 = tpu.matmul %29, %28, %cst_8 {dimension_numbers = #tpu.dot_dimension_numbers<[1], [1], [0], [0], [0, 0, 1, 0], [], []>} : vector<8x8xf32>, vector<8x8xf32>, vector<8x8xf32> -> vector<8x8xf32>
    %cst_9 = arith.constant dense<0xFF800000> : vector<8xf32>
    %32 = vector.multi_reduction <maximumf>, %31, %cst_9 [0] : vector<8x8xf32> to vector<8xf32>
    %33 = vector.shape_cast %32 : vector<8xf32> to vector<1x8xf32>
    %34 = vector.broadcast %33 : vector<1x8xf32> to vector<8x8xf32>
    %35 = arith.subf %31, %34 : vector<8x8xf32>
    %36 = math.exp %35 : vector<8x8xf32>
    %cst_10 = arith.constant dense<0.000000e+00> : vector<8xf32>
    %37 = vector.multi_reduction <add>, %36, %cst_10 [0] : vector<8x8xf32> to vector<8xf32>
    %38 = vector.shape_cast %37 : vector<8xf32> to vector<1x8xf32>
    %39 = tpu.reciprocal %38 : vector<1x8xf32> -> vector<1x8xf32>
    %40 = vector.broadcast %39 : vector<1x8xf32> to vector<8x8xf32>
    %41 = arith.mulf %36, %40 : vector<8x8xf32>
    %cst_11 = arith.constant dense<0.000000e+00> : vector<8x8xf32>
    %42 = tpu.matmul %30, %41, %cst_11 {dimension_numbers = #tpu.dot_dimension_numbers<[1], [0], [0], [1], [0, 0, 1, 1], [], []>} : vector<8x8xf32>, vector<8x8xf32>, vector<8x8xf32> -> vector<8x8xf32>
    %43 = vector.extract_strided_slice %8 {offsets = [0, 8], sizes = [8, 8], strides = [1, 1]} : vector<32x64xf32> to vector<8x8xf32>
    %44 = vector.extract_strided_slice %8 {offsets = [0, 40], sizes = [8, 8], strides = [1, 1]} : vector<32x64xf32> to vector<8x8xf32>
    %45 = vector.extract_strided_slice %10 {offsets = [8, 0], sizes = [8, 8], strides = [1, 1]} : vector<32x32xf32> to vector<8x8xf32>
    %cst_12 = arith.constant dense<0.000000e+00> : vector<8x8xf32>
    %46 = tpu.matmul %44, %43, %cst_12 {dimension_numbers = #tpu.dot_dimension_numbers<[1], [1], [0], [0], [0, 0, 1, 0], [], []>} : vector<8x8xf32>, vector<8x8xf32>, vector<8x8xf32> -> vector<8x8xf32>
    %cst_13 = arith.constant dense<0xFF800000> : vector<8xf32>
    %47 = vector.multi_reduction <maximumf>, %46, %cst_13 [0] : vector<8x8xf32> to vector<8xf32>
    %48 = vector.shape_cast %47 : vector<8xf32> to vector<1x8xf32>
    %49 = vector.broadcast %48 : vector<1x8xf32> to vector<8x8xf32>
    %50 = arith.subf %46, %49 : vector<8x8xf32>
    %51 = math.exp %50 : vector<8x8xf32>
    %cst_14 = arith.constant dense<0.000000e+00> : vector<8xf32>
    %52 = vector.multi_reduction <add>, %51, %cst_14 [0] : vector<8x8xf32> to vector<8xf32>
    %53 = vector.shape_cast %52 : vector<8xf32> to vector<1x8xf32>
    %54 = tpu.reciprocal %53 : vector<1x8xf32> -> vector<1x8xf32>
    %55 = vector.broadcast %54 : vector<1x8xf32> to vector<8x8xf32>
    %56 = arith.mulf %51, %55 : vector<8x8xf32>
    %cst_15 = arith.constant dense<0.000000e+00> : vector<8x8xf32>
    %57 = tpu.matmul %45, %56, %cst_15 {dimension_numbers = #tpu.dot_dimension_numbers<[1], [0], [0], [1], [0, 0, 1, 1], [], []>} : vector<8x8xf32>, vector<8x8xf32>, vector<8x8xf32> -> vector<8x8xf32>
    %58 = vector.extract_strided_slice %8 {offsets = [0, 16], sizes = [8, 8], strides = [1, 1]} : vector<32x64xf32> to vector<8x8xf32>
    %59 = vector.extract_strided_slice %8 {offsets = [0, 48], sizes = [8, 8], strides = [1, 1]} : vector<32x64xf32> to vector<8x8xf32>
    %60 = vector.extract_strided_slice %10 {offsets = [16, 0], sizes = [8, 8], strides = [1, 1]} : vector<32x32xf32> to vector<8x8xf32>
    %cst_16 = arith.constant dense<0.000000e+00> : vector<8x8xf32>
    %61 = tpu.matmul %59, %58, %cst_16 {dimension_numbers = #tpu.dot_dimension_numbers<[1], [1], [0], [0], [0, 0, 1, 0], [], []>} : vector<8x8xf32>, vector<8x8xf32>, vector<8x8xf32> -> vector<8x8xf32>
    %cst_17 = arith.constant dense<0xFF800000> : vector<8xf32>
    %62 = vector.multi_reduction <maximumf>, %61, %cst_17 [0] : vector<8x8xf32> to vector<8xf32>
    %63 = vector.shape_cast %62 : vector<8xf32> to vector<1x8xf32>
    %64 = vector.broadcast %63 : vector<1x8xf32> to vector<8x8xf32>
    %65 = arith.subf %61, %64 : vector<8x8xf32>
    %66 = math.exp %65 : vector<8x8xf32>
    %cst_18 = arith.constant dense<0.000000e+00> : vector<8xf32>
    %67 = vector.multi_reduction <add>, %66, %cst_18 [0] : vector<8x8xf32> to vector<8xf32>
    %68 = vector.shape_cast %67 : vector<8xf32> to vector<1x8xf32>
    %69 = tpu.reciprocal %68 : vector<1x8xf32> -> vector<1x8xf32>
    %70 = vector.broadcast %69 : vector<1x8xf32> to vector<8x8xf32>
    %71 = arith.mulf %66, %70 : vector<8x8xf32>
    %cst_19 = arith.constant dense<0.000000e+00> : vector<8x8xf32>
    %72 = tpu.matmul %60, %71, %cst_19 {dimension_numbers = #tpu.dot_dimension_numbers<[1], [0], [0], [1], [0, 0, 1, 1], [], []>} : vector<8x8xf32>, vector<8x8xf32>, vector<8x8xf32> -> vector<8x8xf32>
    %73 = vector.extract_strided_slice %8 {offsets = [0, 24], sizes = [8, 8], strides = [1, 1]} : vector<32x64xf32> to vector<8x8xf32>
    %74 = vector.extract_strided_slice %8 {offsets = [0, 56], sizes = [8, 8], strides = [1, 1]} : vector<32x64xf32> to vector<8x8xf32>
    %75 = vector.extract_strided_slice %10 {offsets = [24, 0], sizes = [8, 8], strides = [1, 1]} : vector<32x32xf32> to vector<8x8xf32>
    %cst_20 = arith.constant dense<0.000000e+00> : vector<8x8xf32>
    %76 = tpu.matmul %74, %73, %cst_20 {dimension_numbers = #tpu.dot_dimension_numbers<[1], [1], [0], [0], [0, 0, 1, 0], [], []>} : vector<8x8xf32>, vector<8x8xf32>, vector<8x8xf32> -> vector<8x8xf32>
    %cst_21 = arith.constant dense<0xFF800000> : vector<8xf32>
    %77 = vector.multi_reduction <maximumf>, %76, %cst_21 [0] : vector<8x8xf32> to vector<8xf32>
    %78 = vector.shape_cast %77 : vector<8xf32> to vector<1x8xf32>
    %79 = vector.broadcast %78 : vector<1x8xf32> to vector<8x8xf32>
    %80 = arith.subf %76, %79 : vector<8x8xf32>
    %81 = math.exp %80 : vector<8x8xf32>
    %cst_22 = arith.constant dense<0.000000e+00> : vector<8xf32>
    %82 = vector.multi_reduction <add>, %81, %cst_22 [0] : vector<8x8xf32> to vector<8xf32>
    %83 = vector.shape_cast %82 : vector<8xf32> to vector<1x8xf32>
    %84 = tpu.reciprocal %83 : vector<1x8xf32> -> vector<1x8xf32>
    %85 = vector.broadcast %84 : vector<1x8xf32> to vector<8x8xf32>
    %86 = arith.mulf %81, %85 : vector<8x8xf32>
    %cst_23 = arith.constant dense<0.000000e+00> : vector<8x8xf32>
    %87 = tpu.matmul %75, %86, %cst_23 {dimension_numbers = #tpu.dot_dimension_numbers<[1], [0], [0], [1], [0, 0, 1, 1], [], []>} : vector<8x8xf32>, vector<8x8xf32>, vector<8x8xf32> -> vector<8x8xf32>
    %cst_24 = arith.constant 0.000000e+00 : f32
    %88 = vector.broadcast %cst_24 : f32 to vector<8x8xf32>
    %89 = vector.extract_strided_slice %42 {offsets = [0, 0], sizes = [1, 8], strides = [1, 1]} : vector<8x8xf32> to vector<1x8xf32>
    %90 = vector.shape_cast %13 : vector<8x1xi1> to vector<8x1xi1>
    %91 = vector.broadcast %90 : vector<8x1xi1> to vector<8x8xi1>
    %92 = vector.shape_cast %89 : vector<1x8xf32> to vector<1x8xf32>
    %93 = vector.broadcast %92 : vector<1x8xf32> to vector<8x8xf32>
    %94 = arith.select %91, %93, %88 : vector<8x8xi1>, vector<8x8xf32>
    %95 = vector.extract_strided_slice %42 {offsets = [4, 0], sizes = [1, 8], strides = [1, 1]} : vector<8x8xf32> to vector<1x8xf32>
    %96 = vector.shape_cast %15 : vector<8x1xi1> to vector<8x1xi1>
    %97 = vector.broadcast %96 : vector<8x1xi1> to vector<8x8xi1>
    %98 = vector.shape_cast %95 : vector<1x8xf32> to vector<1x8xf32>
    %99 = vector.broadcast %98 : vector<1x8xf32> to vector<8x8xf32>
    %100 = arith.select %97, %99, %94 : vector<8x8xi1>, vector<8x8xf32>
    %101 = vector.extract_strided_slice %57 {offsets = [0, 0], sizes = [1, 8], strides = [1, 1]} : vector<8x8xf32> to vector<1x8xf32>
    %102 = vector.shape_cast %17 : vector<8x1xi1> to vector<8x1xi1>
    %103 = vector.broadcast %102 : vector<8x1xi1> to vector<8x8xi1>
    %104 = vector.shape_cast %101 : vector<1x8xf32> to vector<1x8xf32>
    %105 = vector.broadcast %104 : vector<1x8xf32> to vector<8x8xf32>
    %106 = arith.select %103, %105, %100 : vector<8x8xi1>, vector<8x8xf32>
    %107 = vector.extract_strided_slice %57 {offsets = [4, 0], sizes = [1, 8], strides = [1, 1]} : vector<8x8xf32> to vector<1x8xf32>
    %108 = vector.shape_cast %19 : vector<8x1xi1> to vector<8x1xi1>
    %109 = vector.broadcast %108 : vector<8x1xi1> to vector<8x8xi1>
    %110 = vector.shape_cast %107 : vector<1x8xf32> to vector<1x8xf32>
    %111 = vector.broadcast %110 : vector<1x8xf32> to vector<8x8xf32>
    %112 = arith.select %109, %111, %106 : vector<8x8xi1>, vector<8x8xf32>
    %113 = vector.extract_strided_slice %72 {offsets = [0, 0], sizes = [1, 8], strides = [1, 1]} : vector<8x8xf32> to vector<1x8xf32>
    %114 = vector.shape_cast %21 : vector<8x1xi1> to vector<8x1xi1>
    %115 = vector.broadcast %114 : vector<8x1xi1> to vector<8x8xi1>
    %116 = vector.shape_cast %113 : vector<1x8xf32> to vector<1x8xf32>
    %117 = vector.broadcast %116 : vector<1x8xf32> to vector<8x8xf32>
    %118 = arith.select %115, %117, %112 : vector<8x8xi1>, vector<8x8xf32>
    %119 = vector.extract_strided_slice %72 {offsets = [4, 0], sizes = [1, 8], strides = [1, 1]} : vector<8x8xf32> to vector<1x8xf32>
    %120 = vector.shape_cast %23 : vector<8x1xi1> to vector<8x1xi1>
    %121 = vector.broadcast %120 : vector<8x1xi1> to vector<8x8xi1>
    %122 = vector.shape_cast %119 : vector<1x8xf32> to vector<1x8xf32>
    %123 = vector.broadcast %122 : vector<1x8xf32> to vector<8x8xf32>
    %124 = arith.select %121, %123, %118 : vector<8x8xi1>, vector<8x8xf32>
    %125 = vector.extract_strided_slice %87 {offsets = [0, 0], sizes = [1, 8], strides = [1, 1]} : vector<8x8xf32> to vector<1x8xf32>
    %126 = vector.shape_cast %25 : vector<8x1xi1> to vector<8x1xi1>
    %127 = vector.broadcast %126 : vector<8x1xi1> to vector<8x8xi1>
    %128 = vector.shape_cast %125 : vector<1x8xf32> to vector<1x8xf32>
    %129 = vector.broadcast %128 : vector<1x8xf32> to vector<8x8xf32>
    %130 = arith.select %127, %129, %124 : vector<8x8xi1>, vector<8x8xf32>
    %131 = vector.extract_strided_slice %87 {offsets = [4, 0], sizes = [1, 8], strides = [1, 1]} : vector<8x8xf32> to vector<1x8xf32>
    %132 = vector.shape_cast %27 : vector<8x1xi1> to vector<8x1xi1>
    %133 = vector.broadcast %132 : vector<8x1xi1> to vector<8x8xi1>
    %134 = vector.shape_cast %131 : vector<1x8xf32> to vector<1x8xf32>
    %135 = vector.broadcast %134 : vector<1x8xf32> to vector<8x8xf32>
    %136 = arith.select %133, %135, %130 : vector<8x8xi1>, vector<8x8xf32>
    %cst_25 = arith.constant 0.000000e+00 : f32
    %137 = vector.broadcast %cst_25 : f32 to vector<8x8xf32>
    %138 = vector.extract_strided_slice %42 {offsets = [1, 0], sizes = [1, 8], strides = [1, 1]} : vector<8x8xf32> to vector<1x8xf32>
    %139 = vector.shape_cast %13 : vector<8x1xi1> to vector<8x1xi1>
    %140 = vector.broadcast %139 : vector<8x1xi1> to vector<8x8xi1>
    %141 = vector.shape_cast %138 : vector<1x8xf32> to vector<1x8xf32>
    %142 = vector.broadcast %141 : vector<1x8xf32> to vector<8x8xf32>
    %143 = arith.select %140, %142, %137 : vector<8x8xi1>, vector<8x8xf32>
    %144 = vector.extract_strided_slice %42 {offsets = [5, 0], sizes = [1, 8], strides = [1, 1]} : vector<8x8xf32> to vector<1x8xf32>
    %145 = vector.shape_cast %15 : vector<8x1xi1> to vector<8x1xi1>
    %146 = vector.broadcast %145 : vector<8x1xi1> to vector<8x8xi1>
    %147 = vector.shape_cast %144 : vector<1x8xf32> to vector<1x8xf32>
    %148 = vector.broadcast %147 : vector<1x8xf32> to vector<8x8xf32>
    %149 = arith.select %146, %148, %143 : vector<8x8xi1>, vector<8x8xf32>
    %150 = vector.extract_strided_slice %57 {offsets = [1, 0], sizes = [1, 8], strides = [1, 1]} : vector<8x8xf32> to vector<1x8xf32>
    %151 = vector.shape_cast %17 : vector<8x1xi1> to vector<8x1xi1>
    %152 = vector.broadcast %151 : vector<8x1xi1> to vector<8x8xi1>
    %153 = vector.shape_cast %150 : vector<1x8xf32> to vector<1x8xf32>
    %154 = vector.broadcast %153 : vector<1x8xf32> to vector<8x8xf32>
    %155 = arith.select %152, %154, %149 : vector<8x8xi1>, vector<8x8xf32>
    %156 = vector.extract_strided_slice %57 {offsets = [5, 0], sizes = [1, 8], strides = [1, 1]} : vector<8x8xf32> to vector<1x8xf32>
    %157 = vector.shape_cast %19 : vector<8x1xi1> to vector<8x1xi1>
    %158 = vector.broadcast %157 : vector<8x1xi1> to vector<8x8xi1>
    %159 = vector.shape_cast %156 : vector<1x8xf32> to vector<1x8xf32>
    %160 = vector.broadcast %159 : vector<1x8xf32> to vector<8x8xf32>
    %161 = arith.select %158, %160, %155 : vector<8x8xi1>, vector<8x8xf32>
    %162 = vector.extract_strided_slice %72 {offsets = [1, 0], sizes = [1, 8], strides = [1, 1]} : vector<8x8xf32> to vector<1x8xf32>
    %163 = vector.shape_cast %21 : vector<8x1xi1> to vector<8x1xi1>
    %164 = vector.broadcast %163 : vector<8x1xi1> to vector<8x8xi1>
    %165 = vector.shape_cast %162 : vector<1x8xf32> to vector<1x8xf32>
    %166 = vector.broadcast %165 : vector<1x8xf32> to vector<8x8xf32>
    %167 = arith.select %164, %166, %161 : vector<8x8xi1>, vector<8x8xf32>
    %168 = vector.extract_strided_slice %72 {offsets = [5, 0], sizes = [1, 8], strides = [1, 1]} : vector<8x8xf32> to vector<1x8xf32>
    %169 = vector.shape_cast %23 : vector<8x1xi1> to vector<8x1xi1>
    %170 = vector.broadcast %169 : vector<8x1xi1> to vector<8x8xi1>
    %171 = vector.shape_cast %168 : vector<1x8xf32> to vector<1x8xf32>
    %172 = vector.broadcast %171 : vector<1x8xf32> to vector<8x8xf32>
    %173 = arith.select %170, %172, %167 : vector<8x8xi1>, vector<8x8xf32>
    %174 = vector.extract_strided_slice %87 {offsets = [1, 0], sizes = [1, 8], strides = [1, 1]} : vector<8x8xf32> to vector<1x8xf32>
    %175 = vector.shape_cast %25 : vector<8x1xi1> to vector<8x1xi1>
    %176 = vector.broadcast %175 : vector<8x1xi1> to vector<8x8xi1>
    %177 = vector.shape_cast %174 : vector<1x8xf32> to vector<1x8xf32>
    %178 = vector.broadcast %177 : vector<1x8xf32> to vector<8x8xf32>
    %179 = arith.select %176, %178, %173 : vector<8x8xi1>, vector<8x8xf32>
    %180 = vector.extract_strided_slice %87 {offsets = [5, 0], sizes = [1, 8], strides = [1, 1]} : vector<8x8xf32> to vector<1x8xf32>
    %181 = vector.shape_cast %27 : vector<8x1xi1> to vector<8x1xi1>
    %182 = vector.broadcast %181 : vector<8x1xi1> to vector<8x8xi1>
    %183 = vector.shape_cast %180 : vector<1x8xf32> to vector<1x8xf32>
    %184 = vector.broadcast %183 : vector<1x8xf32> to vector<8x8xf32>
    %185 = arith.select %182, %184, %179 : vector<8x8xi1>, vector<8x8xf32>
    %cst_26 = arith.constant 0.000000e+00 : f32
    %186 = vector.broadcast %cst_26 : f32 to vector<8x8xf32>
    %187 = vector.extract_strided_slice %42 {offsets = [2, 0], sizes = [1, 8], strides = [1, 1]} : vector<8x8xf32> to vector<1x8xf32>
    %188 = vector.shape_cast %13 : vector<8x1xi1> to vector<8x1xi1>
    %189 = vector.broadcast %188 : vector<8x1xi1> to vector<8x8xi1>
    %190 = vector.shape_cast %187 : vector<1x8xf32> to vector<1x8xf32>
    %191 = vector.broadcast %190 : vector<1x8xf32> to vector<8x8xf32>
    %192 = arith.select %189, %191, %186 : vector<8x8xi1>, vector<8x8xf32>
    %193 = vector.extract_strided_slice %42 {offsets = [6, 0], sizes = [1, 8], strides = [1, 1]} : vector<8x8xf32> to vector<1x8xf32>
    %194 = vector.shape_cast %15 : vector<8x1xi1> to vector<8x1xi1>
    %195 = vector.broadcast %194 : vector<8x1xi1> to vector<8x8xi1>
    %196 = vector.shape_cast %193 : vector<1x8xf32> to vector<1x8xf32>
    %197 = vector.broadcast %196 : vector<1x8xf32> to vector<8x8xf32>
    %198 = arith.select %195, %197, %192 : vector<8x8xi1>, vector<8x8xf32>
    %199 = vector.extract_strided_slice %57 {offsets = [2, 0], sizes = [1, 8], strides = [1, 1]} : vector<8x8xf32> to vector<1x8xf32>
    %200 = vector.shape_cast %17 : vector<8x1xi1> to vector<8x1xi1>
    %201 = vector.broadcast %200 : vector<8x1xi1> to vector<8x8xi1>
    %202 = vector.shape_cast %199 : vector<1x8xf32> to vector<1x8xf32>
    %203 = vector.broadcast %202 : vector<1x8xf32> to vector<8x8xf32>
    %204 = arith.select %201, %203, %198 : vector<8x8xi1>, vector<8x8xf32>
    %205 = vector.extract_strided_slice %57 {offsets = [6, 0], sizes = [1, 8], strides = [1, 1]} : vector<8x8xf32> to vector<1x8xf32>
    %206 = vector.shape_cast %19 : vector<8x1xi1> to vector<8x1xi1>
    %207 = vector.broadcast %206 : vector<8x1xi1> to vector<8x8xi1>
    %208 = vector.shape_cast %205 : vector<1x8xf32> to vector<1x8xf32>
    %209 = vector.broadcast %208 : vector<1x8xf32> to vector<8x8xf32>
    %210 = arith.select %207, %209, %204 : vector<8x8xi1>, vector<8x8xf32>
    %211 = vector.extract_strided_slice %72 {offsets = [2, 0], sizes = [1, 8], strides = [1, 1]} : vector<8x8xf32> to vector<1x8xf32>
    %212 = vector.shape_cast %21 : vector<8x1xi1> to vector<8x1xi1>
    %213 = vector.broadcast %212 : vector<8x1xi1> to vector<8x8xi1>
    %214 = vector.shape_cast %211 : vector<1x8xf32> to vector<1x8xf32>
    %215 = vector.broadcast %214 : vector<1x8xf32> to vector<8x8xf32>
    %216 = arith.select %213, %215, %210 : vector<8x8xi1>, vector<8x8xf32>
    %217 = vector.extract_strided_slice %72 {offsets = [6, 0], sizes = [1, 8], strides = [1, 1]} : vector<8x8xf32> to vector<1x8xf32>
    %218 = vector.shape_cast %23 : vector<8x1xi1> to vector<8x1xi1>
    %219 = vector.broadcast %218 : vector<8x1xi1> to vector<8x8xi1>
    %220 = vector.shape_cast %217 : vector<1x8xf32> to vector<1x8xf32>
    %221 = vector.broadcast %220 : vector<1x8xf32> to vector<8x8xf32>
    %222 = arith.select %219, %221, %216 : vector<8x8xi1>, vector<8x8xf32>
    %223 = vector.extract_strided_slice %87 {offsets = [2, 0], sizes = [1, 8], strides = [1, 1]} : vector<8x8xf32> to vector<1x8xf32>
    %224 = vector.shape_cast %25 : vector<8x1xi1> to vector<8x1xi1>
    %225 = vector.broadcast %224 : vector<8x1xi1> to vector<8x8xi1>
    %226 = vector.shape_cast %223 : vector<1x8xf32> to vector<1x8xf32>
    %227 = vector.broadcast %226 : vector<1x8xf32> to vector<8x8xf32>
    %228 = arith.select %225, %227, %222 : vector<8x8xi1>, vector<8x8xf32>
    %229 = vector.extract_strided_slice %87 {offsets = [6, 0], sizes = [1, 8], strides = [1, 1]} : vector<8x8xf32> to vector<1x8xf32>
    %230 = vector.shape_cast %27 : vector<8x1xi1> to vector<8x1xi1>
    %231 = vector.broadcast %230 : vector<8x1xi1> to vector<8x8xi1>
    %232 = vector.shape_cast %229 : vector<1x8xf32> to vector<1x8xf32>
    %233 = vector.broadcast %232 : vector<1x8xf32> to vector<8x8xf32>
    %234 = arith.select %231, %233, %228 : vector<8x8xi1>, vector<8x8xf32>
    %cst_27 = arith.constant 0.000000e+00 : f32
    %235 = vector.broadcast %cst_27 : f32 to vector<8x8xf32>
    %236 = vector.extract_strided_slice %42 {offsets = [3, 0], sizes = [1, 8], strides = [1, 1]} : vector<8x8xf32> to vector<1x8xf32>
    %237 = vector.shape_cast %13 : vector<8x1xi1> to vector<8x1xi1>
    %238 = vector.broadcast %237 : vector<8x1xi1> to vector<8x8xi1>
    %239 = vector.shape_cast %236 : vector<1x8xf32> to vector<1x8xf32>
    %240 = vector.broadcast %239 : vector<1x8xf32> to vector<8x8xf32>
    %241 = arith.select %238, %240, %235 : vector<8x8xi1>, vector<8x8xf32>
    %242 = vector.extract_strided_slice %42 {offsets = [7, 0], sizes = [1, 8], strides = [1, 1]} : vector<8x8xf32> to vector<1x8xf32>
    %243 = vector.shape_cast %15 : vector<8x1xi1> to vector<8x1xi1>
    %244 = vector.broadcast %243 : vector<8x1xi1> to vector<8x8xi1>
    %245 = vector.shape_cast %242 : vector<1x8xf32> to vector<1x8xf32>
    %246 = vector.broadcast %245 : vector<1x8xf32> to vector<8x8xf32>
    %247 = arith.select %244, %246, %241 : vector<8x8xi1>, vector<8x8xf32>
    %248 = vector.extract_strided_slice %57 {offsets = [3, 0], sizes = [1, 8], strides = [1, 1]} : vector<8x8xf32> to vector<1x8xf32>
    %249 = vector.shape_cast %17 : vector<8x1xi1> to vector<8x1xi1>
    %250 = vector.broadcast %249 : vector<8x1xi1> to vector<8x8xi1>
    %251 = vector.shape_cast %248 : vector<1x8xf32> to vector<1x8xf32>
    %252 = vector.broadcast %251 : vector<1x8xf32> to vector<8x8xf32>
    %253 = arith.select %250, %252, %247 : vector<8x8xi1>, vector<8x8xf32>
    %254 = vector.extract_strided_slice %57 {offsets = [7, 0], sizes = [1, 8], strides = [1, 1]} : vector<8x8xf32> to vector<1x8xf32>
    %255 = vector.shape_cast %19 : vector<8x1xi1> to vector<8x1xi1>
    %256 = vector.broadcast %255 : vector<8x1xi1> to vector<8x8xi1>
    %257 = vector.shape_cast %254 : vector<1x8xf32> to vector<1x8xf32>
    %258 = vector.broadcast %257 : vector<1x8xf32> to vector<8x8xf32>
    %259 = arith.select %256, %258, %253 : vector<8x8xi1>, vector<8x8xf32>
    %260 = vector.extract_strided_slice %72 {offsets = [3, 0], sizes = [1, 8], strides = [1, 1]} : vector<8x8xf32> to vector<1x8xf32>
    %261 = vector.shape_cast %21 : vector<8x1xi1> to vector<8x1xi1>
    %262 = vector.broadcast %261 : vector<8x1xi1> to vector<8x8xi1>
    %263 = vector.shape_cast %260 : vector<1x8xf32> to vector<1x8xf32>
    %264 = vector.broadcast %263 : vector<1x8xf32> to vector<8x8xf32>
    %265 = arith.select %262, %264, %259 : vector<8x8xi1>, vector<8x8xf32>
    %266 = vector.extract_strided_slice %72 {offsets = [7, 0], sizes = [1, 8], strides = [1, 1]} : vector<8x8xf32> to vector<1x8xf32>
    %267 = vector.shape_cast %23 : vector<8x1xi1> to vector<8x1xi1>
    %268 = vector.broadcast %267 : vector<8x1xi1> to vector<8x8xi1>
    %269 = vector.shape_cast %266 : vector<1x8xf32> to vector<1x8xf32>
    %270 = vector.broadcast %269 : vector<1x8xf32> to vector<8x8xf32>
    %271 = arith.select %268, %270, %265 : vector<8x8xi1>, vector<8x8xf32>
    %272 = vector.extract_strided_slice %87 {offsets = [3, 0], sizes = [1, 8], strides = [1, 1]} : vector<8x8xf32> to vector<1x8xf32>
    %273 = vector.shape_cast %25 : vector<8x1xi1> to vector<8x1xi1>
    %274 = vector.broadcast %273 : vector<8x1xi1> to vector<8x8xi1>
    %275 = vector.shape_cast %272 : vector<1x8xf32> to vector<1x8xf32>
    %276 = vector.broadcast %275 : vector<1x8xf32> to vector<8x8xf32>
    %277 = arith.select %274, %276, %271 : vector<8x8xi1>, vector<8x8xf32>
    %278 = vector.extract_strided_slice %87 {offsets = [7, 0], sizes = [1, 8], strides = [1, 1]} : vector<8x8xf32> to vector<1x8xf32>
    %279 = vector.shape_cast %27 : vector<8x1xi1> to vector<8x1xi1>
    %280 = vector.broadcast %279 : vector<8x1xi1> to vector<8x8xi1>
    %281 = vector.shape_cast %278 : vector<1x8xf32> to vector<1x8xf32>
    %282 = vector.broadcast %281 : vector<1x8xf32> to vector<8x8xf32>
    %283 = arith.select %280, %282, %277 : vector<8x8xi1>, vector<8x8xf32>
    %284 = vector.extract_strided_slice %8 {offsets = [8, 0], sizes = [8, 8], strides = [1, 1]} : vector<32x64xf32> to vector<8x8xf32>
    %285 = vector.extract_strided_slice %8 {offsets = [8, 32], sizes = [8, 8], strides = [1, 1]} : vector<32x64xf32> to vector<8x8xf32>
    %286 = vector.extract_strided_slice %10 {offsets = [0, 8], sizes = [8, 8], strides = [1, 1]} : vector<32x32xf32> to vector<8x8xf32>
    %cst_28 = arith.constant dense<0.000000e+00> : vector<8x8xf32>
    %287 = tpu.matmul %285, %284, %cst_28 {dimension_numbers = #tpu.dot_dimension_numbers<[1], [1], [0], [0], [0, 0, 1, 0], [], []>} : vector<8x8xf32>, vector<8x8xf32>, vector<8x8xf32> -> vector<8x8xf32>
    %cst_29 = arith.constant dense<0xFF800000> : vector<8xf32>
    %288 = vector.multi_reduction <maximumf>, %287, %cst_29 [0] : vector<8x8xf32> to vector<8xf32>
    %289 = vector.shape_cast %288 : vector<8xf32> to vector<1x8xf32>
    %290 = vector.broadcast %289 : vector<1x8xf32> to vector<8x8xf32>
    %291 = arith.subf %287, %290 : vector<8x8xf32>
    %292 = math.exp %291 : vector<8x8xf32>
    %cst_30 = arith.constant dense<0.000000e+00> : vector<8xf32>
    %293 = vector.multi_reduction <add>, %292, %cst_30 [0] : vector<8x8xf32> to vector<8xf32>
    %294 = vector.shape_cast %293 : vector<8xf32> to vector<1x8xf32>
    %295 = tpu.reciprocal %294 : vector<1x8xf32> -> vector<1x8xf32>
    %296 = vector.broadcast %295 : vector<1x8xf32> to vector<8x8xf32>
    %297 = arith.mulf %292, %296 : vector<8x8xf32>
    %cst_31 = arith.constant dense<0.000000e+00> : vector<8x8xf32>
    %298 = tpu.matmul %286, %297, %cst_31 {dimension_numbers = #tpu.dot_dimension_numbers<[1], [0], [0], [1], [0, 0, 1, 1], [], []>} : vector<8x8xf32>, vector<8x8xf32>, vector<8x8xf32> -> vector<8x8xf32>
    %299 = vector.extract_strided_slice %8 {offsets = [8, 8], sizes = [8, 8], strides = [1, 1]} : vector<32x64xf32> to vector<8x8xf32>
    %300 = vector.extract_strided_slice %8 {offsets = [8, 40], sizes = [8, 8], strides = [1, 1]} : vector<32x64xf32> to vector<8x8xf32>
    %301 = vector.extract_strided_slice %10 {offsets = [8, 8], sizes = [8, 8], strides = [1, 1]} : vector<32x32xf32> to vector<8x8xf32>
    %cst_32 = arith.constant dense<0.000000e+00> : vector<8x8xf32>
    %302 = tpu.matmul %300, %299, %cst_32 {dimension_numbers = #tpu.dot_dimension_numbers<[1], [1], [0], [0], [0, 0, 1, 0], [], []>} : vector<8x8xf32>, vector<8x8xf32>, vector<8x8xf32> -> vector<8x8xf32>
    %cst_33 = arith.constant dense<0xFF800000> : vector<8xf32>
    %303 = vector.multi_reduction <maximumf>, %302, %cst_33 [0] : vector<8x8xf32> to vector<8xf32>
    %304 = vector.shape_cast %303 : vector<8xf32> to vector<1x8xf32>
    %305 = vector.broadcast %304 : vector<1x8xf32> to vector<8x8xf32>
    %306 = arith.subf %302, %305 : vector<8x8xf32>
    %307 = math.exp %306 : vector<8x8xf32>
    %cst_34 = arith.constant dense<0.000000e+00> : vector<8xf32>
    %308 = vector.multi_reduction <add>, %307, %cst_34 [0] : vector<8x8xf32> to vector<8xf32>
    %309 = vector.shape_cast %308 : vector<8xf32> to vector<1x8xf32>
    %310 = tpu.reciprocal %309 : vector<1x8xf32> -> vector<1x8xf32>
    %311 = vector.broadcast %310 : vector<1x8xf32> to vector<8x8xf32>
    %312 = arith.mulf %307, %311 : vector<8x8xf32>
    %cst_35 = arith.constant dense<0.000000e+00> : vector<8x8xf32>
    %313 = tpu.matmul %301, %312, %cst_35 {dimension_numbers = #tpu.dot_dimension_numbers<[1], [0], [0], [1], [0, 0, 1, 1], [], []>} : vector<8x8xf32>, vector<8x8xf32>, vector<8x8xf32> -> vector<8x8xf32>
    %314 = vector.extract_strided_slice %8 {offsets = [8, 16], sizes = [8, 8], strides = [1, 1]} : vector<32x64xf32> to vector<8x8xf32>
    %315 = vector.extract_strided_slice %8 {offsets = [8, 48], sizes = [8, 8], strides = [1, 1]} : vector<32x64xf32> to vector<8x8xf32>
    %316 = vector.extract_strided_slice %10 {offsets = [16, 8], sizes = [8, 8], strides = [1, 1]} : vector<32x32xf32> to vector<8x8xf32>
    %cst_36 = arith.constant dense<0.000000e+00> : vector<8x8xf32>
    %317 = tpu.matmul %315, %314, %cst_36 {dimension_numbers = #tpu.dot_dimension_numbers<[1], [1], [0], [0], [0, 0, 1, 0], [], []>} : vector<8x8xf32>, vector<8x8xf32>, vector<8x8xf32> -> vector<8x8xf32>
    %cst_37 = arith.constant dense<0xFF800000> : vector<8xf32>
    %318 = vector.multi_reduction <maximumf>, %317, %cst_37 [0] : vector<8x8xf32> to vector<8xf32>
    %319 = vector.shape_cast %318 : vector<8xf32> to vector<1x8xf32>
    %320 = vector.broadcast %319 : vector<1x8xf32> to vector<8x8xf32>
    %321 = arith.subf %317, %320 : vector<8x8xf32>
    %322 = math.exp %321 : vector<8x8xf32>
    %cst_38 = arith.constant dense<0.000000e+00> : vector<8xf32>
    %323 = vector.multi_reduction <add>, %322, %cst_38 [0] : vector<8x8xf32> to vector<8xf32>
    %324 = vector.shape_cast %323 : vector<8xf32> to vector<1x8xf32>
    %325 = tpu.reciprocal %324 : vector<1x8xf32> -> vector<1x8xf32>
    %326 = vector.broadcast %325 : vector<1x8xf32> to vector<8x8xf32>
    %327 = arith.mulf %322, %326 : vector<8x8xf32>
    %cst_39 = arith.constant dense<0.000000e+00> : vector<8x8xf32>
    %328 = tpu.matmul %316, %327, %cst_39 {dimension_numbers = #tpu.dot_dimension_numbers<[1], [0], [0], [1], [0, 0, 1, 1], [], []>} : vector<8x8xf32>, vector<8x8xf32>, vector<8x8xf32> -> vector<8x8xf32>
    %329 = vector.extract_strided_slice %8 {offsets = [8, 24], sizes = [8, 8], strides = [1, 1]} : vector<32x64xf32> to vector<8x8xf32>
    %330 = vector.extract_strided_slice %8 {offsets = [8, 56], sizes = [8, 8], strides = [1, 1]} : vector<32x64xf32> to vector<8x8xf32>
    %331 = vector.extract_strided_slice %10 {offsets = [24, 8], sizes = [8, 8], strides = [1, 1]} : vector<32x32xf32> to vector<8x8xf32>
    %cst_40 = arith.constant dense<0.000000e+00> : vector<8x8xf32>
    %332 = tpu.matmul %330, %329, %cst_40 {dimension_numbers = #tpu.dot_dimension_numbers<[1], [1], [0], [0], [0, 0, 1, 0], [], []>} : vector<8x8xf32>, vector<8x8xf32>, vector<8x8xf32> -> vector<8x8xf32>
    %cst_41 = arith.constant dense<0xFF800000> : vector<8xf32>
    %333 = vector.multi_reduction <maximumf>, %332, %cst_41 [0] : vector<8x8xf32> to vector<8xf32>
    %334 = vector.shape_cast %333 : vector<8xf32> to vector<1x8xf32>
    %335 = vector.broadcast %334 : vector<1x8xf32> to vector<8x8xf32>
    %336 = arith.subf %332, %335 : vector<8x8xf32>
    %337 = math.exp %336 : vector<8x8xf32>
    %cst_42 = arith.constant dense<0.000000e+00> : vector<8xf32>
    %338 = vector.multi_reduction <add>, %337, %cst_42 [0] : vector<8x8xf32> to vector<8xf32>
    %339 = vector.shape_cast %338 : vector<8xf32> to vector<1x8xf32>
    %340 = tpu.reciprocal %339 : vector<1x8xf32> -> vector<1x8xf32>
    %341 = vector.broadcast %340 : vector<1x8xf32> to vector<8x8xf32>
    %342 = arith.mulf %337, %341 : vector<8x8xf32>
    %cst_43 = arith.constant dense<0.000000e+00> : vector<8x8xf32>
    %343 = tpu.matmul %331, %342, %cst_43 {dimension_numbers = #tpu.dot_dimension_numbers<[1], [0], [0], [1], [0, 0, 1, 1], [], []>} : vector<8x8xf32>, vector<8x8xf32>, vector<8x8xf32> -> vector<8x8xf32>
    %cst_44 = arith.constant 0.000000e+00 : f32
    %344 = vector.broadcast %cst_44 : f32 to vector<8x8xf32>
    %345 = vector.extract_strided_slice %298 {offsets = [0, 0], sizes = [1, 8], strides = [1, 1]} : vector<8x8xf32> to vector<1x8xf32>
    %346 = vector.shape_cast %13 : vector<8x1xi1> to vector<8x1xi1>
    %347 = vector.broadcast %346 : vector<8x1xi1> to vector<8x8xi1>
    %348 = vector.shape_cast %345 : vector<1x8xf32> to vector<1x8xf32>
    %349 = vector.broadcast %348 : vector<1x8xf32> to vector<8x8xf32>
    %350 = arith.select %347, %349, %344 : vector<8x8xi1>, vector<8x8xf32>
    %351 = vector.extract_strided_slice %298 {offsets = [4, 0], sizes = [1, 8], strides = [1, 1]} : vector<8x8xf32> to vector<1x8xf32>
    %352 = vector.shape_cast %15 : vector<8x1xi1> to vector<8x1xi1>
    %353 = vector.broadcast %352 : vector<8x1xi1> to vector<8x8xi1>
    %354 = vector.shape_cast %351 : vector<1x8xf32> to vector<1x8xf32>
    %355 = vector.broadcast %354 : vector<1x8xf32> to vector<8x8xf32>
    %356 = arith.select %353, %355, %350 : vector<8x8xi1>, vector<8x8xf32>
    %357 = vector.extract_strided_slice %313 {offsets = [0, 0], sizes = [1, 8], strides = [1, 1]} : vector<8x8xf32> to vector<1x8xf32>
    %358 = vector.shape_cast %17 : vector<8x1xi1> to vector<8x1xi1>
    %359 = vector.broadcast %358 : vector<8x1xi1> to vector<8x8xi1>
    %360 = vector.shape_cast %357 : vector<1x8xf32> to vector<1x8xf32>
    %361 = vector.broadcast %360 : vector<1x8xf32> to vector<8x8xf32>
    %362 = arith.select %359, %361, %356 : vector<8x8xi1>, vector<8x8xf32>
    %363 = vector.extract_strided_slice %313 {offsets = [4, 0], sizes = [1, 8], strides = [1, 1]} : vector<8x8xf32> to vector<1x8xf32>
    %364 = vector.shape_cast %19 : vector<8x1xi1> to vector<8x1xi1>
    %365 = vector.broadcast %364 : vector<8x1xi1> to vector<8x8xi1>
    %366 = vector.shape_cast %363 : vector<1x8xf32> to vector<1x8xf32>
    %367 = vector.broadcast %366 : vector<1x8xf32> to vector<8x8xf32>
    %368 = arith.select %365, %367, %362 : vector<8x8xi1>, vector<8x8xf32>
    %369 = vector.extract_strided_slice %328 {offsets = [0, 0], sizes = [1, 8], strides = [1, 1]} : vector<8x8xf32> to vector<1x8xf32>
    %370 = vector.shape_cast %21 : vector<8x1xi1> to vector<8x1xi1>
    %371 = vector.broadcast %370 : vector<8x1xi1> to vector<8x8xi1>
    %372 = vector.shape_cast %369 : vector<1x8xf32> to vector<1x8xf32>
    %373 = vector.broadcast %372 : vector<1x8xf32> to vector<8x8xf32>
    %374 = arith.select %371, %373, %368 : vector<8x8xi1>, vector<8x8xf32>
    %375 = vector.extract_strided_slice %328 {offsets = [4, 0], sizes = [1, 8], strides = [1, 1]} : vector<8x8xf32> to vector<1x8xf32>
    %376 = vector.shape_cast %23 : vector<8x1xi1> to vector<8x1xi1>
    %377 = vector.broadcast %376 : vector<8x1xi1> to vector<8x8xi1>
    %378 = vector.shape_cast %375 : vector<1x8xf32> to vector<1x8xf32>
    %379 = vector.broadcast %378 : vector<1x8xf32> to vector<8x8xf32>
    %380 = arith.select %377, %379, %374 : vector<8x8xi1>, vector<8x8xf32>
    %381 = vector.extract_strided_slice %343 {offsets = [0, 0], sizes = [1, 8], strides = [1, 1]} : vector<8x8xf32> to vector<1x8xf32>
    %382 = vector.shape_cast %25 : vector<8x1xi1> to vector<8x1xi1>
    %383 = vector.broadcast %382 : vector<8x1xi1> to vector<8x8xi1>
    %384 = vector.shape_cast %381 : vector<1x8xf32> to vector<1x8xf32>
    %385 = vector.broadcast %384 : vector<1x8xf32> to vector<8x8xf32>
    %386 = arith.select %383, %385, %380 : vector<8x8xi1>, vector<8x8xf32>
    %387 = vector.extract_strided_slice %343 {offsets = [4, 0], sizes = [1, 8], strides = [1, 1]} : vector<8x8xf32> to vector<1x8xf32>
    %388 = vector.shape_cast %27 : vector<8x1xi1> to vector<8x1xi1>
    %389 = vector.broadcast %388 : vector<8x1xi1> to vector<8x8xi1>
    %390 = vector.shape_cast %387 : vector<1x8xf32> to vector<1x8xf32>
    %391 = vector.broadcast %390 : vector<1x8xf32> to vector<8x8xf32>
    %392 = arith.select %389, %391, %386 : vector<8x8xi1>, vector<8x8xf32>
    %cst_45 = arith.constant 0.000000e+00 : f32
    %393 = vector.broadcast %cst_45 : f32 to vector<8x8xf32>
    %394 = vector.extract_strided_slice %298 {offsets = [1, 0], sizes = [1, 8], strides = [1, 1]} : vector<8x8xf32> to vector<1x8xf32>
    %395 = vector.shape_cast %13 : vector<8x1xi1> to vector<8x1xi1>
    %396 = vector.broadcast %395 : vector<8x1xi1> to vector<8x8xi1>
    %397 = vector.shape_cast %394 : vector<1x8xf32> to vector<1x8xf32>
    %398 = vector.broadcast %397 : vector<1x8xf32> to vector<8x8xf32>
    %399 = arith.select %396, %398, %393 : vector<8x8xi1>, vector<8x8xf32>
    %400 = vector.extract_strided_slice %298 {offsets = [5, 0], sizes = [1, 8], strides = [1, 1]} : vector<8x8xf32> to vector<1x8xf32>
    %401 = vector.shape_cast %15 : vector<8x1xi1> to vector<8x1xi1>
    %402 = vector.broadcast %401 : vector<8x1xi1> to vector<8x8xi1>
    %403 = vector.shape_cast %400 : vector<1x8xf32> to vector<1x8xf32>
    %404 = vector.broadcast %403 : vector<1x8xf32> to vector<8x8xf32>
    %405 = arith.select %402, %404, %399 : vector<8x8xi1>, vector<8x8xf32>
    %406 = vector.extract_strided_slice %313 {offsets = [1, 0], sizes = [1, 8], strides = [1, 1]} : vector<8x8xf32> to vector<1x8xf32>
    %407 = vector.shape_cast %17 : vector<8x1xi1> to vector<8x1xi1>
    %408 = vector.broadcast %407 : vector<8x1xi1> to vector<8x8xi1>
    %409 = vector.shape_cast %406 : vector<1x8xf32> to vector<1x8xf32>
    %410 = vector.broadcast %409 : vector<1x8xf32> to vector<8x8xf32>
    %411 = arith.select %408, %410, %405 : vector<8x8xi1>, vector<8x8xf32>
    %412 = vector.extract_strided_slice %313 {offsets = [5, 0], sizes = [1, 8], strides = [1, 1]} : vector<8x8xf32> to vector<1x8xf32>
    %413 = vector.shape_cast %19 : vector<8x1xi1> to vector<8x1xi1>
    %414 = vector.broadcast %413 : vector<8x1xi1> to vector<8x8xi1>
    %415 = vector.shape_cast %412 : vector<1x8xf32> to vector<1x8xf32>
    %416 = vector.broadcast %415 : vector<1x8xf32> to vector<8x8xf32>
    %417 = arith.select %414, %416, %411 : vector<8x8xi1>, vector<8x8xf32>
    %418 = vector.extract_strided_slice %328 {offsets = [1, 0], sizes = [1, 8], strides = [1, 1]} : vector<8x8xf32> to vector<1x8xf32>
    %419 = vector.shape_cast %21 : vector<8x1xi1> to vector<8x1xi1>
    %420 = vector.broadcast %419 : vector<8x1xi1> to vector<8x8xi1>
    %421 = vector.shape_cast %418 : vector<1x8xf32> to vector<1x8xf32>
    %422 = vector.broadcast %421 : vector<1x8xf32> to vector<8x8xf32>
    %423 = arith.select %420, %422, %417 : vector<8x8xi1>, vector<8x8xf32>
    %424 = vector.extract_strided_slice %328 {offsets = [5, 0], sizes = [1, 8], strides = [1, 1]} : vector<8x8xf32> to vector<1x8xf32>
    %425 = vector.shape_cast %23 : vector<8x1xi1> to vector<8x1xi1>
    %426 = vector.broadcast %425 : vector<8x1xi1> to vector<8x8xi1>
    %427 = vector.shape_cast %424 : vector<1x8xf32> to vector<1x8xf32>
    %428 = vector.broadcast %427 : vector<1x8xf32> to vector<8x8xf32>
    %429 = arith.select %426, %428, %423 : vector<8x8xi1>, vector<8x8xf32>
    %430 = vector.extract_strided_slice %343 {offsets = [1, 0], sizes = [1, 8], strides = [1, 1]} : vector<8x8xf32> to vector<1x8xf32>
    %431 = vector.shape_cast %25 : vector<8x1xi1> to vector<8x1xi1>
    %432 = vector.broadcast %431 : vector<8x1xi1> to vector<8x8xi1>
    %433 = vector.shape_cast %430 : vector<1x8xf32> to vector<1x8xf32>
    %434 = vector.broadcast %433 : vector<1x8xf32> to vector<8x8xf32>
    %435 = arith.select %432, %434, %429 : vector<8x8xi1>, vector<8x8xf32>
    %436 = vector.extract_strided_slice %343 {offsets = [5, 0], sizes = [1, 8], strides = [1, 1]} : vector<8x8xf32> to vector<1x8xf32>
    %437 = vector.shape_cast %27 : vector<8x1xi1> to vector<8x1xi1>
    %438 = vector.broadcast %437 : vector<8x1xi1> to vector<8x8xi1>
    %439 = vector.shape_cast %436 : vector<1x8xf32> to vector<1x8xf32>
    %440 = vector.broadcast %439 : vector<1x8xf32> to vector<8x8xf32>
    %441 = arith.select %438, %440, %435 : vector<8x8xi1>, vector<8x8xf32>
    %cst_46 = arith.constant 0.000000e+00 : f32
    %442 = vector.broadcast %cst_46 : f32 to vector<8x8xf32>
    %443 = vector.extract_strided_slice %298 {offsets = [2, 0], sizes = [1, 8], strides = [1, 1]} : vector<8x8xf32> to vector<1x8xf32>
    %444 = vector.shape_cast %13 : vector<8x1xi1> to vector<8x1xi1>
    %445 = vector.broadcast %444 : vector<8x1xi1> to vector<8x8xi1>
    %446 = vector.shape_cast %443 : vector<1x8xf32> to vector<1x8xf32>
    %447 = vector.broadcast %446 : vector<1x8xf32> to vector<8x8xf32>
    %448 = arith.select %445, %447, %442 : vector<8x8xi1>, vector<8x8xf32>
    %449 = vector.extract_strided_slice %298 {offsets = [6, 0], sizes = [1, 8], strides = [1, 1]} : vector<8x8xf32> to vector<1x8xf32>
    %450 = vector.shape_cast %15 : vector<8x1xi1> to vector<8x1xi1>
    %451 = vector.broadcast %450 : vector<8x1xi1> to vector<8x8xi1>
    %452 = vector.shape_cast %449 : vector<1x8xf32> to vector<1x8xf32>
    %453 = vector.broadcast %452 : vector<1x8xf32> to vector<8x8xf32>
    %454 = arith.select %451, %453, %448 : vector<8x8xi1>, vector<8x8xf32>
    %455 = vector.extract_strided_slice %313 {offsets = [2, 0], sizes = [1, 8], strides = [1, 1]} : vector<8x8xf32> to vector<1x8xf32>
    %456 = vector.shape_cast %17 : vector<8x1xi1> to vector<8x1xi1>
    %457 = vector.broadcast %456 : vector<8x1xi1> to vector<8x8xi1>
    %458 = vector.shape_cast %455 : vector<1x8xf32> to vector<1x8xf32>
    %459 = vector.broadcast %458 : vector<1x8xf32> to vector<8x8xf32>
    %460 = arith.select %457, %459, %454 : vector<8x8xi1>, vector<8x8xf32>
    %461 = vector.extract_strided_slice %313 {offsets = [6, 0], sizes = [1, 8], strides = [1, 1]} : vector<8x8xf32> to vector<1x8xf32>
    %462 = vector.shape_cast %19 : vector<8x1xi1> to vector<8x1xi1>
    %463 = vector.broadcast %462 : vector<8x1xi1> to vector<8x8xi1>
    %464 = vector.shape_cast %461 : vector<1x8xf32> to vector<1x8xf32>
    %465 = vector.broadcast %464 : vector<1x8xf32> to vector<8x8xf32>
    %466 = arith.select %463, %465, %460 : vector<8x8xi1>, vector<8x8xf32>
    %467 = vector.extract_strided_slice %328 {offsets = [2, 0], sizes = [1, 8], strides = [1, 1]} : vector<8x8xf32> to vector<1x8xf32>
    %468 = vector.shape_cast %21 : vector<8x1xi1> to vector<8x1xi1>
    %469 = vector.broadcast %468 : vector<8x1xi1> to vector<8x8xi1>
    %470 = vector.shape_cast %467 : vector<1x8xf32> to vector<1x8xf32>
    %471 = vector.broadcast %470 : vector<1x8xf32> to vector<8x8xf32>
    %472 = arith.select %469, %471, %466 : vector<8x8xi1>, vector<8x8xf32>
    %473 = vector.extract_strided_slice %328 {offsets = [6, 0], sizes = [1, 8], strides = [1, 1]} : vector<8x8xf32> to vector<1x8xf32>
    %474 = vector.shape_cast %23 : vector<8x1xi1> to vector<8x1xi1>
    %475 = vector.broadcast %474 : vector<8x1xi1> to vector<8x8xi1>
    %476 = vector.shape_cast %473 : vector<1x8xf32> to vector<1x8xf32>
    %477 = vector.broadcast %476 : vector<1x8xf32> to vector<8x8xf32>
    %478 = arith.select %475, %477, %472 : vector<8x8xi1>, vector<8x8xf32>
    %479 = vector.extract_strided_slice %343 {offsets = [2, 0], sizes = [1, 8], strides = [1, 1]} : vector<8x8xf32> to vector<1x8xf32>
    %480 = vector.shape_cast %25 : vector<8x1xi1> to vector<8x1xi1>
    %481 = vector.broadcast %480 : vector<8x1xi1> to vector<8x8xi1>
    %482 = vector.shape_cast %479 : vector<1x8xf32> to vector<1x8xf32>
    %483 = vector.broadcast %482 : vector<1x8xf32> to vector<8x8xf32>
    %484 = arith.select %481, %483, %478 : vector<8x8xi1>, vector<8x8xf32>
    %485 = vector.extract_strided_slice %343 {offsets = [6, 0], sizes = [1, 8], strides = [1, 1]} : vector<8x8xf32> to vector<1x8xf32>
    %486 = vector.shape_cast %27 : vector<8x1xi1> to vector<8x1xi1>
    %487 = vector.broadcast %486 : vector<8x1xi1> to vector<8x8xi1>
    %488 = vector.shape_cast %485 : vector<1x8xf32> to vector<1x8xf32>
    %489 = vector.broadcast %488 : vector<1x8xf32> to vector<8x8xf32>
    %490 = arith.select %487, %489, %484 : vector<8x8xi1>, vector<8x8xf32>
    %cst_47 = arith.constant 0.000000e+00 : f32
    %491 = vector.broadcast %cst_47 : f32 to vector<8x8xf32>
    %492 = vector.extract_strided_slice %298 {offsets = [3, 0], sizes = [1, 8], strides = [1, 1]} : vector<8x8xf32> to vector<1x8xf32>
    %493 = vector.shape_cast %13 : vector<8x1xi1> to vector<8x1xi1>
    %494 = vector.broadcast %493 : vector<8x1xi1> to vector<8x8xi1>
    %495 = vector.shape_cast %492 : vector<1x8xf32> to vector<1x8xf32>
    %496 = vector.broadcast %495 : vector<1x8xf32> to vector<8x8xf32>
    %497 = arith.select %494, %496, %491 : vector<8x8xi1>, vector<8x8xf32>
    %498 = vector.extract_strided_slice %298 {offsets = [7, 0], sizes = [1, 8], strides = [1, 1]} : vector<8x8xf32> to vector<1x8xf32>
    %499 = vector.shape_cast %15 : vector<8x1xi1> to vector<8x1xi1>
    %500 = vector.broadcast %499 : vector<8x1xi1> to vector<8x8xi1>
    %501 = vector.shape_cast %498 : vector<1x8xf32> to vector<1x8xf32>
    %502 = vector.broadcast %501 : vector<1x8xf32> to vector<8x8xf32>
    %503 = arith.select %500, %502, %497 : vector<8x8xi1>, vector<8x8xf32>
    %504 = vector.extract_strided_slice %313 {offsets = [3, 0], sizes = [1, 8], strides = [1, 1]} : vector<8x8xf32> to vector<1x8xf32>
    %505 = vector.shape_cast %17 : vector<8x1xi1> to vector<8x1xi1>
    %506 = vector.broadcast %505 : vector<8x1xi1> to vector<8x8xi1>
    %507 = vector.shape_cast %504 : vector<1x8xf32> to vector<1x8xf32>
    %508 = vector.broadcast %507 : vector<1x8xf32> to vector<8x8xf32>
    %509 = arith.select %506, %508, %503 : vector<8x8xi1>, vector<8x8xf32>
    %510 = vector.extract_strided_slice %313 {offsets = [7, 0], sizes = [1, 8], strides = [1, 1]} : vector<8x8xf32> to vector<1x8xf32>
    %511 = vector.shape_cast %19 : vector<8x1xi1> to vector<8x1xi1>
    %512 = vector.broadcast %511 : vector<8x1xi1> to vector<8x8xi1>
    %513 = vector.shape_cast %510 : vector<1x8xf32> to vector<1x8xf32>
    %514 = vector.broadcast %513 : vector<1x8xf32> to vector<8x8xf32>
    %515 = arith.select %512, %514, %509 : vector<8x8xi1>, vector<8x8xf32>
    %516 = vector.extract_strided_slice %328 {offsets = [3, 0], sizes = [1, 8], strides = [1, 1]} : vector<8x8xf32> to vector<1x8xf32>
    %517 = vector.shape_cast %21 : vector<8x1xi1> to vector<8x1xi1>
    %518 = vector.broadcast %517 : vector<8x1xi1> to vector<8x8xi1>
    %519 = vector.shape_cast %516 : vector<1x8xf32> to vector<1x8xf32>
    %520 = vector.broadcast %519 : vector<1x8xf32> to vector<8x8xf32>
    %521 = arith.select %518, %520, %515 : vector<8x8xi1>, vector<8x8xf32>
    %522 = vector.extract_strided_slice %328 {offsets = [7, 0], sizes = [1, 8], strides = [1, 1]} : vector<8x8xf32> to vector<1x8xf32>
    %523 = vector.shape_cast %23 : vector<8x1xi1> to vector<8x1xi1>
    %524 = vector.broadcast %523 : vector<8x1xi1> to vector<8x8xi1>
    %525 = vector.shape_cast %522 : vector<1x8xf32> to vector<1x8xf32>
    %526 = vector.broadcast %525 : vector<1x8xf32> to vector<8x8xf32>
    %527 = arith.select %524, %526, %521 : vector<8x8xi1>, vector<8x8xf32>
    %528 = vector.extract_strided_slice %343 {offsets = [3, 0], sizes = [1, 8], strides = [1, 1]} : vector<8x8xf32> to vector<1x8xf32>
    %529 = vector.shape_cast %25 : vector<8x1xi1> to vector<8x1xi1>
    %530 = vector.broadcast %529 : vector<8x1xi1> to vector<8x8xi1>
    %531 = vector.shape_cast %528 : vector<1x8xf32> to vector<1x8xf32>
    %532 = vector.broadcast %531 : vector<1x8xf32> to vector<8x8xf32>
    %533 = arith.select %530, %532, %527 : vector<8x8xi1>, vector<8x8xf32>
    %534 = vector.extract_strided_slice %343 {offsets = [7, 0], sizes = [1, 8], strides = [1, 1]} : vector<8x8xf32> to vector<1x8xf32>
    %535 = vector.shape_cast %27 : vector<8x1xi1> to vector<8x1xi1>
    %536 = vector.broadcast %535 : vector<8x1xi1> to vector<8x8xi1>
    %537 = vector.shape_cast %534 : vector<1x8xf32> to vector<1x8xf32>
    %538 = vector.broadcast %537 : vector<1x8xf32> to vector<8x8xf32>
    %539 = arith.select %536, %538, %533 : vector<8x8xi1>, vector<8x8xf32>
    %540 = vector.extract_strided_slice %8 {offsets = [16, 0], sizes = [8, 8], strides = [1, 1]} : vector<32x64xf32> to vector<8x8xf32>
    %541 = vector.extract_strided_slice %8 {offsets = [16, 32], sizes = [8, 8], strides = [1, 1]} : vector<32x64xf32> to vector<8x8xf32>
    %542 = vector.extract_strided_slice %10 {offsets = [0, 16], sizes = [8, 8], strides = [1, 1]} : vector<32x32xf32> to vector<8x8xf32>
    %cst_48 = arith.constant dense<0.000000e+00> : vector<8x8xf32>
    %543 = tpu.matmul %541, %540, %cst_48 {dimension_numbers = #tpu.dot_dimension_numbers<[1], [1], [0], [0], [0, 0, 1, 0], [], []>} : vector<8x8xf32>, vector<8x8xf32>, vector<8x8xf32> -> vector<8x8xf32>
    %cst_49 = arith.constant dense<0xFF800000> : vector<8xf32>
    %544 = vector.multi_reduction <maximumf>, %543, %cst_49 [0] : vector<8x8xf32> to vector<8xf32>
    %545 = vector.shape_cast %544 : vector<8xf32> to vector<1x8xf32>
    %546 = vector.broadcast %545 : vector<1x8xf32> to vector<8x8xf32>
    %547 = arith.subf %543, %546 : vector<8x8xf32>
    %548 = math.exp %547 : vector<8x8xf32>
    %cst_50 = arith.constant dense<0.000000e+00> : vector<8xf32>
    %549 = vector.multi_reduction <add>, %548, %cst_50 [0] : vector<8x8xf32> to vector<8xf32>
    %550 = vector.shape_cast %549 : vector<8xf32> to vector<1x8xf32>
    %551 = tpu.reciprocal %550 : vector<1x8xf32> -> vector<1x8xf32>
    %552 = vector.broadcast %551 : vector<1x8xf32> to vector<8x8xf32>
    %553 = arith.mulf %548, %552 : vector<8x8xf32>
    %cst_51 = arith.constant dense<0.000000e+00> : vector<8x8xf32>
    %554 = tpu.matmul %542, %553, %cst_51 {dimension_numbers = #tpu.dot_dimension_numbers<[1], [0], [0], [1], [0, 0, 1, 1], [], []>} : vector<8x8xf32>, vector<8x8xf32>, vector<8x8xf32> -> vector<8x8xf32>
    %555 = vector.extract_strided_slice %8 {offsets = [16, 8], sizes = [8, 8], strides = [1, 1]} : vector<32x64xf32> to vector<8x8xf32>
    %556 = vector.extract_strided_slice %8 {offsets = [16, 40], sizes = [8, 8], strides = [1, 1]} : vector<32x64xf32> to vector<8x8xf32>
    %557 = vector.extract_strided_slice %10 {offsets = [8, 16], sizes = [8, 8], strides = [1, 1]} : vector<32x32xf32> to vector<8x8xf32>
    %cst_52 = arith.constant dense<0.000000e+00> : vector<8x8xf32>
    %558 = tpu.matmul %556, %555, %cst_52 {dimension_numbers = #tpu.dot_dimension_numbers<[1], [1], [0], [0], [0, 0, 1, 0], [], []>} : vector<8x8xf32>, vector<8x8xf32>, vector<8x8xf32> -> vector<8x8xf32>
    %cst_53 = arith.constant dense<0xFF800000> : vector<8xf32>
    %559 = vector.multi_reduction <maximumf>, %558, %cst_53 [0] : vector<8x8xf32> to vector<8xf32>
    %560 = vector.shape_cast %559 : vector<8xf32> to vector<1x8xf32>
    %561 = vector.broadcast %560 : vector<1x8xf32> to vector<8x8xf32>
    %562 = arith.subf %558, %561 : vector<8x8xf32>
    %563 = math.exp %562 : vector<8x8xf32>
    %cst_54 = arith.constant dense<0.000000e+00> : vector<8xf32>
    %564 = vector.multi_reduction <add>, %563, %cst_54 [0] : vector<8x8xf32> to vector<8xf32>
    %565 = vector.shape_cast %564 : vector<8xf32> to vector<1x8xf32>
    %566 = tpu.reciprocal %565 : vector<1x8xf32> -> vector<1x8xf32>
    %567 = vector.broadcast %566 : vector<1x8xf32> to vector<8x8xf32>
    %568 = arith.mulf %563, %567 : vector<8x8xf32>
    %cst_55 = arith.constant dense<0.000000e+00> : vector<8x8xf32>
    %569 = tpu.matmul %557, %568, %cst_55 {dimension_numbers = #tpu.dot_dimension_numbers<[1], [0], [0], [1], [0, 0, 1, 1], [], []>} : vector<8x8xf32>, vector<8x8xf32>, vector<8x8xf32> -> vector<8x8xf32>
    %570 = vector.extract_strided_slice %8 {offsets = [16, 16], sizes = [8, 8], strides = [1, 1]} : vector<32x64xf32> to vector<8x8xf32>
    %571 = vector.extract_strided_slice %8 {offsets = [16, 48], sizes = [8, 8], strides = [1, 1]} : vector<32x64xf32> to vector<8x8xf32>
    %572 = vector.extract_strided_slice %10 {offsets = [16, 16], sizes = [8, 8], strides = [1, 1]} : vector<32x32xf32> to vector<8x8xf32>
    %cst_56 = arith.constant dense<0.000000e+00> : vector<8x8xf32>
    %573 = tpu.matmul %571, %570, %cst_56 {dimension_numbers = #tpu.dot_dimension_numbers<[1], [1], [0], [0], [0, 0, 1, 0], [], []>} : vector<8x8xf32>, vector<8x8xf32>, vector<8x8xf32> -> vector<8x8xf32>
    %cst_57 = arith.constant dense<0xFF800000> : vector<8xf32>
    %574 = vector.multi_reduction <maximumf>, %573, %cst_57 [0] : vector<8x8xf32> to vector<8xf32>
    %575 = vector.shape_cast %574 : vector<8xf32> to vector<1x8xf32>
    %576 = vector.broadcast %575 : vector<1x8xf32> to vector<8x8xf32>
    %577 = arith.subf %573, %576 : vector<8x8xf32>
    %578 = math.exp %577 : vector<8x8xf32>
    %cst_58 = arith.constant dense<0.000000e+00> : vector<8xf32>
    %579 = vector.multi_reduction <add>, %578, %cst_58 [0] : vector<8x8xf32> to vector<8xf32>
    %580 = vector.shape_cast %579 : vector<8xf32> to vector<1x8xf32>
    %581 = tpu.reciprocal %580 : vector<1x8xf32> -> vector<1x8xf32>
    %582 = vector.broadcast %581 : vector<1x8xf32> to vector<8x8xf32>
    %583 = arith.mulf %578, %582 : vector<8x8xf32>
    %cst_59 = arith.constant dense<0.000000e+00> : vector<8x8xf32>
    %584 = tpu.matmul %572, %583, %cst_59 {dimension_numbers = #tpu.dot_dimension_numbers<[1], [0], [0], [1], [0, 0, 1, 1], [], []>} : vector<8x8xf32>, vector<8x8xf32>, vector<8x8xf32> -> vector<8x8xf32>
    %585 = vector.extract_strided_slice %8 {offsets = [16, 24], sizes = [8, 8], strides = [1, 1]} : vector<32x64xf32> to vector<8x8xf32>
    %586 = vector.extract_strided_slice %8 {offsets = [16, 56], sizes = [8, 8], strides = [1, 1]} : vector<32x64xf32> to vector<8x8xf32>
    %587 = vector.extract_strided_slice %10 {offsets = [24, 16], sizes = [8, 8], strides = [1, 1]} : vector<32x32xf32> to vector<8x8xf32>
    %cst_60 = arith.constant dense<0.000000e+00> : vector<8x8xf32>
    %588 = tpu.matmul %586, %585, %cst_60 {dimension_numbers = #tpu.dot_dimension_numbers<[1], [1], [0], [0], [0, 0, 1, 0], [], []>} : vector<8x8xf32>, vector<8x8xf32>, vector<8x8xf32> -> vector<8x8xf32>
    %cst_61 = arith.constant dense<0xFF800000> : vector<8xf32>
    %589 = vector.multi_reduction <maximumf>, %588, %cst_61 [0] : vector<8x8xf32> to vector<8xf32>
    %590 = vector.shape_cast %589 : vector<8xf32> to vector<1x8xf32>
    %591 = vector.broadcast %590 : vector<1x8xf32> to vector<8x8xf32>
    %592 = arith.subf %588, %591 : vector<8x8xf32>
    %593 = math.exp %592 : vector<8x8xf32>
    %cst_62 = arith.constant dense<0.000000e+00> : vector<8xf32>
    %594 = vector.multi_reduction <add>, %593, %cst_62 [0] : vector<8x8xf32> to vector<8xf32>
    %595 = vector.shape_cast %594 : vector<8xf32> to vector<1x8xf32>
    %596 = tpu.reciprocal %595 : vector<1x8xf32> -> vector<1x8xf32>
    %597 = vector.broadcast %596 : vector<1x8xf32> to vector<8x8xf32>
    %598 = arith.mulf %593, %597 : vector<8x8xf32>
    %cst_63 = arith.constant dense<0.000000e+00> : vector<8x8xf32>
    %599 = tpu.matmul %587, %598, %cst_63 {dimension_numbers = #tpu.dot_dimension_numbers<[1], [0], [0], [1], [0, 0, 1, 1], [], []>} : vector<8x8xf32>, vector<8x8xf32>, vector<8x8xf32> -> vector<8x8xf32>
    %cst_64 = arith.constant 0.000000e+00 : f32
    %600 = vector.broadcast %cst_64 : f32 to vector<8x8xf32>
    %601 = vector.extract_strided_slice %554 {offsets = [0, 0], sizes = [1, 8], strides = [1, 1]} : vector<8x8xf32> to vector<1x8xf32>
    %602 = vector.shape_cast %13 : vector<8x1xi1> to vector<8x1xi1>
    %603 = vector.broadcast %602 : vector<8x1xi1> to vector<8x8xi1>
    %604 = vector.shape_cast %601 : vector<1x8xf32> to vector<1x8xf32>
    %605 = vector.broadcast %604 : vector<1x8xf32> to vector<8x8xf32>
    %606 = arith.select %603, %605, %600 : vector<8x8xi1>, vector<8x8xf32>
    %607 = vector.extract_strided_slice %554 {offsets = [4, 0], sizes = [1, 8], strides = [1, 1]} : vector<8x8xf32> to vector<1x8xf32>
    %608 = vector.shape_cast %15 : vector<8x1xi1> to vector<8x1xi1>
    %609 = vector.broadcast %608 : vector<8x1xi1> to vector<8x8xi1>
    %610 = vector.shape_cast %607 : vector<1x8xf32> to vector<1x8xf32>
    %611 = vector.broadcast %610 : vector<1x8xf32> to vector<8x8xf32>
    %612 = arith.select %609, %611, %606 : vector<8x8xi1>, vector<8x8xf32>
    %613 = vector.extract_strided_slice %569 {offsets = [0, 0], sizes = [1, 8], strides = [1, 1]} : vector<8x8xf32> to vector<1x8xf32>
    %614 = vector.shape_cast %17 : vector<8x1xi1> to vector<8x1xi1>
    %615 = vector.broadcast %614 : vector<8x1xi1> to vector<8x8xi1>
    %616 = vector.shape_cast %613 : vector<1x8xf32> to vector<1x8xf32>
    %617 = vector.broadcast %616 : vector<1x8xf32> to vector<8x8xf32>
    %618 = arith.select %615, %617, %612 : vector<8x8xi1>, vector<8x8xf32>
    %619 = vector.extract_strided_slice %569 {offsets = [4, 0], sizes = [1, 8], strides = [1, 1]} : vector<8x8xf32> to vector<1x8xf32>
    %620 = vector.shape_cast %19 : vector<8x1xi1> to vector<8x1xi1>
    %621 = vector.broadcast %620 : vector<8x1xi1> to vector<8x8xi1>
    %622 = vector.shape_cast %619 : vector<1x8xf32> to vector<1x8xf32>
    %623 = vector.broadcast %622 : vector<1x8xf32> to vector<8x8xf32>
    %624 = arith.select %621, %623, %618 : vector<8x8xi1>, vector<8x8xf32>
    %625 = vector.extract_strided_slice %584 {offsets = [0, 0], sizes = [1, 8], strides = [1, 1]} : vector<8x8xf32> to vector<1x8xf32>
    %626 = vector.shape_cast %21 : vector<8x1xi1> to vector<8x1xi1>
    %627 = vector.broadcast %626 : vector<8x1xi1> to vector<8x8xi1>
    %628 = vector.shape_cast %625 : vector<1x8xf32> to vector<1x8xf32>
    %629 = vector.broadcast %628 : vector<1x8xf32> to vector<8x8xf32>
    %630 = arith.select %627, %629, %624 : vector<8x8xi1>, vector<8x8xf32>
    %631 = vector.extract_strided_slice %584 {offsets = [4, 0], sizes = [1, 8], strides = [1, 1]} : vector<8x8xf32> to vector<1x8xf32>
    %632 = vector.shape_cast %23 : vector<8x1xi1> to vector<8x1xi1>
    %633 = vector.broadcast %632 : vector<8x1xi1> to vector<8x8xi1>
    %634 = vector.shape_cast %631 : vector<1x8xf32> to vector<1x8xf32>
    %635 = vector.broadcast %634 : vector<1x8xf32> to vector<8x8xf32>
    %636 = arith.select %633, %635, %630 : vector<8x8xi1>, vector<8x8xf32>
    %637 = vector.extract_strided_slice %599 {offsets = [0, 0], sizes = [1, 8], strides = [1, 1]} : vector<8x8xf32> to vector<1x8xf32>
    %638 = vector.shape_cast %25 : vector<8x1xi1> to vector<8x1xi1>
    %639 = vector.broadcast %638 : vector<8x1xi1> to vector<8x8xi1>
    %640 = vector.shape_cast %637 : vector<1x8xf32> to vector<1x8xf32>
    %641 = vector.broadcast %640 : vector<1x8xf32> to vector<8x8xf32>
    %642 = arith.select %639, %641, %636 : vector<8x8xi1>, vector<8x8xf32>
    %643 = vector.extract_strided_slice %599 {offsets = [4, 0], sizes = [1, 8], strides = [1, 1]} : vector<8x8xf32> to vector<1x8xf32>
    %644 = vector.shape_cast %27 : vector<8x1xi1> to vector<8x1xi1>
    %645 = vector.broadcast %644 : vector<8x1xi1> to vector<8x8xi1>
    %646 = vector.shape_cast %643 : vector<1x8xf32> to vector<1x8xf32>
    %647 = vector.broadcast %646 : vector<1x8xf32> to vector<8x8xf32>
    %648 = arith.select %645, %647, %642 : vector<8x8xi1>, vector<8x8xf32>
    %cst_65 = arith.constant 0.000000e+00 : f32
    %649 = vector.broadcast %cst_65 : f32 to vector<8x8xf32>
    %650 = vector.extract_strided_slice %554 {offsets = [1, 0], sizes = [1, 8], strides = [1, 1]} : vector<8x8xf32> to vector<1x8xf32>
    %651 = vector.shape_cast %13 : vector<8x1xi1> to vector<8x1xi1>
    %652 = vector.broadcast %651 : vector<8x1xi1> to vector<8x8xi1>
    %653 = vector.shape_cast %650 : vector<1x8xf32> to vector<1x8xf32>
    %654 = vector.broadcast %653 : vector<1x8xf32> to vector<8x8xf32>
    %655 = arith.select %652, %654, %649 : vector<8x8xi1>, vector<8x8xf32>
    %656 = vector.extract_strided_slice %554 {offsets = [5, 0], sizes = [1, 8], strides = [1, 1]} : vector<8x8xf32> to vector<1x8xf32>
    %657 = vector.shape_cast %15 : vector<8x1xi1> to vector<8x1xi1>
    %658 = vector.broadcast %657 : vector<8x1xi1> to vector<8x8xi1>
    %659 = vector.shape_cast %656 : vector<1x8xf32> to vector<1x8xf32>
    %660 = vector.broadcast %659 : vector<1x8xf32> to vector<8x8xf32>
    %661 = arith.select %658, %660, %655 : vector<8x8xi1>, vector<8x8xf32>
    %662 = vector.extract_strided_slice %569 {offsets = [1, 0], sizes = [1, 8], strides = [1, 1]} : vector<8x8xf32> to vector<1x8xf32>
    %663 = vector.shape_cast %17 : vector<8x1xi1> to vector<8x1xi1>
    %664 = vector.broadcast %663 : vector<8x1xi1> to vector<8x8xi1>
    %665 = vector.shape_cast %662 : vector<1x8xf32> to vector<1x8xf32>
    %666 = vector.broadcast %665 : vector<1x8xf32> to vector<8x8xf32>
    %667 = arith.select %664, %666, %661 : vector<8x8xi1>, vector<8x8xf32>
    %668 = vector.extract_strided_slice %569 {offsets = [5, 0], sizes = [1, 8], strides = [1, 1]} : vector<8x8xf32> to vector<1x8xf32>
    %669 = vector.shape_cast %19 : vector<8x1xi1> to vector<8x1xi1>
    %670 = vector.broadcast %669 : vector<8x1xi1> to vector<8x8xi1>
    %671 = vector.shape_cast %668 : vector<1x8xf32> to vector<1x8xf32>
    %672 = vector.broadcast %671 : vector<1x8xf32> to vector<8x8xf32>
    %673 = arith.select %670, %672, %667 : vector<8x8xi1>, vector<8x8xf32>
    %674 = vector.extract_strided_slice %584 {offsets = [1, 0], sizes = [1, 8], strides = [1, 1]} : vector<8x8xf32> to vector<1x8xf32>
    %675 = vector.shape_cast %21 : vector<8x1xi1> to vector<8x1xi1>
    %676 = vector.broadcast %675 : vector<8x1xi1> to vector<8x8xi1>
    %677 = vector.shape_cast %674 : vector<1x8xf32> to vector<1x8xf32>
    %678 = vector.broadcast %677 : vector<1x8xf32> to vector<8x8xf32>
    %679 = arith.select %676, %678, %673 : vector<8x8xi1>, vector<8x8xf32>
    %680 = vector.extract_strided_slice %584 {offsets = [5, 0], sizes = [1, 8], strides = [1, 1]} : vector<8x8xf32> to vector<1x8xf32>
    %681 = vector.shape_cast %23 : vector<8x1xi1> to vector<8x1xi1>
    %682 = vector.broadcast %681 : vector<8x1xi1> to vector<8x8xi1>
    %683 = vector.shape_cast %680 : vector<1x8xf32> to vector<1x8xf32>
    %684 = vector.broadcast %683 : vector<1x8xf32> to vector<8x8xf32>
    %685 = arith.select %682, %684, %679 : vector<8x8xi1>, vector<8x8xf32>
    %686 = vector.extract_strided_slice %599 {offsets = [1, 0], sizes = [1, 8], strides = [1, 1]} : vector<8x8xf32> to vector<1x8xf32>
    %687 = vector.shape_cast %25 : vector<8x1xi1> to vector<8x1xi1>
    %688 = vector.broadcast %687 : vector<8x1xi1> to vector<8x8xi1>
    %689 = vector.shape_cast %686 : vector<1x8xf32> to vector<1x8xf32>
    %690 = vector.broadcast %689 : vector<1x8xf32> to vector<8x8xf32>
    %691 = arith.select %688, %690, %685 : vector<8x8xi1>, vector<8x8xf32>
    %692 = vector.extract_strided_slice %599 {offsets = [5, 0], sizes = [1, 8], strides = [1, 1]} : vector<8x8xf32> to vector<1x8xf32>
    %693 = vector.shape_cast %27 : vector<8x1xi1> to vector<8x1xi1>
    %694 = vector.broadcast %693 : vector<8x1xi1> to vector<8x8xi1>
    %695 = vector.shape_cast %692 : vector<1x8xf32> to vector<1x8xf32>
    %696 = vector.broadcast %695 : vector<1x8xf32> to vector<8x8xf32>
    %697 = arith.select %694, %696, %691 : vector<8x8xi1>, vector<8x8xf32>
    %cst_66 = arith.constant 0.000000e+00 : f32
    %698 = vector.broadcast %cst_66 : f32 to vector<8x8xf32>
    %699 = vector.extract_strided_slice %554 {offsets = [2, 0], sizes = [1, 8], strides = [1, 1]} : vector<8x8xf32> to vector<1x8xf32>
    %700 = vector.shape_cast %13 : vector<8x1xi1> to vector<8x1xi1>
    %701 = vector.broadcast %700 : vector<8x1xi1> to vector<8x8xi1>
    %702 = vector.shape_cast %699 : vector<1x8xf32> to vector<1x8xf32>
    %703 = vector.broadcast %702 : vector<1x8xf32> to vector<8x8xf32>
    %704 = arith.select %701, %703, %698 : vector<8x8xi1>, vector<8x8xf32>
    %705 = vector.extract_strided_slice %554 {offsets = [6, 0], sizes = [1, 8], strides = [1, 1]} : vector<8x8xf32> to vector<1x8xf32>
    %706 = vector.shape_cast %15 : vector<8x1xi1> to vector<8x1xi1>
    %707 = vector.broadcast %706 : vector<8x1xi1> to vector<8x8xi1>
    %708 = vector.shape_cast %705 : vector<1x8xf32> to vector<1x8xf32>
    %709 = vector.broadcast %708 : vector<1x8xf32> to vector<8x8xf32>
    %710 = arith.select %707, %709, %704 : vector<8x8xi1>, vector<8x8xf32>
    %711 = vector.extract_strided_slice %569 {offsets = [2, 0], sizes = [1, 8], strides = [1, 1]} : vector<8x8xf32> to vector<1x8xf32>
    %712 = vector.shape_cast %17 : vector<8x1xi1> to vector<8x1xi1>
    %713 = vector.broadcast %712 : vector<8x1xi1> to vector<8x8xi1>
    %714 = vector.shape_cast %711 : vector<1x8xf32> to vector<1x8xf32>
    %715 = vector.broadcast %714 : vector<1x8xf32> to vector<8x8xf32>
    %716 = arith.select %713, %715, %710 : vector<8x8xi1>, vector<8x8xf32>
    %717 = vector.extract_strided_slice %569 {offsets = [6, 0], sizes = [1, 8], strides = [1, 1]} : vector<8x8xf32> to vector<1x8xf32>
    %718 = vector.shape_cast %19 : vector<8x1xi1> to vector<8x1xi1>
    %719 = vector.broadcast %718 : vector<8x1xi1> to vector<8x8xi1>
    %720 = vector.shape_cast %717 : vector<1x8xf32> to vector<1x8xf32>
    %721 = vector.broadcast %720 : vector<1x8xf32> to vector<8x8xf32>
    %722 = arith.select %719, %721, %716 : vector<8x8xi1>, vector<8x8xf32>
    %723 = vector.extract_strided_slice %584 {offsets = [2, 0], sizes = [1, 8], strides = [1, 1]} : vector<8x8xf32> to vector<1x8xf32>
    %724 = vector.shape_cast %21 : vector<8x1xi1> to vector<8x1xi1>
    %725 = vector.broadcast %724 : vector<8x1xi1> to vector<8x8xi1>
    %726 = vector.shape_cast %723 : vector<1x8xf32> to vector<1x8xf32>
    %727 = vector.broadcast %726 : vector<1x8xf32> to vector<8x8xf32>
    %728 = arith.select %725, %727, %722 : vector<8x8xi1>, vector<8x8xf32>
    %729 = vector.extract_strided_slice %584 {offsets = [6, 0], sizes = [1, 8], strides = [1, 1]} : vector<8x8xf32> to vector<1x8xf32>
    %730 = vector.shape_cast %23 : vector<8x1xi1> to vector<8x1xi1>
    %731 = vector.broadcast %730 : vector<8x1xi1> to vector<8x8xi1>
    %732 = vector.shape_cast %729 : vector<1x8xf32> to vector<1x8xf32>
    %733 = vector.broadcast %732 : vector<1x8xf32> to vector<8x8xf32>
    %734 = arith.select %731, %733, %728 : vector<8x8xi1>, vector<8x8xf32>
    %735 = vector.extract_strided_slice %599 {offsets = [2, 0], sizes = [1, 8], strides = [1, 1]} : vector<8x8xf32> to vector<1x8xf32>
    %736 = vector.shape_cast %25 : vector<8x1xi1> to vector<8x1xi1>
    %737 = vector.broadcast %736 : vector<8x1xi1> to vector<8x8xi1>
    %738 = vector.shape_cast %735 : vector<1x8xf32> to vector<1x8xf32>
    %739 = vector.broadcast %738 : vector<1x8xf32> to vector<8x8xf32>
    %740 = arith.select %737, %739, %734 : vector<8x8xi1>, vector<8x8xf32>
    %741 = vector.extract_strided_slice %599 {offsets = [6, 0], sizes = [1, 8], strides = [1, 1]} : vector<8x8xf32> to vector<1x8xf32>
    %742 = vector.shape_cast %27 : vector<8x1xi1> to vector<8x1xi1>
    %743 = vector.broadcast %742 : vector<8x1xi1> to vector<8x8xi1>
    %744 = vector.shape_cast %741 : vector<1x8xf32> to vector<1x8xf32>
    %745 = vector.broadcast %744 : vector<1x8xf32> to vector<8x8xf32>
    %746 = arith.select %743, %745, %740 : vector<8x8xi1>, vector<8x8xf32>
    %cst_67 = arith.constant 0.000000e+00 : f32
    %747 = vector.broadcast %cst_67 : f32 to vector<8x8xf32>
    %748 = vector.extract_strided_slice %554 {offsets = [3, 0], sizes = [1, 8], strides = [1, 1]} : vector<8x8xf32> to vector<1x8xf32>
    %749 = vector.shape_cast %13 : vector<8x1xi1> to vector<8x1xi1>
    %750 = vector.broadcast %749 : vector<8x1xi1> to vector<8x8xi1>
    %751 = vector.shape_cast %748 : vector<1x8xf32> to vector<1x8xf32>
    %752 = vector.broadcast %751 : vector<1x8xf32> to vector<8x8xf32>
    %753 = arith.select %750, %752, %747 : vector<8x8xi1>, vector<8x8xf32>
    %754 = vector.extract_strided_slice %554 {offsets = [7, 0], sizes = [1, 8], strides = [1, 1]} : vector<8x8xf32> to vector<1x8xf32>
    %755 = vector.shape_cast %15 : vector<8x1xi1> to vector<8x1xi1>
    %756 = vector.broadcast %755 : vector<8x1xi1> to vector<8x8xi1>
    %757 = vector.shape_cast %754 : vector<1x8xf32> to vector<1x8xf32>
    %758 = vector.broadcast %757 : vector<1x8xf32> to vector<8x8xf32>
    %759 = arith.select %756, %758, %753 : vector<8x8xi1>, vector<8x8xf32>
    %760 = vector.extract_strided_slice %569 {offsets = [3, 0], sizes = [1, 8], strides = [1, 1]} : vector<8x8xf32> to vector<1x8xf32>
    %761 = vector.shape_cast %17 : vector<8x1xi1> to vector<8x1xi1>
    %762 = vector.broadcast %761 : vector<8x1xi1> to vector<8x8xi1>
    %763 = vector.shape_cast %760 : vector<1x8xf32> to vector<1x8xf32>
    %764 = vector.broadcast %763 : vector<1x8xf32> to vector<8x8xf32>
    %765 = arith.select %762, %764, %759 : vector<8x8xi1>, vector<8x8xf32>
    %766 = vector.extract_strided_slice %569 {offsets = [7, 0], sizes = [1, 8], strides = [1, 1]} : vector<8x8xf32> to vector<1x8xf32>
    %767 = vector.shape_cast %19 : vector<8x1xi1> to vector<8x1xi1>
    %768 = vector.broadcast %767 : vector<8x1xi1> to vector<8x8xi1>
    %769 = vector.shape_cast %766 : vector<1x8xf32> to vector<1x8xf32>
    %770 = vector.broadcast %769 : vector<1x8xf32> to vector<8x8xf32>
    %771 = arith.select %768, %770, %765 : vector<8x8xi1>, vector<8x8xf32>
    %772 = vector.extract_strided_slice %584 {offsets = [3, 0], sizes = [1, 8], strides = [1, 1]} : vector<8x8xf32> to vector<1x8xf32>
    %773 = vector.shape_cast %21 : vector<8x1xi1> to vector<8x1xi1>
    %774 = vector.broadcast %773 : vector<8x1xi1> to vector<8x8xi1>
    %775 = vector.shape_cast %772 : vector<1x8xf32> to vector<1x8xf32>
    %776 = vector.broadcast %775 : vector<1x8xf32> to vector<8x8xf32>
    %777 = arith.select %774, %776, %771 : vector<8x8xi1>, vector<8x8xf32>
    %778 = vector.extract_strided_slice %584 {offsets = [7, 0], sizes = [1, 8], strides = [1, 1]} : vector<8x8xf32> to vector<1x8xf32>
    %779 = vector.shape_cast %23 : vector<8x1xi1> to vector<8x1xi1>
    %780 = vector.broadcast %779 : vector<8x1xi1> to vector<8x8xi1>
    %781 = vector.shape_cast %778 : vector<1x8xf32> to vector<1x8xf32>
    %782 = vector.broadcast %781 : vector<1x8xf32> to vector<8x8xf32>
    %783 = arith.select %780, %782, %777 : vector<8x8xi1>, vector<8x8xf32>
    %784 = vector.extract_strided_slice %599 {offsets = [3, 0], sizes = [1, 8], strides = [1, 1]} : vector<8x8xf32> to vector<1x8xf32>
    %785 = vector.shape_cast %25 : vector<8x1xi1> to vector<8x1xi1>
    %786 = vector.broadcast %785 : vector<8x1xi1> to vector<8x8xi1>
    %787 = vector.shape_cast %784 : vector<1x8xf32> to vector<1x8xf32>
    %788 = vector.broadcast %787 : vector<1x8xf32> to vector<8x8xf32>
    %789 = arith.select %786, %788, %783 : vector<8x8xi1>, vector<8x8xf32>
    %790 = vector.extract_strided_slice %599 {offsets = [7, 0], sizes = [1, 8], strides = [1, 1]} : vector<8x8xf32> to vector<1x8xf32>
    %791 = vector.shape_cast %27 : vector<8x1xi1> to vector<8x1xi1>
    %792 = vector.broadcast %791 : vector<8x1xi1> to vector<8x8xi1>
    %793 = vector.shape_cast %790 : vector<1x8xf32> to vector<1x8xf32>
    %794 = vector.broadcast %793 : vector<1x8xf32> to vector<8x8xf32>
    %795 = arith.select %792, %794, %789 : vector<8x8xi1>, vector<8x8xf32>
    %796 = vector.extract_strided_slice %8 {offsets = [24, 0], sizes = [8, 8], strides = [1, 1]} : vector<32x64xf32> to vector<8x8xf32>
    %797 = vector.extract_strided_slice %8 {offsets = [24, 32], sizes = [8, 8], strides = [1, 1]} : vector<32x64xf32> to vector<8x8xf32>
    %798 = vector.extract_strided_slice %10 {offsets = [0, 24], sizes = [8, 8], strides = [1, 1]} : vector<32x32xf32> to vector<8x8xf32>
    %cst_68 = arith.constant dense<0.000000e+00> : vector<8x8xf32>
    %799 = tpu.matmul %797, %796, %cst_68 {dimension_numbers = #tpu.dot_dimension_numbers<[1], [1], [0], [0], [0, 0, 1, 0], [], []>} : vector<8x8xf32>, vector<8x8xf32>, vector<8x8xf32> -> vector<8x8xf32>
    %cst_69 = arith.constant dense<0xFF800000> : vector<8xf32>
    %800 = vector.multi_reduction <maximumf>, %799, %cst_69 [0] : vector<8x8xf32> to vector<8xf32>
    %801 = vector.shape_cast %800 : vector<8xf32> to vector<1x8xf32>
    %802 = vector.broadcast %801 : vector<1x8xf32> to vector<8x8xf32>
    %803 = arith.subf %799, %802 : vector<8x8xf32>
    %804 = math.exp %803 : vector<8x8xf32>
    %cst_70 = arith.constant dense<0.000000e+00> : vector<8xf32>
    %805 = vector.multi_reduction <add>, %804, %cst_70 [0] : vector<8x8xf32> to vector<8xf32>
    %806 = vector.shape_cast %805 : vector<8xf32> to vector<1x8xf32>
    %807 = tpu.reciprocal %806 : vector<1x8xf32> -> vector<1x8xf32>
    %808 = vector.broadcast %807 : vector<1x8xf32> to vector<8x8xf32>
    %809 = arith.mulf %804, %808 : vector<8x8xf32>
    %cst_71 = arith.constant dense<0.000000e+00> : vector<8x8xf32>
    %810 = tpu.matmul %798, %809, %cst_71 {dimension_numbers = #tpu.dot_dimension_numbers<[1], [0], [0], [1], [0, 0, 1, 1], [], []>} : vector<8x8xf32>, vector<8x8xf32>, vector<8x8xf32> -> vector<8x8xf32>
    %811 = vector.extract_strided_slice %8 {offsets = [24, 8], sizes = [8, 8], strides = [1, 1]} : vector<32x64xf32> to vector<8x8xf32>
    %812 = vector.extract_strided_slice %8 {offsets = [24, 40], sizes = [8, 8], strides = [1, 1]} : vector<32x64xf32> to vector<8x8xf32>
    %813 = vector.extract_strided_slice %10 {offsets = [8, 24], sizes = [8, 8], strides = [1, 1]} : vector<32x32xf32> to vector<8x8xf32>
    %cst_72 = arith.constant dense<0.000000e+00> : vector<8x8xf32>
    %814 = tpu.matmul %812, %811, %cst_72 {dimension_numbers = #tpu.dot_dimension_numbers<[1], [1], [0], [0], [0, 0, 1, 0], [], []>} : vector<8x8xf32>, vector<8x8xf32>, vector<8x8xf32> -> vector<8x8xf32>
    %cst_73 = arith.constant dense<0xFF800000> : vector<8xf32>
    %815 = vector.multi_reduction <maximumf>, %814, %cst_73 [0] : vector<8x8xf32> to vector<8xf32>
    %816 = vector.shape_cast %815 : vector<8xf32> to vector<1x8xf32>
    %817 = vector.broadcast %816 : vector<1x8xf32> to vector<8x8xf32>
    %818 = arith.subf %814, %817 : vector<8x8xf32>
    %819 = math.exp %818 : vector<8x8xf32>
    %cst_74 = arith.constant dense<0.000000e+00> : vector<8xf32>
    %820 = vector.multi_reduction <add>, %819, %cst_74 [0] : vector<8x8xf32> to vector<8xf32>
    %821 = vector.shape_cast %820 : vector<8xf32> to vector<1x8xf32>
    %822 = tpu.reciprocal %821 : vector<1x8xf32> -> vector<1x8xf32>
    %823 = vector.broadcast %822 : vector<1x8xf32> to vector<8x8xf32>
    %824 = arith.mulf %819, %823 : vector<8x8xf32>
    %cst_75 = arith.constant dense<0.000000e+00> : vector<8x8xf32>
    %825 = tpu.matmul %813, %824, %cst_75 {dimension_numbers = #tpu.dot_dimension_numbers<[1], [0], [0], [1], [0, 0, 1, 1], [], []>} : vector<8x8xf32>, vector<8x8xf32>, vector<8x8xf32> -> vector<8x8xf32>
    %826 = vector.extract_strided_slice %8 {offsets = [24, 16], sizes = [8, 8], strides = [1, 1]} : vector<32x64xf32> to vector<8x8xf32>
    %827 = vector.extract_strided_slice %8 {offsets = [24, 48], sizes = [8, 8], strides = [1, 1]} : vector<32x64xf32> to vector<8x8xf32>
    %828 = vector.extract_strided_slice %10 {offsets = [16, 24], sizes = [8, 8], strides = [1, 1]} : vector<32x32xf32> to vector<8x8xf32>
    %cst_76 = arith.constant dense<0.000000e+00> : vector<8x8xf32>
    %829 = tpu.matmul %827, %826, %cst_76 {dimension_numbers = #tpu.dot_dimension_numbers<[1], [1], [0], [0], [0, 0, 1, 0], [], []>} : vector<8x8xf32>, vector<8x8xf32>, vector<8x8xf32> -> vector<8x8xf32>
    %cst_77 = arith.constant dense<0xFF800000> : vector<8xf32>
    %830 = vector.multi_reduction <maximumf>, %829, %cst_77 [0] : vector<8x8xf32> to vector<8xf32>
    %831 = vector.shape_cast %830 : vector<8xf32> to vector<1x8xf32>
    %832 = vector.broadcast %831 : vector<1x8xf32> to vector<8x8xf32>
    %833 = arith.subf %829, %832 : vector<8x8xf32>
    %834 = math.exp %833 : vector<8x8xf32>
    %cst_78 = arith.constant dense<0.000000e+00> : vector<8xf32>
    %835 = vector.multi_reduction <add>, %834, %cst_78 [0] : vector<8x8xf32> to vector<8xf32>
    %836 = vector.shape_cast %835 : vector<8xf32> to vector<1x8xf32>
    %837 = tpu.reciprocal %836 : vector<1x8xf32> -> vector<1x8xf32>
    %838 = vector.broadcast %837 : vector<1x8xf32> to vector<8x8xf32>
    %839 = arith.mulf %834, %838 : vector<8x8xf32>
    %cst_79 = arith.constant dense<0.000000e+00> : vector<8x8xf32>
    %840 = tpu.matmul %828, %839, %cst_79 {dimension_numbers = #tpu.dot_dimension_numbers<[1], [0], [0], [1], [0, 0, 1, 1], [], []>} : vector<8x8xf32>, vector<8x8xf32>, vector<8x8xf32> -> vector<8x8xf32>
    %841 = vector.extract_strided_slice %8 {offsets = [24, 24], sizes = [8, 8], strides = [1, 1]} : vector<32x64xf32> to vector<8x8xf32>
    %842 = vector.extract_strided_slice %8 {offsets = [24, 56], sizes = [8, 8], strides = [1, 1]} : vector<32x64xf32> to vector<8x8xf32>
    %843 = vector.extract_strided_slice %10 {offsets = [24, 24], sizes = [8, 8], strides = [1, 1]} : vector<32x32xf32> to vector<8x8xf32>
    %cst_80 = arith.constant dense<0.000000e+00> : vector<8x8xf32>
    %844 = tpu.matmul %842, %841, %cst_80 {dimension_numbers = #tpu.dot_dimension_numbers<[1], [1], [0], [0], [0, 0, 1, 0], [], []>} : vector<8x8xf32>, vector<8x8xf32>, vector<8x8xf32> -> vector<8x8xf32>
    %cst_81 = arith.constant dense<0xFF800000> : vector<8xf32>
    %845 = vector.multi_reduction <maximumf>, %844, %cst_81 [0] : vector<8x8xf32> to vector<8xf32>
    %846 = vector.shape_cast %845 : vector<8xf32> to vector<1x8xf32>
    %847 = vector.broadcast %846 : vector<1x8xf32> to vector<8x8xf32>
    %848 = arith.subf %844, %847 : vector<8x8xf32>
    %849 = math.exp %848 : vector<8x8xf32>
    %cst_82 = arith.constant dense<0.000000e+00> : vector<8xf32>
    %850 = vector.multi_reduction <add>, %849, %cst_82 [0] : vector<8x8xf32> to vector<8xf32>
    %851 = vector.shape_cast %850 : vector<8xf32> to vector<1x8xf32>
    %852 = tpu.reciprocal %851 : vector<1x8xf32> -> vector<1x8xf32>
    %853 = vector.broadcast %852 : vector<1x8xf32> to vector<8x8xf32>
    %854 = arith.mulf %849, %853 : vector<8x8xf32>
    %cst_83 = arith.constant dense<0.000000e+00> : vector<8x8xf32>
    %855 = tpu.matmul %843, %854, %cst_83 {dimension_numbers = #tpu.dot_dimension_numbers<[1], [0], [0], [1], [0, 0, 1, 1], [], []>} : vector<8x8xf32>, vector<8x8xf32>, vector<8x8xf32> -> vector<8x8xf32>
    %cst_84 = arith.constant 0.000000e+00 : f32
    %856 = vector.broadcast %cst_84 : f32 to vector<8x8xf32>
    %857 = vector.extract_strided_slice %810 {offsets = [0, 0], sizes = [1, 8], strides = [1, 1]} : vector<8x8xf32> to vector<1x8xf32>
    %858 = vector.shape_cast %13 : vector<8x1xi1> to vector<8x1xi1>
    %859 = vector.broadcast %858 : vector<8x1xi1> to vector<8x8xi1>
    %860 = vector.shape_cast %857 : vector<1x8xf32> to vector<1x8xf32>
    %861 = vector.broadcast %860 : vector<1x8xf32> to vector<8x8xf32>
    %862 = arith.select %859, %861, %856 : vector<8x8xi1>, vector<8x8xf32>
    %863 = vector.extract_strided_slice %810 {offsets = [4, 0], sizes = [1, 8], strides = [1, 1]} : vector<8x8xf32> to vector<1x8xf32>
    %864 = vector.shape_cast %15 : vector<8x1xi1> to vector<8x1xi1>
    %865 = vector.broadcast %864 : vector<8x1xi1> to vector<8x8xi1>
    %866 = vector.shape_cast %863 : vector<1x8xf32> to vector<1x8xf32>
    %867 = vector.broadcast %866 : vector<1x8xf32> to vector<8x8xf32>
    %868 = arith.select %865, %867, %862 : vector<8x8xi1>, vector<8x8xf32>
    %869 = vector.extract_strided_slice %825 {offsets = [0, 0], sizes = [1, 8], strides = [1, 1]} : vector<8x8xf32> to vector<1x8xf32>
    %870 = vector.shape_cast %17 : vector<8x1xi1> to vector<8x1xi1>
    %871 = vector.broadcast %870 : vector<8x1xi1> to vector<8x8xi1>
    %872 = vector.shape_cast %869 : vector<1x8xf32> to vector<1x8xf32>
    %873 = vector.broadcast %872 : vector<1x8xf32> to vector<8x8xf32>
    %874 = arith.select %871, %873, %868 : vector<8x8xi1>, vector<8x8xf32>
    %875 = vector.extract_strided_slice %825 {offsets = [4, 0], sizes = [1, 8], strides = [1, 1]} : vector<8x8xf32> to vector<1x8xf32>
    %876 = vector.shape_cast %19 : vector<8x1xi1> to vector<8x1xi1>
    %877 = vector.broadcast %876 : vector<8x1xi1> to vector<8x8xi1>
    %878 = vector.shape_cast %875 : vector<1x8xf32> to vector<1x8xf32>
    %879 = vector.broadcast %878 : vector<1x8xf32> to vector<8x8xf32>
    %880 = arith.select %877, %879, %874 : vector<8x8xi1>, vector<8x8xf32>
    %881 = vector.extract_strided_slice %840 {offsets = [0, 0], sizes = [1, 8], strides = [1, 1]} : vector<8x8xf32> to vector<1x8xf32>
    %882 = vector.shape_cast %21 : vector<8x1xi1> to vector<8x1xi1>
    %883 = vector.broadcast %882 : vector<8x1xi1> to vector<8x8xi1>
    %884 = vector.shape_cast %881 : vector<1x8xf32> to vector<1x8xf32>
    %885 = vector.broadcast %884 : vector<1x8xf32> to vector<8x8xf32>
    %886 = arith.select %883, %885, %880 : vector<8x8xi1>, vector<8x8xf32>
    %887 = vector.extract_strided_slice %840 {offsets = [4, 0], sizes = [1, 8], strides = [1, 1]} : vector<8x8xf32> to vector<1x8xf32>
    %888 = vector.shape_cast %23 : vector<8x1xi1> to vector<8x1xi1>
    %889 = vector.broadcast %888 : vector<8x1xi1> to vector<8x8xi1>
    %890 = vector.shape_cast %887 : vector<1x8xf32> to vector<1x8xf32>
    %891 = vector.broadcast %890 : vector<1x8xf32> to vector<8x8xf32>
    %892 = arith.select %889, %891, %886 : vector<8x8xi1>, vector<8x8xf32>
    %893 = vector.extract_strided_slice %855 {offsets = [0, 0], sizes = [1, 8], strides = [1, 1]} : vector<8x8xf32> to vector<1x8xf32>
    %894 = vector.shape_cast %25 : vector<8x1xi1> to vector<8x1xi1>
    %895 = vector.broadcast %894 : vector<8x1xi1> to vector<8x8xi1>
    %896 = vector.shape_cast %893 : vector<1x8xf32> to vector<1x8xf32>
    %897 = vector.broadcast %896 : vector<1x8xf32> to vector<8x8xf32>
    %898 = arith.select %895, %897, %892 : vector<8x8xi1>, vector<8x8xf32>
    %899 = vector.extract_strided_slice %855 {offsets = [4, 0], sizes = [1, 8], strides = [1, 1]} : vector<8x8xf32> to vector<1x8xf32>
    %900 = vector.shape_cast %27 : vector<8x1xi1> to vector<8x1xi1>
    %901 = vector.broadcast %900 : vector<8x1xi1> to vector<8x8xi1>
    %902 = vector.shape_cast %899 : vector<1x8xf32> to vector<1x8xf32>
    %903 = vector.broadcast %902 : vector<1x8xf32> to vector<8x8xf32>
    %904 = arith.select %901, %903, %898 : vector<8x8xi1>, vector<8x8xf32>
    %cst_85 = arith.constant 0.000000e+00 : f32
    %905 = vector.broadcast %cst_85 : f32 to vector<8x8xf32>
    %906 = vector.extract_strided_slice %810 {offsets = [1, 0], sizes = [1, 8], strides = [1, 1]} : vector<8x8xf32> to vector<1x8xf32>
    %907 = vector.shape_cast %13 : vector<8x1xi1> to vector<8x1xi1>
    %908 = vector.broadcast %907 : vector<8x1xi1> to vector<8x8xi1>
    %909 = vector.shape_cast %906 : vector<1x8xf32> to vector<1x8xf32>
    %910 = vector.broadcast %909 : vector<1x8xf32> to vector<8x8xf32>
    %911 = arith.select %908, %910, %905 : vector<8x8xi1>, vector<8x8xf32>
    %912 = vector.extract_strided_slice %810 {offsets = [5, 0], sizes = [1, 8], strides = [1, 1]} : vector<8x8xf32> to vector<1x8xf32>
    %913 = vector.shape_cast %15 : vector<8x1xi1> to vector<8x1xi1>
    %914 = vector.broadcast %913 : vector<8x1xi1> to vector<8x8xi1>
    %915 = vector.shape_cast %912 : vector<1x8xf32> to vector<1x8xf32>
    %916 = vector.broadcast %915 : vector<1x8xf32> to vector<8x8xf32>
    %917 = arith.select %914, %916, %911 : vector<8x8xi1>, vector<8x8xf32>
    %918 = vector.extract_strided_slice %825 {offsets = [1, 0], sizes = [1, 8], strides = [1, 1]} : vector<8x8xf32> to vector<1x8xf32>
    %919 = vector.shape_cast %17 : vector<8x1xi1> to vector<8x1xi1>
    %920 = vector.broadcast %919 : vector<8x1xi1> to vector<8x8xi1>
    %921 = vector.shape_cast %918 : vector<1x8xf32> to vector<1x8xf32>
    %922 = vector.broadcast %921 : vector<1x8xf32> to vector<8x8xf32>
    %923 = arith.select %920, %922, %917 : vector<8x8xi1>, vector<8x8xf32>
    %924 = vector.extract_strided_slice %825 {offsets = [5, 0], sizes = [1, 8], strides = [1, 1]} : vector<8x8xf32> to vector<1x8xf32>
    %925 = vector.shape_cast %19 : vector<8x1xi1> to vector<8x1xi1>
    %926 = vector.broadcast %925 : vector<8x1xi1> to vector<8x8xi1>
    %927 = vector.shape_cast %924 : vector<1x8xf32> to vector<1x8xf32>
    %928 = vector.broadcast %927 : vector<1x8xf32> to vector<8x8xf32>
    %929 = arith.select %926, %928, %923 : vector<8x8xi1>, vector<8x8xf32>
    %930 = vector.extract_strided_slice %840 {offsets = [1, 0], sizes = [1, 8], strides = [1, 1]} : vector<8x8xf32> to vector<1x8xf32>
    %931 = vector.shape_cast %21 : vector<8x1xi1> to vector<8x1xi1>
    %932 = vector.broadcast %931 : vector<8x1xi1> to vector<8x8xi1>
    %933 = vector.shape_cast %930 : vector<1x8xf32> to vector<1x8xf32>
    %934 = vector.broadcast %933 : vector<1x8xf32> to vector<8x8xf32>
    %935 = arith.select %932, %934, %929 : vector<8x8xi1>, vector<8x8xf32>
    %936 = vector.extract_strided_slice %840 {offsets = [5, 0], sizes = [1, 8], strides = [1, 1]} : vector<8x8xf32> to vector<1x8xf32>
    %937 = vector.shape_cast %23 : vector<8x1xi1> to vector<8x1xi1>
    %938 = vector.broadcast %937 : vector<8x1xi1> to vector<8x8xi1>
    %939 = vector.shape_cast %936 : vector<1x8xf32> to vector<1x8xf32>
    %940 = vector.broadcast %939 : vector<1x8xf32> to vector<8x8xf32>
    %941 = arith.select %938, %940, %935 : vector<8x8xi1>, vector<8x8xf32>
    %942 = vector.extract_strided_slice %855 {offsets = [1, 0], sizes = [1, 8], strides = [1, 1]} : vector<8x8xf32> to vector<1x8xf32>
    %943 = vector.shape_cast %25 : vector<8x1xi1> to vector<8x1xi1>
    %944 = vector.broadcast %943 : vector<8x1xi1> to vector<8x8xi1>
    %945 = vector.shape_cast %942 : vector<1x8xf32> to vector<1x8xf32>
    %946 = vector.broadcast %945 : vector<1x8xf32> to vector<8x8xf32>
    %947 = arith.select %944, %946, %941 : vector<8x8xi1>, vector<8x8xf32>
    %948 = vector.extract_strided_slice %855 {offsets = [5, 0], sizes = [1, 8], strides = [1, 1]} : vector<8x8xf32> to vector<1x8xf32>
    %949 = vector.shape_cast %27 : vector<8x1xi1> to vector<8x1xi1>
    %950 = vector.broadcast %949 : vector<8x1xi1> to vector<8x8xi1>
    %951 = vector.shape_cast %948 : vector<1x8xf32> to vector<1x8xf32>
    %952 = vector.broadcast %951 : vector<1x8xf32> to vector<8x8xf32>
    %953 = arith.select %950, %952, %947 : vector<8x8xi1>, vector<8x8xf32>
    %cst_86 = arith.constant 0.000000e+00 : f32
    %954 = vector.broadcast %cst_86 : f32 to vector<8x8xf32>
    %955 = vector.extract_strided_slice %810 {offsets = [2, 0], sizes = [1, 8], strides = [1, 1]} : vector<8x8xf32> to vector<1x8xf32>
    %956 = vector.shape_cast %13 : vector<8x1xi1> to vector<8x1xi1>
    %957 = vector.broadcast %956 : vector<8x1xi1> to vector<8x8xi1>
    %958 = vector.shape_cast %955 : vector<1x8xf32> to vector<1x8xf32>
    %959 = vector.broadcast %958 : vector<1x8xf32> to vector<8x8xf32>
    %960 = arith.select %957, %959, %954 : vector<8x8xi1>, vector<8x8xf32>
    %961 = vector.extract_strided_slice %810 {offsets = [6, 0], sizes = [1, 8], strides = [1, 1]} : vector<8x8xf32> to vector<1x8xf32>
    %962 = vector.shape_cast %15 : vector<8x1xi1> to vector<8x1xi1>
    %963 = vector.broadcast %962 : vector<8x1xi1> to vector<8x8xi1>
    %964 = vector.shape_cast %961 : vector<1x8xf32> to vector<1x8xf32>
    %965 = vector.broadcast %964 : vector<1x8xf32> to vector<8x8xf32>
    %966 = arith.select %963, %965, %960 : vector<8x8xi1>, vector<8x8xf32>
    %967 = vector.extract_strided_slice %825 {offsets = [2, 0], sizes = [1, 8], strides = [1, 1]} : vector<8x8xf32> to vector<1x8xf32>
    %968 = vector.shape_cast %17 : vector<8x1xi1> to vector<8x1xi1>
    %969 = vector.broadcast %968 : vector<8x1xi1> to vector<8x8xi1>
    %970 = vector.shape_cast %967 : vector<1x8xf32> to vector<1x8xf32>
    %971 = vector.broadcast %970 : vector<1x8xf32> to vector<8x8xf32>
    %972 = arith.select %969, %971, %966 : vector<8x8xi1>, vector<8x8xf32>
    %973 = vector.extract_strided_slice %825 {offsets = [6, 0], sizes = [1, 8], strides = [1, 1]} : vector<8x8xf32> to vector<1x8xf32>
    %974 = vector.shape_cast %19 : vector<8x1xi1> to vector<8x1xi1>
    %975 = vector.broadcast %974 : vector<8x1xi1> to vector<8x8xi1>
    %976 = vector.shape_cast %973 : vector<1x8xf32> to vector<1x8xf32>
    %977 = vector.broadcast %976 : vector<1x8xf32> to vector<8x8xf32>
    %978 = arith.select %975, %977, %972 : vector<8x8xi1>, vector<8x8xf32>
    %979 = vector.extract_strided_slice %840 {offsets = [2, 0], sizes = [1, 8], strides = [1, 1]} : vector<8x8xf32> to vector<1x8xf32>
    %980 = vector.shape_cast %21 : vector<8x1xi1> to vector<8x1xi1>
    %981 = vector.broadcast %980 : vector<8x1xi1> to vector<8x8xi1>
    %982 = vector.shape_cast %979 : vector<1x8xf32> to vector<1x8xf32>
    %983 = vector.broadcast %982 : vector<1x8xf32> to vector<8x8xf32>
    %984 = arith.select %981, %983, %978 : vector<8x8xi1>, vector<8x8xf32>
    %985 = vector.extract_strided_slice %840 {offsets = [6, 0], sizes = [1, 8], strides = [1, 1]} : vector<8x8xf32> to vector<1x8xf32>
    %986 = vector.shape_cast %23 : vector<8x1xi1> to vector<8x1xi1>
    %987 = vector.broadcast %986 : vector<8x1xi1> to vector<8x8xi1>
    %988 = vector.shape_cast %985 : vector<1x8xf32> to vector<1x8xf32>
    %989 = vector.broadcast %988 : vector<1x8xf32> to vector<8x8xf32>
    %990 = arith.select %987, %989, %984 : vector<8x8xi1>, vector<8x8xf32>
    %991 = vector.extract_strided_slice %855 {offsets = [2, 0], sizes = [1, 8], strides = [1, 1]} : vector<8x8xf32> to vector<1x8xf32>
    %992 = vector.shape_cast %25 : vector<8x1xi1> to vector<8x1xi1>
    %993 = vector.broadcast %992 : vector<8x1xi1> to vector<8x8xi1>
    %994 = vector.shape_cast %991 : vector<1x8xf32> to vector<1x8xf32>
    %995 = vector.broadcast %994 : vector<1x8xf32> to vector<8x8xf32>
    %996 = arith.select %993, %995, %990 : vector<8x8xi1>, vector<8x8xf32>
    %997 = vector.extract_strided_slice %855 {offsets = [6, 0], sizes = [1, 8], strides = [1, 1]} : vector<8x8xf32> to vector<1x8xf32>
    %998 = vector.shape_cast %27 : vector<8x1xi1> to vector<8x1xi1>
    %999 = vector.broadcast %998 : vector<8x1xi1> to vector<8x8xi1>
    %1000 = vector.shape_cast %997 : vector<1x8xf32> to vector<1x8xf32>
    %1001 = vector.broadcast %1000 : vector<1x8xf32> to vector<8x8xf32>
    %1002 = arith.select %999, %1001, %996 : vector<8x8xi1>, vector<8x8xf32>
    %cst_87 = arith.constant 0.000000e+00 : f32
    %1003 = vector.broadcast %cst_87 : f32 to vector<8x8xf32>
    %1004 = vector.extract_strided_slice %810 {offsets = [3, 0], sizes = [1, 8], strides = [1, 1]} : vector<8x8xf32> to vector<1x8xf32>
    %1005 = vector.shape_cast %13 : vector<8x1xi1> to vector<8x1xi1>
    %1006 = vector.broadcast %1005 : vector<8x1xi1> to vector<8x8xi1>
    %1007 = vector.shape_cast %1004 : vector<1x8xf32> to vector<1x8xf32>
    %1008 = vector.broadcast %1007 : vector<1x8xf32> to vector<8x8xf32>
    %1009 = arith.select %1006, %1008, %1003 : vector<8x8xi1>, vector<8x8xf32>
    %1010 = vector.extract_strided_slice %810 {offsets = [7, 0], sizes = [1, 8], strides = [1, 1]} : vector<8x8xf32> to vector<1x8xf32>
    %1011 = vector.shape_cast %15 : vector<8x1xi1> to vector<8x1xi1>
    %1012 = vector.broadcast %1011 : vector<8x1xi1> to vector<8x8xi1>
    %1013 = vector.shape_cast %1010 : vector<1x8xf32> to vector<1x8xf32>
    %1014 = vector.broadcast %1013 : vector<1x8xf32> to vector<8x8xf32>
    %1015 = arith.select %1012, %1014, %1009 : vector<8x8xi1>, vector<8x8xf32>
    %1016 = vector.extract_strided_slice %825 {offsets = [3, 0], sizes = [1, 8], strides = [1, 1]} : vector<8x8xf32> to vector<1x8xf32>
    %1017 = vector.shape_cast %17 : vector<8x1xi1> to vector<8x1xi1>
    %1018 = vector.broadcast %1017 : vector<8x1xi1> to vector<8x8xi1>
    %1019 = vector.shape_cast %1016 : vector<1x8xf32> to vector<1x8xf32>
    %1020 = vector.broadcast %1019 : vector<1x8xf32> to vector<8x8xf32>
    %1021 = arith.select %1018, %1020, %1015 : vector<8x8xi1>, vector<8x8xf32>
    %1022 = vector.extract_strided_slice %825 {offsets = [7, 0], sizes = [1, 8], strides = [1, 1]} : vector<8x8xf32> to vector<1x8xf32>
    %1023 = vector.shape_cast %19 : vector<8x1xi1> to vector<8x1xi1>
    %1024 = vector.broadcast %1023 : vector<8x1xi1> to vector<8x8xi1>
    %1025 = vector.shape_cast %1022 : vector<1x8xf32> to vector<1x8xf32>
    %1026 = vector.broadcast %1025 : vector<1x8xf32> to vector<8x8xf32>
    %1027 = arith.select %1024, %1026, %1021 : vector<8x8xi1>, vector<8x8xf32>
    %1028 = vector.extract_strided_slice %840 {offsets = [3, 0], sizes = [1, 8], strides = [1, 1]} : vector<8x8xf32> to vector<1x8xf32>
    %1029 = vector.shape_cast %21 : vector<8x1xi1> to vector<8x1xi1>
    %1030 = vector.broadcast %1029 : vector<8x1xi1> to vector<8x8xi1>
    %1031 = vector.shape_cast %1028 : vector<1x8xf32> to vector<1x8xf32>
    %1032 = vector.broadcast %1031 : vector<1x8xf32> to vector<8x8xf32>
    %1033 = arith.select %1030, %1032, %1027 : vector<8x8xi1>, vector<8x8xf32>
    %1034 = vector.extract_strided_slice %840 {offsets = [7, 0], sizes = [1, 8], strides = [1, 1]} : vector<8x8xf32> to vector<1x8xf32>
    %1035 = vector.shape_cast %23 : vector<8x1xi1> to vector<8x1xi1>
    %1036 = vector.broadcast %1035 : vector<8x1xi1> to vector<8x8xi1>
    %1037 = vector.shape_cast %1034 : vector<1x8xf32> to vector<1x8xf32>
    %1038 = vector.broadcast %1037 : vector<1x8xf32> to vector<8x8xf32>
    %1039 = arith.select %1036, %1038, %1033 : vector<8x8xi1>, vector<8x8xf32>
    %1040 = vector.extract_strided_slice %855 {offsets = [3, 0], sizes = [1, 8], strides = [1, 1]} : vector<8x8xf32> to vector<1x8xf32>
    %1041 = vector.shape_cast %25 : vector<8x1xi1> to vector<8x1xi1>
    %1042 = vector.broadcast %1041 : vector<8x1xi1> to vector<8x8xi1>
    %1043 = vector.shape_cast %1040 : vector<1x8xf32> to vector<1x8xf32>
    %1044 = vector.broadcast %1043 : vector<1x8xf32> to vector<8x8xf32>
    %1045 = arith.select %1042, %1044, %1039 : vector<8x8xi1>, vector<8x8xf32>
    %1046 = vector.extract_strided_slice %855 {offsets = [7, 0], sizes = [1, 8], strides = [1, 1]} : vector<8x8xf32> to vector<1x8xf32>
    %1047 = vector.shape_cast %27 : vector<8x1xi1> to vector<8x1xi1>
    %1048 = vector.broadcast %1047 : vector<8x1xi1> to vector<8x8xi1>
    %1049 = vector.shape_cast %1046 : vector<1x8xf32> to vector<1x8xf32>
    %1050 = vector.broadcast %1049 : vector<1x8xf32> to vector<8x8xf32>
    %1051 = arith.select %1048, %1050, %1045 : vector<8x8xi1>, vector<8x8xf32>
    %1052 = tpu.concatenate %136, %392, %648, %904 in 0 : vector<8x8xf32>, vector<8x8xf32>, vector<8x8xf32>, vector<8x8xf32> -> vector<32x8xf32>
    %c0_88 = arith.constant 0 : index
    %c0_89 = arith.constant 0 : index
    %c0_90 = arith.constant 0 : index
    %1053 = vector.load %arg4[%c0_88, %c0_89, %c0_90] : memref<4x8x32xf32, #tpu.memory_space<vmem>>, vector<1x8x32xf32>
    %1054 = vector.shape_cast %1053 : vector<1x8x32xf32> to vector<8x32xf32>
    %cst_91 = arith.constant dense<0.000000e+00> : vector<32x32xf32>
    %1055 = tpu.matmul %1052, %1054, %cst_91 {dimension_numbers = #tpu.dot_dimension_numbers<[1], [0], [0], [1], [0, 0, 1, 1], [], []>} : vector<32x8xf32>, vector<8x32xf32>, vector<32x32xf32> -> vector<32x32xf32>
    %1056 = tpu.concatenate %185, %441, %697, %953 in 0 : vector<8x8xf32>, vector<8x8xf32>, vector<8x8xf32>, vector<8x8xf32> -> vector<32x8xf32>
    %c1 = arith.constant 1 : index
    %c0_92 = arith.constant 0 : index
    %c0_93 = arith.constant 0 : index
    %1057 = vector.load %arg4[%c1, %c0_92, %c0_93] : memref<4x8x32xf32, #tpu.memory_space<vmem>>, vector<1x8x32xf32>
    %1058 = vector.shape_cast %1057 : vector<1x8x32xf32> to vector<8x32xf32>
    %cst_94 = arith.constant dense<0.000000e+00> : vector<32x32xf32>
    %1059 = tpu.matmul %1056, %1058, %cst_94 {dimension_numbers = #tpu.dot_dimension_numbers<[1], [0], [0], [1], [0, 0, 1, 1], [], []>} : vector<32x8xf32>, vector<8x32xf32>, vector<32x32xf32> -> vector<32x32xf32>
    %1060 = tpu.concatenate %234, %490, %746, %1002 in 0 : vector<8x8xf32>, vector<8x8xf32>, vector<8x8xf32>, vector<8x8xf32> -> vector<32x8xf32>
    %c2 = arith.constant 2 : index
    %c0_95 = arith.constant 0 : index
    %c0_96 = arith.constant 0 : index
    %1061 = vector.load %arg4[%c2, %c0_95, %c0_96] : memref<4x8x32xf32, #tpu.memory_space<vmem>>, vector<1x8x32xf32>
    %1062 = vector.shape_cast %1061 : vector<1x8x32xf32> to vector<8x32xf32>
    %cst_97 = arith.constant dense<0.000000e+00> : vector<32x32xf32>
    %1063 = tpu.matmul %1060, %1062, %cst_97 {dimension_numbers = #tpu.dot_dimension_numbers<[1], [0], [0], [1], [0, 0, 1, 1], [], []>} : vector<32x8xf32>, vector<8x32xf32>, vector<32x32xf32> -> vector<32x32xf32>
    %1064 = tpu.concatenate %283, %539, %795, %1051 in 0 : vector<8x8xf32>, vector<8x8xf32>, vector<8x8xf32>, vector<8x8xf32> -> vector<32x8xf32>
    %c3 = arith.constant 3 : index
    %c0_98 = arith.constant 0 : index
    %c0_99 = arith.constant 0 : index
    %1065 = vector.load %arg4[%c3, %c0_98, %c0_99] : memref<4x8x32xf32, #tpu.memory_space<vmem>>, vector<1x8x32xf32>
    %1066 = vector.shape_cast %1065 : vector<1x8x32xf32> to vector<8x32xf32>
    %cst_100 = arith.constant dense<0.000000e+00> : vector<32x32xf32>
    %1067 = tpu.matmul %1064, %1066, %cst_100 {dimension_numbers = #tpu.dot_dimension_numbers<[1], [0], [0], [1], [0, 0, 1, 1], [], []>} : vector<32x8xf32>, vector<8x32xf32>, vector<32x32xf32> -> vector<32x32xf32>
    %1068 = arith.addf %1055, %1059 : vector<32x32xf32>
    %1069 = arith.addf %1068, %1063 : vector<32x32xf32>
    %1070 = arith.addf %1069, %1067 : vector<32x32xf32>
    %1071 = arith.addf %6, %1070 : vector<32x32xf32>
    %cst_101 = arith.constant dense<0.000000e+00> : vector<32xf32>
    %1072 = vector.multi_reduction <add>, %1071, %cst_101 [1] : vector<32x32xf32> to vector<32xf32>
    %1073 = vector.shape_cast %1072 : vector<32xf32> to vector<32x1xf32>
    %cst_102 = arith.constant 3.200000e+01 : f32
    %1074 = vector.broadcast %cst_102 : f32 to vector<32x1xf32>
    %1075 = arith.divf %1073, %1074 : vector<32x1xf32>
    %1076 = vector.broadcast %1075 : vector<32x1xf32> to vector<32x32xf32>
    %1077 = arith.subf %1071, %1076 : vector<32x32xf32>
    %1078 = arith.mulf %1077, %1077 : vector<32x32xf32>
    %cst_103 = arith.constant dense<0.000000e+00> : vector<32xf32>
    %1079 = vector.multi_reduction <add>, %1078, %cst_103 [1] : vector<32x32xf32> to vector<32xf32>
    %1080 = vector.shape_cast %1079 : vector<32xf32> to vector<32x1xf32>
    %cst_104 = arith.constant 3.200000e+01 : f32
    %1081 = vector.broadcast %cst_104 : f32 to vector<32x1xf32>
    %1082 = arith.divf %1080, %1081 : vector<32x1xf32>
    %1083 = vector.broadcast %1075 : vector<32x1xf32> to vector<32x32xf32>
    %1084 = arith.subf %1071, %1083 : vector<32x32xf32>
    %cst_105 = arith.constant 9.99999974E-6 : f32
    %1085 = vector.broadcast %cst_105 : f32 to vector<32x1xf32>
    %1086 = arith.addf %1082, %1085 : vector<32x1xf32>
    %1087 = math.rsqrt %1086 : vector<32x1xf32>
    %1088 = vector.broadcast %1087 : vector<32x1xf32> to vector<32x32xf32>
    %1089 = arith.mulf %1084, %1088 : vector<32x32xf32>
    %1090 = vector.broadcast %1 : vector<1x32xf32> to vector<32x32xf32>
    %1091 = arith.mulf %1089, %1090 : vector<32x32xf32>
    %1092 = vector.broadcast %2 : vector<1x32xf32> to vector<32x32xf32>
    %1093 = arith.addf %1091, %1092 : vector<32x32xf32>
    %c0_106 = arith.constant 0 : index
    %c0_107 = arith.constant 0 : index
    %1094 = vector.load %arg5[%c0_106, %c0_107] : memref<32x32xf32, #tpu.memory_space<vmem>>, vector<32x32xf32>
    %cst_108 = arith.constant dense<0.000000e+00> : vector<32x32xf32>
    %1095 = tpu.matmul %1093, %1094, %cst_108 {dimension_numbers = #tpu.dot_dimension_numbers<[1], [0], [0], [1], [0, 0, 1, 1], [], []>} : vector<32x32xf32>, vector<32x32xf32>, vector<32x32xf32> -> vector<32x32xf32>
    %1096 = vector.broadcast %3 : vector<1x32xf32> to vector<32x32xf32>
    %1097 = arith.addf %1095, %1096 : vector<32x32xf32>
    %1098 = arith.addf %1097, %1093 : vector<32x32xf32>
    %cst_109 = arith.constant dense<0.000000e+00> : vector<32xf32>
    %1099 = vector.multi_reduction <add>, %1098, %cst_109 [1] : vector<32x32xf32> to vector<32xf32>
    %1100 = vector.shape_cast %1099 : vector<32xf32> to vector<32x1xf32>
    %cst_110 = arith.constant 3.200000e+01 : f32
    %1101 = vector.broadcast %cst_110 : f32 to vector<32x1xf32>
    %1102 = arith.divf %1100, %1101 : vector<32x1xf32>
    %1103 = vector.broadcast %1102 : vector<32x1xf32> to vector<32x32xf32>
    %1104 = arith.subf %1098, %1103 : vector<32x32xf32>
    %1105 = arith.mulf %1104, %1104 : vector<32x32xf32>
    %cst_111 = arith.constant dense<0.000000e+00> : vector<32xf32>
    %1106 = vector.multi_reduction <add>, %1105, %cst_111 [1] : vector<32x32xf32> to vector<32xf32>
    %1107 = vector.shape_cast %1106 : vector<32xf32> to vector<32x1xf32>
    %cst_112 = arith.constant 3.200000e+01 : f32
    %1108 = vector.broadcast %cst_112 : f32 to vector<32x1xf32>
    %1109 = arith.divf %1107, %1108 : vector<32x1xf32>
    %1110 = vector.broadcast %1102 : vector<32x1xf32> to vector<32x32xf32>
    %1111 = arith.subf %1098, %1110 : vector<32x32xf32>
    %cst_113 = arith.constant 9.99999974E-6 : f32
    %1112 = vector.broadcast %cst_113 : f32 to vector<32x1xf32>
    %1113 = arith.addf %1109, %1112 : vector<32x1xf32>
    %1114 = math.rsqrt %1113 : vector<32x1xf32>
    %1115 = vector.broadcast %1114 : vector<32x1xf32> to vector<32x32xf32>
    %1116 = arith.mulf %1111, %1115 : vector<32x32xf32>
    %1117 = vector.broadcast %4 : vector<1x32xf32> to vector<32x32xf32>
    %1118 = arith.mulf %1116, %1117 : vector<32x32xf32>
    %1119 = vector.broadcast %5 : vector<1x32xf32> to vector<32x32xf32>
    %1120 = arith.addf %1118, %1119 : vector<32x32xf32>
    %c0_114 = arith.constant 0 : index
    %c0_115 = arith.constant 0 : index
    %1121 = vector.load %arg7[%c0_114, %c0_115] : memref<32x32xf32, #tpu.memory_space<vmem>>, vector<32x32xf32>
    tpu.vector_store %arg7[%c0_114, %c0_115], %1120 {strides = array<i32>} : memref<32x32xf32, #tpu.memory_space<vmem>>, vector<32x32xf32>,
    return
  }
  func.func @transform_0(%arg0: i32) -> (i32, i32) {
    %c0_i32 = arith.constant 0 : i32
    %c0_i32_0 = arith.constant 0 : i32
    return %arg0, %c0_i32 : i32, i32
  }
  func.func @transform_1(%arg0: i32) -> (i32, i32) {
    %c0_i32 = arith.constant 0 : i32
    %c0_i32_0 = arith.constant 0 : i32
    %c0_i32_1 = arith.constant 0 : i32
    return %c0_i32, %c0_i32_0 : i32, i32
  }
  func.func @transform_2(%arg0: i32) -> (i32, i32) {
    %c0_i32 = arith.constant 0 : i32
    %c0_i32_0 = arith.constant 0 : i32
    %c0_i32_1 = arith.constant 0 : i32
    return %c0_i32, %c0_i32_0 : i32, i32
  }
  func.func @transform_3(%arg0: i32) -> (i32, i32, i32) {
    %c0_i32 = arith.constant 0 : i32
    %c0_i32_0 = arith.constant 0 : i32
    %c0_i32_1 = arith.constant 0 : i32
    %c0_i32_2 = arith.constant 0 : i32
    return %c0_i32, %c0_i32_0, %c0_i32_1 : i32, i32, i32
  }
  func.func @transform_4(%arg0: i32) -> (i32, i32) {
    %c0_i32 = arith.constant 0 : i32
    %c0_i32_0 = arith.constant 0 : i32
    %c0_i32_1 = arith.constant 0 : i32
    return %c0_i32, %c0_i32_0 : i32, i32
  }
  func.func @transform_5(%arg0: i32) -> (i32, i32) {
    %c0_i32 = arith.constant 0 : i32
    %c0_i32_0 = arith.constant 0 : i32
    %c0_i32_1 = arith.constant 0 : i32
    return %c0_i32, %c0_i32_0 : i32, i32
  }
  func.func @transform_6(%arg0: i32) -> (i32, i32) {
    %c0_i32 = arith.constant 0 : i32
    %c0_i32_0 = arith.constant 0 : i32
    return %arg0, %c0_i32 : i32, i32
  }
}

</mosaic_0001>

<llo_original>
// kernel: tpu_custom_call.1
$region0: #{tpu_custom_call.1}
  #allocation0 [shape = 'u32[]', space=smem, size = 0x4, offset = 0x4, fixed_abs, tag = 'smem constant byte address 0x4 - core index']
  #allocation1 [shape = 'u32[144,128]{1,0:T(1,128)}', space=vmem, size = 0x12000, scoped, tag = 'internal scratch']
  %s0 = inlined_call_operand.vmem [shape: f32[64,32], index: 0, kind: input, shape index: {}]
  %s1 = inlined_call_operand.vmem [shape: f32[32,64], index: 1, kind: input, shape index: {}]
  %s2 = inlined_call_operand.vmem [shape: f32[32,32], index: 2, kind: input, shape index: {}]
  %s3 = inlined_call_operand.vmem [shape: f32[4,8,32], index: 3, kind: input, shape index: {}]
  %s4 = inlined_call_operand.hbm [shape: f32[32,32], index: 4, kind: input, shape index: {}]
  %s5 = inlined_call_operand.vmem [shape: f32[8,32], index: 5, kind: input, shape index: {}]
  %s6 = inlined_call_operand.vmem [shape: f32[64,32], index: 6, kind: output, shape index: {}]
  %s7 = sld [smem:[#allocation0]]
  $region61: #{tpu_custom_call.1} parent=0
    _
  %s9 = ssub.s32 1, %s7
  %s10 = scalar_select 0, %s9, %s7
  $region1: #{tpu_custom_call.1} parent=0
    #allocation2 [shape = 'u8[16384]{0}', space=vmem, size = 0x4000, scoped, tag = 'input window, operand 4, single buffered']
    #allocation3 [shape = 's32[2]{0}', space=sflag, size = 0x8, scoped, tag = 'scoped memory for tpu_custom_call.1']
    %11 = vsyncpa [#allocation3], 0
    loop: start=0, step=1, limit=4
    $region2: #{tpu_custom_call.1} parent=1 // loop_pre_header
      _
    $region3: #{tpu_custom_call.1} parent=1 // loop_header
      %s13 = sphi 0, %s17
      %p14 = scmp.ge.s32.totalorder %s13, 4
      %s23 = sphi 0, %s25
      %s26 = sphi 0, %s23
      %s27 = sphi 0, %s26
      %s43 = sphi 0, %s27
      %s47 = sphi 0, %s47
      %s49 = sphi 0, %s47
      %s50 = sphi 0, %s49
      %s64 = sphi 0, %s50
      %s68 = sphi 0, %s68
      %s70 = sphi 0, %s68
      %s71 = sphi 0, %s70
      %s85 = sphi 0, %s71
      %s89 = sphi 0, %s89
      %s91 = sphi 0, %s89
      %s92 = sphi 0, %s91
      %s106 = sphi 0, %s92
      %s110 = sphi 0, %s110
      %s112 = sphi 0, %s110
      %s113 = sphi 0, %s112
      %s127 = sphi 0, %s113
      %s131 = sphi 0, %s131
      %s133 = sphi 0, %s131
      %s134 = sphi 0, %s133
      %s148 = sphi 0, %s134
      %s154 = sphi 0, %s156
      %s157 = sphi 0, %s154
      %s158 = sphi 0, %s157
      %s174 = sphi 0, %s158
    $region4: #{tpu_custom_call.1} parent=1 // loop_header_branch
      %16 = sbr.rel (%p14) target = $region8
    $region5: #{tpu_custom_call.1} parent=1 // loop_body
      %s18 = ssub.s32 %s13, 1
      %s19 = ssub.s32 %s13, 2
      %s20 = sadd.s32 %s13, 1
      %s21 = ssub.s32 %s13, %s20
      %p22 = scmp.eq.s32.totalorder %s21, 0
      %s24 = sadd.s32 %s23, 1
      %s25 = scalar_select %p22, %s23, %s24
      %p28 = pneg %p22
      %p29 = scmp.eq.s32.totalorder %s13, 1
      %p30 = por %p28, %p29
      %p31 = scmp.ne.s32.totalorder %s23, %s26
      %p32 = scmp.eq.s32.totalorder %s13, 0
      %p33 = por %p31, %p32
      %p34 = scmp.ne.s32.totalorder %s23, %s26
      %p35 = scmp.eq.s32.totalorder %s18, 1
      %p36 = por %p34, %p35
      %p37 = scmp.ne.s32.totalorder %s26, %s27
      %p38 = scmp.eq.s32.totalorder %s18, 0
      %p39 = por %p37, %p38
      %p40 = scmp.ne.s32.totalorder %s26, %s27
      %p41 = scmp.eq.s32.totalorder %s19, 1
      %p42 = por %p40, %p41
      %p44 = scmp.ne.s32.totalorder %s27, %s43
      %p45 = scmp.eq.s32.totalorder %s19, 0
      %p46 = por %p44, %p45
      %s48 = sadd.s32 %s47, 1
      %p51 = scmp.eq.s32.totalorder %s13, 1
      %p52 = scmp.ne.s32.totalorder %s47, %s49
      %p53 = scmp.eq.s32.totalorder %s13, 0
      %p54 = por %p52, %p53
      %p55 = scmp.ne.s32.totalorder %s47, %s49
      %p56 = scmp.eq.s32.totalorder %s18, 1
      %p57 = por %p55, %p56
      %p58 = scmp.ne.s32.totalorder %s49, %s50
      %p59 = scmp.eq.s32.totalorder %s18, 0
      %p60 = por %p58, %p59
      %p61 = scmp.ne.s32.totalorder %s49, %s50
      %p62 = scmp.eq.s32.totalorder %s19, 1
      %p63 = por %p61, %p62
      %p65 = scmp.ne.s32.totalorder %s50, %s64
      %p66 = scmp.eq.s32.totalorder %s19, 0
      %p67 = por %p65, %p66
      %s69 = sadd.s32 %s68, 1
      %p72 = scmp.eq.s32.totalorder %s13, 1
      %p73 = scmp.ne.s32.totalorder %s68, %s70
      %p74 = scmp.eq.s32.totalorder %s13, 0
      %p75 = por %p73, %p74
      %p76 = scmp.ne.s32.totalorder %s68, %s70
      %p77 = scmp.eq.s32.totalorder %s18, 1
      %p78 = por %p76, %p77
      %p79 = scmp.ne.s32.totalorder %s70, %s71
      %p80 = scmp.eq.s32.totalorder %s18, 0
      %p81 = por %p79, %p80
      %p82 = scmp.ne.s32.totalorder %s70, %s71
      %p83 = scmp.eq.s32.totalorder %s19, 1
      %p84 = por %p82, %p83
      %p86 = scmp.ne.s32.totalorder %s71, %s85
      %p87 = scmp.eq.s32.totalorder %s19, 0
      %p88 = por %p86, %p87
      %s90 = sadd.s32 %s89, 1
      %p93 = scmp.eq.s32.totalorder %s13, 1
      %p94 = scmp.ne.s32.totalorder %s89, %s91
      %p95 = scmp.eq.s32.totalorder %s13, 0
      %p96 = por %p94, %p95
      %p97 = scmp.ne.s32.totalorder %s89, %s91
      %p98 = scmp.eq.s32.totalorder %s18, 1
      %p99 = por %p97, %p98
      %p100 = scmp.ne.s32.totalorder %s91, %s92
      %p101 = scmp.eq.s32.totalorder %s18, 0
      %p102 = por %p100, %p101
      %p103 = scmp.ne.s32.totalorder %s91, %s92
      %p104 = scmp.eq.s32.totalorder %s19, 1
      %p105 = por %p103, %p104
      %p107 = scmp.ne.s32.totalorder %s92, %s106
      %p108 = scmp.eq.s32.totalorder %s19, 0
      %p109 = por %p107, %p108
      %s111 = sadd.s32 %s110, 1
      %p114 = scmp.eq.s32.totalorder %s13, 1
      %p115 = scmp.ne.s32.totalorder %s110, %s112
      %p116 = scmp.eq.s32.totalorder %s13, 0
      %p117 = por %p115, %p116
      %p118 = scmp.ne.s32.totalorder %s110, %s112
      %p119 = scmp.eq.s32.totalorder %s18, 1
      %p120 = por %p118, %p119
      %p121 = scmp.ne.s32.totalorder %s112, %s113
      %p122 = scmp.eq.s32.totalorder %s18, 0
      %p123 = por %p121, %p122
      %p124 = scmp.ne.s32.totalorder %s112, %s113
      %p125 = scmp.eq.s32.totalorder %s19, 1
      %p126 = por %p124, %p125
      %p128 = scmp.ne.s32.totalorder %s113, %s127
      %p129 = scmp.eq.s32.totalorder %s19, 0
      %p130 = por %p128, %p129
      %s132 = sadd.s32 %s131, 1
      %p135 = scmp.eq.s32.totalorder %s13, 1
      %p136 = scmp.ne.s32.totalorder %s131, %s133
      %p137 = scmp.eq.s32.totalorder %s13, 0
      %p138 = por %p136, %p137
      %p139 = scmp.ne.s32.totalorder %s131, %s133
      %p140 = scmp.eq.s32.totalorder %s18, 1
      %p141 = por %p139, %p140
      %p142 = scmp.ne.s32.totalorder %s133, %s134
      %p143 = scmp.eq.s32.totalorder %s18, 0
      %p144 = por %p142, %p143
      %p145 = scmp.ne.s32.totalorder %s133, %s134
      %p146 = scmp.eq.s32.totalorder %s19, 1
      %p147 = por %p145, %p146
      %p149 = scmp.ne.s32.totalorder %s134, %s148
      %p150 = scmp.eq.s32.totalorder %s19, 0
      %p151 = por %p149, %p150
      %s152 = ssub.s32 %s13, %s20
      %p153 = scmp.eq.s32.totalorder %s152, 0
      %s155 = sadd.s32 %s154, 1
      %s156 = scalar_select %p153, %s154, %s155
      %p159 = pneg %p153
      %p160 = scmp.eq.s32.totalorder %s13, 1
      %p161 = por %p159, %p160
      %p162 = scmp.ne.s32.totalorder %s154, %s157
      %p163 = scmp.eq.s32.totalorder %s13, 0
      %p164 = por %p162, %p163
      %p165 = scmp.ne.s32.totalorder %s154, %s157
      %p166 = scmp.eq.s32.totalorder %s18, 1
      %p167 = por %p165, %p166
      %p168 = scmp.ne.s32.totalorder %s157, %s158
      %p169 = scmp.eq.s32.totalorder %s18, 0
      %p170 = por %p168, %p169
      %p171 = scmp.ne.s32.totalorder %s157, %s158
      %p172 = scmp.eq.s32.totalorder %s19, 1
      %p173 = por %p171, %p172
      %p175 = scmp.ne.s32.totalorder %s158, %s174
      %p176 = scmp.eq.s32.totalorder %s19, 0
      %p177 = por %p175, %p176
      %p178 = scmp.le.s32.totalorder 1, %s13
      %p179 = scmp.lt.s32.totalorder %s13, 3
      %p180 = pnand %p178, %p179
      %p181 = pneg %p180
      // Predicated region
      $region9: #{tpu_custom_call.1} parent=5 // pred_check
        _
      $region10: #{tpu_custom_call.1} parent=5 // pred_check_branch
        %183 = sbr.rel (%p180) target = $region12
      $region11: #{tpu_custom_call.1} parent=5 // pred_region
        %s184 = ssub.s32 %s13, 1
        // Predicated region
        $region13: #{tpu_custom_call.1} parent=11 // pred_check
          %p185 = pneg %p60
        $region14: #{tpu_custom_call.1} parent=11 // pred_check_branch
          %187 = sbr.rel (%p185) target = $region16
        $region15: #{tpu_custom_call.1} parent=11 // pred_region
          _
        $region16: #{tpu_custom_call.1} parent=11 // pred_fallthru
          _
        // Predicated region
        $region17: #{tpu_custom_call.1} parent=11 // pred_check
          %p188 = pneg %p81
        $region18: #{tpu_custom_call.1} parent=11 // pred_check_branch
          %190 = sbr.rel (%p188) target = $region20
        $region19: #{tpu_custom_call.1} parent=11 // pred_region
          _
        $region20: #{tpu_custom_call.1} parent=11 // pred_fallthru
          _
        // Predicated region
        $region21: #{tpu_custom_call.1} parent=11 // pred_check
          %p191 = pneg %p102
        $region22: #{tpu_custom_call.1} parent=11 // pred_check_branch
          %193 = sbr.rel (%p191) target = $region24
        $region23: #{tpu_custom_call.1} parent=11 // pred_region
          _
        $region24: #{tpu_custom_call.1} parent=11 // pred_fallthru
          _
        // Predicated region
        $region25: #{tpu_custom_call.1} parent=11 // pred_check
          %p194 = pneg %p123
        $region26: #{tpu_custom_call.1} parent=11 // pred_check_branch
          %196 = sbr.rel (%p194) target = $region28
        $region27: #{tpu_custom_call.1} parent=11 // pred_region
          %s198 = ssub.s32 512, 512
          %199 = vsyncadd [#allocation3], %s198
          %s200 = sshll.u32 [#allocation2], 4
          %s201 = int_to_ptr.vmem [resolvable:$true] %s200
          %206 = dma.hbm_to_vmem [thread:$0]  %s4, 512, %s201, [#allocation3], 128, 128, 8
        $region28: #{tpu_custom_call.1} parent=11 // pred_fallthru
          _
        // Predicated region
        $region29: #{tpu_custom_call.1} parent=11 // pred_check
          %p207 = pneg %p144
        $region30: #{tpu_custom_call.1} parent=11 // pred_check_branch
          %209 = sbr.rel (%p207) target = $region32
        $region31: #{tpu_custom_call.1} parent=11 // pred_region
          _
        $region32: #{tpu_custom_call.1} parent=11 // pred_fallthru
          _
      $region12: #{tpu_custom_call.1} parent=5 // pred_fallthru
        _
      %p210 = scmp.lt.s32.totalorder %s13, 2
      // Predicated region
      $region33: #{tpu_custom_call.1} parent=5 // pred_check
        %p211 = pneg %p210
      $region34: #{tpu_custom_call.1} parent=5 // pred_check_branch
        %213 = sbr.rel (%p211) target = $region36
      $region35: #{tpu_custom_call.1} parent=5 // pred_region
        // Predicated region
        $region37: #{tpu_custom_call.1} parent=35 // pred_check
          %p214 = pneg %p33
        $region38: #{tpu_custom_call.1} parent=35 // pred_check_branch
          %216 = sbr.rel (%p214) target = $region40
        $region39: #{tpu_custom_call.1} parent=35 // pred_region
          %s217 = smul.u32 4, %s13
          %p218 = scmp.lt.s32.totalorder %s217, 7
          %s219 = scalar_select %p218, %s217, 7
          %s220 = smul.addr %s219, 8
          %s221 = scalar_lea.vmem %s0, %s220
          %s222 = smul.u32 4, %s13
        $region40: #{tpu_custom_call.1} parent=35 // pred_fallthru
          _
      $region36: #{tpu_custom_call.1} parent=5 // pred_fallthru
        _
      %p223 = scmp.le.s32.totalorder 1, %s13
      %p224 = scmp.lt.s32.totalorder %s13, 3
      %p225 = pnand %p223, %p224
      %p226 = pneg %p225
      // Predicated region
      $region41: #{tpu_custom_call.1} parent=5 // pred_check
        _
      $region42: #{tpu_custom_call.1} parent=5 // pred_check_branch
        %228 = sbr.rel (%p225) target = $region44
      $region43: #{tpu_custom_call.1} parent=5 // pred_region
        %s229 = ssub.s32 %s13, 1
        // Predicated region
        $region45: #{tpu_custom_call.1} parent=43 // pred_check
          %p230 = pneg %p123
        $region46: #{tpu_custom_call.1} parent=43 // pred_check_branch
          %232 = sbr.rel (%p230) target = $region48
        $region47: #{tpu_custom_call.1} parent=43 // pred_region
          %233 = dma.done [#allocation3], 512
        $region48: #{tpu_custom_call.1} parent=43 // pred_fallthru
          _
        %s234 = smul.u32 4, %s18
        %p235 = scmp.lt.s32.totalorder %s234, 7
        %s236 = scalar_select %p235, %s234, 7
        %s237 = smul.addr %s236, 8
        %s238 = scalar_lea.vmem %s0, %s237
        %p239 = pneg %p39
        %p240 = pneg %p36
        %p241 = pneg %p60
        %p242 = pneg %p57
        %p243 = pneg %p81
        %p244 = pneg %p78
        %p245 = pneg %p102
        %p246 = pneg %p99
        %p247 = pneg %p123
        %p248 = pneg %p120
        %p249 = pneg %p144
        %p250 = pneg %p141
        %p251 = pneg %p170
        %p252 = pneg %p167
        %s253 = smul.u32 4, %s18
        %p254 = scmp.lt.s32.totalorder %s253, 7
        %s255 = scalar_select %p254, %s253, 7
        %s256 = smul.addr %s255, 8
        %s257 = scalar_lea.vmem %s6, %s256
        %s258 = smul.u32 4, %s18
        %p259 = scmp.lt.s32.totalorder %s258, 7
        %s260 = scalar_select %p259, %s258, 7
        %s261 = smul.addr %s260, 8
        %s262 = scalar_lea.vmem %s0, %s261
        %s263 = smul.u32 4, %s18
        %s264 = smul.u32 4, %s18
        %p265 = scmp.lt.s32.totalorder %s264, 7
        %s266 = scalar_select %p265, %s264, 7
        %s267 = smul.addr %s266, 8
        %s268 = scalar_lea.vmem %s6, %s267
        %s269 = smul.u32 4, %s18
        %v270 = vld [vmem:[%s5] sm:$0xff]
        %v271 = vld [vmem:[%s262] sm:$0xff]
        %v272 = vld [vmem:[%s262 + $0x8] sm:$0xff]
        %v273 = vld [vmem:[%s262 + $0x10] sm:$0xff]
        %v274 = vld [vmem:[%s262 + $0x18] sm:$0xff]
        %v275 = vld [vmem:[%s1] sm:$0xff]
        %v276 = vld [vmem:[%s1 + $0x8] sm:$0xff]
        %v277 = vld [vmem:[%s1 + $0x10] sm:$0xff]
        %v278 = vld [vmem:[%s1 + $0x18] sm:$0xff]
        %vm279 = vcmask 261120
        %v281 = vsel %vm279, %v271, 0
        %v284 = vsel %vm279, %v272, 0
        %v287 = vsel %vm279, %v273, 0
        %v290 = vsel %vm279, %v274, 0
        %292 = vmatprep.subr.mxu0 0.0
        %293 = vmatpush1.msra.mxu0 0.0
        %294 = vmatprep.subr.mxu0 0.0
        %295 = vmatpush1.msra.mxu0 0.0
        %296 = vmatprep.subr.mxu0 0.0
        %297 = vmatpush1.msra.mxu0 0.0
        %298 = vmatprep.subr.mxu0 0.0
        %299 = vmatpush1.msra.mxu0 0.0
        %300 = vmatprep.subr.mxu0 0.0
        %301 = vmatpush1.msra.mxu0 0.0
        %302 = vmatprep.subr.mxu0 0.0
        %303 = vmatpush1.msra.mxu0 0.0
        %304 = vmatprep.subr.mxu0 0.0
        %305 = vmatpush1.msra.mxu0 0.0
        %306 = vmatprep.subr.mxu0 0.0
        %307 = vmatpush1.msra.mxu0 0.0
        %308 = vmatprep.subr.mxu0 0.0
        %309 = vmatpush1.msra.mxu0 0.0
        %310 = vmatprep.subr.mxu0 0.0
        %311 = vmatpush1.msra.mxu0 0.0
        %312 = vmatprep.subr.mxu0 0.0
        %313 = vmatpush1.msra.mxu0 0.0
        %314 = vmatprep.subr.mxu0 0.0
        %315 = vmatpush1.msra.mxu0 0.0
        %316 = vmatprep.subr.mxu0 0.0
        %317 = vmatpush1.msra.mxu0 %v278
        %318 = vmatprep.subr.mxu0 0.0
        %319 = vmatpush1.msra.mxu0 %v277
        %320 = vmatprep.subr.mxu0 0.0
        %321 = vmatpush1.msra.mxu0 %v276
        %322 = vmatprep.subr.mxu0 0.0
        %323 = vmatpush1.msra.mxu0 %v275
        %324 = vmatprep.subr.mxu0 0.0
        %325 = vmatpush2.msra.mxu0 0.0
        %326 = vmatprep.subr.mxu0 0.0
        %327 = vmatpush2.msra.mxu0 0.0
        %328 = vmatprep.subr.mxu0 0.0
        %329 = vmatpush2.msra.mxu0 0.0
        %330 = vmatprep.subr.mxu0 0.0
        %331 = vmatpush2.msra.mxu0 0.0
        %332 = vmatprep.subr.mxu0 0.0
        %333 = vmatpush2.msra.mxu0 0.0
        %334 = vmatprep.subr.mxu0 0.0
        %335 = vmatpush2.msra.mxu0 0.0
        %336 = vmatprep.subr.mxu0 0.0
        %337 = vmatpush2.msra.mxu0 0.0
        %338 = vmatprep.subr.mxu0 0.0
        %339 = vmatpush2.msra.mxu0 0.0
        %340 = vmatprep.subr.mxu0 0.0
        %341 = vmatpush2.msra.mxu0 0.0
        %342 = vmatprep.subr.mxu0 0.0
        %343 = vmatpush2.msra.mxu0 0.0
        %344 = vmatprep.subr.mxu0 0.0
        %345 = vmatpush2.msra.mxu0 0.0
        %346 = vmatprep.subr.mxu0 0.0
        %347 = vmatpush2.msra.mxu0 0.0
        %348 = vmatprep.subr.mxu0 0.0
        %349 = vmatpush2.msra.mxu0 0.0
        %350 = vmatprep.subr.mxu0 0.0
        %351 = vmatpush2.msra.mxu0 0.0
        %352 = vmatprep.subr.mxu0 0.0
        %353 = vmatpush2.msra.mxu0 0.0
        %354 = vmatprep.subr.mxu0 0.0
        %355 = vmatpush2.msra.mxu0 0.0
        %356 = vmatprep.mubr.f32.mxu0 0.0
        %357 = vmatmul.mubr.f32.gmra.mxu0 %v281
        %v358 = vpop.f32.mrf.mxu0
        %v359 = vadd.f32 0.0, %v358
        %v360 = vpop.f32.mrf.mxu0
        %361 = vmatprep.mubr.f32.mxu0 0.0
        %362 = vmatmul.mubr.f32.gmra.mxu0 %v284
        %v363 = vpop.f32.mrf.mxu0
        %v364 = vadd.f32 0.0, %v363
        %v365 = vpop.f32.mrf.mxu0
        %366 = vmatprep.mubr.f32.mxu0 0.0
        %367 = vmatmul.mubr.f32.gmra.mxu0 %v287
        %v368 = vpop.f32.mrf.mxu0
        %v369 = vadd.f32 0.0, %v368
        %v370 = vpop.f32.mrf.mxu0
        %371 = vmatprep.mubr.f32.mxu0 0.0
        %372 = vmatmul.mubr.f32.gmra.mxu0 %v290
        %v373 = vpop.f32.mrf.mxu0
        %v374 = vadd.f32 0.0, %v373
        %v375 = vpop.f32.mrf.mxu0
        %376 = vdwg.mxu0
        %v377 = vld [vmem:[%s2] sm:$0xff]
        %v378 = vld [vmem:[%s2 + $0x8] sm:$0xff]
        %v379 = vld [vmem:[%s2 + $0x10] sm:$0xff]
        %v380 = vld [vmem:[%s2 + $0x18] sm:$0xff]
        %v382 = vsel %vm279, %v377, 0
        %v385 = vsel %vm279, %v378, 0
        %v388 = vsel %vm279, %v379, 0
        %v391 = vsel %vm279, %v380, 0
        %393 = vmatprep.subr.mxu0 0.0
        %394 = vmatpush1.xpose.msra.mxu0 0.0
        %395 = vmatprep.subr.mxu0 0.0
        %396 = vmatpush1.xpose.msra.mxu0 0.0
        %397 = vmatprep.subr.mxu0 0.0
        %398 = vmatpush1.xpose.msra.mxu0 0.0
        %399 = vmatprep.subr.mxu0 0.0
        %400 = vmatpush1.xpose.msra.mxu0 0.0
        %401 = vmatprep.subr.mxu0 0.0
        %402 = vmatpush1.xpose.msra.mxu0 0.0
        %403 = vmatprep.subr.mxu0 0.0
        %404 = vmatpush1.xpose.msra.mxu0 0.0
        %405 = vmatprep.subr.mxu0 0.0
        %406 = vmatpush1.xpose.msra.mxu0 0.0
        %407 = vmatprep.subr.mxu0 0.0
        %408 = vmatpush1.xpose.msra.mxu0 0.0
        %409 = vmatprep.subr.mxu0 0.0
        %410 = vmatpush1.xpose.msra.mxu0 0.0
        %411 = vmatprep.subr.mxu0 0.0
        %412 = vmatpush1.xpose.msra.mxu0 0.0
        %413 = vmatprep.subr.mxu0 0.0
        %414 = vmatpush1.xpose.msra.mxu0 0.0
        %415 = vmatprep.subr.mxu0 0.0
        %416 = vmatpush1.xpose.msra.mxu0 0.0
        %417 = vmatprep.subr.mxu0 0.0
        %418 = vmatpush1.xpose.msra.mxu0 %v290
        %419 = vmatprep.subr.mxu0 0.0
        %420 = vmatpush1.xpose.msra.mxu0 %v287
        %421 = vmatprep.subr.mxu0 0.0
        %422 = vmatpush1.xpose.msra.mxu0 %v284
        %423 = vmatprep.subr.mxu0 0.0
        %424 = vmatpush1.xpose.msra.mxu0 %v281
        %425 = vmatprep.subr.mxu0 0.0
        %426 = vmatpush2.xpose.msra.mxu0 0.0
        %427 = vmatprep.subr.mxu0 0.0
        %428 = vmatpush2.xpose.msra.mxu0 0.0
        %429 = vmatprep.subr.mxu0 0.0
        %430 = vmatpush2.xpose.msra.mxu0 0.0
        %431 = vmatprep.subr.mxu0 0.0
        %432 = vmatpush2.xpose.msra.mxu0 0.0
        %433 = vmatprep.subr.mxu0 0.0
        %434 = vmatpush2.xpose.msra.mxu0 0.0
        %435 = vmatprep.subr.mxu0 0.0
        %436 = vmatpush2.xpose.msra.mxu0 0.0
        %437 = vmatprep.subr.mxu0 0.0
        %438 = vmatpush2.xpose.msra.mxu0 0.0
        %439 = vmatprep.subr.mxu0 0.0
        %440 = vmatpush2.xpose.msra.mxu0 0.0
        %441 = vmatprep.subr.mxu0 0.0
        %442 = vmatpush2.xpose.msra.mxu0 0.0
        %443 = vmatprep.subr.mxu0 0.0
        %444 = vmatpush2.xpose.msra.mxu0 0.0
        %445 = vmatprep.subr.mxu0 0.0
        %446 = vmatpush2.xpose.msra.mxu0 0.0
        %447 = vmatprep.subr.mxu0 0.0
        %448 = vmatpush2.xpose.msra.mxu0 0.0
        %449 = vmatprep.subr.mxu0 0.0
        %450 = vmatpush2.xpose.msra.mxu0 0.0
        %451 = vmatprep.subr.mxu0 0.0
        %452 = vmatpush2.xpose.msra.mxu0 0.0
        %453 = vmatprep.subr.mxu0 0.0
        %454 = vmatpush2.xpose.msra.mxu0 0.0
        %455 = vmatprep.subr.mxu0 0.0
        %456 = vmatpush2.xpose.msra.mxu0 0.0
        %457 = vmatprep.mubr.f32.mxu0 0.0
        %458 = vmatmul.mubr.f32.gmra.mxu0 %v382
        %v459 = vpop.f32.mrf.mxu0
        %v460 = vadd.f32 0.0, %v459
        %v461 = vpop.f32.mrf.mxu0
        %462 = vmatprep.mubr.f32.mxu0 0.0
        %463 = vmatmul.mubr.f32.gmra.mxu0 %v385
        %v464 = vpop.f32.mrf.mxu0
        %v465 = vadd.f32 0.0, %v464
        %v466 = vpop.f32.mrf.mxu0
        %467 = vmatprep.mubr.f32.mxu0 0.0
        %468 = vmatmul.mubr.f32.gmra.mxu0 %v388
        %v469 = vpop.f32.mrf.mxu0
        %v470 = vadd.f32 0.0, %v469
        %v471 = vpop.f32.mrf.mxu0
        %472 = vmatprep.mubr.f32.mxu0 0.0
        %473 = vmatmul.mubr.f32.gmra.mxu0 %v391
        %v474 = vpop.f32.mrf.mxu0
        %v475 = vadd.f32 0.0, %v474
        %v476 = vpop.f32.mrf.mxu0
        %477 = vdwg.mxu0
        %v478 = vlaneseq
        %v479 = vshrl.u32 %v478, 7
        %vm480 = vcmp.eq.s32.totalorder %v479, 0
        %vm481 = vcmp.eq.s32.totalorder %v479, 1
        %vm482 = vcmp.eq.s32.totalorder %v479, 2
        %vm483 = vcmp.eq.s32.totalorder %v479, 3
        %vm484 = vcmp.eq.s32.totalorder %v479, 4
        %vm485 = vcmp.eq.s32.totalorder %v479, 5
        %vm486 = vcmp.eq.s32.totalorder %v479, 6
        %vm487 = vcmp.eq.s32.totalorder %v479, 7
        %489 = vrot.lane.b32.xlu0 %v359, 96
        %v490 = vpop.permute.xlu0 %489
        %vm491 = vcmask 64512
        %v492 = vsel %vm491, %v490, 0
        %v494 = vsel %vm491, %v359, 0
        %496 = vmatprep.subr.mxu0 0.0
        %497 = vmatpush1.xpose.msra.mxu0 0.0
        %498 = vmatprep.subr.mxu0 0.0
        %499 = vmatpush1.xpose.msra.mxu0 0.0
        %500 = vmatprep.subr.mxu0 0.0
        %501 = vmatpush1.xpose.msra.mxu0 0.0
        %502 = vmatprep.subr.mxu0 0.0
        %503 = vmatpush1.xpose.msra.mxu0 0.0
        %504 = vmatprep.subr.mxu0 0.0
        %505 = vmatpush1.xpose.msra.mxu0 0.0
        %506 = vmatprep.subr.mxu0 0.0
        %507 = vmatpush1.xpose.msra.mxu0 0.0
        %508 = vmatprep.subr.mxu0 0.0
        %509 = vmatpush1.xpose.msra.mxu0 0.0
        %510 = vmatprep.subr.mxu0 0.0
        %511 = vmatpush1.xpose.msra.mxu0 0.0
        %512 = vmatprep.subr.mxu0 0.0
        %513 = vmatpush1.xpose.msra.mxu0 0.0
        %514 = vmatprep.subr.mxu0 0.0
        %515 = vmatpush1.xpose.msra.mxu0 0.0
        %516 = vmatprep.subr.mxu0 0.0
        %517 = vmatpush1.xpose.msra.mxu0 0.0
        %518 = vmatprep.subr.mxu0 0.0
        %519 = vmatpush1.xpose.msra.mxu0 0.0
        %520 = vmatprep.subr.mxu0 0.0
        %521 = vmatpush1.xpose.msra.mxu0 0.0
        %522 = vmatprep.subr.mxu0 0.0
        %523 = vmatpush1.xpose.msra.mxu0 0.0
        %524 = vmatprep.subr.mxu0 0.0
        %525 = vmatpush1.xpose.msra.mxu0 0.0
        %526 = vmatprep.subr.mxu0 0.0
        %527 = vmatpush1.xpose.msra.mxu0 %v494
        %528 = vmatprep.subr.mxu0 0.0
        %529 = vmatpush2.xpose.msra.mxu0 0.0
        %530 = vmatprep.subr.mxu0 0.0
        %531 = vmatpush2.xpose.msra.mxu0 0.0
        %532 = vmatprep.subr.mxu0 0.0
        %533 = vmatpush2.xpose.msra.mxu0 0.0
        %534 = vmatprep.subr.mxu0 0.0
        %535 = vmatpush2.xpose.msra.mxu0 0.0
        %536 = vmatprep.subr.mxu0 0.0
        %537 = vmatpush2.xpose.msra.mxu0 0.0
        %538 = vmatprep.subr.mxu0 0.0
        %539 = vmatpush2.xpose.msra.mxu0 0.0
        %540 = vmatprep.subr.mxu0 0.0
        %541 = vmatpush2.xpose.msra.mxu0 0.0
        %542 = vmatprep.subr.mxu0 0.0
        %543 = vmatpush2.xpose.msra.mxu0 0.0
        %544 = vmatprep.subr.mxu0 0.0
        %545 = vmatpush2.xpose.msra.mxu0 0.0
        %546 = vmatprep.subr.mxu0 0.0
        %547 = vmatpush2.xpose.msra.mxu0 0.0
        %548 = vmatprep.subr.mxu0 0.0
        %549 = vmatpush2.xpose.msra.mxu0 0.0
        %550 = vmatprep.subr.mxu0 0.0
        %551 = vmatpush2.xpose.msra.mxu0 0.0
        %552 = vmatprep.subr.mxu0 0.0
        %553 = vmatpush2.xpose.msra.mxu0 0.0
        %554 = vmatprep.subr.mxu0 0.0
        %555 = vmatpush2.xpose.msra.mxu0 0.0
        %556 = vmatprep.subr.mxu0 0.0
        %557 = vmatpush2.xpose.msra.mxu0 0.0
        %558 = vmatprep.subr.mxu0 0.0
        %559 = vmatpush2.xpose.msra.mxu0 0.0
        %560 = vmatprep.mubr.f32.mxu0 0.0
        %561 = vmatmul.mubr.f32.gmra.mxu0 %v492
        %v562 = vpop.f32.mrf.mxu0
        %v563 = vadd.f32 0.0, %v562
        %v564 = vpop.f32.mrf.mxu0
        %565 = vdwg.mxu0
        %v566 = vsel %vm491, %v563, -inf
        %v567 = vrot.slane %v566, 4
        %v568 = vmax.f32 %v566, %v567
        %v569 = vrot.slane %v568, 2
        %v570 = vmax.f32 %v568, %v569
        %v571 = vrot.slane %v570, 1
        %v572 = vmax.f32 %v570, %v571
        %v573 = vsub.f32 %v563, %v572
        %v574 = vmul.f32 %v573, 1.442695
        %v575 = vpow.pop %v574
        %v576 = vsel %vm491, %v575, 0.0
        %v577 = vrot.slane %v576, 4
        %v578 = vadd.f32 %v576, %v577
        %v579 = vrot.slane %v578, 2
        %v580 = vadd.f32 %v578, %v579
        %v581 = vrot.slane %v580, 1
        %v582 = vadd.f32 %v580, %v581
        %v583 = vrcp.pop %v582
        %v584 = vmul.f32 %v575, %v583
        %v586 = vsel %vm491, %v460, 0
        %588 = vmatprep.subr.mxu0 0.0
        %589 = vmatpush1.msra.mxu0 0.0
        %590 = vmatprep.subr.mxu0 0.0
        %591 = vmatpush1.msra.mxu0 0.0
        %592 = vmatprep.subr.mxu0 0.0
        %593 = vmatpush1.msra.mxu0 0.0
        %594 = vmatprep.subr.mxu0 0.0
        %595 = vmatpush1.msra.mxu0 0.0
        %596 = vmatprep.subr.mxu0 0.0
        %597 = vmatpush1.msra.mxu0 0.0
        %598 = vmatprep.subr.mxu0 0.0
        %599 = vmatpush1.msra.mxu0 0.0
        %600 = vmatprep.subr.mxu0 0.0
        %601 = vmatpush1.msra.mxu0 0.0
        %602 = vmatprep.subr.mxu0 0.0
        %603 = vmatpush1.msra.mxu0 0.0
        %604 = vmatprep.subr.mxu0 0.0
        %605 = vmatpush1.msra.mxu0 0.0
        %606 = vmatprep.subr.mxu0 0.0
        %607 = vmatpush1.msra.mxu0 0.0
        %608 = vmatprep.subr.mxu0 0.0
        %609 = vmatpush1.msra.mxu0 0.0
        %610 = vmatprep.subr.mxu0 0.0
        %611 = vmatpush1.msra.mxu0 0.0
        %612 = vmatprep.subr.mxu0 0.0
        %613 = vmatpush1.msra.mxu0 0.0
        %614 = vmatprep.subr.mxu0 0.0
        %615 = vmatpush1.msra.mxu0 0.0
        %616 = vmatprep.subr.mxu0 0.0
        %617 = vmatpush1.msra.mxu0 0.0
        %618 = vmatprep.subr.mxu0 0.0
        %619 = vmatpush1.msra.mxu0 %v584
        %620 = vmatprep.subr.mxu0 0.0
        %621 = vmatpush2.msra.mxu0 0.0
        %622 = vmatprep.subr.mxu0 0.0
        %623 = vmatpush2.msra.mxu0 0.0
        %624 = vmatprep.subr.mxu0 0.0
        %625 = vmatpush2.msra.mxu0 0.0
        %626 = vmatprep.subr.mxu0 0.0
        %627 = vmatpush2.msra.mxu0 0.0
        %628 = vmatprep.subr.mxu0 0.0
        %629 = vmatpush2.msra.mxu0 0.0
        %630 = vmatprep.subr.mxu0 0.0
        %631 = vmatpush2.msra.mxu0 0.0
        %632 = vmatprep.subr.mxu0 0.0
        %633 = vmatpush2.msra.mxu0 0.0
        %634 = vmatprep.subr.mxu0 0.0
        %635 = vmatpush2.msra.mxu0 0.0
        %636 = vmatprep.subr.mxu0 0.0
        %637 = vmatpush2.msra.mxu0 0.0
        %638 = vmatprep.subr.mxu0 0.0
        %639 = vmatpush2.msra.mxu0 0.0
        %640 = vmatprep.subr.mxu0 0.0
        %641 = vmatpush2.msra.mxu0 0.0
        %642 = vmatprep.subr.mxu0 0.0
        %643 = vmatpush2.msra.mxu0 0.0
        %644 = vmatprep.subr.mxu0 0.0
        %645 = vmatpush2.msra.mxu0 0.0
        %646 = vmatprep.subr.mxu0 0.0
        %647 = vmatpush2.msra.mxu0 0.0
        %648 = vmatprep.subr.mxu0 0.0
        %649 = vmatpush2.msra.mxu0 0.0
        %650 = vmatprep.subr.mxu0 0.0
        %651 = vmatpush2.msra.mxu0 0.0
        %652 = vmatprep.mubr.f32.mxu0 0.0
        %653 = vmatmul.mubr.f32.gmra.mxu0 %v586
        %v654 = vpop.f32.mrf.mxu0
        %v655 = vadd.f32 0.0, %v654
        %v656 = vpop.f32.mrf.mxu0
        %657 = vdwg.mxu0
        %658 = vrot.lane.b32.xlu0 %v359, 88
        %v659 = vpop.permute.xlu0 %658
        %660 = vrot.lane.b32.xlu0 %v359, 120
        %v661 = vpop.permute.xlu0 %660
        %v662 = vsel %vm491, %v659, 0
        %v664 = vsel %vm491, %v661, 0
        %666 = vmatprep.subr.mxu0 0.0
        %667 = vmatpush1.xpose.msra.mxu0 0.0
        %668 = vmatprep.subr.mxu0 0.0
        %669 = vmatpush1.xpose.msra.mxu0 0.0
        %670 = vmatprep.subr.mxu0 0.0
        %671 = vmatpush1.xpose.msra.mxu0 0.0
        %672 = vmatprep.subr.mxu0 0.0
        %673 = vmatpush1.xpose.msra.mxu0 0.0
        %674 = vmatprep.subr.mxu0 0.0
        %675 = vmatpush1.xpose.msra.mxu0 0.0
        %676 = vmatprep.subr.mxu0 0.0
        %677 = vmatpush1.xpose.msra.mxu0 0.0
        %678 = vmatprep.subr.mxu0 0.0
        %679 = vmatpush1.xpose.msra.mxu0 0.0
        %680 = vmatprep.subr.mxu0 0.0
        %681 = vmatpush1.xpose.msra.mxu0 0.0
        %682 = vmatprep.subr.mxu0 0.0
        %683 = vmatpush1.xpose.msra.mxu0 0.0
        %684 = vmatprep.subr.mxu0 0.0
        %685 = vmatpush1.xpose.msra.mxu0 0.0
        %686 = vmatprep.subr.mxu0 0.0
        %687 = vmatpush1.xpose.msra.mxu0 0.0
        %688 = vmatprep.subr.mxu0 0.0
        %689 = vmatpush1.xpose.msra.mxu0 0.0
        %690 = vmatprep.subr.mxu0 0.0
        %691 = vmatpush1.xpose.msra.mxu0 0.0
        %692 = vmatprep.subr.mxu0 0.0
        %693 = vmatpush1.xpose.msra.mxu0 0.0
        %694 = vmatprep.subr.mxu0 0.0
        %695 = vmatpush1.xpose.msra.mxu0 0.0
        %696 = vmatprep.subr.mxu0 0.0
        %697 = vmatpush1.xpose.msra.mxu0 %v664
        %698 = vmatprep.subr.mxu0 0.0
        %699 = vmatpush2.xpose.msra.mxu0 0.0
        %700 = vmatprep.subr.mxu0 0.0
        %701 = vmatpush2.xpose.msra.mxu0 0.0
        %702 = vmatprep.subr.mxu0 0.0
        %703 = vmatpush2.xpose.msra.mxu0 0.0
        %704 = vmatprep.subr.mxu0 0.0
        %705 = vmatpush2.xpose.msra.mxu0 0.0
        %706 = vmatprep.subr.mxu0 0.0
        %707 = vmatpush2.xpose.msra.mxu0 0.0
        %708 = vmatprep.subr.mxu0 0.0
        %709 = vmatpush2.xpose.msra.mxu0 0.0
        %710 = vmatprep.subr.mxu0 0.0
        %711 = vmatpush2.xpose.msra.mxu0 0.0
        %712 = vmatprep.subr.mxu0 0.0
        %713 = vmatpush2.xpose.msra.mxu0 0.0
        %714 = vmatprep.subr.mxu0 0.0
        %715 = vmatpush2.xpose.msra.mxu0 0.0
        %716 = vmatprep.subr.mxu0 0.0
        %717 = vmatpush2.xpose.msra.mxu0 0.0
        %718 = vmatprep.subr.mxu0 0.0
        %719 = vmatpush2.xpose.msra.mxu0 0.0
        %720 = vmatprep.subr.mxu0 0.0
        %721 = vmatpush2.xpose.msra.mxu0 0.0
        %722 = vmatprep.subr.mxu0 0.0
        %723 = vmatpush2.xpose.msra.mxu0 0.0
        %724 = vmatprep.subr.mxu0 0.0
        %725 = vmatpush2.xpose.msra.mxu0 0.0
        %726 = vmatprep.subr.mxu0 0.0
        %727 = vmatpush2.xpose.msra.mxu0 0.0
        %728 = vmatprep.subr.mxu0 0.0
        %729 = vmatpush2.xpose.msra.mxu0 0.0
        %730 = vmatprep.mubr.f32.mxu0 0.0
        %731 = vmatmul.mubr.f32.gmra.mxu0 %v662
        %v732 = vpop.f32.mrf.mxu0
        %v733 = vadd.f32 0.0, %v732
        %v734 = vpop.f32.mrf.mxu0
        %735 = vdwg.mxu0
        %v736 = vsel %vm491, %v733, -inf
        %v737 = vrot.slane %v736, 4
        %v738 = vmax.f32 %v736, %v737
        %v739 = vrot.slane %v738, 2
        %v740 = vmax.f32 %v738, %v739
        %v741 = vrot.slane %v740, 1
        %v742 = vmax.f32 %v740, %v741
        %v743 = vsub.f32 %v733, %v742
        %v744 = vmul.f32 %v743, 1.442695
        %v745 = vpow.pop %v744
        %v746 = vsel %vm491, %v745, 0.0
        %v747 = vrot.slane %v746, 4
        %v748 = vadd.f32 %v746, %v747
        %v749 = vrot.slane %v748, 2
        %v750 = vadd.f32 %v748, %v749
        %v751 = vrot.slane %v750, 1
        %v752 = vadd.f32 %v750, %v751
        %v753 = vrcp.pop %v752
        %v754 = vmul.f32 %v745, %v753
        %v756 = vsel %vm491, %v465, 0
        %758 = vmatprep.subr.mxu0 0.0
        %759 = vmatpush1.msra.mxu0 0.0
        %760 = vmatprep.subr.mxu0 0.0
        %761 = vmatpush1.msra.mxu0 0.0
        %762 = vmatprep.subr.mxu0 0.0
        %763 = vmatpush1.msra.mxu0 0.0
        %764 = vmatprep.subr.mxu0 0.0
        %765 = vmatpush1.msra.mxu0 0.0
        %766 = vmatprep.subr.mxu0 0.0
        %767 = vmatpush1.msra.mxu0 0.0
        %768 = vmatprep.subr.mxu0 0.0
        %769 = vmatpush1.msra.mxu0 0.0
        %770 = vmatprep.subr.mxu0 0.0
        %771 = vmatpush1.msra.mxu0 0.0
        %772 = vmatprep.subr.mxu0 0.0
        %773 = vmatpush1.msra.mxu0 0.0
        %774 = vmatprep.subr.mxu0 0.0
        %775 = vmatpush1.msra.mxu0 0.0
        %776 = vmatprep.subr.mxu0 0.0
        %777 = vmatpush1.msra.mxu0 0.0
        %778 = vmatprep.subr.mxu0 0.0
        %779 = vmatpush1.msra.mxu0 0.0
        %780 = vmatprep.subr.mxu0 0.0
        %781 = vmatpush1.msra.mxu0 0.0
        %782 = vmatprep.subr.mxu0 0.0
        %783 = vmatpush1.msra.mxu0 0.0
        %784 = vmatprep.subr.mxu0 0.0
        %785 = vmatpush1.msra.mxu0 0.0
        %786 = vmatprep.subr.mxu0 0.0
        %787 = vmatpush1.msra.mxu0 0.0
        %788 = vmatprep.subr.mxu0 0.0
        %789 = vmatpush1.msra.mxu0 %v754
        %790 = vmatprep.subr.mxu0 0.0
        %791 = vmatpush2.msra.mxu0 0.0
        %792 = vmatprep.subr.mxu0 0.0
        %793 = vmatpush2.msra.mxu0 0.0
        %794 = vmatprep.subr.mxu0 0.0
        %795 = vmatpush2.msra.mxu0 0.0
        %796 = vmatprep.subr.mxu0 0.0
        %797 = vmatpush2.msra.mxu0 0.0
        %798 = vmatprep.subr.mxu0 0.0
        %799 = vmatpush2.msra.mxu0 0.0
        %800 = vmatprep.subr.mxu0 0.0
        %801 = vmatpush2.msra.mxu0 0.0
        %802 = vmatprep.subr.mxu0 0.0
        %803 = vmatpush2.msra.mxu0 0.0
        %804 = vmatprep.subr.mxu0 0.0
        %805 = vmatpush2.msra.mxu0 0.0
        %806 = vmatprep.subr.mxu0 0.0
        %807 = vmatpush2.msra.mxu0 0.0
        %808 = vmatprep.subr.mxu0 0.0
        %809 = vmatpush2.msra.mxu0 0.0
        %810 = vmatprep.subr.mxu0 0.0
        %811 = vmatpush2.msra.mxu0 0.0
        %812 = vmatprep.subr.mxu0 0.0
        %813 = vmatpush2.msra.mxu0 0.0
        %814 = vmatprep.subr.mxu0 0.0
        %815 = vmatpush2.msra.mxu0 0.0
        %816 = vmatprep.subr.mxu0 0.0
        %817 = vmatpush2.msra.mxu0 0.0
        %818 = vmatprep.subr.mxu0 0.0
        %819 = vmatpush2.msra.mxu0 0.0
        %820 = vmatprep.subr.mxu0 0.0
        %821 = vmatpush2.msra.mxu0 0.0
        %822 = vmatprep.mubr.f32.mxu0 0.0
        %823 = vmatmul.mubr.f32.gmra.mxu0 %v756
        %v824 = vpop.f32.mrf.mxu0
        %v825 = vadd.f32 0.0, %v824
        %v826 = vpop.f32.mrf.mxu0
        %827 = vdwg.mxu0
        %828 = vrot.lane.b32.xlu0 %v359, 80
        %v829 = vpop.permute.xlu0 %828
        %830 = vrot.lane.b32.xlu0 %v359, 112
        %v831 = vpop.permute.xlu0 %830
        %v832 = vsel %vm491, %v829, 0
        %v834 = vsel %vm491, %v831, 0
        %836 = vmatprep.subr.mxu0 0.0
        %837 = vmatpush1.xpose.msra.mxu0 0.0
        %838 = vmatprep.subr.mxu0 0.0
        %839 = vmatpush1.xpose.msra.mxu0 0.0
        %840 = vmatprep.subr.mxu0 0.0
        %841 = vmatpush1.xpose.msra.mxu0 0.0
        %842 = vmatprep.subr.mxu0 0.0
        %843 = vmatpush1.xpose.msra.mxu0 0.0
        %844 = vmatprep.subr.mxu0 0.0
        %845 = vmatpush1.xpose.msra.mxu0 0.0
        %846 = vmatprep.subr.mxu0 0.0
        %847 = vmatpush1.xpose.msra.mxu0 0.0
        %848 = vmatprep.subr.mxu0 0.0
        %849 = vmatpush1.xpose.msra.mxu0 0.0
        %850 = vmatprep.subr.mxu0 0.0
        %851 = vmatpush1.xpose.msra.mxu0 0.0
        %852 = vmatprep.subr.mxu0 0.0
        %853 = vmatpush1.xpose.msra.mxu0 0.0
        %854 = vmatprep.subr.mxu0 0.0
        %855 = vmatpush1.xpose.msra.mxu0 0.0
        %856 = vmatprep.subr.mxu0 0.0
        %857 = vmatpush1.xpose.msra.mxu0 0.0
        %858 = vmatprep.subr.mxu0 0.0
        %859 = vmatpush1.xpose.msra.mxu0 0.0
        %860 = vmatprep.subr.mxu0 0.0
        %861 = vmatpush1.xpose.msra.mxu0 0.0
        %862 = vmatprep.subr.mxu0 0.0
        %863 = vmatpush1.xpose.msra.mxu0 0.0
        %864 = vmatprep.subr.mxu0 0.0
        %865 = vmatpush1.xpose.msra.mxu0 0.0
        %866 = vmatprep.subr.mxu0 0.0
        %867 = vmatpush1.xpose.msra.mxu0 %v834
        %868 = vmatprep.subr.mxu0 0.0
        %869 = vmatpush2.xpose.msra.mxu0 0.0
        %870 = vmatprep.subr.mxu0 0.0
        %871 = vmatpush2.xpose.msra.mxu0 0.0
        %872 = vmatprep.subr.mxu0 0.0
        %873 = vmatpush2.xpose.msra.mxu0 0.0
        %874 = vmatprep.subr.mxu0 0.0
        %875 = vmatpush2.xpose.msra.mxu0 0.0
        %876 = vmatprep.subr.mxu0 0.0
        %877 = vmatpush2.xpose.msra.mxu0 0.0
        %878 = vmatprep.subr.mxu0 0.0
        %879 = vmatpush2.xpose.msra.mxu0 0.0
        %880 = vmatprep.subr.mxu0 0.0
        %881 = vmatpush2.xpose.msra.mxu0 0.0
        %882 = vmatprep.subr.mxu0 0.0
        %883 = vmatpush2.xpose.msra.mxu0 0.0
        %884 = vmatprep.subr.mxu0 0.0
        %885 = vmatpush2.xpose.msra.mxu0 0.0
        %886 = vmatprep.subr.mxu0 0.0
        %887 = vmatpush2.xpose.msra.mxu0 0.0
        %888 = vmatprep.subr.mxu0 0.0
        %889 = vmatpush2.xpose.msra.mxu0 0.0
        %890 = vmatprep.subr.mxu0 0.0
        %891 = vmatpush2.xpose.msra.mxu0 0.0
        %892 = vmatprep.subr.mxu0 0.0
        %893 = vmatpush2.xpose.msra.mxu0 0.0
        %894 = vmatprep.subr.mxu0 0.0
        %895 = vmatpush2.xpose.msra.mxu0 0.0
        %896 = vmatprep.subr.mxu0 0.0
        %897 = vmatpush2.xpose.msra.mxu0 0.0
        %898 = vmatprep.subr.mxu0 0.0
        %899 = vmatpush2.xpose.msra.mxu0 0.0
        %900 = vmatprep.mubr.f32.mxu0 0.0
        %901 = vmatmul.mubr.f32.gmra.mxu0 %v832
        %v902 = vpop.f32.mrf.mxu0
        %v903 = vadd.f32 0.0, %v902
        %v904 = vpop.f32.mrf.mxu0
        %905 = vdwg.mxu0
        %v906 = vsel %vm491, %v903, -inf
        %v907 = vrot.slane %v906, 4
        %v908 = vmax.f32 %v906, %v907
        %v909 = vrot.slane %v908, 2
        %v910 = vmax.f32 %v908, %v909
        %v911 = vrot.slane %v910, 1
        %v912 = vmax.f32 %v910, %v911
        %v913 = vsub.f32 %v903, %v912
        %v914 = vmul.f32 %v913, 1.442695
        %v915 = vpow.pop %v914
        %v916 = vsel %vm491, %v915, 0.0
        %v917 = vrot.slane %v916, 4
        %v918 = vadd.f32 %v916, %v917
        %v919 = vrot.slane %v918, 2
        %v920 = vadd.f32 %v918, %v919
        %v921 = vrot.slane %v920, 1
        %v922 = vadd.f32 %v920, %v921
        %v923 = vrcp.pop %v922
        %v924 = vmul.f32 %v915, %v923
        %v926 = vsel %vm491, %v470, 0
        %928 = vmatprep.subr.mxu0 0.0
        %929 = vmatpush1.msra.mxu0 0.0
        %930 = vmatprep.subr.mxu0 0.0
        %931 = vmatpush1.msra.mxu0 0.0
        %932 = vmatprep.subr.mxu0 0.0
        %933 = vmatpush1.msra.mxu0 0.0
        %934 = vmatprep.subr.mxu0 0.0
        %935 = vmatpush1.msra.mxu0 0.0
        %936 = vmatprep.subr.mxu0 0.0
        %937 = vmatpush1.msra.mxu0 0.0
        %938 = vmatprep.subr.mxu0 0.0
        %939 = vmatpush1.msra.mxu0 0.0
        %940 = vmatprep.subr.mxu0 0.0
        %941 = vmatpush1.msra.mxu0 0.0
        %942 = vmatprep.subr.mxu0 0.0
        %943 = vmatpush1.msra.mxu0 0.0
        %944 = vmatprep.subr.mxu0 0.0
        %945 = vmatpush1.msra.mxu0 0.0
        %946 = vmatprep.subr.mxu0 0.0
        %947 = vmatpush1.msra.mxu0 0.0
        %948 = vmatprep.subr.mxu0 0.0
        %949 = vmatpush1.msra.mxu0 0.0
        %950 = vmatprep.subr.mxu0 0.0
        %951 = vmatpush1.msra.mxu0 0.0
        %952 = vmatprep.subr.mxu0 0.0
        %953 = vmatpush1.msra.mxu0 0.0
        %954 = vmatprep.subr.mxu0 0.0
        %955 = vmatpush1.msra.mxu0 0.0
        %956 = vmatprep.subr.mxu0 0.0
        %957 = vmatpush1.msra.mxu0 0.0
        %958 = vmatprep.subr.mxu0 0.0
        %959 = vmatpush1.msra.mxu0 %v924
        %960 = vmatprep.subr.mxu0 0.0
        %961 = vmatpush2.msra.mxu0 0.0
        %962 = vmatprep.subr.mxu0 0.0
        %963 = vmatpush2.msra.mxu0 0.0
        %964 = vmatprep.subr.mxu0 0.0
        %965 = vmatpush2.msra.mxu0 0.0
        %966 = vmatprep.subr.mxu0 0.0
        %967 = vmatpush2.msra.mxu0 0.0
        %968 = vmatprep.subr.mxu0 0.0
        %969 = vmatpush2.msra.mxu0 0.0
        %970 = vmatprep.subr.mxu0 0.0
        %971 = vmatpush2.msra.mxu0 0.0
        %972 = vmatprep.subr.mxu0 0.0
        %973 = vmatpush2.msra.mxu0 0.0
        %974 = vmatprep.subr.mxu0 0.0
        %975 = vmatpush2.msra.mxu0 0.0
        %976 = vmatprep.subr.mxu0 0.0
        %977 = vmatpush2.msra.mxu0 0.0
        %978 = vmatprep.subr.mxu0 0.0
        %979 = vmatpush2.msra.mxu0 0.0
        %980 = vmatprep.subr.mxu0 0.0
        %981 = vmatpush2.msra.mxu0 0.0
        %982 = vmatprep.subr.mxu0 0.0
        %983 = vmatpush2.msra.mxu0 0.0
        %984 = vmatprep.subr.mxu0 0.0
        %985 = vmatpush2.msra.mxu0 0.0
        %986 = vmatprep.subr.mxu0 0.0
        %987 = vmatpush2.msra.mxu0 0.0
        %988 = vmatprep.subr.mxu0 0.0
        %989 = vmatpush2.msra.mxu0 0.0
        %990 = vmatprep.subr.mxu0 0.0
        %991 = vmatpush2.msra.mxu0 0.0
        %992 = vmatprep.mubr.f32.mxu0 0.0
        %993 = vmatmul.mubr.f32.gmra.mxu0 %v926
        %v994 = vpop.f32.mrf.mxu0
        %v995 = vadd.f32 0.0, %v994
        %v996 = vpop.f32.mrf.mxu0
        %997 = vdwg.mxu0
        %998 = vrot.lane.b32.xlu0 %v359, 72
        %v999 = vpop.permute.xlu0 %998
        %1000 = vrot.lane.b32.xlu0 %v359, 104
        %v1001 = vpop.permute.xlu0 %1000
        %v1002 = vsel %vm491, %v999, 0
        %v1004 = vsel %vm491, %v1001, 0
        %1006 = vmatprep.subr.mxu0 0.0
        %1007 = vmatpush1.xpose.msra.mxu0 0.0
        %1008 = vmatprep.subr.mxu0 0.0
        %1009 = vmatpush1.xpose.msra.mxu0 0.0
        %1010 = vmatprep.subr.mxu0 0.0
        %1011 = vmatpush1.xpose.msra.mxu0 0.0
        %1012 = vmatprep.subr.mxu0 0.0
        %1013 = vmatpush1.xpose.msra.mxu0 0.0
        %1014 = vmatprep.subr.mxu0 0.0
        %1015 = vmatpush1.xpose.msra.mxu0 0.0
        %1016 = vmatprep.subr.mxu0 0.0
        %1017 = vmatpush1.xpose.msra.mxu0 0.0
        %1018 = vmatprep.subr.mxu0 0.0
        %1019 = vmatpush1.xpose.msra.mxu0 0.0
        %1020 = vmatprep.subr.mxu0 0.0
        %1021 = vmatpush1.xpose.msra.mxu0 0.0
        %1022 = vmatprep.subr.mxu0 0.0
        %1023 = vmatpush1.xpose.msra.mxu0 0.0
        %1024 = vmatprep.subr.mxu0 0.0
        %1025 = vmatpush1.xpose.msra.mxu0 0.0
        %1026 = vmatprep.subr.mxu0 0.0
        %1027 = vmatpush1.xpose.msra.mxu0 0.0
        %1028 = vmatprep.subr.mxu0 0.0
        %1029 = vmatpush1.xpose.msra.mxu0 0.0
        %1030 = vmatprep.subr.mxu0 0.0
        %1031 = vmatpush1.xpose.msra.mxu0 0.0
        %1032 = vmatprep.subr.mxu0 0.0
        %1033 = vmatpush1.xpose.msra.mxu0 0.0
        %1034 = vmatprep.subr.mxu0 0.0
        %1035 = vmatpush1.xpose.msra.mxu0 0.0
        %1036 = vmatprep.subr.mxu0 0.0
        %1037 = vmatpush1.xpose.msra.mxu0 %v1004
        %1038 = vmatprep.subr.mxu0 0.0
        %1039 = vmatpush2.xpose.msra.mxu0 0.0
        %1040 = vmatprep.subr.mxu0 0.0
        %1041 = vmatpush2.xpose.msra.mxu0 0.0
        %1042 = vmatprep.subr.mxu0 0.0
        %1043 = vmatpush2.xpose.msra.mxu0 0.0
        %1044 = vmatprep.subr.mxu0 0.0
        %1045 = vmatpush2.xpose.msra.mxu0 0.0
        %1046 = vmatprep.subr.mxu0 0.0
        %1047 = vmatpush2.xpose.msra.mxu0 0.0
        %1048 = vmatprep.subr.mxu0 0.0
        %1049 = vmatpush2.xpose.msra.mxu0 0.0
        %1050 = vmatprep.subr.mxu0 0.0
        %1051 = vmatpush2.xpose.msra.mxu0 0.0
        %1052 = vmatprep.subr.mxu0 0.0
        %1053 = vmatpush2.xpose.msra.mxu0 0.0
        %1054 = vmatprep.subr.mxu0 0.0
        %1055 = vmatpush2.xpose.msra.mxu0 0.0
        %1056 = vmatprep.subr.mxu0 0.0
        %1057 = vmatpush2.xpose.msra.mxu0 0.0
        %1058 = vmatprep.subr.mxu0 0.0
        %1059 = vmatpush2.xpose.msra.mxu0 0.0
        %1060 = vmatprep.subr.mxu0 0.0
        %1061 = vmatpush2.xpose.msra.mxu0 0.0
        %1062 = vmatprep.subr.mxu0 0.0
        %1063 = vmatpush2.xpose.msra.mxu0 0.0
        %1064 = vmatprep.subr.mxu0 0.0
        %1065 = vmatpush2.xpose.msra.mxu0 0.0
        %1066 = vmatprep.subr.mxu0 0.0
        %1067 = vmatpush2.xpose.msra.mxu0 0.0
        %1068 = vmatprep.subr.mxu0 0.0
        %1069 = vmatpush2.xpose.msra.mxu0 0.0
        %1070 = vmatprep.mubr.f32.mxu0 0.0
        %1071 = vmatmul.mubr.f32.gmra.mxu0 %v1002
        %v1072 = vpop.f32.mrf.mxu0
        %v1073 = vadd.f32 0.0, %v1072
        %v1074 = vpop.f32.mrf.mxu0
        %1075 = vdwg.mxu0
        %v1076 = vsel %vm491, %v1073, -inf
        %v1077 = vrot.slane %v1076, 4
        %v1078 = vmax.f32 %v1076, %v1077
        %v1079 = vrot.slane %v1078, 2
        %v1080 = vmax.f32 %v1078, %v1079
        %v1081 = vrot.slane %v1080, 1
        %v1082 = vmax.f32 %v1080, %v1081
        %v1083 = vsub.f32 %v1073, %v1082
        %v1084 = vmul.f32 %v1083, 1.442695
        %v1085 = vpow.pop %v1084
        %v1086 = vsel %vm491, %v1085, 0.0
        %v1087 = vrot.slane %v1086, 4
        %v1088 = vadd.f32 %v1086, %v1087
        %v1089 = vrot.slane %v1088, 2
        %v1090 = vadd.f32 %v1088, %v1089
        %v1091 = vrot.slane %v1090, 1
        %v1092 = vadd.f32 %v1090, %v1091
        %v1093 = vrcp.pop %v1092
        %v1094 = vmul.f32 %v1085, %v1093
        %v1096 = vsel %vm491, %v475, 0
        %1098 = vmatprep.subr.mxu0 0.0
        %1099 = vmatpush1.msra.mxu0 0.0
        %1100 = vmatprep.subr.mxu0 0.0
        %1101 = vmatpush1.msra.mxu0 0.0
        %1102 = vmatprep.subr.mxu0 0.0
        %1103 = vmatpush1.msra.mxu0 0.0
        %1104 = vmatprep.subr.mxu0 0.0
        %1105 = vmatpush1.msra.mxu0 0.0
        %1106 = vmatprep.subr.mxu0 0.0
        %1107 = vmatpush1.msra.mxu0 0.0
        %1108 = vmatprep.subr.mxu0 0.0
        %1109 = vmatpush1.msra.mxu0 0.0
        %1110 = vmatprep.subr.mxu0 0.0
        %1111 = vmatpush1.msra.mxu0 0.0
        %1112 = vmatprep.subr.mxu0 0.0
        %1113 = vmatpush1.msra.mxu0 0.0
        %1114 = vmatprep.subr.mxu0 0.0
        %1115 = vmatpush1.msra.mxu0 0.0
        %1116 = vmatprep.subr.mxu0 0.0
        %1117 = vmatpush1.msra.mxu0 0.0
        %1118 = vmatprep.subr.mxu0 0.0
        %1119 = vmatpush1.msra.mxu0 0.0
        %1120 = vmatprep.subr.mxu0 0.0
        %1121 = vmatpush1.msra.mxu0 0.0
        %1122 = vmatprep.subr.mxu0 0.0
        %1123 = vmatpush1.msra.mxu0 0.0
        %1124 = vmatprep.subr.mxu0 0.0
        %1125 = vmatpush1.msra.mxu0 0.0
        %1126 = vmatprep.subr.mxu0 0.0
        %1127 = vmatpush1.msra.mxu0 0.0
        %1128 = vmatprep.subr.mxu0 0.0
        %1129 = vmatpush1.msra.mxu0 %v1094
        %1130 = vmatprep.subr.mxu0 0.0
        %1131 = vmatpush2.msra.mxu0 0.0
        %1132 = vmatprep.subr.mxu0 0.0
        %1133 = vmatpush2.msra.mxu0 0.0
        %1134 = vmatprep.subr.mxu0 0.0
        %1135 = vmatpush2.msra.mxu0 0.0
        %1136 = vmatprep.subr.mxu0 0.0
        %1137 = vmatpush2.msra.mxu0 0.0
        %1138 = vmatprep.subr.mxu0 0.0
        %1139 = vmatpush2.msra.mxu0 0.0
        %1140 = vmatprep.subr.mxu0 0.0
        %1141 = vmatpush2.msra.mxu0 0.0
        %1142 = vmatprep.subr.mxu0 0.0
        %1143 = vmatpush2.msra.mxu0 0.0
        %1144 = vmatprep.subr.mxu0 0.0
        %1145 = vmatpush2.msra.mxu0 0.0
        %1146 = vmatprep.subr.mxu0 0.0
        %1147 = vmatpush2.msra.mxu0 0.0
        %1148 = vmatprep.subr.mxu0 0.0
        %1149 = vmatpush2.msra.mxu0 0.0
        %1150 = vmatprep.subr.mxu0 0.0
        %1151 = vmatpush2.msra.mxu0 0.0
        %1152 = vmatprep.subr.mxu0 0.0
        %1153 = vmatpush2.msra.mxu0 0.0
        %1154 = vmatprep.subr.mxu0 0.0
        %1155 = vmatpush2.msra.mxu0 0.0
        %1156 = vmatprep.subr.mxu0 0.0
        %1157 = vmatpush2.msra.mxu0 0.0
        %1158 = vmatprep.subr.mxu0 0.0
        %1159 = vmatpush2.msra.mxu0 0.0
        %1160 = vmatprep.subr.mxu0 0.0
        %1161 = vmatpush2.msra.mxu0 0.0
        %1162 = vmatprep.mubr.f32.mxu0 0.0
        %1163 = vmatmul.mubr.f32.gmra.mxu0 %v1096
        %v1164 = vpop.f32.mrf.mxu0
        %v1165 = vadd.f32 0.0, %v1164
        %v1166 = vpop.f32.mrf.mxu0
        %1167 = vdwg.mxu0
        %v1168 = vsel %vm480, 1, 0
        %vm1169 = vcmp.eq.s32.totalorder %v1168, 1
        %v1170 = vlaneseq
        %v1171 = vshrl.u32 %v1170, 7
        %v1172 = vsub.s32 0, %v1171
        %v1173 = vrot.slane %v655, %v1172
        %v1174 = vsel %vm1169, %v1173, 0.0
        %v1175 = vsel %vm481, 1, 0
        %vm1176 = vcmp.eq.s32.totalorder %v1175, 1
        %v1177 = vlaneseq
        %v1178 = vshrl.u32 %v1177, 7
        %v1179 = vsub.s32 4, %v1178
        %v1180 = vrot.slane %v655, %v1179
        %v1181 = vsel %vm1176, %v1180, %v1174
        %v1182 = vsel %vm482, 1, 0
        %vm1183 = vcmp.eq.s32.totalorder %v1182, 1
        %v1184 = vlaneseq
        %v1185 = vshrl.u32 %v1184, 7
        %v1186 = vsub.s32 0, %v1185
        %v1187 = vrot.slane %v825, %v1186
        %v1188 = vsel %vm1183, %v1187, %v1181
        %v1189 = vsel %vm483, 1, 0
        %vm1190 = vcmp.eq.s32.totalorder %v1189, 1
        %v1191 = vlaneseq
        %v1192 = vshrl.u32 %v1191, 7
        %v1193 = vsub.s32 4, %v1192
        %v1194 = vrot.slane %v825, %v1193
        %v1195 = vsel %vm1190, %v1194, %v1188
        %v1196 = vsel %vm484, 1, 0
        %vm1197 = vcmp.eq.s32.totalorder %v1196, 1
        %v1198 = vlaneseq
        %v1199 = vshrl.u32 %v1198, 7
        %v1200 = vsub.s32 0, %v1199
        %v1201 = vrot.slane %v995, %v1200
        %v1202 = vsel %vm1197, %v1201, %v1195
        %v1203 = vsel %vm485, 1, 0
        %vm1204 = vcmp.eq.s32.totalorder %v1203, 1
        %v1205 = vlaneseq
        %v1206 = vshrl.u32 %v1205, 7
        %v1207 = vsub.s32 4, %v1206
        %v1208 = vrot.slane %v995, %v1207
        %v1209 = vsel %vm1204, %v1208, %v1202
        %v1210 = vsel %vm486, 1, 0
        %vm1211 = vcmp.eq.s32.totalorder %v1210, 1
        %v1212 = vlaneseq
        %v1213 = vshrl.u32 %v1212, 7
        %v1214 = vsub.s32 0, %v1213
        %v1215 = vrot.slane %v1165, %v1214
        %v1216 = vsel %vm1211, %v1215, %v1209
        %v1217 = vsel %vm487, 1, 0
        %vm1218 = vcmp.eq.s32.totalorder %v1217, 1
        %v1219 = vlaneseq
        %v1220 = vshrl.u32 %v1219, 7
        %v1221 = vsub.s32 4, %v1220
        %v1222 = vrot.slane %v1165, %v1221
        %v1223 = vsel %vm1218, %v1222, %v1216
        %v1224 = vlaneseq
        %v1225 = vshrl.u32 %v1224, 7
        %v1226 = vsub.s32 1, %v1225
        %v1227 = vrot.slane %v655, %v1226
        %v1228 = vsel %vm1169, %v1227, 0.0
        %v1229 = vlaneseq
        %v1230 = vshrl.u32 %v1229, 7
        %v1231 = vsub.s32 5, %v1230
        %v1232 = vrot.slane %v655, %v1231
        %v1233 = vsel %vm1176, %v1232, %v1228
        %v1234 = vlaneseq
        %v1235 = vshrl.u32 %v1234, 7
        %v1236 = vsub.s32 1, %v1235
        %v1237 = vrot.slane %v825, %v1236
        %v1238 = vsel %vm1183, %v1237, %v1233
        %v1239 = vlaneseq
        %v1240 = vshrl.u32 %v1239, 7
        %v1241 = vsub.s32 5, %v1240
        %v1242 = vrot.slane %v825, %v1241
        %v1243 = vsel %vm1190, %v1242, %v1238
        %v1244 = vlaneseq
        %v1245 = vshrl.u32 %v1244, 7
        %v1246 = vsub.s32 1, %v1245
        %v1247 = vrot.slane %v995, %v1246
        %v1248 = vsel %vm1197, %v1247, %v1243
        %v1249 = vlaneseq
        %v1250 = vshrl.u32 %v1249, 7
        %v1251 = vsub.s32 5, %v1250
        %v1252 = vrot.slane %v995, %v1251
        %v1253 = vsel %vm1204, %v1252, %v1248
        %v1254 = vlaneseq
        %v1255 = vshrl.u32 %v1254, 7
        %v1256 = vsub.s32 1, %v1255
        %v1257 = vrot.slane %v1165, %v1256
        %v1258 = vsel %vm1211, %v1257, %v1253
        %v1259 = vlaneseq
        %v1260 = vshrl.u32 %v1259, 7
        %v1261 = vsub.s32 5, %v1260
        %v1262 = vrot.slane %v1165, %v1261
        %v1263 = vsel %vm1218, %v1262, %v1258
        %v1264 = vlaneseq
        %v1265 = vshrl.u32 %v1264, 7
        %v1266 = vsub.s32 2, %v1265
        %v1267 = vrot.slane %v655, %v1266
        %v1268 = vsel %vm1169, %v1267, 0.0
        %v1269 = vlaneseq
        %v1270 = vshrl.u32 %v1269, 7
        %v1271 = vsub.s32 6, %v1270
        %v1272 = vrot.slane %v655, %v1271
        %v1273 = vsel %vm1176, %v1272, %v1268
        %v1274 = vlaneseq
        %v1275 = vshrl.u32 %v1274, 7
        %v1276 = vsub.s32 2, %v1275
        %v1277 = vrot.slane %v825, %v1276
        %v1278 = vsel %vm1183, %v1277, %v1273
        %v1279 = vlaneseq
        %v1280 = vshrl.u32 %v1279, 7
        %v1281 = vsub.s32 6, %v1280
        %v1282 = vrot.slane %v825, %v1281
        %v1283 = vsel %vm1190, %v1282, %v1278
        %v1284 = vlaneseq
        %v1285 = vshrl.u32 %v1284, 7
        %v1286 = vsub.s32 2, %v1285
        %v1287 = vrot.slane %v995, %v1286
        %v1288 = vsel %vm1197, %v1287, %v1283
        %v1289 = vlaneseq
        %v1290 = vshrl.u32 %v1289, 7
        %v1291 = vsub.s32 6, %v1290
        %v1292 = vrot.slane %v995, %v1291
        %v1293 = vsel %vm1204, %v1292, %v1288
        %v1294 = vlaneseq
        %v1295 = vshrl.u32 %v1294, 7
        %v1296 = vsub.s32 2, %v1295
        %v1297 = vrot.slane %v1165, %v1296
        %v1298 = vsel %vm1211, %v1297, %v1293
        %v1299 = vlaneseq
        %v1300 = vshrl.u32 %v1299, 7
        %v1301 = vsub.s32 6, %v1300
        %v1302 = vrot.slane %v1165, %v1301
        %v1303 = vsel %vm1218, %v1302, %v1298
        %v1304 = vlaneseq
        %v1305 = vshrl.u32 %v1304, 7
        %v1306 = vsub.s32 3, %v1305
        %v1307 = vrot.slane %v655, %v1306
        %v1308 = vsel %vm1169, %v1307, 0.0
        %v1309 = vlaneseq
        %v1310 = vshrl.u32 %v1309, 7
        %v1311 = vsub.s32 7, %v1310
        %v1312 = vrot.slane %v655, %v1311
        %v1313 = vsel %vm1176, %v1312, %v1308
        %v1314 = vlaneseq
        %v1315 = vshrl.u32 %v1314, 7
        %v1316 = vsub.s32 3, %v1315
        %v1317 = vrot.slane %v825, %v1316
        %v1318 = vsel %vm1183, %v1317, %v1313
        %v1319 = vlaneseq
        %v1320 = vshrl.u32 %v1319, 7
        %v1321 = vsub.s32 7, %v1320
        %v1322 = vrot.slane %v825, %v1321
        %v1323 = vsel %vm1190, %v1322, %v1318
        %v1324 = vlaneseq
        %v1325 = vshrl.u32 %v1324, 7
        %v1326 = vsub.s32 3, %v1325
        %v1327 = vrot.slane %v995, %v1326
        %v1328 = vsel %vm1197, %v1327, %v1323
        %v1329 = vlaneseq
        %v1330 = vshrl.u32 %v1329, 7
        %v1331 = vsub.s32 7, %v1330
        %v1332 = vrot.slane %v995, %v1331
        %v1333 = vsel %vm1204, %v1332, %v1328
        %v1334 = vlaneseq
        %v1335 = vshrl.u32 %v1334, 7
        %v1336 = vsub.s32 3, %v1335
        %v1337 = vrot.slane %v1165, %v1336
        %v1338 = vsel %vm1211, %v1337, %v1333
        %v1339 = vlaneseq
        %v1340 = vshrl.u32 %v1339, 7
        %v1341 = vsub.s32 7, %v1340
        %v1342 = vrot.slane %v1165, %v1341
        %v1343 = vsel %vm1218, %v1342, %v1338
        %1345 = vrot.lane.b32.xlu0 %v364, 96
        %v1346 = vpop.permute.xlu0 %1345
        %v1347 = vsel %vm491, %v1346, 0
        %v1349 = vsel %vm491, %v364, 0
        %1351 = vmatprep.subr.mxu0 0.0
        %1352 = vmatpush1.xpose.msra.mxu0 0.0
        %1353 = vmatprep.subr.mxu0 0.0
        %1354 = vmatpush1.xpose.msra.mxu0 0.0
        %1355 = vmatprep.subr.mxu0 0.0
        %1356 = vmatpush1.xpose.msra.mxu0 0.0
        %1357 = vmatprep.subr.mxu0 0.0
        %1358 = vmatpush1.xpose.msra.mxu0 0.0
        %1359 = vmatprep.subr.mxu0 0.0
        %1360 = vmatpush1.xpose.msra.mxu0 0.0
        %1361 = vmatprep.subr.mxu0 0.0
        %1362 = vmatpush1.xpose.msra.mxu0 0.0
        %1363 = vmatprep.subr.mxu0 0.0
        %1364 = vmatpush1.xpose.msra.mxu0 0.0
        %1365 = vmatprep.subr.mxu0 0.0
        %1366 = vmatpush1.xpose.msra.mxu0 0.0
        %1367 = vmatprep.subr.mxu0 0.0
        %1368 = vmatpush1.xpose.msra.mxu0 0.0
        %1369 = vmatprep.subr.mxu0 0.0
        %1370 = vmatpush1.xpose.msra.mxu0 0.0
        %1371 = vmatprep.subr.mxu0 0.0
        %1372 = vmatpush1.xpose.msra.mxu0 0.0
        %1373 = vmatprep.subr.mxu0 0.0
        %1374 = vmatpush1.xpose.msra.mxu0 0.0
        %1375 = vmatprep.subr.mxu0 0.0
        %1376 = vmatpush1.xpose.msra.mxu0 0.0
        %1377 = vmatprep.subr.mxu0 0.0
        %1378 = vmatpush1.xpose.msra.mxu0 0.0
        %1379 = vmatprep.subr.mxu0 0.0
        %1380 = vmatpush1.xpose.msra.mxu0 0.0
        %1381 = vmatprep.subr.mxu0 0.0
        %1382 = vmatpush1.xpose.msra.mxu0 %v1349
        %1383 = vmatprep.subr.mxu0 0.0
        %1384 = vmatpush2.xpose.msra.mxu0 0.0
        %1385 = vmatprep.subr.mxu0 0.0
        %1386 = vmatpush2.xpose.msra.mxu0 0.0
        %1387 = vmatprep.subr.mxu0 0.0
        %1388 = vmatpush2.xpose.msra.mxu0 0.0
        %1389 = vmatprep.subr.mxu0 0.0
        %1390 = vmatpush2.xpose.msra.mxu0 0.0
        %1391 = vmatprep.subr.mxu0 0.0
        %1392 = vmatpush2.xpose.msra.mxu0 0.0
        %1393 = vmatprep.subr.mxu0 0.0
        %1394 = vmatpush2.xpose.msra.mxu0 0.0
        %1395 = vmatprep.subr.mxu0 0.0
        %1396 = vmatpush2.xpose.msra.mxu0 0.0
        %1397 = vmatprep.subr.mxu0 0.0
        %1398 = vmatpush2.xpose.msra.mxu0 0.0
        %1399 = vmatprep.subr.mxu0 0.0
        %1400 = vmatpush2.xpose.msra.mxu0 0.0
        %1401 = vmatprep.subr.mxu0 0.0
        %1402 = vmatpush2.xpose.msra.mxu0 0.0
        %1403 = vmatprep.subr.mxu0 0.0
        %1404 = vmatpush2.xpose.msra.mxu0 0.0
        %1405 = vmatprep.subr.mxu0 0.0
        %1406 = vmatpush2.xpose.msra.mxu0 0.0
        %1407 = vmatprep.subr.mxu0 0.0
        %1408 = vmatpush2.xpose.msra.mxu0 0.0
        %1409 = vmatprep.subr.mxu0 0.0
        %1410 = vmatpush2.xpose.msra.mxu0 0.0
        %1411 = vmatprep.subr.mxu0 0.0
        %1412 = vmatpush2.xpose.msra.mxu0 0.0
        %1413 = vmatprep.subr.mxu0 0.0
        %1414 = vmatpush2.xpose.msra.mxu0 0.0
        %1415 = vmatprep.mubr.f32.mxu0 0.0
        %1416 = vmatmul.mubr.f32.gmra.mxu0 %v1347
        %v1417 = vpop.f32.mrf.mxu0
        %v1418 = vadd.f32 0.0, %v1417
        %v1419 = vpop.f32.mrf.mxu0
        %1420 = vdwg.mxu0
        %v1421 = vsel %vm491, %v1418, -inf
        %v1422 = vrot.slane %v1421, 4
        %v1423 = vmax.f32 %v1421, %v1422
        %v1424 = vrot.slane %v1423, 2
        %v1425 = vmax.f32 %v1423, %v1424
        %v1426 = vrot.slane %v1425, 1
        %v1427 = vmax.f32 %v1425, %v1426
        %v1428 = vsub.f32 %v1418, %v1427
        %v1429 = vmul.f32 %v1428, 1.442695
        %v1430 = vpow.pop %v1429
        %v1431 = vsel %vm491, %v1430, 0.0
        %v1432 = vrot.slane %v1431, 4
        %v1433 = vadd.f32 %v1431, %v1432
        %v1434 = vrot.slane %v1433, 2
        %v1435 = vadd.f32 %v1433, %v1434
        %v1436 = vrot.slane %v1435, 1
        %v1437 = vadd.f32 %v1435, %v1436
        %v1438 = vrcp.pop %v1437
        %v1439 = vmul.f32 %v1430, %v1438
        %1440 = vrot.lane.b32.xlu0 %v460, 120
        %v1441 = vpop.permute.xlu0 %1440
        %v1442 = vsel %vm491, %v1441, 0
        %1444 = vmatprep.subr.mxu0 0.0
        %1445 = vmatpush1.msra.mxu0 0.0
        %1446 = vmatprep.subr.mxu0 0.0
        %1447 = vmatpush1.msra.mxu0 0.0
        %1448 = vmatprep.subr.mxu0 0.0
        %1449 = vmatpush1.msra.mxu0 0.0
        %1450 = vmatprep.subr.mxu0 0.0
        %1451 = vmatpush1.msra.mxu0 0.0
        %1452 = vmatprep.subr.mxu0 0.0
        %1453 = vmatpush1.msra.mxu0 0.0
        %1454 = vmatprep.subr.mxu0 0.0
        %1455 = vmatpush1.msra.mxu0 0.0
        %1456 = vmatprep.subr.mxu0 0.0
        %1457 = vmatpush1.msra.mxu0 0.0
        %1458 = vmatprep.subr.mxu0 0.0
        %1459 = vmatpush1.msra.mxu0 0.0
        %1460 = vmatprep.subr.mxu0 0.0
        %1461 = vmatpush1.msra.mxu0 0.0
        %1462 = vmatprep.subr.mxu0 0.0
        %1463 = vmatpush1.msra.mxu0 0.0
        %1464 = vmatprep.subr.mxu0 0.0
        %1465 = vmatpush1.msra.mxu0 0.0
        %1466 = vmatprep.subr.mxu0 0.0
        %1467 = vmatpush1.msra.mxu0 0.0
        %1468 = vmatprep.subr.mxu0 0.0
        %1469 = vmatpush1.msra.mxu0 0.0
        %1470 = vmatprep.subr.mxu0 0.0
        %1471 = vmatpush1.msra.mxu0 0.0
        %1472 = vmatprep.subr.mxu0 0.0
        %1473 = vmatpush1.msra.mxu0 0.0
        %1474 = vmatprep.subr.mxu0 0.0
        %1475 = vmatpush1.msra.mxu0 %v1439
        %1476 = vmatprep.subr.mxu0 0.0
        %1477 = vmatpush2.msra.mxu0 0.0
        %1478 = vmatprep.subr.mxu0 0.0
        %1479 = vmatpush2.msra.mxu0 0.0
        %1480 = vmatprep.subr.mxu0 0.0
        %1481 = vmatpush2.msra.mxu0 0.0
        %1482 = vmatprep.subr.mxu0 0.0
        %1483 = vmatpush2.msra.mxu0 0.0
        %1484 = vmatprep.subr.mxu0 0.0
        %1485 = vmatpush2.msra.mxu0 0.0
        %1486 = vmatprep.subr.mxu0 0.0
        %1487 = vmatpush2.msra.mxu0 0.0
        %1488 = vmatprep.subr.mxu0 0.0
        %1489 = vmatpush2.msra.mxu0 0.0
        %1490 = vmatprep.subr.mxu0 0.0
        %1491 = vmatpush2.msra.mxu0 0.0
        %1492 = vmatprep.subr.mxu0 0.0
        %1493 = vmatpush2.msra.mxu0 0.0
        %1494 = vmatprep.subr.mxu0 0.0
        %1495 = vmatpush2.msra.mxu0 0.0
        %1496 = vmatprep.subr.mxu0 0.0
        %1497 = vmatpush2.msra.mxu0 0.0
        %1498 = vmatprep.subr.mxu0 0.0
        %1499 = vmatpush2.msra.mxu0 0.0
        %1500 = vmatprep.subr.mxu0 0.0
        %1501 = vmatpush2.msra.mxu0 0.0
        %1502 = vmatprep.subr.mxu0 0.0
        %1503 = vmatpush2.msra.mxu0 0.0
        %1504 = vmatprep.subr.mxu0 0.0
        %1505 = vmatpush2.msra.mxu0 0.0
        %1506 = vmatprep.subr.mxu0 0.0
        %1507 = vmatpush2.msra.mxu0 0.0
        %1508 = vmatprep.mubr.f32.mxu0 0.0
        %1509 = vmatmul.mubr.f32.gmra.mxu0 %v1442
        %v1510 = vpop.f32.mrf.mxu0
        %v1511 = vadd.f32 0.0, %v1510
        %v1512 = vpop.f32.mrf.mxu0
        %1513 = vdwg.mxu0
        %1514 = vrot.lane.b32.xlu0 %v364, 88
        %v1515 = vpop.permute.xlu0 %1514
        %1516 = vrot.lane.b32.xlu0 %v364, 120
        %v1517 = vpop.permute.xlu0 %1516
        %v1518 = vsel %vm491, %v1515, 0
        %v1520 = vsel %vm491, %v1517, 0
        %1522 = vmatprep.subr.mxu0 0.0
        %1523 = vmatpush1.xpose.msra.mxu0 0.0
        %1524 = vmatprep.subr.mxu0 0.0
        %1525 = vmatpush1.xpose.msra.mxu0 0.0
        %1526 = vmatprep.subr.mxu0 0.0
        %1527 = vmatpush1.xpose.msra.mxu0 0.0
        %1528 = vmatprep.subr.mxu0 0.0
        %1529 = vmatpush1.xpose.msra.mxu0 0.0
        %1530 = vmatprep.subr.mxu0 0.0
        %1531 = vmatpush1.xpose.msra.mxu0 0.0
        %1532 = vmatprep.subr.mxu0 0.0
        %1533 = vmatpush1.xpose.msra.mxu0 0.0
        %1534 = vmatprep.subr.mxu0 0.0
        %1535 = vmatpush1.xpose.msra.mxu0 0.0
        %1536 = vmatprep.subr.mxu0 0.0
        %1537 = vmatpush1.xpose.msra.mxu0 0.0
        %1538 = vmatprep.subr.mxu0 0.0
        %1539 = vmatpush1.xpose.msra.mxu0 0.0
        %1540 = vmatprep.subr.mxu0 0.0
        %1541 = vmatpush1.xpose.msra.mxu0 0.0
        %1542 = vmatprep.subr.mxu0 0.0
        %1543 = vmatpush1.xpose.msra.mxu0 0.0
        %1544 = vmatprep.subr.mxu0 0.0
        %1545 = vmatpush1.xpose.msra.mxu0 0.0
        %1546 = vmatprep.subr.mxu0 0.0
        %1547 = vmatpush1.xpose.msra.mxu0 0.0
        %1548 = vmatprep.subr.mxu0 0.0
        %1549 = vmatpush1.xpose.msra.mxu0 0.0
        %1550 = vmatprep.subr.mxu0 0.0
        %1551 = vmatpush1.xpose.msra.mxu0 0.0
        %1552 = vmatprep.subr.mxu0 0.0
        %1553 = vmatpush1.xpose.msra.mxu0 %v1520
        %1554 = vmatprep.subr.mxu0 0.0
        %1555 = vmatpush2.xpose.msra.mxu0 0.0
        %1556 = vmatprep.subr.mxu0 0.0
        %1557 = vmatpush2.xpose.msra.mxu0 0.0
        %1558 = vmatprep.subr.mxu0 0.0
        %1559 = vmatpush2.xpose.msra.mxu0 0.0
        %1560 = vmatprep.subr.mxu0 0.0
        %1561 = vmatpush2.xpose.msra.mxu0 0.0
        %1562 = vmatprep.subr.mxu0 0.0
        %1563 = vmatpush2.xpose.msra.mxu0 0.0
        %1564 = vmatprep.subr.mxu0 0.0
        %1565 = vmatpush2.xpose.msra.mxu0 0.0
        %1566 = vmatprep.subr.mxu0 0.0
        %1567 = vmatpush2.xpose.msra.mxu0 0.0
        %1568 = vmatprep.subr.mxu0 0.0
        %1569 = vmatpush2.xpose.msra.mxu0 0.0
        %1570 = vmatprep.subr.mxu0 0.0
        %1571 = vmatpush2.xpose.msra.mxu0 0.0
        %1572 = vmatprep.subr.mxu0 0.0
        %1573 = vmatpush2.xpose.msra.mxu0 0.0
        %1574 = vmatprep.subr.mxu0 0.0
        %1575 = vmatpush2.xpose.msra.mxu0 0.0
        %1576 = vmatprep.subr.mxu0 0.0
        %1577 = vmatpush2.xpose.msra.mxu0 0.0
        %1578 = vmatprep.subr.mxu0 0.0
        %1579 = vmatpush2.xpose.msra.mxu0 0.0
        %1580 = vmatprep.subr.mxu0 0.0
        %1581 = vmatpush2.xpose.msra.mxu0 0.0
        %1582 = vmatprep.subr.mxu0 0.0
        %1583 = vmatpush2.xpose.msra.mxu0 0.0
        %1584 = vmatprep.subr.mxu0 0.0
        %1585 = vmatpush2.xpose.msra.mxu0 0.0
        %1586 = vmatprep.mubr.f32.mxu0 0.0
        %1587 = vmatmul.mubr.f32.gmra.mxu0 %v1518
        %v1588 = vpop.f32.mrf.mxu0
        %v1589 = vadd.f32 0.0, %v1588
        %v1590 = vpop.f32.mrf.mxu0
        %1591 = vdwg.mxu0
        %v1592 = vsel %vm491, %v1589, -inf
        %v1593 = vrot.slane %v1592, 4
        %v1594 = vmax.f32 %v1592, %v1593
        %v1595 = vrot.slane %v1594, 2
        %v1596 = vmax.f32 %v1594, %v1595
        %v1597 = vrot.slane %v1596, 1
        %v1598 = vmax.f32 %v1596, %v1597
        %v1599 = vsub.f32 %v1589, %v1598
        %v1600 = vmul.f32 %v1599, 1.442695
        %v1601 = vpow.pop %v1600
        %v1602 = vsel %vm491, %v1601, 0.0
        %v1603 = vrot.slane %v1602, 4
        %v1604 = vadd.f32 %v1602, %v1603
        %v1605 = vrot.slane %v1604, 2
        %v1606 = vadd.f32 %v1604, %v1605
        %v1607 = vrot.slane %v1606, 1
        %v1608 = vadd.f32 %v1606, %v1607
        %v1609 = vrcp.pop %v1608
        %v1610 = vmul.f32 %v1601, %v1609
        %1611 = vrot.lane.b32.xlu0 %v465, 120
        %v1612 = vpop.permute.xlu0 %1611
        %v1613 = vsel %vm491, %v1612, 0
        %1615 = vmatprep.subr.mxu0 0.0
        %1616 = vmatpush1.msra.mxu0 0.0
        %1617 = vmatprep.subr.mxu0 0.0
        %1618 = vmatpush1.msra.mxu0 0.0
        %1619 = vmatprep.subr.mxu0 0.0
        %1620 = vmatpush1.msra.mxu0 0.0
        %1621 = vmatprep.subr.mxu0 0.0
        %1622 = vmatpush1.msra.mxu0 0.0
        %1623 = vmatprep.subr.mxu0 0.0
        %1624 = vmatpush1.msra.mxu0 0.0
        %1625 = vmatprep.subr.mxu0 0.0
        %1626 = vmatpush1.msra.mxu0 0.0
        %1627 = vmatprep.subr.mxu0 0.0
        %1628 = vmatpush1.msra.mxu0 0.0
        %1629 = vmatprep.subr.mxu0 0.0
        %1630 = vmatpush1.msra.mxu0 0.0
        %1631 = vmatprep.subr.mxu0 0.0
        %1632 = vmatpush1.msra.mxu0 0.0
        %1633 = vmatprep.subr.mxu0 0.0
        %1634 = vmatpush1.msra.mxu0 0.0
        %1635 = vmatprep.subr.mxu0 0.0
        %1636 = vmatpush1.msra.mxu0 0.0
        %1637 = vmatprep.subr.mxu0 0.0
        %1638 = vmatpush1.msra.mxu0 0.0
        %1639 = vmatprep.subr.mxu0 0.0
        %1640 = vmatpush1.msra.mxu0 0.0
        %1641 = vmatprep.subr.mxu0 0.0
        %1642 = vmatpush1.msra.mxu0 0.0
        %1643 = vmatprep.subr.mxu0 0.0
        %1644 = vmatpush1.msra.mxu0 0.0
        %1645 = vmatprep.subr.mxu0 0.0
        %1646 = vmatpush1.msra.mxu0 %v1610
        %1647 = vmatprep.subr.mxu0 0.0
        %1648 = vmatpush2.msra.mxu0 0.0
        %1649 = vmatprep.subr.mxu0 0.0
        %1650 = vmatpush2.msra.mxu0 0.0
        %1651 = vmatprep.subr.mxu0 0.0
        %1652 = vmatpush2.msra.mxu0 0.0
        %1653 = vmatprep.subr.mxu0 0.0
        %1654 = vmatpush2.msra.mxu0 0.0
        %1655 = vmatprep.subr.mxu0 0.0
        %1656 = vmatpush2.msra.mxu0 0.0
        %1657 = vmatprep.subr.mxu0 0.0
        %1658 = vmatpush2.msra.mxu0 0.0
        %1659 = vmatprep.subr.mxu0 0.0
        %1660 = vmatpush2.msra.mxu0 0.0
        %1661 = vmatprep.subr.mxu0 0.0
        %1662 = vmatpush2.msra.mxu0 0.0
        %1663 = vmatprep.subr.mxu0 0.0
        %1664 = vmatpush2.msra.mxu0 0.0
        %1665 = vmatprep.subr.mxu0 0.0
        %1666 = vmatpush2.msra.mxu0 0.0
        %1667 = vmatprep.subr.mxu0 0.0
        %1668 = vmatpush2.msra.mxu0 0.0
        %1669 = vmatprep.subr.mxu0 0.0
        %1670 = vmatpush2.msra.mxu0 0.0
        %1671 = vmatprep.subr.mxu0 0.0
        %1672 = vmatpush2.msra.mxu0 0.0
        %1673 = vmatprep.subr.mxu0 0.0
        %1674 = vmatpush2.msra.mxu0 0.0
        %1675 = vmatprep.subr.mxu0 0.0
        %1676 = vmatpush2.msra.mxu0 0.0
        %1677 = vmatprep.subr.mxu0 0.0
        %1678 = vmatpush2.msra.mxu0 0.0
        %1679 = vmatprep.mubr.f32.mxu0 0.0
        %1680 = vmatmul.mubr.f32.gmra.mxu0 %v1613
        %v1681 = vpop.f32.mrf.mxu0
        %v1682 = vadd.f32 0.0, %v1681
        %v1683 = vpop.f32.mrf.mxu0
        %1684 = vdwg.mxu0
        %1685 = vrot.lane.b32.xlu0 %v364, 80
        %v1686 = vpop.permute.xlu0 %1685
        %1687 = vrot.lane.b32.xlu0 %v364, 112
        %v1688 = vpop.permute.xlu0 %1687
        %v1689 = vsel %vm491, %v1686, 0
        %v1691 = vsel %vm491, %v1688, 0
        %1693 = vmatprep.subr.mxu0 0.0
        %1694 = vmatpush1.xpose.msra.mxu0 0.0
        %1695 = vmatprep.subr.mxu0 0.0
        %1696 = vmatpush1.xpose.msra.mxu0 0.0
        %1697 = vmatprep.subr.mxu0 0.0
        %1698 = vmatpush1.xpose.msra.mxu0 0.0
        %1699 = vmatprep.subr.mxu0 0.0
        %1700 = vmatpush1.xpose.msra.mxu0 0.0
        %1701 = vmatprep.subr.mxu0 0.0
        %1702 = vmatpush1.xpose.msra.mxu0 0.0
        %1703 = vmatprep.subr.mxu0 0.0
        %1704 = vmatpush1.xpose.msra.mxu0 0.0
        %1705 = vmatprep.subr.mxu0 0.0
        %1706 = vmatpush1.xpose.msra.mxu0 0.0
        %1707 = vmatprep.subr.mxu0 0.0
        %1708 = vmatpush1.xpose.msra.mxu0 0.0
        %1709 = vmatprep.subr.mxu0 0.0
        %1710 = vmatpush1.xpose.msra.mxu0 0.0
        %1711 = vmatprep.subr.mxu0 0.0
        %1712 = vmatpush1.xpose.msra.mxu0 0.0
        %1713 = vmatprep.subr.mxu0 0.0
        %1714 = vmatpush1.xpose.msra.mxu0 0.0
        %1715 = vmatprep.subr.mxu0 0.0
        %1716 = vmatpush1.xpose.msra.mxu0 0.0
        %1717 = vmatprep.subr.mxu0 0.0
        %1718 = vmatpush1.xpose.msra.mxu0 0.0
        %1719 = vmatprep.subr.mxu0 0.0
        %1720 = vmatpush1.xpose.msra.mxu0 0.0
        %1721 = vmatprep.subr.mxu0 0.0
        %1722 = vmatpush1.xpose.msra.mxu0 0.0
        %1723 = vmatprep.subr.mxu0 0.0
        %1724 = vmatpush1.xpose.msra.mxu0 %v1691
        %1725 = vmatprep.subr.mxu0 0.0
        %1726 = vmatpush2.xpose.msra.mxu0 0.0
        %1727 = vmatprep.subr.mxu0 0.0
        %1728 = vmatpush2.xpose.msra.mxu0 0.0
        %1729 = vmatprep.subr.mxu0 0.0
        %1730 = vmatpush2.xpose.msra.mxu0 0.0
        %1731 = vmatprep.subr.mxu0 0.0
        %1732 = vmatpush2.xpose.msra.mxu0 0.0
        %1733 = vmatprep.subr.mxu0 0.0
        %1734 = vmatpush2.xpose.msra.mxu0 0.0
        %1735 = vmatprep.subr.mxu0 0.0
        %1736 = vmatpush2.xpose.msra.mxu0 0.0
        %1737 = vmatprep.subr.mxu0 0.0
        %1738 = vmatpush2.xpose.msra.mxu0 0.0
        %1739 = vmatprep.subr.mxu0 0.0
        %1740 = vmatpush2.xpose.msra.mxu0 0.0
        %1741 = vmatprep.subr.mxu0 0.0
        %1742 = vmatpush2.xpose.msra.mxu0 0.0
        %1743 = vmatprep.subr.mxu0 0.0
        %1744 = vmatpush2.xpose.msra.mxu0 0.0
        %1745 = vmatprep.subr.mxu0 0.0
        %1746 = vmatpush2.xpose.msra.mxu0 0.0
        %1747 = vmatprep.subr.mxu0 0.0
        %1748 = vmatpush2.xpose.msra.mxu0 0.0
        %1749 = vmatprep.subr.mxu0 0.0
        %1750 = vmatpush2.xpose.msra.mxu0 0.0
        %1751 = vmatprep.subr.mxu0 0.0
        %1752 = vmatpush2.xpose.msra.mxu0 0.0
        %1753 = vmatprep.subr.mxu0 0.0
        %1754 = vmatpush2.xpose.msra.mxu0 0.0
        %1755 = vmatprep.subr.mxu0 0.0
        %1756 = vmatpush2.xpose.msra.mxu0 0.0
        %1757 = vmatprep.mubr.f32.mxu0 0.0
        %1758 = vmatmul.mubr.f32.gmra.mxu0 %v1689
        %v1759 = vpop.f32.mrf.mxu0
        %v1760 = vadd.f32 0.0, %v1759
        %v1761 = vpop.f32.mrf.mxu0
        %1762 = vdwg.mxu0
        %v1763 = vsel %vm491, %v1760, -inf
        %v1764 = vrot.slane %v1763, 4
        %v1765 = vmax.f32 %v1763, %v1764
        %v1766 = vrot.slane %v1765, 2
        %v1767 = vmax.f32 %v1765, %v1766
        %v1768 = vrot.slane %v1767, 1
        %v1769 = vmax.f32 %v1767, %v1768
        %v1770 = vsub.f32 %v1760, %v1769
        %v1771 = vmul.f32 %v1770, 1.442695
        %v1772 = vpow.pop %v1771
        %v1773 = vsel %vm491, %v1772, 0.0
        %v1774 = vrot.slane %v1773, 4
        %v1775 = vadd.f32 %v1773, %v1774
        %v1776 = vrot.slane %v1775, 2
        %v1777 = vadd.f32 %v1775, %v1776
        %v1778 = vrot.slane %v1777, 1
        %v1779 = vadd.f32 %v1777, %v1778
        %v1780 = vrcp.pop %v1779
        %v1781 = vmul.f32 %v1772, %v1780
        %1782 = vrot.lane.b32.xlu0 %v470, 120
        %v1783 = vpop.permute.xlu0 %1782
        %v1784 = vsel %vm491, %v1783, 0
        %1786 = vmatprep.subr.mxu0 0.0
        %1787 = vmatpush1.msra.mxu0 0.0
        %1788 = vmatprep.subr.mxu0 0.0
        %1789 = vmatpush1.msra.mxu0 0.0
        %1790 = vmatprep.subr.mxu0 0.0
        %1791 = vmatpush1.msra.mxu0 0.0
        %1792 = vmatprep.subr.mxu0 0.0
        %1793 = vmatpush1.msra.mxu0 0.0
        %1794 = vmatprep.subr.mxu0 0.0
        %1795 = vmatpush1.msra.mxu0 0.0
        %1796 = vmatprep.subr.mxu0 0.0
        %1797 = vmatpush1.msra.mxu0 0.0
        %1798 = vmatprep.subr.mxu0 0.0
        %1799 = vmatpush1.msra.mxu0 0.0
        %1800 = vmatprep.subr.mxu0 0.0
        %1801 = vmatpush1.msra.mxu0 0.0
        %1802 = vmatprep.subr.mxu0 0.0
        %1803 = vmatpush1.msra.mxu0 0.0
        %1804 = vmatprep.subr.mxu0 0.0
        %1805 = vmatpush1.msra.mxu0 0.0
        %1806 = vmatprep.subr.mxu0 0.0
        %1807 = vmatpush1.msra.mxu0 0.0
        %1808 = vmatprep.subr.mxu0 0.0
        %1809 = vmatpush1.msra.mxu0 0.0
        %1810 = vmatprep.subr.mxu0 0.0
        %1811 = vmatpush1.msra.mxu0 0.0
        %1812 = vmatprep.subr.mxu0 0.0
        %1813 = vmatpush1.msra.mxu0 0.0
        %1814 = vmatprep.subr.mxu0 0.0
        %1815 = vmatpush1.msra.mxu0 0.0
        %1816 = vmatprep.subr.mxu0 0.0
        %1817 = vmatpush1.msra.mxu0 %v1781
        %1818 = vmatprep.subr.mxu0 0.0
        %1819 = vmatpush2.msra.mxu0 0.0
        %1820 = vmatprep.subr.mxu0 0.0
        %1821 = vmatpush2.msra.mxu0 0.0
        %1822 = vmatprep.subr.mxu0 0.0
        %1823 = vmatpush2.msra.mxu0 0.0
        %1824 = vmatprep.subr.mxu0 0.0
        %1825 = vmatpush2.msra.mxu0 0.0
        %1826 = vmatprep.subr.mxu0 0.0
        %1827 = vmatpush2.msra.mxu0 0.0
        %1828 = vmatprep.subr.mxu0 0.0
        %1829 = vmatpush2.msra.mxu0 0.0
        %1830 = vmatprep.subr.mxu0 0.0
        %1831 = vmatpush2.msra.mxu0 0.0
        %1832 = vmatprep.subr.mxu0 0.0
        %1833 = vmatpush2.msra.mxu0 0.0
        %1834 = vmatprep.subr.mxu0 0.0
        %1835 = vmatpush2.msra.mxu0 0.0
        %1836 = vmatprep.subr.mxu0 0.0
        %1837 = vmatpush2.msra.mxu0 0.0
        %1838 = vmatprep.subr.mxu0 0.0
        %1839 = vmatpush2.msra.mxu0 0.0
        %1840 = vmatprep.subr.mxu0 0.0
        %1841 = vmatpush2.msra.mxu0 0.0
        %1842 = vmatprep.subr.mxu0 0.0
        %1843 = vmatpush2.msra.mxu0 0.0
        %1844 = vmatprep.subr.mxu0 0.0
        %1845 = vmatpush2.msra.mxu0 0.0
        %1846 = vmatprep.subr.mxu0 0.0
        %1847 = vmatpush2.msra.mxu0 0.0
        %1848 = vmatprep.subr.mxu0 0.0
        %1849 = vmatpush2.msra.mxu0 0.0
        %1850 = vmatprep.mubr.f32.mxu0 0.0
        %1851 = vmatmul.mubr.f32.gmra.mxu0 %v1784
        %v1852 = vpop.f32.mrf.mxu0
        %v1853 = vadd.f32 0.0, %v1852
        %v1854 = vpop.f32.mrf.mxu0
        %1855 = vdwg.mxu0
        %1856 = vrot.lane.b32.xlu0 %v364, 72
        %v1857 = vpop.permute.xlu0 %1856
        %1858 = vrot.lane.b32.xlu0 %v364, 104
        %v1859 = vpop.permute.xlu0 %1858
        %v1860 = vsel %vm491, %v1857, 0
        %v1862 = vsel %vm491, %v1859, 0
        %1864 = vmatprep.subr.mxu0 0.0
        %1865 = vmatpush1.xpose.msra.mxu0 0.0
        %1866 = vmatprep.subr.mxu0 0.0
        %1867 = vmatpush1.xpose.msra.mxu0 0.0
        %1868 = vmatprep.subr.mxu0 0.0
        %1869 = vmatpush1.xpose.msra.mxu0 0.0
        %1870 = vmatprep.subr.mxu0 0.0
        %1871 = vmatpush1.xpose.msra.mxu0 0.0
        %1872 = vmatprep.subr.mxu0 0.0
        %1873 = vmatpush1.xpose.msra.mxu0 0.0
        %1874 = vmatprep.subr.mxu0 0.0
        %1875 = vmatpush1.xpose.msra.mxu0 0.0
        %1876 = vmatprep.subr.mxu0 0.0
        %1877 = vmatpush1.xpose.msra.mxu0 0.0
        %1878 = vmatprep.subr.mxu0 0.0
        %1879 = vmatpush1.xpose.msra.mxu0 0.0
        %1880 = vmatprep.subr.mxu0 0.0
        %1881 = vmatpush1.xpose.msra.mxu0 0.0
        %1882 = vmatprep.subr.mxu0 0.0
        %1883 = vmatpush1.xpose.msra.mxu0 0.0
        %1884 = vmatprep.subr.mxu0 0.0
        %1885 = vmatpush1.xpose.msra.mxu0 0.0
        %1886 = vmatprep.subr.mxu0 0.0
        %1887 = vmatpush1.xpose.msra.mxu0 0.0
        %1888 = vmatprep.subr.mxu0 0.0
        %1889 = vmatpush1.xpose.msra.mxu0 0.0
        %1890 = vmatprep.subr.mxu0 0.0
        %1891 = vmatpush1.xpose.msra.mxu0 0.0
        %1892 = vmatprep.subr.mxu0 0.0
        %1893 = vmatpush1.xpose.msra.mxu0 0.0
        %1894 = vmatprep.subr.mxu0 0.0
        %1895 = vmatpush1.xpose.msra.mxu0 %v1862
        %1896 = vmatprep.subr.mxu0 0.0
        %1897 = vmatpush2.xpose.msra.mxu0 0.0
        %1898 = vmatprep.subr.mxu0 0.0
        %1899 = vmatpush2.xpose.msra.mxu0 0.0
        %1900 = vmatprep.subr.mxu0 0.0
        %1901 = vmatpush2.xpose.msra.mxu0 0.0
        %1902 = vmatprep.subr.mxu0 0.0
        %1903 = vmatpush2.xpose.msra.mxu0 0.0
        %1904 = vmatprep.subr.mxu0 0.0
        %1905 = vmatpush2.xpose.msra.mxu0 0.0
        %1906 = vmatprep.subr.mxu0 0.0
        %1907 = vmatpush2.xpose.msra.mxu0 0.0
        %1908 = vmatprep.subr.mxu0 0.0
        %1909 = vmatpush2.xpose.msra.mxu0 0.0
        %1910 = vmatprep.subr.mxu0 0.0
        %1911 = vmatpush2.xpose.msra.mxu0 0.0
        %1912 = vmatprep.subr.mxu0 0.0
        %1913 = vmatpush2.xpose.msra.mxu0 0.0
        %1914 = vmatprep.subr.mxu0 0.0
        %1915 = vmatpush2.xpose.msra.mxu0 0.0
        %1916 = vmatprep.subr.mxu0 0.0
        %1917 = vmatpush2.xpose.msra.mxu0 0.0
        %1918 = vmatprep.subr.mxu0 0.0
        %1919 = vmatpush2.xpose.msra.mxu0 0.0
        %1920 = vmatprep.subr.mxu0 0.0
        %1921 = vmatpush2.xpose.msra.mxu0 0.0
        %1922 = vmatprep.subr.mxu0 0.0
        %1923 = vmatpush2.xpose.msra.mxu0 0.0
        %1924 = vmatprep.subr.mxu0 0.0
        %1925 = vmatpush2.xpose.msra.mxu0 0.0
        %1926 = vmatprep.subr.mxu0 0.0
        %1927 = vmatpush2.xpose.msra.mxu0 0.0
        %1928 = vmatprep.mubr.f32.mxu0 0.0
        %1929 = vmatmul.mubr.f32.gmra.mxu0 %v1860
        %v1930 = vpop.f32.mrf.mxu0
        %v1931 = vadd.f32 0.0, %v1930
        %v1932 = vpop.f32.mrf.mxu0
        %1933 = vdwg.mxu0
        %v1934 = vsel %vm491, %v1931, -inf
        %v1935 = vrot.slane %v1934, 4
        %v1936 = vmax.f32 %v1934, %v1935
        %v1937 = vrot.slane %v1936, 2
        %v1938 = vmax.f32 %v1936, %v1937
        %v1939 = vrot.slane %v1938, 1
        %v1940 = vmax.f32 %v1938, %v1939
        %v1941 = vsub.f32 %v1931, %v1940
        %v1942 = vmul.f32 %v1941, 1.442695
        %v1943 = vpow.pop %v1942
        %v1944 = vsel %vm491, %v1943, 0.0
        %v1945 = vrot.slane %v1944, 4
        %v1946 = vadd.f32 %v1944, %v1945
        %v1947 = vrot.slane %v1946, 2
        %v1948 = vadd.f32 %v1946, %v1947
        %v1949 = vrot.slane %v1948, 1
        %v1950 = vadd.f32 %v1948, %v1949
        %v1951 = vrcp.pop %v1950
        %v1952 = vmul.f32 %v1943, %v1951
        %1953 = vrot.lane.b32.xlu0 %v475, 120
        %v1954 = vpop.permute.xlu0 %1953
        %v1955 = vsel %vm491, %v1954, 0
        %1957 = vmatprep.subr.mxu0 0.0
        %1958 = vmatpush1.msra.mxu0 0.0
        %1959 = vmatprep.subr.mxu0 0.0
        %1960 = vmatpush1.msra.mxu0 0.0
        %1961 = vmatprep.subr.mxu0 0.0
        %1962 = vmatpush1.msra.mxu0 0.0
        %1963 = vmatprep.subr.mxu0 0.0
        %1964 = vmatpush1.msra.mxu0 0.0
        %1965 = vmatprep.subr.mxu0 0.0
        %1966 = vmatpush1.msra.mxu0 0.0
        %1967 = vmatprep.subr.mxu0 0.0
        %1968 = vmatpush1.msra.mxu0 0.0
        %1969 = vmatprep.subr.mxu0 0.0
        %1970 = vmatpush1.msra.mxu0 0.0
        %1971 = vmatprep.subr.mxu0 0.0
        %1972 = vmatpush1.msra.mxu0 0.0
        %1973 = vmatprep.subr.mxu0 0.0
        %1974 = vmatpush1.msra.mxu0 0.0
        %1975 = vmatprep.subr.mxu0 0.0
        %1976 = vmatpush1.msra.mxu0 0.0
        %1977 = vmatprep.subr.mxu0 0.0
        %1978 = vmatpush1.msra.mxu0 0.0
        %1979 = vmatprep.subr.mxu0 0.0
        %1980 = vmatpush1.msra.mxu0 0.0
        %1981 = vmatprep.subr.mxu0 0.0
        %1982 = vmatpush1.msra.mxu0 0.0
        %1983 = vmatprep.subr.mxu0 0.0
        %1984 = vmatpush1.msra.mxu0 0.0
        %1985 = vmatprep.subr.mxu0 0.0
        %1986 = vmatpush1.msra.mxu0 0.0
        %1987 = vmatprep.subr.mxu0 0.0
        %1988 = vmatpush1.msra.mxu0 %v1952
        %1989 = vmatprep.subr.mxu0 0.0
        %1990 = vmatpush2.msra.mxu0 0.0
        %1991 = vmatprep.subr.mxu0 0.0
        %1992 = vmatpush2.msra.mxu0 0.0
        %1993 = vmatprep.subr.mxu0 0.0
        %1994 = vmatpush2.msra.mxu0 0.0
        %1995 = vmatprep.subr.mxu0 0.0
        %1996 = vmatpush2.msra.mxu0 0.0
        %1997 = vmatprep.subr.mxu0 0.0
        %1998 = vmatpush2.msra.mxu0 0.0
        %1999 = vmatprep.subr.mxu0 0.0
        %2000 = vmatpush2.msra.mxu0 0.0
        %2001 = vmatprep.subr.mxu0 0.0
        %2002 = vmatpush2.msra.mxu0 0.0
        %2003 = vmatprep.subr.mxu0 0.0
        %2004 = vmatpush2.msra.mxu0 0.0
        %2005 = vmatprep.subr.mxu0 0.0
        %2006 = vmatpush2.msra.mxu0 0.0
        %2007 = vmatprep.subr.mxu0 0.0
        %2008 = vmatpush2.msra.mxu0 0.0
        %2009 = vmatprep.subr.mxu0 0.0
        %2010 = vmatpush2.msra.mxu0 0.0
        %2011 = vmatprep.subr.mxu0 0.0
        %2012 = vmatpush2.msra.mxu0 0.0
        %2013 = vmatprep.subr.mxu0 0.0
        %2014 = vmatpush2.msra.mxu0 0.0
        %2015 = vmatprep.subr.mxu0 0.0
        %2016 = vmatpush2.msra.mxu0 0.0
        %2017 = vmatprep.subr.mxu0 0.0
        %2018 = vmatpush2.msra.mxu0 0.0
        %2019 = vmatprep.subr.mxu0 0.0
        %2020 = vmatpush2.msra.mxu0 0.0
        %2021 = vmatprep.mubr.f32.mxu0 0.0
        %2022 = vmatmul.mubr.f32.gmra.mxu0 %v1955
        %v2023 = vpop.f32.mrf.mxu0
        %v2024 = vadd.f32 0.0, %v2023
        %v2025 = vpop.f32.mrf.mxu0
        %2026 = vdwg.mxu0
        %v2027 = vlaneseq
        %v2028 = vshrl.u32 %v2027, 7
        %v2029 = vsub.s32 0, %v2028
        %v2030 = vrot.slane %v1511, %v2029
        %v2031 = vsel %vm1169, %v2030, 0.0
        %v2032 = vlaneseq
        %v2033 = vshrl.u32 %v2032, 7
        %v2034 = vsub.s32 4, %v2033
        %v2035 = vrot.slane %v1511, %v2034
        %v2036 = vsel %vm1176, %v2035, %v2031
        %v2037 = vlaneseq
        %v2038 = vshrl.u32 %v2037, 7
        %v2039 = vsub.s32 0, %v2038
        %v2040 = vrot.slane %v1682, %v2039
        %v2041 = vsel %vm1183, %v2040, %v2036
        %v2042 = vlaneseq
        %v2043 = vshrl.u32 %v2042, 7
        %v2044 = vsub.s32 4, %v2043
        %v2045 = vrot.slane %v1682, %v2044
        %v2046 = vsel %vm1190, %v2045, %v2041
        %v2047 = vlaneseq
        %v2048 = vshrl.u32 %v2047, 7
        %v2049 = vsub.s32 0, %v2048
        %v2050 = vrot.slane %v1853, %v2049
        %v2051 = vsel %vm1197, %v2050, %v2046
        %v2052 = vlaneseq
        %v2053 = vshrl.u32 %v2052, 7
        %v2054 = vsub.s32 4, %v2053
        %v2055 = vrot.slane %v1853, %v2054
        %v2056 = vsel %vm1204, %v2055, %v2051
        %v2057 = vlaneseq
        %v2058 = vshrl.u32 %v2057, 7
        %v2059 = vsub.s32 0, %v2058
        %v2060 = vrot.slane %v2024, %v2059
        %v2061 = vsel %vm1211, %v2060, %v2056
        %v2062 = vlaneseq
        %v2063 = vshrl.u32 %v2062, 7
        %v2064 = vsub.s32 4, %v2063
        %v2065 = vrot.slane %v2024, %v2064
        %v2066 = vsel %vm1218, %v2065, %v2061
        %v2067 = vlaneseq
        %v2068 = vshrl.u32 %v2067, 7
        %v2069 = vsub.s32 1, %v2068
        %v2070 = vrot.slane %v1511, %v2069
        %v2071 = vsel %vm1169, %v2070, 0.0
        %v2072 = vlaneseq
        %v2073 = vshrl.u32 %v2072, 7
        %v2074 = vsub.s32 5, %v2073
        %v2075 = vrot.slane %v1511, %v2074
        %v2076 = vsel %vm1176, %v2075, %v2071
        %v2077 = vlaneseq
        %v2078 = vshrl.u32 %v2077, 7
        %v2079 = vsub.s32 1, %v2078
        %v2080 = vrot.slane %v1682, %v2079
        %v2081 = vsel %vm1183, %v2080, %v2076
        %v2082 = vlaneseq
        %v2083 = vshrl.u32 %v2082, 7
        %v2084 = vsub.s32 5, %v2083
        %v2085 = vrot.slane %v1682, %v2084
        %v2086 = vsel %vm1190, %v2085, %v2081
        %v2087 = vlaneseq
        %v2088 = vshrl.u32 %v2087, 7
        %v2089 = vsub.s32 1, %v2088
        %v2090 = vrot.slane %v1853, %v2089
        %v2091 = vsel %vm1197, %v2090, %v2086
        %v2092 = vlaneseq
        %v2093 = vshrl.u32 %v2092, 7
        %v2094 = vsub.s32 5, %v2093
        %v2095 = vrot.slane %v1853, %v2094
        %v2096 = vsel %vm1204, %v2095, %v2091
        %v2097 = vlaneseq
        %v2098 = vshrl.u32 %v2097, 7
        %v2099 = vsub.s32 1, %v2098
        %v2100 = vrot.slane %v2024, %v2099
        %v2101 = vsel %vm1211, %v2100, %v2096
        %v2102 = vlaneseq
        %v2103 = vshrl.u32 %v2102, 7
        %v2104 = vsub.s32 5, %v2103
        %v2105 = vrot.slane %v2024, %v2104
        %v2106 = vsel %vm1218, %v2105, %v2101
        %v2107 = vlaneseq
        %v2108 = vshrl.u32 %v2107, 7
        %v2109 = vsub.s32 2, %v2108
        %v2110 = vrot.slane %v1511, %v2109
        %v2111 = vsel %vm1169, %v2110, 0.0
        %v2112 = vlaneseq
        %v2113 = vshrl.u32 %v2112, 7
        %v2114 = vsub.s32 6, %v2113
        %v2115 = vrot.slane %v1511, %v2114
        %v2116 = vsel %vm1176, %v2115, %v2111
        %v2117 = vlaneseq
        %v2118 = vshrl.u32 %v2117, 7
        %v2119 = vsub.s32 2, %v2118
        %v2120 = vrot.slane %v1682, %v2119
        %v2121 = vsel %vm1183, %v2120, %v2116
        %v2122 = vlaneseq
        %v2123 = vshrl.u32 %v2122, 7
        %v2124 = vsub.s32 6, %v2123
        %v2125 = vrot.slane %v1682, %v2124
        %v2126 = vsel %vm1190, %v2125, %v2121
        %v2127 = vlaneseq
        %v2128 = vshrl.u32 %v2127, 7
        %v2129 = vsub.s32 2, %v2128
        %v2130 = vrot.slane %v1853, %v2129
        %v2131 = vsel %vm1197, %v2130, %v2126
        %v2132 = vlaneseq
        %v2133 = vshrl.u32 %v2132, 7
        %v2134 = vsub.s32 6, %v2133
        %v2135 = vrot.slane %v1853, %v2134
        %v2136 = vsel %vm1204, %v2135, %v2131
        %v2137 = vlaneseq
        %v2138 = vshrl.u32 %v2137, 7
        %v2139 = vsub.s32 2, %v2138
        %v2140 = vrot.slane %v2024, %v2139
        %v2141 = vsel %vm1211, %v2140, %v2136
        %v2142 = vlaneseq
        %v2143 = vshrl.u32 %v2142, 7
        %v2144 = vsub.s32 6, %v2143
        %v2145 = vrot.slane %v2024, %v2144
        %v2146 = vsel %vm1218, %v2145, %v2141
        %v2147 = vlaneseq
        %v2148 = vshrl.u32 %v2147, 7
        %v2149 = vsub.s32 3, %v2148
        %v2150 = vrot.slane %v1511, %v2149
        %v2151 = vsel %vm1169, %v2150, 0.0
        %v2152 = vlaneseq
        %v2153 = vshrl.u32 %v2152, 7
        %v2154 = vsub.s32 7, %v2153
        %v2155 = vrot.slane %v1511, %v2154
        %v2156 = vsel %vm1176, %v2155, %v2151
        %v2157 = vlaneseq
        %v2158 = vshrl.u32 %v2157, 7
        %v2159 = vsub.s32 3, %v2158
        %v2160 = vrot.slane %v1682, %v2159
        %v2161 = vsel %vm1183, %v2160, %v2156
        %v2162 = vlaneseq
        %v2163 = vshrl.u32 %v2162, 7
        %v2164 = vsub.s32 7, %v2163
        %v2165 = vrot.slane %v1682, %v2164
        %v2166 = vsel %vm1190, %v2165, %v2161
        %v2167 = vlaneseq
        %v2168 = vshrl.u32 %v2167, 7
        %v2169 = vsub.s32 3, %v2168
        %v2170 = vrot.slane %v1853, %v2169
        %v2171 = vsel %vm1197, %v2170, %v2166
        %v2172 = vlaneseq
        %v2173 = vshrl.u32 %v2172, 7
        %v2174 = vsub.s32 7, %v2173
        %v2175 = vrot.slane %v1853, %v2174
        %v2176 = vsel %vm1204, %v2175, %v2171
        %v2177 = vlaneseq
        %v2178 = vshrl.u32 %v2177, 7
        %v2179 = vsub.s32 3, %v2178
        %v2180 = vrot.slane %v2024, %v2179
        %v2181 = vsel %vm1211, %v2180, %v2176
        %v2182 = vlaneseq
        %v2183 = vshrl.u32 %v2182, 7
        %v2184 = vsub.s32 7, %v2183
        %v2185 = vrot.slane %v2024, %v2184
        %v2186 = vsel %vm1218, %v2185, %v2181
        %2188 = vrot.lane.b32.xlu0 %v369, 96
        %v2189 = vpop.permute.xlu0 %2188
        %v2190 = vsel %vm491, %v2189, 0
        %v2192 = vsel %vm491, %v369, 0
        %2194 = vmatprep.subr.mxu0 0.0
        %2195 = vmatpush1.xpose.msra.mxu0 0.0
        %2196 = vmatprep.subr.mxu0 0.0
        %2197 = vmatpush1.xpose.msra.mxu0 0.0
        %2198 = vmatprep.subr.mxu0 0.0
        %2199 = vmatpush1.xpose.msra.mxu0 0.0
        %2200 = vmatprep.subr.mxu0 0.0
        %2201 = vmatpush1.xpose.msra.mxu0 0.0
        %2202 = vmatprep.subr.mxu0 0.0
        %2203 = vmatpush1.xpose.msra.mxu0 0.0
        %2204 = vmatprep.subr.mxu0 0.0
        %2205 = vmatpush1.xpose.msra.mxu0 0.0
        %2206 = vmatprep.subr.mxu0 0.0
        %2207 = vmatpush1.xpose.msra.mxu0 0.0
        %2208 = vmatprep.subr.mxu0 0.0
        %2209 = vmatpush1.xpose.msra.mxu0 0.0
        %2210 = vmatprep.subr.mxu0 0.0
        %2211 = vmatpush1.xpose.msra.mxu0 0.0
        %2212 = vmatprep.subr.mxu0 0.0
        %2213 = vmatpush1.xpose.msra.mxu0 0.0
        %2214 = vmatprep.subr.mxu0 0.0
        %2215 = vmatpush1.xpose.msra.mxu0 0.0
        %2216 = vmatprep.subr.mxu0 0.0
        %2217 = vmatpush1.xpose.msra.mxu0 0.0
        %2218 = vmatprep.subr.mxu0 0.0
        %2219 = vmatpush1.xpose.msra.mxu0 0.0
        %2220 = vmatprep.subr.mxu0 0.0
        %2221 = vmatpush1.xpose.msra.mxu0 0.0
        %2222 = vmatprep.subr.mxu0 0.0
        %2223 = vmatpush1.xpose.msra.mxu0 0.0
        %2224 = vmatprep.subr.mxu0 0.0
        %2225 = vmatpush1.xpose.msra.mxu0 %v2192
        %2226 = vmatprep.subr.mxu0 0.0
        %2227 = vmatpush2.xpose.msra.mxu0 0.0
        %2228 = vmatprep.subr.mxu0 0.0
        %2229 = vmatpush2.xpose.msra.mxu0 0.0
        %2230 = vmatprep.subr.mxu0 0.0
        %2231 = vmatpush2.xpose.msra.mxu0 0.0
        %2232 = vmatprep.subr.mxu0 0.0
        %2233 = vmatpush2.xpose.msra.mxu0 0.0
        %2234 = vmatprep.subr.mxu0 0.0
        %2235 = vmatpush2.xpose.msra.mxu0 0.0
        %2236 = vmatprep.subr.mxu0 0.0
        %2237 = vmatpush2.xpose.msra.mxu0 0.0
        %2238 = vmatprep.subr.mxu0 0.0
        %2239 = vmatpush2.xpose.msra.mxu0 0.0
        %2240 = vmatprep.subr.mxu0 0.0
        %2241 = vmatpush2.xpose.msra.mxu0 0.0
        %2242 = vmatprep.subr.mxu0 0.0
        %2243 = vmatpush2.xpose.msra.mxu0 0.0
        %2244 = vmatprep.subr.mxu0 0.0
        %2245 = vmatpush2.xpose.msra.mxu0 0.0
        %2246 = vmatprep.subr.mxu0 0.0
        %2247 = vmatpush2.xpose.msra.mxu0 0.0
        %2248 = vmatprep.subr.mxu0 0.0
        %2249 = vmatpush2.xpose.msra.mxu0 0.0
        %2250 = vmatprep.subr.mxu0 0.0
        %2251 = vmatpush2.xpose.msra.mxu0 0.0
        %2252 = vmatprep.subr.mxu0 0.0
        %2253 = vmatpush2.xpose.msra.mxu0 0.0
        %2254 = vmatprep.subr.mxu0 0.0
        %2255 = vmatpush2.xpose.msra.mxu0 0.0
        %2256 = vmatprep.subr.mxu0 0.0
        %2257 = vmatpush2.xpose.msra.mxu0 0.0
        %2258 = vmatprep.mubr.f32.mxu0 0.0
        %2259 = vmatmul.mubr.f32.gmra.mxu0 %v2190
        %v2260 = vpop.f32.mrf.mxu0
        %v2261 = vadd.f32 0.0, %v2260
        %v2262 = vpop.f32.mrf.mxu0
        %2263 = vdwg.mxu0
        %v2264 = vsel %vm491, %v2261, -inf
        %v2265 = vrot.slane %v2264, 4
        %v2266 = vmax.f32 %v2264, %v2265
        %v2267 = vrot.slane %v2266, 2
        %v2268 = vmax.f32 %v2266, %v2267
        %v2269 = vrot.slane %v2268, 1
        %v2270 = vmax.f32 %v2268, %v2269
        %v2271 = vsub.f32 %v2261, %v2270
        %v2272 = vmul.f32 %v2271, 1.442695
        %v2273 = vpow.pop %v2272
        %v2274 = vsel %vm491, %v2273, 0.0
        %v2275 = vrot.slane %v2274, 4
        %v2276 = vadd.f32 %v2274, %v2275
        %v2277 = vrot.slane %v2276, 2
        %v2278 = vadd.f32 %v2276, %v2277
        %v2279 = vrot.slane %v2278, 1
        %v2280 = vadd.f32 %v2278, %v2279
        %v2281 = vrcp.pop %v2280
        %v2282 = vmul.f32 %v2273, %v2281
        %2283 = vrot.lane.b32.xlu0 %v460, 112
        %v2284 = vpop.permute.xlu0 %2283
        %v2285 = vsel %vm491, %v2284, 0
        %2287 = vmatprep.subr.mxu0 0.0
        %2288 = vmatpush1.msra.mxu0 0.0
        %2289 = vmatprep.subr.mxu0 0.0
        %2290 = vmatpush1.msra.mxu0 0.0
        %2291 = vmatprep.subr.mxu0 0.0
        %2292 = vmatpush1.msra.mxu0 0.0
        %2293 = vmatprep.subr.mxu0 0.0
        %2294 = vmatpush1.msra.mxu0 0.0
        %2295 = vmatprep.subr.mxu0 0.0
        %2296 = vmatpush1.msra.mxu0 0.0
        %2297 = vmatprep.subr.mxu0 0.0
        %2298 = vmatpush1.msra.mxu0 0.0
        %2299 = vmatprep.subr.mxu0 0.0
        %2300 = vmatpush1.msra.mxu0 0.0
        %2301 = vmatprep.subr.mxu0 0.0
        %2302 = vmatpush1.msra.mxu0 0.0
        %2303 = vmatprep.subr.mxu0 0.0
        %2304 = vmatpush1.msra.mxu0 0.0
        %2305 = vmatprep.subr.mxu0 0.0
        %2306 = vmatpush1.msra.mxu0 0.0
        %2307 = vmatprep.subr.mxu0 0.0
        %2308 = vmatpush1.msra.mxu0 0.0
        %2309 = vmatprep.subr.mxu0 0.0
        %2310 = vmatpush1.msra.mxu0 0.0
        %2311 = vmatprep.subr.mxu0 0.0
        %2312 = vmatpush1.msra.mxu0 0.0
        %2313 = vmatprep.subr.mxu0 0.0
        %2314 = vmatpush1.msra.mxu0 0.0
        %2315 = vmatprep.subr.mxu0 0.0
        %2316 = vmatpush1.msra.mxu0 0.0
        %2317 = vmatprep.subr.mxu0 0.0
        %2318 = vmatpush1.msra.mxu0 %v2282
        %2319 = vmatprep.subr.mxu0 0.0
        %2320 = vmatpush2.msra.mxu0 0.0
        %2321 = vmatprep.subr.mxu0 0.0
        %2322 = vmatpush2.msra.mxu0 0.0
        %2323 = vmatprep.subr.mxu0 0.0
        %2324 = vmatpush2.msra.mxu0 0.0
        %2325 = vmatprep.subr.mxu0 0.0
        %2326 = vmatpush2.msra.mxu0 0.0
        %2327 = vmatprep.subr.mxu0 0.0
        %2328 = vmatpush2.msra.mxu0 0.0
        %2329 = vmatprep.subr.mxu0 0.0
        %2330 = vmatpush2.msra.mxu0 0.0
        %2331 = vmatprep.subr.mxu0 0.0
        %2332 = vmatpush2.msra.mxu0 0.0
        %2333 = vmatprep.subr.mxu0 0.0
        %2334 = vmatpush2.msra.mxu0 0.0
        %2335 = vmatprep.subr.mxu0 0.0
        %2336 = vmatpush2.msra.mxu0 0.0
        %2337 = vmatprep.subr.mxu0 0.0
        %2338 = vmatpush2.msra.mxu0 0.0
        %2339 = vmatprep.subr.mxu0 0.0
        %2340 = vmatpush2.msra.mxu0 0.0
        %2341 = vmatprep.subr.mxu0 0.0
        %2342 = vmatpush2.msra.mxu0 0.0
        %2343 = vmatprep.subr.mxu0 0.0
        %2344 = vmatpush2.msra.mxu0 0.0
        %2345 = vmatprep.subr.mxu0 0.0
        %2346 = vmatpush2.msra.mxu0 0.0
        %2347 = vmatprep.subr.mxu0 0.0
        %2348 = vmatpush2.msra.mxu0 0.0
        %2349 = vmatprep.subr.mxu0 0.0
        %2350 = vmatpush2.msra.mxu0 0.0
        %2351 = vmatprep.mubr.f32.mxu0 0.0
        %2352 = vmatmul.mubr.f32.gmra.mxu0 %v2285
        %v2353 = vpop.f32.mrf.mxu0
        %v2354 = vadd.f32 0.0, %v2353
        %v2355 = vpop.f32.mrf.mxu0
        %2356 = vdwg.mxu0
        %2357 = vrot.lane.b32.xlu0 %v369, 88
        %v2358 = vpop.permute.xlu0 %2357
        %2359 = vrot.lane.b32.xlu0 %v369, 120
        %v2360 = vpop.permute.xlu0 %2359
        %v2361 = vsel %vm491, %v2358, 0
        %v2363 = vsel %vm491, %v2360, 0
        %2365 = vmatprep.subr.mxu0 0.0
        %2366 = vmatpush1.xpose.msra.mxu0 0.0
        %2367 = vmatprep.subr.mxu0 0.0
        %2368 = vmatpush1.xpose.msra.mxu0 0.0
        %2369 = vmatprep.subr.mxu0 0.0
        %2370 = vmatpush1.xpose.msra.mxu0 0.0
        %2371 = vmatprep.subr.mxu0 0.0
        %2372 = vmatpush1.xpose.msra.mxu0 0.0
        %2373 = vmatprep.subr.mxu0 0.0
        %2374 = vmatpush1.xpose.msra.mxu0 0.0
        %2375 = vmatprep.subr.mxu0 0.0
        %2376 = vmatpush1.xpose.msra.mxu0 0.0
        %2377 = vmatprep.subr.mxu0 0.0
        %2378 = vmatpush1.xpose.msra.mxu0 0.0
        %2379 = vmatprep.subr.mxu0 0.0
        %2380 = vmatpush1.xpose.msra.mxu0 0.0
        %2381 = vmatprep.subr.mxu0 0.0
        %2382 = vmatpush1.xpose.msra.mxu0 0.0
        %2383 = vmatprep.subr.mxu0 0.0
        %2384 = vmatpush1.xpose.msra.mxu0 0.0
        %2385 = vmatprep.subr.mxu0 0.0
        %2386 = vmatpush1.xpose.msra.mxu0 0.0
        %2387 = vmatprep.subr.mxu0 0.0
        %2388 = vmatpush1.xpose.msra.mxu0 0.0
        %2389 = vmatprep.subr.mxu0 0.0
        %2390 = vmatpush1.xpose.msra.mxu0 0.0
        %2391 = vmatprep.subr.mxu0 0.0
        %2392 = vmatpush1.xpose.msra.mxu0 0.0
        %2393 = vmatprep.subr.mxu0 0.0
        %2394 = vmatpush1.xpose.msra.mxu0 0.0
        %2395 = vmatprep.subr.mxu0 0.0
        %2396 = vmatpush1.xpose.msra.mxu0 %v2363
        %2397 = vmatprep.subr.mxu0 0.0
        %2398 = vmatpush2.xpose.msra.mxu0 0.0
        %2399 = vmatprep.subr.mxu0 0.0
        %2400 = vmatpush2.xpose.msra.mxu0 0.0
        %2401 = vmatprep.subr.mxu0 0.0
        %2402 = vmatpush2.xpose.msra.mxu0 0.0
        %2403 = vmatprep.subr.mxu0 0.0
        %2404 = vmatpush2.xpose.msra.mxu0 0.0
        %2405 = vmatprep.subr.mxu0 0.0
        %2406 = vmatpush2.xpose.msra.mxu0 0.0
        %2407 = vmatprep.subr.mxu0 0.0
        %2408 = vmatpush2.xpose.msra.mxu0 0.0
        %2409 = vmatprep.subr.mxu0 0.0
        %2410 = vmatpush2.xpose.msra.mxu0 0.0
        %2411 = vmatprep.subr.mxu0 0.0
        %2412 = vmatpush2.xpose.msra.mxu0 0.0
        %2413 = vmatprep.subr.mxu0 0.0
        %2414 = vmatpush2.xpose.msra.mxu0 0.0
        %2415 = vmatprep.subr.mxu0 0.0
        %2416 = vmatpush2.xpose.msra.mxu0 0.0
        %2417 = vmatprep.subr.mxu0 0.0
        %2418 = vmatpush2.xpose.msra.mxu0 0.0
        %2419 = vmatprep.subr.mxu0 0.0
        %2420 = vmatpush2.xpose.msra.mxu0 0.0
        %2421 = vmatprep.subr.mxu0 0.0
        %2422 = vmatpush2.xpose.msra.mxu0 0.0
        %2423 = vmatprep.subr.mxu0 0.0
        %2424 = vmatpush2.xpose.msra.mxu0 0.0
        %2425 = vmatprep.subr.mxu0 0.0
        %2426 = vmatpush2.xpose.msra.mxu0 0.0
        %2427 = vmatprep.subr.mxu0 0.0
        %2428 = vmatpush2.xpose.msra.mxu0 0.0
        %2429 = vmatprep.mubr.f32.mxu0 0.0
        %2430 = vmatmul.mubr.f32.gmra.mxu0 %v2361
        %v2431 = vpop.f32.mrf.mxu0
        %v2432 = vadd.f32 0.0, %v2431
        %v2433 = vpop.f32.mrf.mxu0
        %2434 = vdwg.mxu0
        %v2435 = vsel %vm491, %v2432, -inf
        %v2436 = vrot.slane %v2435, 4
        %v2437 = vmax.f32 %v2435, %v2436
        %v2438 = vrot.slane %v2437, 2
        %v2439 = vmax.f32 %v2437, %v2438
        %v2440 = vrot.slane %v2439, 1
        %v2441 = vmax.f32 %v2439, %v2440
        %v2442 = vsub.f32 %v2432, %v2441
        %v2443 = vmul.f32 %v2442, 1.442695
        %v2444 = vpow.pop %v2443
        %v2445 = vsel %vm491, %v2444, 0.0
        %v2446 = vrot.slane %v2445, 4
        %v2447 = vadd.f32 %v2445, %v2446
        %v2448 = vrot.slane %v2447, 2
        %v2449 = vadd.f32 %v2447, %v2448
        %v2450 = vrot.slane %v2449, 1
        %v2451 = vadd.f32 %v2449, %v2450
        %v2452 = vrcp.pop %v2451
        %v2453 = vmul.f32 %v2444, %v2452
        %2454 = vrot.lane.b32.xlu0 %v465, 112
        %v2455 = vpop.permute.xlu0 %2454
        %v2456 = vsel %vm491, %v2455, 0
        %2458 = vmatprep.subr.mxu0 0.0
        %2459 = vmatpush1.msra.mxu0 0.0
        %2460 = vmatprep.subr.mxu0 0.0
        %2461 = vmatpush1.msra.mxu0 0.0
        %2462 = vmatprep.subr.mxu0 0.0
        %2463 = vmatpush1.msra.mxu0 0.0
        %2464 = vmatprep.subr.mxu0 0.0
        %2465 = vmatpush1.msra.mxu0 0.0
        %2466 = vmatprep.subr.mxu0 0.0
        %2467 = vmatpush1.msra.mxu0 0.0
        %2468 = vmatprep.subr.mxu0 0.0
        %2469 = vmatpush1.msra.mxu0 0.0
        %2470 = vmatprep.subr.mxu0 0.0
        %2471 = vmatpush1.msra.mxu0 0.0
        %2472 = vmatprep.subr.mxu0 0.0
        %2473 = vmatpush1.msra.mxu0 0.0
        %2474 = vmatprep.subr.mxu0 0.0
        %2475 = vmatpush1.msra.mxu0 0.0
        %2476 = vmatprep.subr.mxu0 0.0
        %2477 = vmatpush1.msra.mxu0 0.0
        %2478 = vmatprep.subr.mxu0 0.0
        %2479 = vmatpush1.msra.mxu0 0.0
        %2480 = vmatprep.subr.mxu0 0.0
        %2481 = vmatpush1.msra.mxu0 0.0
        %2482 = vmatprep.subr.mxu0 0.0
        %2483 = vmatpush1.msra.mxu0 0.0
        %2484 = vmatprep.subr.mxu0 0.0
        %2485 = vmatpush1.msra.mxu0 0.0
        %2486 = vmatprep.subr.mxu0 0.0
        %2487 = vmatpush1.msra.mxu0 0.0
        %2488 = vmatprep.subr.mxu0 0.0
        %2489 = vmatpush1.msra.mxu0 %v2453
        %2490 = vmatprep.subr.mxu0 0.0
        %2491 = vmatpush2.msra.mxu0 0.0
        %2492 = vmatprep.subr.mxu0 0.0
        %2493 = vmatpush2.msra.mxu0 0.0
        %2494 = vmatprep.subr.mxu0 0.0
        %2495 = vmatpush2.msra.mxu0 0.0
        %2496 = vmatprep.subr.mxu0 0.0
        %2497 = vmatpush2.msra.mxu0 0.0
        %2498 = vmatprep.subr.mxu0 0.0
        %2499 = vmatpush2.msra.mxu0 0.0
        %2500 = vmatprep.subr.mxu0 0.0
        %2501 = vmatpush2.msra.mxu0 0.0
        %2502 = vmatprep.subr.mxu0 0.0
        %2503 = vmatpush2.msra.mxu0 0.0
        %2504 = vmatprep.subr.mxu0 0.0
        %2505 = vmatpush2.msra.mxu0 0.0
        %2506 = vmatprep.subr.mxu0 0.0
        %2507 = vmatpush2.msra.mxu0 0.0
        %2508 = vmatprep.subr.mxu0 0.0
        %2509 = vmatpush2.msra.mxu0 0.0
        %2510 = vmatprep.subr.mxu0 0.0
        %2511 = vmatpush2.msra.mxu0 0.0
        %2512 = vmatprep.subr.mxu0 0.0
        %2513 = vmatpush2.msra.mxu0 0.0
        %2514 = vmatprep.subr.mxu0 0.0
        %2515 = vmatpush2.msra.mxu0 0.0
        %2516 = vmatprep.subr.mxu0 0.0
        %2517 = vmatpush2.msra.mxu0 0.0
        %2518 = vmatprep.subr.mxu0 0.0
        %2519 = vmatpush2.msra.mxu0 0.0
        %2520 = vmatprep.subr.mxu0 0.0
        %2521 = vmatpush2.msra.mxu0 0.0
        %2522 = vmatprep.mubr.f32.mxu0 0.0
        %2523 = vmatmul.mubr.f32.gmra.mxu0 %v2456
        %v2524 = vpop.f32.mrf.mxu0
        %v2525 = vadd.f32 0.0, %v2524
        %v2526 = vpop.f32.mrf.mxu0
        %2527 = vdwg.mxu0
        %2528 = vrot.lane.b32.xlu0 %v369, 80
        %v2529 = vpop.permute.xlu0 %2528
        %2530 = vrot.lane.b32.xlu0 %v369, 112
        %v2531 = vpop.permute.xlu0 %2530
        %v2532 = vsel %vm491, %v2529, 0
        %v2534 = vsel %vm491, %v2531, 0
        %2536 = vmatprep.subr.mxu0 0.0
        %2537 = vmatpush1.xpose.msra.mxu0 0.0
        %2538 = vmatprep.subr.mxu0 0.0
        %2539 = vmatpush1.xpose.msra.mxu0 0.0
        %2540 = vmatprep.subr.mxu0 0.0
        %2541 = vmatpush1.xpose.msra.mxu0 0.0
        %2542 = vmatprep.subr.mxu0 0.0
        %2543 = vmatpush1.xpose.msra.mxu0 0.0
        %2544 = vmatprep.subr.mxu0 0.0
        %2545 = vmatpush1.xpose.msra.mxu0 0.0
        %2546 = vmatprep.subr.mxu0 0.0
        %2547 = vmatpush1.xpose.msra.mxu0 0.0
        %2548 = vmatprep.subr.mxu0 0.0
        %2549 = vmatpush1.xpose.msra.mxu0 0.0
        %2550 = vmatprep.subr.mxu0 0.0
        %2551 = vmatpush1.xpose.msra.mxu0 0.0
        %2552 = vmatprep.subr.mxu0 0.0
        %2553 = vmatpush1.xpose.msra.mxu0 0.0
        %2554 = vmatprep.subr.mxu0 0.0
        %2555 = vmatpush1.xpose.msra.mxu0 0.0
        %2556 = vmatprep.subr.mxu0 0.0
        %2557 = vmatpush1.xpose.msra.mxu0 0.0
        %2558 = vmatprep.subr.mxu0 0.0
        %2559 = vmatpush1.xpose.msra.mxu0 0.0
        %2560 = vmatprep.subr.mxu0 0.0
        %2561 = vmatpush1.xpose.msra.mxu0 0.0
        %2562 = vmatprep.subr.mxu0 0.0
        %2563 = vmatpush1.xpose.msra.mxu0 0.0
        %2564 = vmatprep.subr.mxu0 0.0
        %2565 = vmatpush1.xpose.msra.mxu0 0.0
        %2566 = vmatprep.subr.mxu0 0.0
        %2567 = vmatpush1.xpose.msra.mxu0 %v2534
        %2568 = vmatprep.subr.mxu0 0.0
        %2569 = vmatpush2.xpose.msra.mxu0 0.0
        %2570 = vmatprep.subr.mxu0 0.0
        %2571 = vmatpush2.xpose.msra.mxu0 0.0
        %2572 = vmatprep.subr.mxu0 0.0
        %2573 = vmatpush2.xpose.msra.mxu0 0.0
        %2574 = vmatprep.subr.mxu0 0.0
        %2575 = vmatpush2.xpose.msra.mxu0 0.0
        %2576 = vmatprep.subr.mxu0 0.0
        %2577 = vmatpush2.xpose.msra.mxu0 0.0
        %2578 = vmatprep.subr.mxu0 0.0
        %2579 = vmatpush2.xpose.msra.mxu0 0.0
        %2580 = vmatprep.subr.mxu0 0.0
        %2581 = vmatpush2.xpose.msra.mxu0 0.0
        %2582 = vmatprep.subr.mxu0 0.0
        %2583 = vmatpush2.xpose.msra.mxu0 0.0
        %2584 = vmatprep.subr.mxu0 0.0
        %2585 = vmatpush2.xpose.msra.mxu0 0.0
        %2586 = vmatprep.subr.mxu0 0.0
        %2587 = vmatpush2.xpose.msra.mxu0 0.0
        %2588 = vmatprep.subr.mxu0 0.0
        %2589 = vmatpush2.xpose.msra.mxu0 0.0
        %2590 = vmatprep.subr.mxu0 0.0
        %2591 = vmatpush2.xpose.msra.mxu0 0.0
        %2592 = vmatprep.subr.mxu0 0.0
        %2593 = vmatpush2.xpose.msra.mxu0 0.0
        %2594 = vmatprep.subr.mxu0 0.0
        %2595 = vmatpush2.xpose.msra.mxu0 0.0
        %2596 = vmatprep.subr.mxu0 0.0
        %2597 = vmatpush2.xpose.msra.mxu0 0.0
        %2598 = vmatprep.subr.mxu0 0.0
        %2599 = vmatpush2.xpose.msra.mxu0 0.0
        %2600 = vmatprep.mubr.f32.mxu0 0.0
        %2601 = vmatmul.mubr.f32.gmra.mxu0 %v2532
        %v2602 = vpop.f32.mrf.mxu0
        %v2603 = vadd.f32 0.0, %v2602
        %v2604 = vpop.f32.mrf.mxu0
        %2605 = vdwg.mxu0
        %v2606 = vsel %vm491, %v2603, -inf
        %v2607 = vrot.slane %v2606, 4
        %v2608 = vmax.f32 %v2606, %v2607
        %v2609 = vrot.slane %v2608, 2
        %v2610 = vmax.f32 %v2608, %v2609
        %v2611 = vrot.slane %v2610, 1
        %v2612 = vmax.f32 %v2610, %v2611
        %v2613 = vsub.f32 %v2603, %v2612
        %v2614 = vmul.f32 %v2613, 1.442695
        %v2615 = vpow.pop %v2614
        %v2616 = vsel %vm491, %v2615, 0.0
        %v2617 = vrot.slane %v2616, 4
        %v2618 = vadd.f32 %v2616, %v2617
        %v2619 = vrot.slane %v2618, 2
        %v2620 = vadd.f32 %v2618, %v2619
        %v2621 = vrot.slane %v2620, 1
        %v2622 = vadd.f32 %v2620, %v2621
        %v2623 = vrcp.pop %v2622
        %v2624 = vmul.f32 %v2615, %v2623
        %2625 = vrot.lane.b32.xlu0 %v470, 112
        %v2626 = vpop.permute.xlu0 %2625
        %v2627 = vsel %vm491, %v2626, 0
        %2629 = vmatprep.subr.mxu0 0.0
        %2630 = vmatpush1.msra.mxu0 0.0
        %2631 = vmatprep.subr.mxu0 0.0
        %2632 = vmatpush1.msra.mxu0 0.0
        %2633 = vmatprep.subr.mxu0 0.0
        %2634 = vmatpush1.msra.mxu0 0.0
        %2635 = vmatprep.subr.mxu0 0.0
        %2636 = vmatpush1.msra.mxu0 0.0
        %2637 = vmatprep.subr.mxu0 0.0
        %2638 = vmatpush1.msra.mxu0 0.0
        %2639 = vmatprep.subr.mxu0 0.0
        %2640 = vmatpush1.msra.mxu0 0.0
        %2641 = vmatprep.subr.mxu0 0.0
        %2642 = vmatpush1.msra.mxu0 0.0
        %2643 = vmatprep.subr.mxu0 0.0
        %2644 = vmatpush1.msra.mxu0 0.0
        %2645 = vmatprep.subr.mxu0 0.0
        %2646 = vmatpush1.msra.mxu0 0.0
        %2647 = vmatprep.subr.mxu0 0.0
        %2648 = vmatpush1.msra.mxu0 0.0
        %2649 = vmatprep.subr.mxu0 0.0
        %2650 = vmatpush1.msra.mxu0 0.0
        %2651 = vmatprep.subr.mxu0 0.0
        %2652 = vmatpush1.msra.mxu0 0.0
        %2653 = vmatprep.subr.mxu0 0.0
        %2654 = vmatpush1.msra.mxu0 0.0
        %2655 = vmatprep.subr.mxu0 0.0
        %2656 = vmatpush1.msra.mxu0 0.0
        %2657 = vmatprep.subr.mxu0 0.0
        %2658 = vmatpush1.msra.mxu0 0.0
        %2659 = vmatprep.subr.mxu0 0.0
        %2660 = vmatpush1.msra.mxu0 %v2624
        %2661 = vmatprep.subr.mxu0 0.0
        %2662 = vmatpush2.msra.mxu0 0.0
        %2663 = vmatprep.subr.mxu0 0.0
        %2664 = vmatpush2.msra.mxu0 0.0
        %2665 = vmatprep.subr.mxu0 0.0
        %2666 = vmatpush2.msra.mxu0 0.0
        %2667 = vmatprep.subr.mxu0 0.0
        %2668 = vmatpush2.msra.mxu0 0.0
        %2669 = vmatprep.subr.mxu0 0.0
        %2670 = vmatpush2.msra.mxu0 0.0
        %2671 = vmatprep.subr.mxu0 0.0
        %2672 = vmatpush2.msra.mxu0 0.0
        %2673 = vmatprep.subr.mxu0 0.0
        %2674 = vmatpush2.msra.mxu0 0.0
        %2675 = vmatprep.subr.mxu0 0.0
        %2676 = vmatpush2.msra.mxu0 0.0
        %2677 = vmatprep.subr.mxu0 0.0
        %2678 = vmatpush2.msra.mxu0 0.0
        %2679 = vmatprep.subr.mxu0 0.0
        %2680 = vmatpush2.msra.mxu0 0.0
        %2681 = vmatprep.subr.mxu0 0.0
        %2682 = vmatpush2.msra.mxu0 0.0
        %2683 = vmatprep.subr.mxu0 0.0
        %2684 = vmatpush2.msra.mxu0 0.0
        %2685 = vmatprep.subr.mxu0 0.0
        %2686 = vmatpush2.msra.mxu0 0.0
        %2687 = vmatprep.subr.mxu0 0.0
        %2688 = vmatpush2.msra.mxu0 0.0
        %2689 = vmatprep.subr.mxu0 0.0
        %2690 = vmatpush2.msra.mxu0 0.0
        %2691 = vmatprep.subr.mxu0 0.0
        %2692 = vmatpush2.msra.mxu0 0.0
        %2693 = vmatprep.mubr.f32.mxu0 0.0
        %2694 = vmatmul.mubr.f32.gmra.mxu0 %v2627
        %v2695 = vpop.f32.mrf.mxu0
        %v2696 = vadd.f32 0.0, %v2695
        %v2697 = vpop.f32.mrf.mxu0
        %2698 = vdwg.mxu0
        %2699 = vrot.lane.b32.xlu0 %v369, 72
        %v2700 = vpop.permute.xlu0 %2699
        %2701 = vrot.lane.b32.xlu0 %v369, 104
        %v2702 = vpop.permute.xlu0 %2701
        %v2703 = vsel %vm491, %v2700, 0
        %v2705 = vsel %vm491, %v2702, 0
        %2707 = vmatprep.subr.mxu0 0.0
        %2708 = vmatpush1.xpose.msra.mxu0 0.0
        %2709 = vmatprep.subr.mxu0 0.0
        %2710 = vmatpush1.xpose.msra.mxu0 0.0
        %2711 = vmatprep.subr.mxu0 0.0
        %2712 = vmatpush1.xpose.msra.mxu0 0.0
        %2713 = vmatprep.subr.mxu0 0.0
        %2714 = vmatpush1.xpose.msra.mxu0 0.0
        %2715 = vmatprep.subr.mxu0 0.0
        %2716 = vmatpush1.xpose.msra.mxu0 0.0
        %2717 = vmatprep.subr.mxu0 0.0
        %2718 = vmatpush1.xpose.msra.mxu0 0.0
        %2719 = vmatprep.subr.mxu0 0.0
        %2720 = vmatpush1.xpose.msra.mxu0 0.0
        %2721 = vmatprep.subr.mxu0 0.0
        %2722 = vmatpush1.xpose.msra.mxu0 0.0
        %2723 = vmatprep.subr.mxu0 0.0
        %2724 = vmatpush1.xpose.msra.mxu0 0.0
        %2725 = vmatprep.subr.mxu0 0.0
        %2726 = vmatpush1.xpose.msra.mxu0 0.0
        %2727 = vmatprep.subr.mxu0 0.0
        %2728 = vmatpush1.xpose.msra.mxu0 0.0
        %2729 = vmatprep.subr.mxu0 0.0
        %2730 = vmatpush1.xpose.msra.mxu0 0.0
        %2731 = vmatprep.subr.mxu0 0.0
        %2732 = vmatpush1.xpose.msra.mxu0 0.0
        %2733 = vmatprep.subr.mxu0 0.0
        %2734 = vmatpush1.xpose.msra.mxu0 0.0
        %2735 = vmatprep.subr.mxu0 0.0
        %2736 = vmatpush1.xpose.msra.mxu0 0.0
        %2737 = vmatprep.subr.mxu0 0.0
        %2738 = vmatpush1.xpose.msra.mxu0 %v2705
        %2739 = vmatprep.subr.mxu0 0.0
        %2740 = vmatpush2.xpose.msra.mxu0 0.0
        %2741 = vmatprep.subr.mxu0 0.0
        %2742 = vmatpush2.xpose.msra.mxu0 0.0
        %2743 = vmatprep.subr.mxu0 0.0
        %2744 = vmatpush2.xpose.msra.mxu0 0.0
        %2745 = vmatprep.subr.mxu0 0.0
        %2746 = vmatpush2.xpose.msra.mxu0 0.0
        %2747 = vmatprep.subr.mxu0 0.0
        %2748 = vmatpush2.xpose.msra.mxu0 0.0
        %2749 = vmatprep.subr.mxu0 0.0
        %2750 = vmatpush2.xpose.msra.mxu0 0.0
        %2751 = vmatprep.subr.mxu0 0.0
        %2752 = vmatpush2.xpose.msra.mxu0 0.0
        %2753 = vmatprep.subr.mxu0 0.0
        %2754 = vmatpush2.xpose.msra.mxu0 0.0
        %2755 = vmatprep.subr.mxu0 0.0
        %2756 = vmatpush2.xpose.msra.mxu0 0.0
        %2757 = vmatprep.subr.mxu0 0.0
        %2758 = vmatpush2.xpose.msra.mxu0 0.0
        %2759 = vmatprep.subr.mxu0 0.0
        %2760 = vmatpush2.xpose.msra.mxu0 0.0
        %2761 = vmatprep.subr.mxu0 0.0
        %2762 = vmatpush2.xpose.msra.mxu0 0.0
        %2763 = vmatprep.subr.mxu0 0.0
        %2764 = vmatpush2.xpose.msra.mxu0 0.0
        %2765 = vmatprep.subr.mxu0 0.0
        %2766 = vmatpush2.xpose.msra.mxu0 0.0
        %2767 = vmatprep.subr.mxu0 0.0
        %2768 = vmatpush2.xpose.msra.mxu0 0.0
        %2769 = vmatprep.subr.mxu0 0.0
        %2770 = vmatpush2.xpose.msra.mxu0 0.0
        %2771 = vmatprep.mubr.f32.mxu0 0.0
        %2772 = vmatmul.mubr.f32.gmra.mxu0 %v2703
        %v2773 = vpop.f32.mrf.mxu0
        %v2774 = vadd.f32 0.0, %v2773
        %v2775 = vpop.f32.mrf.mxu0
        %2776 = vdwg.mxu0
        %v2777 = vsel %vm491, %v2774, -inf
        %v2778 = vrot.slane %v2777, 4
        %v2779 = vmax.f32 %v2777, %v2778
        %v2780 = vrot.slane %v2779, 2
        %v2781 = vmax.f32 %v2779, %v2780
        %v2782 = vrot.slane %v2781, 1
        %v2783 = vmax.f32 %v2781, %v2782
        %v2784 = vsub.f32 %v2774, %v2783
        %v2785 = vmul.f32 %v2784, 1.442695
        %v2786 = vpow.pop %v2785
        %v2787 = vsel %vm491, %v2786, 0.0
        %v2788 = vrot.slane %v2787, 4
        %v2789 = vadd.f32 %v2787, %v2788
        %v2790 = vrot.slane %v2789, 2
        %v2791 = vadd.f32 %v2789, %v2790
        %v2792 = vrot.slane %v2791, 1
        %v2793 = vadd.f32 %v2791, %v2792
        %v2794 = vrcp.pop %v2793
        %v2795 = vmul.f32 %v2786, %v2794
        %2796 = vrot.lane.b32.xlu0 %v475, 112
        %v2797 = vpop.permute.xlu0 %2796
        %v2798 = vsel %vm491, %v2797, 0
        %2800 = vmatprep.subr.mxu0 0.0
        %2801 = vmatpush1.msra.mxu0 0.0
        %2802 = vmatprep.subr.mxu0 0.0
        %2803 = vmatpush1.msra.mxu0 0.0
        %2804 = vmatprep.subr.mxu0 0.0
        %2805 = vmatpush1.msra.mxu0 0.0
        %2806 = vmatprep.subr.mxu0 0.0
        %2807 = vmatpush1.msra.mxu0 0.0
        %2808 = vmatprep.subr.mxu0 0.0
        %2809 = vmatpush1.msra.mxu0 0.0
        %2810 = vmatprep.subr.mxu0 0.0
        %2811 = vmatpush1.msra.mxu0 0.0
        %2812 = vmatprep.subr.mxu0 0.0
        %2813 = vmatpush1.msra.mxu0 0.0
        %2814 = vmatprep.subr.mxu0 0.0
        %2815 = vmatpush1.msra.mxu0 0.0
        %2816 = vmatprep.subr.mxu0 0.0
        %2817 = vmatpush1.msra.mxu0 0.0
        %2818 = vmatprep.subr.mxu0 0.0
        %2819 = vmatpush1.msra.mxu0 0.0
        %2820 = vmatprep.subr.mxu0 0.0
        %2821 = vmatpush1.msra.mxu0 0.0
        %2822 = vmatprep.subr.mxu0 0.0
        %2823 = vmatpush1.msra.mxu0 0.0
        %2824 = vmatprep.subr.mxu0 0.0
        %2825 = vmatpush1.msra.mxu0 0.0
        %2826 = vmatprep.subr.mxu0 0.0
        %2827 = vmatpush1.msra.mxu0 0.0
        %2828 = vmatprep.subr.mxu0 0.0
        %2829 = vmatpush1.msra.mxu0 0.0
        %2830 = vmatprep.subr.mxu0 0.0
        %2831 = vmatpush1.msra.mxu0 %v2795
        %2832 = vmatprep.subr.mxu0 0.0
        %2833 = vmatpush2.msra.mxu0 0.0
        %2834 = vmatprep.subr.mxu0 0.0
        %2835 = vmatpush2.msra.mxu0 0.0
        %2836 = vmatprep.subr.mxu0 0.0
        %2837 = vmatpush2.msra.mxu0 0.0
        %2838 = vmatprep.subr.mxu0 0.0
        %2839 = vmatpush2.msra.mxu0 0.0
        %2840 = vmatprep.subr.mxu0 0.0
        %2841 = vmatpush2.msra.mxu0 0.0
        %2842 = vmatprep.subr.mxu0 0.0
        %2843 = vmatpush2.msra.mxu0 0.0
        %2844 = vmatprep.subr.mxu0 0.0
        %2845 = vmatpush2.msra.mxu0 0.0
        %2846 = vmatprep.subr.mxu0 0.0
        %2847 = vmatpush2.msra.mxu0 0.0
        %2848 = vmatprep.subr.mxu0 0.0
        %2849 = vmatpush2.msra.mxu0 0.0
        %2850 = vmatprep.subr.mxu0 0.0
        %2851 = vmatpush2.msra.mxu0 0.0
        %2852 = vmatprep.subr.mxu0 0.0
        %2853 = vmatpush2.msra.mxu0 0.0
        %2854 = vmatprep.subr.mxu0 0.0
        %2855 = vmatpush2.msra.mxu0 0.0
        %2856 = vmatprep.subr.mxu0 0.0
        %2857 = vmatpush2.msra.mxu0 0.0
        %2858 = vmatprep.subr.mxu0 0.0
        %2859 = vmatpush2.msra.mxu0 0.0
        %2860 = vmatprep.subr.mxu0 0.0
        %2861 = vmatpush2.msra.mxu0 0.0
        %2862 = vmatprep.subr.mxu0 0.0
        %2863 = vmatpush2.msra.mxu0 0.0
        %2864 = vmatprep.mubr.f32.mxu0 0.0
        %2865 = vmatmul.mubr.f32.gmra.mxu0 %v2798
        %v2866 = vpop.f32.mrf.mxu0
        %v2867 = vadd.f32 0.0, %v2866
        %v2868 = vpop.f32.mrf.mxu0
        %2869 = vdwg.mxu0
        %v2870 = vlaneseq
        %v2871 = vshrl.u32 %v2870, 7
        %v2872 = vsub.s32 0, %v2871
        %v2873 = vrot.slane %v2354, %v2872
        %v2874 = vsel %vm1169, %v2873, 0.0
        %v2875 = vlaneseq
        %v2876 = vshrl.u32 %v2875, 7
        %v2877 = vsub.s32 4, %v2876
        %v2878 = vrot.slane %v2354, %v2877
        %v2879 = vsel %vm1176, %v2878, %v2874
        %v2880 = vlaneseq
        %v2881 = vshrl.u32 %v2880, 7
        %v2882 = vsub.s32 0, %v2881
        %v2883 = vrot.slane %v2525, %v2882
        %v2884 = vsel %vm1183, %v2883, %v2879
        %v2885 = vlaneseq
        %v2886 = vshrl.u32 %v2885, 7
        %v2887 = vsub.s32 4, %v2886
        %v2888 = vrot.slane %v2525, %v2887
        %v2889 = vsel %vm1190, %v2888, %v2884
        %v2890 = vlaneseq
        %v2891 = vshrl.u32 %v2890, 7
        %v2892 = vsub.s32 0, %v2891
        %v2893 = vrot.slane %v2696, %v2892
        %v2894 = vsel %vm1197, %v2893, %v2889
        %v2895 = vlaneseq
        %v2896 = vshrl.u32 %v2895, 7
        %v2897 = vsub.s32 4, %v2896
        %v2898 = vrot.slane %v2696, %v2897
        %v2899 = vsel %vm1204, %v2898, %v2894
        %v2900 = vlaneseq
        %v2901 = vshrl.u32 %v2900, 7
        %v2902 = vsub.s32 0, %v2901
        %v2903 = vrot.slane %v2867, %v2902
        %v2904 = vsel %vm1211, %v2903, %v2899
        %v2905 = vlaneseq
        %v2906 = vshrl.u32 %v2905, 7
        %v2907 = vsub.s32 4, %v2906
        %v2908 = vrot.slane %v2867, %v2907
        %v2909 = vsel %vm1218, %v2908, %v2904
        %v2910 = vlaneseq
        %v2911 = vshrl.u32 %v2910, 7
        %v2912 = vsub.s32 1, %v2911
        %v2913 = vrot.slane %v2354, %v2912
        %v2914 = vsel %vm1169, %v2913, 0.0
        %v2915 = vlaneseq
        %v2916 = vshrl.u32 %v2915, 7
        %v2917 = vsub.s32 5, %v2916
        %v2918 = vrot.slane %v2354, %v2917
        %v2919 = vsel %vm1176, %v2918, %v2914
        %v2920 = vlaneseq
        %v2921 = vshrl.u32 %v2920, 7
        %v2922 = vsub.s32 1, %v2921
        %v2923 = vrot.slane %v2525, %v2922
        %v2924 = vsel %vm1183, %v2923, %v2919
        %v2925 = vlaneseq
        %v2926 = vshrl.u32 %v2925, 7
        %v2927 = vsub.s32 5, %v2926
        %v2928 = vrot.slane %v2525, %v2927
        %v2929 = vsel %vm1190, %v2928, %v2924
        %v2930 = vlaneseq
        %v2931 = vshrl.u32 %v2930, 7
        %v2932 = vsub.s32 1, %v2931
        %v2933 = vrot.slane %v2696, %v2932
        %v2934 = vsel %vm1197, %v2933, %v2929
        %v2935 = vlaneseq
        %v2936 = vshrl.u32 %v2935, 7
        %v2937 = vsub.s32 5, %v2936
        %v2938 = vrot.slane %v2696, %v2937
        %v2939 = vsel %vm1204, %v2938, %v2934
        %v2940 = vlaneseq
        %v2941 = vshrl.u32 %v2940, 7
        %v2942 = vsub.s32 1, %v2941
        %v2943 = vrot.slane %v2867, %v2942
        %v2944 = vsel %vm1211, %v2943, %v2939
        %v2945 = vlaneseq
        %v2946 = vshrl.u32 %v2945, 7
        %v2947 = vsub.s32 5, %v2946
        %v2948 = vrot.slane %v2867, %v2947
        %v2949 = vsel %vm1218, %v2948, %v2944
        %v2950 = vlaneseq
        %v2951 = vshrl.u32 %v2950, 7
        %v2952 = vsub.s32 2, %v2951
        %v2953 = vrot.slane %v2354, %v2952
        %v2954 = vsel %vm1169, %v2953, 0.0
        %v2955 = vlaneseq
        %v2956 = vshrl.u32 %v2955, 7
        %v2957 = vsub.s32 6, %v2956
        %v2958 = vrot.slane %v2354, %v2957
        %v2959 = vsel %vm1176, %v2958, %v2954
        %v2960 = vlaneseq
        %v2961 = vshrl.u32 %v2960, 7
        %v2962 = vsub.s32 2, %v2961
        %v2963 = vrot.slane %v2525, %v2962
        %v2964 = vsel %vm1183, %v2963, %v2959
        %v2965 = vlaneseq
        %v2966 = vshrl.u32 %v2965, 7
        %v2967 = vsub.s32 6, %v2966
        %v2968 = vrot.slane %v2525, %v2967
        %v2969 = vsel %vm1190, %v2968, %v2964
        %v2970 = vlaneseq
        %v2971 = vshrl.u32 %v2970, 7
        %v2972 = vsub.s32 2, %v2971
        %v2973 = vrot.slane %v2696, %v2972
        %v2974 = vsel %vm1197, %v2973, %v2969
        %v2975 = vlaneseq
        %v2976 = vshrl.u32 %v2975, 7
        %v2977 = vsub.s32 6, %v2976
        %v2978 = vrot.slane %v2696, %v2977
        %v2979 = vsel %vm1204, %v2978, %v2974
        %v2980 = vlaneseq
        %v2981 = vshrl.u32 %v2980, 7
        %v2982 = vsub.s32 2, %v2981
        %v2983 = vrot.slane %v2867, %v2982
        %v2984 = vsel %vm1211, %v2983, %v2979
        %v2985 = vlaneseq
        %v2986 = vshrl.u32 %v2985, 7
        %v2987 = vsub.s32 6, %v2986
        %v2988 = vrot.slane %v2867, %v2987
        %v2989 = vsel %vm1218, %v2988, %v2984
        %v2990 = vlaneseq
        %v2991 = vshrl.u32 %v2990, 7
        %v2992 = vsub.s32 3, %v2991
        %v2993 = vrot.slane %v2354, %v2992
        %v2994 = vsel %vm1169, %v2993, 0.0
        %v2995 = vlaneseq
        %v2996 = vshrl.u32 %v2995, 7
        %v2997 = vsub.s32 7, %v2996
        %v2998 = vrot.slane %v2354, %v2997
        %v2999 = vsel %vm1176, %v2998, %v2994
        %v3000 = vlaneseq
        %v3001 = vshrl.u32 %v3000, 7
        %v3002 = vsub.s32 3, %v3001
        %v3003 = vrot.slane %v2525, %v3002
        %v3004 = vsel %vm1183, %v3003, %v2999
        %v3005 = vlaneseq
        %v3006 = vshrl.u32 %v3005, 7
        %v3007 = vsub.s32 7, %v3006
        %v3008 = vrot.slane %v2525, %v3007
        %v3009 = vsel %vm1190, %v3008, %v3004
        %v3010 = vlaneseq
        %v3011 = vshrl.u32 %v3010, 7
        %v3012 = vsub.s32 3, %v3011
        %v3013 = vrot.slane %v2696, %v3012
        %v3014 = vsel %vm1197, %v3013, %v3009
        %v3015 = vlaneseq
        %v3016 = vshrl.u32 %v3015, 7
        %v3017 = vsub.s32 7, %v3016
        %v3018 = vrot.slane %v2696, %v3017
        %v3019 = vsel %vm1204, %v3018, %v3014
        %v3020 = vlaneseq
        %v3021 = vshrl.u32 %v3020, 7
        %v3022 = vsub.s32 3, %v3021
        %v3023 = vrot.slane %v2867, %v3022
        %v3024 = vsel %vm1211, %v3023, %v3019
        %v3025 = vlaneseq
        %v3026 = vshrl.u32 %v3025, 7
        %v3027 = vsub.s32 7, %v3026
        %v3028 = vrot.slane %v2867, %v3027
        %v3029 = vsel %vm1218, %v3028, %v3024
        %3031 = vrot.lane.b32.xlu0 %v374, 96
        %v3032 = vpop.permute.xlu0 %3031
        %v3033 = vsel %vm491, %v3032, 0
        %v3035 = vsel %vm491, %v374, 0
        %3037 = vmatprep.subr.mxu0 0.0
        %3038 = vmatpush1.xpose.msra.mxu0 0.0
        %3039 = vmatprep.subr.mxu0 0.0
        %3040 = vmatpush1.xpose.msra.mxu0 0.0
        %3041 = vmatprep.subr.mxu0 0.0
        %3042 = vmatpush1.xpose.msra.mxu0 0.0
        %3043 = vmatprep.subr.mxu0 0.0
        %3044 = vmatpush1.xpose.msra.mxu0 0.0
        %3045 = vmatprep.subr.mxu0 0.0
        %3046 = vmatpush1.xpose.msra.mxu0 0.0
        %3047 = vmatprep.subr.mxu0 0.0
        %3048 = vmatpush1.xpose.msra.mxu0 0.0
        %3049 = vmatprep.subr.mxu0 0.0
        %3050 = vmatpush1.xpose.msra.mxu0 0.0
        %3051 = vmatprep.subr.mxu0 0.0
        %3052 = vmatpush1.xpose.msra.mxu0 0.0
        %3053 = vmatprep.subr.mxu0 0.0
        %3054 = vmatpush1.xpose.msra.mxu0 0.0
        %3055 = vmatprep.subr.mxu0 0.0
        %3056 = vmatpush1.xpose.msra.mxu0 0.0
        %3057 = vmatprep.subr.mxu0 0.0
        %3058 = vmatpush1.xpose.msra.mxu0 0.0
        %3059 = vmatprep.subr.mxu0 0.0
        %3060 = vmatpush1.xpose.msra.mxu0 0.0
        %3061 = vmatprep.subr.mxu0 0.0
        %3062 = vmatpush1.xpose.msra.mxu0 0.0
        %3063 = vmatprep.subr.mxu0 0.0
        %3064 = vmatpush1.xpose.msra.mxu0 0.0
        %3065 = vmatprep.subr.mxu0 0.0
        %3066 = vmatpush1.xpose.msra.mxu0 0.0
        %3067 = vmatprep.subr.mxu0 0.0
        %3068 = vmatpush1.xpose.msra.mxu0 %v3035
        %3069 = vmatprep.subr.mxu0 0.0
        %3070 = vmatpush2.xpose.msra.mxu0 0.0
        %3071 = vmatprep.subr.mxu0 0.0
        %3072 = vmatpush2.xpose.msra.mxu0 0.0
        %3073 = vmatprep.subr.mxu0 0.0
        %3074 = vmatpush2.xpose.msra.mxu0 0.0
        %3075 = vmatprep.subr.mxu0 0.0
        %3076 = vmatpush2.xpose.msra.mxu0 0.0
        %3077 = vmatprep.subr.mxu0 0.0
        %3078 = vmatpush2.xpose.msra.mxu0 0.0
        %3079 = vmatprep.subr.mxu0 0.0
        %3080 = vmatpush2.xpose.msra.mxu0 0.0
        %3081 = vmatprep.subr.mxu0 0.0
        %3082 = vmatpush2.xpose.msra.mxu0 0.0
        %3083 = vmatprep.subr.mxu0 0.0
        %3084 = vmatpush2.xpose.msra.mxu0 0.0
        %3085 = vmatprep.subr.mxu0 0.0
        %3086 = vmatpush2.xpose.msra.mxu0 0.0
        %3087 = vmatprep.subr.mxu0 0.0
        %3088 = vmatpush2.xpose.msra.mxu0 0.0
        %3089 = vmatprep.subr.mxu0 0.0
        %3090 = vmatpush2.xpose.msra.mxu0 0.0
        %3091 = vmatprep.subr.mxu0 0.0
        %3092 = vmatpush2.xpose.msra.mxu0 0.0
        %3093 = vmatprep.subr.mxu0 0.0
        %3094 = vmatpush2.xpose.msra.mxu0 0.0
        %3095 = vmatprep.subr.mxu0 0.0
        %3096 = vmatpush2.xpose.msra.mxu0 0.0
        %3097 = vmatprep.subr.mxu0 0.0
        %3098 = vmatpush2.xpose.msra.mxu0 0.0
        %3099 = vmatprep.subr.mxu0 0.0
        %3100 = vmatpush2.xpose.msra.mxu0 0.0
        %3101 = vmatprep.mubr.f32.mxu0 0.0
        %3102 = vmatmul.mubr.f32.gmra.mxu0 %v3033
        %v3103 = vpop.f32.mrf.mxu0
        %v3104 = vadd.f32 0.0, %v3103
        %v3105 = vpop.f32.mrf.mxu0
        %3106 = vdwg.mxu0
        %v3107 = vsel %vm491, %v3104, -inf
        %v3108 = vrot.slane %v3107, 4
        %v3109 = vmax.f32 %v3107, %v3108
        %v3110 = vrot.slane %v3109, 2
        %v3111 = vmax.f32 %v3109, %v3110
        %v3112 = vrot.slane %v3111, 1
        %v3113 = vmax.f32 %v3111, %v3112
        %v3114 = vsub.f32 %v3104, %v3113
        %v3115 = vmul.f32 %v3114, 1.442695
        %v3116 = vpow.pop %v3115
        %v3117 = vsel %vm491, %v3116, 0.0
        %v3118 = vrot.slane %v3117, 4
        %v3119 = vadd.f32 %v3117, %v3118
        %v3120 = vrot.slane %v3119, 2
        %v3121 = vadd.f32 %v3119, %v3120
        %v3122 = vrot.slane %v3121, 1
        %v3123 = vadd.f32 %v3121, %v3122
        %v3124 = vrcp.pop %v3123
        %v3125 = vmul.f32 %v3116, %v3124
        %3126 = vrot.lane.b32.xlu0 %v460, 104
        %v3127 = vpop.permute.xlu0 %3126
        %v3128 = vsel %vm491, %v3127, 0
        %3130 = vmatprep.subr.mxu0 0.0
        %3131 = vmatpush1.msra.mxu0 0.0
        %3132 = vmatprep.subr.mxu0 0.0
        %3133 = vmatpush1.msra.mxu0 0.0
        %3134 = vmatprep.subr.mxu0 0.0
        %3135 = vmatpush1.msra.mxu0 0.0
        %3136 = vmatprep.subr.mxu0 0.0
        %3137 = vmatpush1.msra.mxu0 0.0
        %3138 = vmatprep.subr.mxu0 0.0
        %3139 = vmatpush1.msra.mxu0 0.0
        %3140 = vmatprep.subr.mxu0 0.0
        %3141 = vmatpush1.msra.mxu0 0.0
        %3142 = vmatprep.subr.mxu0 0.0
        %3143 = vmatpush1.msra.mxu0 0.0
        %3144 = vmatprep.subr.mxu0 0.0
        %3145 = vmatpush1.msra.mxu0 0.0
        %3146 = vmatprep.subr.mxu0 0.0
        %3147 = vmatpush1.msra.mxu0 0.0
        %3148 = vmatprep.subr.mxu0 0.0
        %3149 = vmatpush1.msra.mxu0 0.0
        %3150 = vmatprep.subr.mxu0 0.0
        %3151 = vmatpush1.msra.mxu0 0.0
        %3152 = vmatprep.subr.mxu0 0.0
        %3153 = vmatpush1.msra.mxu0 0.0
        %3154 = vmatprep.subr.mxu0 0.0
        %3155 = vmatpush1.msra.mxu0 0.0
        %3156 = vmatprep.subr.mxu0 0.0
        %3157 = vmatpush1.msra.mxu0 0.0
        %3158 = vmatprep.subr.mxu0 0.0
        %3159 = vmatpush1.msra.mxu0 0.0
        %3160 = vmatprep.subr.mxu0 0.0
        %3161 = vmatpush1.msra.mxu0 %v3125
        %3162 = vmatprep.subr.mxu0 0.0
        %3163 = vmatpush2.msra.mxu0 0.0
        %3164 = vmatprep.subr.mxu0 0.0
        %3165 = vmatpush2.msra.mxu0 0.0
        %3166 = vmatprep.subr.mxu0 0.0
        %3167 = vmatpush2.msra.mxu0 0.0
        %3168 = vmatprep.subr.mxu0 0.0
        %3169 = vmatpush2.msra.mxu0 0.0
        %3170 = vmatprep.subr.mxu0 0.0
        %3171 = vmatpush2.msra.mxu0 0.0
        %3172 = vmatprep.subr.mxu0 0.0
        %3173 = vmatpush2.msra.mxu0 0.0
        %3174 = vmatprep.subr.mxu0 0.0
        %3175 = vmatpush2.msra.mxu0 0.0
        %3176 = vmatprep.subr.mxu0 0.0
        %3177 = vmatpush2.msra.mxu0 0.0
        %3178 = vmatprep.subr.mxu0 0.0
        %3179 = vmatpush2.msra.mxu0 0.0
        %3180 = vmatprep.subr.mxu0 0.0
        %3181 = vmatpush2.msra.mxu0 0.0
        %3182 = vmatprep.subr.mxu0 0.0
        %3183 = vmatpush2.msra.mxu0 0.0
        %3184 = vmatprep.subr.mxu0 0.0
        %3185 = vmatpush2.msra.mxu0 0.0
        %3186 = vmatprep.subr.mxu0 0.0
        %3187 = vmatpush2.msra.mxu0 0.0
        %3188 = vmatprep.subr.mxu0 0.0
        %3189 = vmatpush2.msra.mxu0 0.0
        %3190 = vmatprep.subr.mxu0 0.0
        %3191 = vmatpush2.msra.mxu0 0.0
        %3192 = vmatprep.subr.mxu0 0.0
        %3193 = vmatpush2.msra.mxu0 0.0
        %3194 = vmatprep.mubr.f32.mxu0 0.0
        %3195 = vmatmul.mubr.f32.gmra.mxu0 %v3128
        %v3196 = vpop.f32.mrf.mxu0
        %v3197 = vadd.f32 0.0, %v3196
        %v3198 = vpop.f32.mrf.mxu0
        %3199 = vdwg.mxu0
        %3200 = vrot.lane.b32.xlu0 %v374, 88
        %v3201 = vpop.permute.xlu0 %3200
        %3202 = vrot.lane.b32.xlu0 %v374, 120
        %v3203 = vpop.permute.xlu0 %3202
        %v3204 = vsel %vm491, %v3201, 0
        %v3206 = vsel %vm491, %v3203, 0
        %3208 = vmatprep.subr.mxu0 0.0
        %3209 = vmatpush1.xpose.msra.mxu0 0.0
        %3210 = vmatprep.subr.mxu0 0.0
        %3211 = vmatpush1.xpose.msra.mxu0 0.0
        %3212 = vmatprep.subr.mxu0 0.0
        %3213 = vmatpush1.xpose.msra.mxu0 0.0
        %3214 = vmatprep.subr.mxu0 0.0
        %3215 = vmatpush1.xpose.msra.mxu0 0.0
        %3216 = vmatprep.subr.mxu0 0.0
        %3217 = vmatpush1.xpose.msra.mxu0 0.0
        %3218 = vmatprep.subr.mxu0 0.0
        %3219 = vmatpush1.xpose.msra.mxu0 0.0
        %3220 = vmatprep.subr.mxu0 0.0
        %3221 = vmatpush1.xpose.msra.mxu0 0.0
        %3222 = vmatprep.subr.mxu0 0.0
        %3223 = vmatpush1.xpose.msra.mxu0 0.0
        %3224 = vmatprep.subr.mxu0 0.0
        %3225 = vmatpush1.xpose.msra.mxu0 0.0
        %3226 = vmatprep.subr.mxu0 0.0
        %3227 = vmatpush1.xpose.msra.mxu0 0.0
        %3228 = vmatprep.subr.mxu0 0.0
        %3229 = vmatpush1.xpose.msra.mxu0 0.0
        %3230 = vmatprep.subr.mxu0 0.0
        %3231 = vmatpush1.xpose.msra.mxu0 0.0
        %3232 = vmatprep.subr.mxu0 0.0
        %3233 = vmatpush1.xpose.msra.mxu0 0.0
        %3234 = vmatprep.subr.mxu0 0.0
        %3235 = vmatpush1.xpose.msra.mxu0 0.0
        %3236 = vmatprep.subr.mxu0 0.0
        %3237 = vmatpush1.xpose.msra.mxu0 0.0
        %3238 = vmatprep.subr.mxu0 0.0
        %3239 = vmatpush1.xpose.msra.mxu0 %v3206
        %3240 = vmatprep.subr.mxu0 0.0
        %3241 = vmatpush2.xpose.msra.mxu0 0.0
        %3242 = vmatprep.subr.mxu0 0.0
        %3243 = vmatpush2.xpose.msra.mxu0 0.0
        %3244 = vmatprep.subr.mxu0 0.0
        %3245 = vmatpush2.xpose.msra.mxu0 0.0
        %3246 = vmatprep.subr.mxu0 0.0
        %3247 = vmatpush2.xpose.msra.mxu0 0.0
        %3248 = vmatprep.subr.mxu0 0.0
        %3249 = vmatpush2.xpose.msra.mxu0 0.0
        %3250 = vmatprep.subr.mxu0 0.0
        %3251 = vmatpush2.xpose.msra.mxu0 0.0
        %3252 = vmatprep.subr.mxu0 0.0
        %3253 = vmatpush2.xpose.msra.mxu0 0.0
        %3254 = vmatprep.subr.mxu0 0.0
        %3255 = vmatpush2.xpose.msra.mxu0 0.0
        %3256 = vmatprep.subr.mxu0 0.0
        %3257 = vmatpush2.xpose.msra.mxu0 0.0
        %3258 = vmatprep.subr.mxu0 0.0
        %3259 = vmatpush2.xpose.msra.mxu0 0.0
        %3260 = vmatprep.subr.mxu0 0.0
        %3261 = vmatpush2.xpose.msra.mxu0 0.0
        %3262 = vmatprep.subr.mxu0 0.0
        %3263 = vmatpush2.xpose.msra.mxu0 0.0
        %3264 = vmatprep.subr.mxu0 0.0
        %3265 = vmatpush2.xpose.msra.mxu0 0.0
        %3266 = vmatprep.subr.mxu0 0.0
        %3267 = vmatpush2.xpose.msra.mxu0 0.0
        %3268 = vmatprep.subr.mxu0 0.0
        %3269 = vmatpush2.xpose.msra.mxu0 0.0
        %3270 = vmatprep.subr.mxu0 0.0
        %3271 = vmatpush2.xpose.msra.mxu0 0.0
        %3272 = vmatprep.mubr.f32.mxu0 0.0
        %3273 = vmatmul.mubr.f32.gmra.mxu0 %v3204
        %v3274 = vpop.f32.mrf.mxu0
        %v3275 = vadd.f32 0.0, %v3274
        %v3276 = vpop.f32.mrf.mxu0
        %3277 = vdwg.mxu0
        %v3278 = vsel %vm491, %v3275, -inf
        %v3279 = vrot.slane %v3278, 4
        %v3280 = vmax.f32 %v3278, %v3279
        %v3281 = vrot.slane %v3280, 2
        %v3282 = vmax.f32 %v3280, %v3281
        %v3283 = vrot.slane %v3282, 1
        %v3284 = vmax.f32 %v3282, %v3283
        %v3285 = vsub.f32 %v3275, %v3284
        %v3286 = vmul.f32 %v3285, 1.442695
        %v3287 = vpow.pop %v3286
        %v3288 = vsel %vm491, %v3287, 0.0
        %v3289 = vrot.slane %v3288, 4
        %v3290 = vadd.f32 %v3288, %v3289
        %v3291 = vrot.slane %v3290, 2
        %v3292 = vadd.f32 %v3290, %v3291
        %v3293 = vrot.slane %v3292, 1
        %v3294 = vadd.f32 %v3292, %v3293
        %v3295 = vrcp.pop %v3294
        %v3296 = vmul.f32 %v3287, %v3295
        %3297 = vrot.lane.b32.xlu0 %v465, 104
        %v3298 = vpop.permute.xlu0 %3297
        %v3299 = vsel %vm491, %v3298, 0
        %3301 = vmatprep.subr.mxu0 0.0
        %3302 = vmatpush1.msra.mxu0 0.0
        %3303 = vmatprep.subr.mxu0 0.0
        %3304 = vmatpush1.msra.mxu0 0.0
        %3305 = vmatprep.subr.mxu0 0.0
        %3306 = vmatpush1.msra.mxu0 0.0
        %3307 = vmatprep.subr.mxu0 0.0
        %3308 = vmatpush1.msra.mxu0 0.0
        %3309 = vmatprep.subr.mxu0 0.0
        %3310 = vmatpush1.msra.mxu0 0.0
        %3311 = vmatprep.subr.mxu0 0.0
        %3312 = vmatpush1.msra.mxu0 0.0
        %3313 = vmatprep.subr.mxu0 0.0
        %3314 = vmatpush1.msra.mxu0 0.0
        %3315 = vmatprep.subr.mxu0 0.0
        %3316 = vmatpush1.msra.mxu0 0.0
        %3317 = vmatprep.subr.mxu0 0.0
        %3318 = vmatpush1.msra.mxu0 0.0
        %3319 = vmatprep.subr.mxu0 0.0
        %3320 = vmatpush1.msra.mxu0 0.0
        %3321 = vmatprep.subr.mxu0 0.0
        %3322 = vmatpush1.msra.mxu0 0.0
        %3323 = vmatprep.subr.mxu0 0.0
        %3324 = vmatpush1.msra.mxu0 0.0
        %3325 = vmatprep.subr.mxu0 0.0
        %3326 = vmatpush1.msra.mxu0 0.0
        %3327 = vmatprep.subr.mxu0 0.0
        %3328 = vmatpush1.msra.mxu0 0.0
        %3329 = vmatprep.subr.mxu0 0.0
        %3330 = vmatpush1.msra.mxu0 0.0
        %3331 = vmatprep.subr.mxu0 0.0
        %3332 = vmatpush1.msra.mxu0 %v3296
        %3333 = vmatprep.subr.mxu0 0.0
        %3334 = vmatpush2.msra.mxu0 0.0
        %3335 = vmatprep.subr.mxu0 0.0
        %3336 = vmatpush2.msra.mxu0 0.0
        %3337 = vmatprep.subr.mxu0 0.0
        %3338 = vmatpush2.msra.mxu0 0.0
        %3339 = vmatprep.subr.mxu0 0.0
        %3340 = vmatpush2.msra.mxu0 0.0
        %3341 = vmatprep.subr.mxu0 0.0
        %3342 = vmatpush2.msra.mxu0 0.0
        %3343 = vmatprep.subr.mxu0 0.0
        %3344 = vmatpush2.msra.mxu0 0.0
        %3345 = vmatprep.subr.mxu0 0.0
        %3346 = vmatpush2.msra.mxu0 0.0
        %3347 = vmatprep.subr.mxu0 0.0
        %3348 = vmatpush2.msra.mxu0 0.0
        %3349 = vmatprep.subr.mxu0 0.0
        %3350 = vmatpush2.msra.mxu0 0.0
        %3351 = vmatprep.subr.mxu0 0.0
        %3352 = vmatpush2.msra.mxu0 0.0
        %3353 = vmatprep.subr.mxu0 0.0
        %3354 = vmatpush2.msra.mxu0 0.0
        %3355 = vmatprep.subr.mxu0 0.0
        %3356 = vmatpush2.msra.mxu0 0.0
        %3357 = vmatprep.subr.mxu0 0.0
        %3358 = vmatpush2.msra.mxu0 0.0
        %3359 = vmatprep.subr.mxu0 0.0
        %3360 = vmatpush2.msra.mxu0 0.0
        %3361 = vmatprep.subr.mxu0 0.0
        %3362 = vmatpush2.msra.mxu0 0.0
        %3363 = vmatprep.subr.mxu0 0.0
        %3364 = vmatpush2.msra.mxu0 0.0
        %3365 = vmatprep.mubr.f32.mxu0 0.0
        %3366 = vmatmul.mubr.f32.gmra.mxu0 %v3299
        %v3367 = vpop.f32.mrf.mxu0
        %v3368 = vadd.f32 0.0, %v3367
        %v3369 = vpop.f32.mrf.mxu0
        %3370 = vdwg.mxu0
        %3371 = vrot.lane.b32.xlu0 %v374, 80
        %v3372 = vpop.permute.xlu0 %3371
        %3373 = vrot.lane.b32.xlu0 %v374, 112
        %v3374 = vpop.permute.xlu0 %3373
        %v3375 = vsel %vm491, %v3372, 0
        %v3377 = vsel %vm491, %v3374, 0
        %3379 = vmatprep.subr.mxu0 0.0
        %3380 = vmatpush1.xpose.msra.mxu0 0.0
        %3381 = vmatprep.subr.mxu0 0.0
        %3382 = vmatpush1.xpose.msra.mxu0 0.0
        %3383 = vmatprep.subr.mxu0 0.0
        %3384 = vmatpush1.xpose.msra.mxu0 0.0
        %3385 = vmatprep.subr.mxu0 0.0
        %3386 = vmatpush1.xpose.msra.mxu0 0.0
        %3387 = vmatprep.subr.mxu0 0.0
        %3388 = vmatpush1.xpose.msra.mxu0 0.0
        %3389 = vmatprep.subr.mxu0 0.0
        %3390 = vmatpush1.xpose.msra.mxu0 0.0
        %3391 = vmatprep.subr.mxu0 0.0
        %3392 = vmatpush1.xpose.msra.mxu0 0.0
        %3393 = vmatprep.subr.mxu0 0.0
        %3394 = vmatpush1.xpose.msra.mxu0 0.0
        %3395 = vmatprep.subr.mxu0 0.0
        %3396 = vmatpush1.xpose.msra.mxu0 0.0
        %3397 = vmatprep.subr.mxu0 0.0
        %3398 = vmatpush1.xpose.msra.mxu0 0.0
        %3399 = vmatprep.subr.mxu0 0.0
        %3400 = vmatpush1.xpose.msra.mxu0 0.0
        %3401 = vmatprep.subr.mxu0 0.0
        %3402 = vmatpush1.xpose.msra.mxu0 0.0
        %3403 = vmatprep.subr.mxu0 0.0
        %3404 = vmatpush1.xpose.msra.mxu0 0.0
        %3405 = vmatprep.subr.mxu0 0.0
        %3406 = vmatpush1.xpose.msra.mxu0 0.0
        %3407 = vmatprep.subr.mxu0 0.0
        %3408 = vmatpush1.xpose.msra.mxu0 0.0
        %3409 = vmatprep.subr.mxu0 0.0
        %3410 = vmatpush1.xpose.msra.mxu0 %v3377
        %3411 = vmatprep.subr.mxu0 0.0
        %3412 = vmatpush2.xpose.msra.mxu0 0.0
        %3413 = vmatprep.subr.mxu0 0.0
        %3414 = vmatpush2.xpose.msra.mxu0 0.0
        %3415 = vmatprep.subr.mxu0 0.0
        %3416 = vmatpush2.xpose.msra.mxu0 0.0
        %3417 = vmatprep.subr.mxu0 0.0
        %3418 = vmatpush2.xpose.msra.mxu0 0.0
        %3419 = vmatprep.subr.mxu0 0.0
        %3420 = vmatpush2.xpose.msra.mxu0 0.0
        %3421 = vmatprep.subr.mxu0 0.0
        %3422 = vmatpush2.xpose.msra.mxu0 0.0
        %3423 = vmatprep.subr.mxu0 0.0
        %3424 = vmatpush2.xpose.msra.mxu0 0.0
        %3425 = vmatprep.subr.mxu0 0.0
        %3426 = vmatpush2.xpose.msra.mxu0 0.0
        %3427 = vmatprep.subr.mxu0 0.0
        %3428 = vmatpush2.xpose.msra.mxu0 0.0
        %3429 = vmatprep.subr.mxu0 0.0
        %3430 = vmatpush2.xpose.msra.mxu0 0.0
        %3431 = vmatprep.subr.mxu0 0.0
        %3432 = vmatpush2.xpose.msra.mxu0 0.0
        %3433 = vmatprep.subr.mxu0 0.0
        %3434 = vmatpush2.xpose.msra.mxu0 0.0
        %3435 = vmatprep.subr.mxu0 0.0
        %3436 = vmatpush2.xpose.msra.mxu0 0.0
        %3437 = vmatprep.subr.mxu0 0.0
        %3438 = vmatpush2.xpose.msra.mxu0 0.0
        %3439 = vmatprep.subr.mxu0 0.0
        %3440 = vmatpush2.xpose.msra.mxu0 0.0
        %3441 = vmatprep.subr.mxu0 0.0
        %3442 = vmatpush2.xpose.msra.mxu0 0.0
        %3443 = vmatprep.mubr.f32.mxu0 0.0
        %3444 = vmatmul.mubr.f32.gmra.mxu0 %v3375
        %v3445 = vpop.f32.mrf.mxu0
        %v3446 = vadd.f32 0.0, %v3445
        %v3447 = vpop.f32.mrf.mxu0
        %3448 = vdwg.mxu0
        %v3449 = vsel %vm491, %v3446, -inf
        %v3450 = vrot.slane %v3449, 4
        %v3451 = vmax.f32 %v3449, %v3450
        %v3452 = vrot.slane %v3451, 2
        %v3453 = vmax.f32 %v3451, %v3452
        %v3454 = vrot.slane %v3453, 1
        %v3455 = vmax.f32 %v3453, %v3454
        %v3456 = vsub.f32 %v3446, %v3455
        %v3457 = vmul.f32 %v3456, 1.442695
        %v3458 = vpow.pop %v3457
        %v3459 = vsel %vm491, %v3458, 0.0
        %v3460 = vrot.slane %v3459, 4
        %v3461 = vadd.f32 %v3459, %v3460
        %v3462 = vrot.slane %v3461, 2
        %v3463 = vadd.f32 %v3461, %v3462
        %v3464 = vrot.slane %v3463, 1
        %v3465 = vadd.f32 %v3463, %v3464
        %v3466 = vrcp.pop %v3465
        %v3467 = vmul.f32 %v3458, %v3466
        %3468 = vrot.lane.b32.xlu0 %v470, 104
        %v3469 = vpop.permute.xlu0 %3468
        %v3470 = vsel %vm491, %v3469, 0
        %3472 = vmatprep.subr.mxu0 0.0
        %3473 = vmatpush1.msra.mxu0 0.0
        %3474 = vmatprep.subr.mxu0 0.0
        %3475 = vmatpush1.msra.mxu0 0.0
        %3476 = vmatprep.subr.mxu0 0.0
        %3477 = vmatpush1.msra.mxu0 0.0
        %3478 = vmatprep.subr.mxu0 0.0
        %3479 = vmatpush1.msra.mxu0 0.0
        %3480 = vmatprep.subr.mxu0 0.0
        %3481 = vmatpush1.msra.mxu0 0.0
        %3482 = vmatprep.subr.mxu0 0.0
        %3483 = vmatpush1.msra.mxu0 0.0
        %3484 = vmatprep.subr.mxu0 0.0
        %3485 = vmatpush1.msra.mxu0 0.0
        %3486 = vmatprep.subr.mxu0 0.0
        %3487 = vmatpush1.msra.mxu0 0.0
        %3488 = vmatprep.subr.mxu0 0.0
        %3489 = vmatpush1.msra.mxu0 0.0
        %3490 = vmatprep.subr.mxu0 0.0
        %3491 = vmatpush1.msra.mxu0 0.0
        %3492 = vmatprep.subr.mxu0 0.0
        %3493 = vmatpush1.msra.mxu0 0.0
        %3494 = vmatprep.subr.mxu0 0.0
        %3495 = vmatpush1.msra.mxu0 0.0
        %3496 = vmatprep.subr.mxu0 0.0
        %3497 = vmatpush1.msra.mxu0 0.0
        %3498 = vmatprep.subr.mxu0 0.0
        %3499 = vmatpush1.msra.mxu0 0.0
        %3500 = vmatprep.subr.mxu0 0.0
        %3501 = vmatpush1.msra.mxu0 0.0
        %3502 = vmatprep.subr.mxu0 0.0
        %3503 = vmatpush1.msra.mxu0 %v3467
        %3504 = vmatprep.subr.mxu0 0.0
        %3505 = vmatpush2.msra.mxu0 0.0
        %3506 = vmatprep.subr.mxu0 0.0
        %3507 = vmatpush2.msra.mxu0 0.0
        %3508 = vmatprep.subr.mxu0 0.0
        %3509 = vmatpush2.msra.mxu0 0.0
        %3510 = vmatprep.subr.mxu0 0.0
        %3511 = vmatpush2.msra.mxu0 0.0
        %3512 = vmatprep.subr.mxu0 0.0
        %3513 = vmatpush2.msra.mxu0 0.0
        %3514 = vmatprep.subr.mxu0 0.0
        %3515 = vmatpush2.msra.mxu0 0.0
        %3516 = vmatprep.subr.mxu0 0.0
        %3517 = vmatpush2.msra.mxu0 0.0
        %3518 = vmatprep.subr.mxu0 0.0
        %3519 = vmatpush2.msra.mxu0 0.0
        %3520 = vmatprep.subr.mxu0 0.0
        %3521 = vmatpush2.msra.mxu0 0.0
        %3522 = vmatprep.subr.mxu0 0.0
        %3523 = vmatpush2.msra.mxu0 0.0
        %3524 = vmatprep.subr.mxu0 0.0
        %3525 = vmatpush2.msra.mxu0 0.0
        %3526 = vmatprep.subr.mxu0 0.0
        %3527 = vmatpush2.msra.mxu0 0.0
        %3528 = vmatprep.subr.mxu0 0.0
        %3529 = vmatpush2.msra.mxu0 0.0
        %3530 = vmatprep.subr.mxu0 0.0
        %3531 = vmatpush2.msra.mxu0 0.0
        %3532 = vmatprep.subr.mxu0 0.0
        %3533 = vmatpush2.msra.mxu0 0.0
        %3534 = vmatprep.subr.mxu0 0.0
        %3535 = vmatpush2.msra.mxu0 0.0
        %3536 = vmatprep.mubr.f32.mxu0 0.0
        %3537 = vmatmul.mubr.f32.gmra.mxu0 %v3470
        %v3538 = vpop.f32.mrf.mxu0
        %v3539 = vadd.f32 0.0, %v3538
        %v3540 = vpop.f32.mrf.mxu0
        %3541 = vdwg.mxu0
        %3542 = vrot.lane.b32.xlu0 %v374, 72
        %v3543 = vpop.permute.xlu0 %3542
        %3544 = vrot.lane.b32.xlu0 %v374, 104
        %v3545 = vpop.permute.xlu0 %3544
        %v3546 = vsel %vm491, %v3543, 0
        %v3548 = vsel %vm491, %v3545, 0
        %3550 = vmatprep.subr.mxu0 0.0
        %3551 = vmatpush1.xpose.msra.mxu0 0.0
        %3552 = vmatprep.subr.mxu0 0.0
        %3553 = vmatpush1.xpose.msra.mxu0 0.0
        %3554 = vmatprep.subr.mxu0 0.0
        %3555 = vmatpush1.xpose.msra.mxu0 0.0
        %3556 = vmatprep.subr.mxu0 0.0
        %3557 = vmatpush1.xpose.msra.mxu0 0.0
        %3558 = vmatprep.subr.mxu0 0.0
        %3559 = vmatpush1.xpose.msra.mxu0 0.0
        %3560 = vmatprep.subr.mxu0 0.0
        %3561 = vmatpush1.xpose.msra.mxu0 0.0
        %3562 = vmatprep.subr.mxu0 0.0
        %3563 = vmatpush1.xpose.msra.mxu0 0.0
        %3564 = vmatprep.subr.mxu0 0.0
        %3565 = vmatpush1.xpose.msra.mxu0 0.0
        %3566 = vmatprep.subr.mxu0 0.0
        %3567 = vmatpush1.xpose.msra.mxu0 0.0
        %3568 = vmatprep.subr.mxu0 0.0
        %3569 = vmatpush1.xpose.msra.mxu0 0.0
        %3570 = vmatprep.subr.mxu0 0.0
        %3571 = vmatpush1.xpose.msra.mxu0 0.0
        %3572 = vmatprep.subr.mxu0 0.0
        %3573 = vmatpush1.xpose.msra.mxu0 0.0
        %3574 = vmatprep.subr.mxu0 0.0
        %3575 = vmatpush1.xpose.msra.mxu0 0.0
        %3576 = vmatprep.subr.mxu0 0.0
        %3577 = vmatpush1.xpose.msra.mxu0 0.0
        %3578 = vmatprep.subr.mxu0 0.0
        %3579 = vmatpush1.xpose.msra.mxu0 0.0
        %3580 = vmatprep.subr.mxu0 0.0
        %3581 = vmatpush1.xpose.msra.mxu0 %v3548
        %3582 = vmatprep.subr.mxu0 0.0
        %3583 = vmatpush2.xpose.msra.mxu0 0.0
        %3584 = vmatprep.subr.mxu0 0.0
        %3585 = vmatpush2.xpose.msra.mxu0 0.0
        %3586 = vmatprep.subr.mxu0 0.0
        %3587 = vmatpush2.xpose.msra.mxu0 0.0
        %3588 = vmatprep.subr.mxu0 0.0
        %3589 = vmatpush2.xpose.msra.mxu0 0.0
        %3590 = vmatprep.subr.mxu0 0.0
        %3591 = vmatpush2.xpose.msra.mxu0 0.0
        %3592 = vmatprep.subr.mxu0 0.0
        %3593 = vmatpush2.xpose.msra.mxu0 0.0
        %3594 = vmatprep.subr.mxu0 0.0
        %3595 = vmatpush2.xpose.msra.mxu0 0.0
        %3596 = vmatprep.subr.mxu0 0.0
        %3597 = vmatpush2.xpose.msra.mxu0 0.0
        %3598 = vmatprep.subr.mxu0 0.0
        %3599 = vmatpush2.xpose.msra.mxu0 0.0
        %3600 = vmatprep.subr.mxu0 0.0
        %3601 = vmatpush2.xpose.msra.mxu0 0.0
        %3602 = vmatprep.subr.mxu0 0.0
        %3603 = vmatpush2.xpose.msra.mxu0 0.0
        %3604 = vmatprep.subr.mxu0 0.0
        %3605 = vmatpush2.xpose.msra.mxu0 0.0
        %3606 = vmatprep.subr.mxu0 0.0
        %3607 = vmatpush2.xpose.msra.mxu0 0.0
        %3608 = vmatprep.subr.mxu0 0.0
        %3609 = vmatpush2.xpose.msra.mxu0 0.0
        %3610 = vmatprep.subr.mxu0 0.0
        %3611 = vmatpush2.xpose.msra.mxu0 0.0
        %3612 = vmatprep.subr.mxu0 0.0
        %3613 = vmatpush2.xpose.msra.mxu0 0.0
        %3614 = vmatprep.mubr.f32.mxu0 0.0
        %3615 = vmatmul.mubr.f32.gmra.mxu0 %v3546
        %v3616 = vpop.f32.mrf.mxu0
        %v3617 = vadd.f32 0.0, %v3616
        %v3618 = vpop.f32.mrf.mxu0
        %3619 = vdwg.mxu0
        %v3620 = vsel %vm491, %v3617, -inf
        %v3621 = vrot.slane %v3620, 4
        %v3622 = vmax.f32 %v3620, %v3621
        %v3623 = vrot.slane %v3622, 2
        %v3624 = vmax.f32 %v3622, %v3623
        %v3625 = vrot.slane %v3624, 1
        %v3626 = vmax.f32 %v3624, %v3625
        %v3627 = vsub.f32 %v3617, %v3626
        %v3628 = vmul.f32 %v3627, 1.442695
        %v3629 = vpow.pop %v3628
        %v3630 = vsel %vm491, %v3629, 0.0
        %v3631 = vrot.slane %v3630, 4
        %v3632 = vadd.f32 %v3630, %v3631
        %v3633 = vrot.slane %v3632, 2
        %v3634 = vadd.f32 %v3632, %v3633
        %v3635 = vrot.slane %v3634, 1
        %v3636 = vadd.f32 %v3634, %v3635
        %v3637 = vrcp.pop %v3636
        %v3638 = vmul.f32 %v3629, %v3637
        %3639 = vrot.lane.b32.xlu0 %v475, 104
        %v3640 = vpop.permute.xlu0 %3639
        %v3641 = vsel %vm491, %v3640, 0
        %3643 = vmatprep.subr.mxu0 0.0
        %3644 = vmatpush1.msra.mxu0 0.0
        %3645 = vmatprep.subr.mxu0 0.0
        %3646 = vmatpush1.msra.mxu0 0.0
        %3647 = vmatprep.subr.mxu0 0.0
        %3648 = vmatpush1.msra.mxu0 0.0
        %3649 = vmatprep.subr.mxu0 0.0
        %3650 = vmatpush1.msra.mxu0 0.0
        %3651 = vmatprep.subr.mxu0 0.0
        %3652 = vmatpush1.msra.mxu0 0.0
        %3653 = vmatprep.subr.mxu0 0.0
        %3654 = vmatpush1.msra.mxu0 0.0
        %3655 = vmatprep.subr.mxu0 0.0
        %3656 = vmatpush1.msra.mxu0 0.0
        %3657 = vmatprep.subr.mxu0 0.0
        %3658 = vmatpush1.msra.mxu0 0.0
        %3659 = vmatprep.subr.mxu0 0.0
        %3660 = vmatpush1.msra.mxu0 0.0
        %3661 = vmatprep.subr.mxu0 0.0
        %3662 = vmatpush1.msra.mxu0 0.0
        %3663 = vmatprep.subr.mxu0 0.0
        %3664 = vmatpush1.msra.mxu0 0.0
        %3665 = vmatprep.subr.mxu0 0.0
        %3666 = vmatpush1.msra.mxu0 0.0
        %3667 = vmatprep.subr.mxu0 0.0
        %3668 = vmatpush1.msra.mxu0 0.0
        %3669 = vmatprep.subr.mxu0 0.0
        %3670 = vmatpush1.msra.mxu0 0.0
        %3671 = vmatprep.subr.mxu0 0.0
        %3672 = vmatpush1.msra.mxu0 0.0
        %3673 = vmatprep.subr.mxu0 0.0
        %3674 = vmatpush1.msra.mxu0 %v3638
        %3675 = vmatprep.subr.mxu0 0.0
        %3676 = vmatpush2.msra.mxu0 0.0
        %3677 = vmatprep.subr.mxu0 0.0
        %3678 = vmatpush2.msra.mxu0 0.0
        %3679 = vmatprep.subr.mxu0 0.0
        %3680 = vmatpush2.msra.mxu0 0.0
        %3681 = vmatprep.subr.mxu0 0.0
        %3682 = vmatpush2.msra.mxu0 0.0
        %3683 = vmatprep.subr.mxu0 0.0
        %3684 = vmatpush2.msra.mxu0 0.0
        %3685 = vmatprep.subr.mxu0 0.0
        %3686 = vmatpush2.msra.mxu0 0.0
        %3687 = vmatprep.subr.mxu0 0.0
        %3688 = vmatpush2.msra.mxu0 0.0
        %3689 = vmatprep.subr.mxu0 0.0
        %3690 = vmatpush2.msra.mxu0 0.0
        %3691 = vmatprep.subr.mxu0 0.0
        %3692 = vmatpush2.msra.mxu0 0.0
        %3693 = vmatprep.subr.mxu0 0.0
        %3694 = vmatpush2.msra.mxu0 0.0
        %3695 = vmatprep.subr.mxu0 0.0
        %3696 = vmatpush2.msra.mxu0 0.0
        %3697 = vmatprep.subr.mxu0 0.0
        %3698 = vmatpush2.msra.mxu0 0.0
        %3699 = vmatprep.subr.mxu0 0.0
        %3700 = vmatpush2.msra.mxu0 0.0
        %3701 = vmatprep.subr.mxu0 0.0
        %3702 = vmatpush2.msra.mxu0 0.0
        %3703 = vmatprep.subr.mxu0 0.0
        %3704 = vmatpush2.msra.mxu0 0.0
        %3705 = vmatprep.subr.mxu0 0.0
        %3706 = vmatpush2.msra.mxu0 0.0
        %3707 = vmatprep.mubr.f32.mxu0 0.0
        %3708 = vmatmul.mubr.f32.gmra.mxu0 %v3641
        %v3709 = vpop.f32.mrf.mxu0
        %v3710 = vadd.f32 0.0, %v3709
        %v3711 = vpop.f32.mrf.mxu0
        %3712 = vdwg.mxu0
        %v3713 = vlaneseq
        %v3714 = vshrl.u32 %v3713, 7
        %v3715 = vsub.s32 0, %v3714
        %v3716 = vrot.slane %v3197, %v3715
        %v3717 = vsel %vm1169, %v3716, 0.0
        %v3718 = vlaneseq
        %v3719 = vshrl.u32 %v3718, 7
        %v3720 = vsub.s32 4, %v3719
        %v3721 = vrot.slane %v3197, %v3720
        %v3722 = vsel %vm1176, %v3721, %v3717
        %v3723 = vlaneseq
        %v3724 = vshrl.u32 %v3723, 7
        %v3725 = vsub.s32 0, %v3724
        %v3726 = vrot.slane %v3368, %v3725
        %v3727 = vsel %vm1183, %v3726, %v3722
        %v3728 = vlaneseq
        %v3729 = vshrl.u32 %v3728, 7
        %v3730 = vsub.s32 4, %v3729
        %v3731 = vrot.slane %v3368, %v3730
        %v3732 = vsel %vm1190, %v3731, %v3727
        %v3733 = vlaneseq
        %v3734 = vshrl.u32 %v3733, 7
        %v3735 = vsub.s32 0, %v3734
        %v3736 = vrot.slane %v3539, %v3735
        %v3737 = vsel %vm1197, %v3736, %v3732
        %v3738 = vlaneseq
        %v3739 = vshrl.u32 %v3738, 7
        %v3740 = vsub.s32 4, %v3739
        %v3741 = vrot.slane %v3539, %v3740
        %v3742 = vsel %vm1204, %v3741, %v3737
        %v3743 = vlaneseq
        %v3744 = vshrl.u32 %v3743, 7
        %v3745 = vsub.s32 0, %v3744
        %v3746 = vrot.slane %v3710, %v3745
        %v3747 = vsel %vm1211, %v3746, %v3742
        %v3748 = vlaneseq
        %v3749 = vshrl.u32 %v3748, 7
        %v3750 = vsub.s32 4, %v3749
        %v3751 = vrot.slane %v3710, %v3750
        %v3752 = vsel %vm1218, %v3751, %v3747
        %v3753 = vlaneseq
        %v3754 = vshrl.u32 %v3753, 7
        %v3755 = vsub.s32 1, %v3754
        %v3756 = vrot.slane %v3197, %v3755
        %v3757 = vsel %vm1169, %v3756, 0.0
        %v3758 = vlaneseq
        %v3759 = vshrl.u32 %v3758, 7
        %v3760 = vsub.s32 5, %v3759
        %v3761 = vrot.slane %v3197, %v3760
        %v3762 = vsel %vm1176, %v3761, %v3757
        %v3763 = vlaneseq
        %v3764 = vshrl.u32 %v3763, 7
        %v3765 = vsub.s32 1, %v3764
        %v3766 = vrot.slane %v3368, %v3765
        %v3767 = vsel %vm1183, %v3766, %v3762
        %v3768 = vlaneseq
        %v3769 = vshrl.u32 %v3768, 7
        %v3770 = vsub.s32 5, %v3769
        %v3771 = vrot.slane %v3368, %v3770
        %v3772 = vsel %vm1190, %v3771, %v3767
        %v3773 = vlaneseq
        %v3774 = vshrl.u32 %v3773, 7
        %v3775 = vsub.s32 1, %v3774
        %v3776 = vrot.slane %v3539, %v3775
        %v3777 = vsel %vm1197, %v3776, %v3772
        %v3778 = vlaneseq
        %v3779 = vshrl.u32 %v3778, 7
        %v3780 = vsub.s32 5, %v3779
        %v3781 = vrot.slane %v3539, %v3780
        %v3782 = vsel %vm1204, %v3781, %v3777
        %v3783 = vlaneseq
        %v3784 = vshrl.u32 %v3783, 7
        %v3785 = vsub.s32 1, %v3784
        %v3786 = vrot.slane %v3710, %v3785
        %v3787 = vsel %vm1211, %v3786, %v3782
        %v3788 = vlaneseq
        %v3789 = vshrl.u32 %v3788, 7
        %v3790 = vsub.s32 5, %v3789
        %v3791 = vrot.slane %v3710, %v3790
        %v3792 = vsel %vm1218, %v3791, %v3787
        %v3793 = vlaneseq
        %v3794 = vshrl.u32 %v3793, 7
        %v3795 = vsub.s32 2, %v3794
        %v3796 = vrot.slane %v3197, %v3795
        %v3797 = vsel %vm1169, %v3796, 0.0
        %v3798 = vlaneseq
        %v3799 = vshrl.u32 %v3798, 7
        %v3800 = vsub.s32 6, %v3799
        %v3801 = vrot.slane %v3197, %v3800
        %v3802 = vsel %vm1176, %v3801, %v3797
        %v3803 = vlaneseq
        %v3804 = vshrl.u32 %v3803, 7
        %v3805 = vsub.s32 2, %v3804
        %v3806 = vrot.slane %v3368, %v3805
        %v3807 = vsel %vm1183, %v3806, %v3802
        %v3808 = vlaneseq
        %v3809 = vshrl.u32 %v3808, 7
        %v3810 = vsub.s32 6, %v3809
        %v3811 = vrot.slane %v3368, %v3810
        %v3812 = vsel %vm1190, %v3811, %v3807
        %v3813 = vlaneseq
        %v3814 = vshrl.u32 %v3813, 7
        %v3815 = vsub.s32 2, %v3814
        %v3816 = vrot.slane %v3539, %v3815
        %v3817 = vsel %vm1197, %v3816, %v3812
        %v3818 = vlaneseq
        %v3819 = vshrl.u32 %v3818, 7
        %v3820 = vsub.s32 6, %v3819
        %v3821 = vrot.slane %v3539, %v3820
        %v3822 = vsel %vm1204, %v3821, %v3817
        %v3823 = vlaneseq
        %v3824 = vshrl.u32 %v3823, 7
        %v3825 = vsub.s32 2, %v3824
        %v3826 = vrot.slane %v3710, %v3825
        %v3827 = vsel %vm1211, %v3826, %v3822
        %v3828 = vlaneseq
        %v3829 = vshrl.u32 %v3828, 7
        %v3830 = vsub.s32 6, %v3829
        %v3831 = vrot.slane %v3710, %v3830
        %v3832 = vsel %vm1218, %v3831, %v3827
        %v3833 = vlaneseq
        %v3834 = vshrl.u32 %v3833, 7
        %v3835 = vsub.s32 3, %v3834
        %v3836 = vrot.slane %v3197, %v3835
        %v3837 = vsel %vm1169, %v3836, 0.0
        %v3838 = vlaneseq
        %v3839 = vshrl.u32 %v3838, 7
        %v3840 = vsub.s32 7, %v3839
        %v3841 = vrot.slane %v3197, %v3840
        %v3842 = vsel %vm1176, %v3841, %v3837
        %v3843 = vlaneseq
        %v3844 = vshrl.u32 %v3843, 7
        %v3845 = vsub.s32 3, %v3844
        %v3846 = vrot.slane %v3368, %v3845
        %v3847 = vsel %vm1183, %v3846, %v3842
        %v3848 = vlaneseq
        %v3849 = vshrl.u32 %v3848, 7
        %v3850 = vsub.s32 7, %v3849
        %v3851 = vrot.slane %v3368, %v3850
        %v3852 = vsel %vm1190, %v3851, %v3847
        %v3853 = vlaneseq
        %v3854 = vshrl.u32 %v3853, 7
        %v3855 = vsub.s32 3, %v3854
        %v3856 = vrot.slane %v3539, %v3855
        %v3857 = vsel %vm1197, %v3856, %v3852
        %v3858 = vlaneseq
        %v3859 = vshrl.u32 %v3858, 7
        %v3860 = vsub.s32 7, %v3859
        %v3861 = vrot.slane %v3539, %v3860
        %v3862 = vsel %vm1204, %v3861, %v3857
        %v3863 = vlaneseq
        %v3864 = vshrl.u32 %v3863, 7
        %v3865 = vsub.s32 3, %v3864
        %v3866 = vrot.slane %v3710, %v3865
        %v3867 = vsel %vm1211, %v3866, %v3862
        %v3868 = vlaneseq
        %v3869 = vshrl.u32 %v3868, 7
        %v3870 = vsub.s32 7, %v3869
        %v3871 = vrot.slane %v3710, %v3870
        %v3872 = vsel %vm1218, %v3871, %v3867
        %v3873 = vld [vmem:[%s3] sm:$0xff]
        %s3874 = scalar_lea.vmem %s3, 8
        %v3875 = vld [vmem:[%s3874] sm:$0xff]
        %v3877 = vsel %vm491, %v1263, 0
        %v3880 = vsel %vm491, %v2106, 0
        %v3883 = vsel %vm491, %v2949, 0
        %v3886 = vsel %vm491, %v3792, 0
        %3888 = vmatprep.subr.mxu0 0.0
        %3889 = vmatpush1.msra.mxu0 0.0
        %3890 = vmatprep.subr.mxu0 0.0
        %3891 = vmatpush1.msra.mxu0 0.0
        %3892 = vmatprep.subr.mxu0 0.0
        %3893 = vmatpush1.msra.mxu0 0.0
        %3894 = vmatprep.subr.mxu0 0.0
        %3895 = vmatpush1.msra.mxu0 0.0
        %3896 = vmatprep.subr.mxu0 0.0
        %3897 = vmatpush1.msra.mxu0 0.0
        %3898 = vmatprep.subr.mxu0 0.0
        %3899 = vmatpush1.msra.mxu0 0.0
        %3900 = vmatprep.subr.mxu0 0.0
        %3901 = vmatpush1.msra.mxu0 0.0
        %3902 = vmatprep.subr.mxu0 0.0
        %3903 = vmatpush1.msra.mxu0 0.0
        %3904 = vmatprep.subr.mxu0 0.0
        %3905 = vmatpush1.msra.mxu0 0.0
        %3906 = vmatprep.subr.mxu0 0.0
        %3907 = vmatpush1.msra.mxu0 0.0
        %3908 = vmatprep.subr.mxu0 0.0
        %3909 = vmatpush1.msra.mxu0 0.0
        %3910 = vmatprep.subr.mxu0 0.0
        %3911 = vmatpush1.msra.mxu0 0.0
        %3912 = vmatprep.subr.mxu0 0.0
        %3913 = vmatpush1.msra.mxu0 0.0
        %3914 = vmatprep.subr.mxu0 0.0
        %3915 = vmatpush1.msra.mxu0 0.0
        %3916 = vmatprep.subr.mxu0 0.0
        %3917 = vmatpush1.msra.mxu0 0.0
        %3918 = vmatprep.subr.mxu0 0.0
        %3919 = vmatpush1.msra.mxu0 %v3875
        %3920 = vmatprep.subr.mxu0 0.0
        %3921 = vmatpush2.msra.mxu0 0.0
        %3922 = vmatprep.subr.mxu0 0.0
        %3923 = vmatpush2.msra.mxu0 0.0
        %3924 = vmatprep.subr.mxu0 0.0
        %3925 = vmatpush2.msra.mxu0 0.0
        %3926 = vmatprep.subr.mxu0 0.0
        %3927 = vmatpush2.msra.mxu0 0.0
        %3928 = vmatprep.subr.mxu0 0.0
        %3929 = vmatpush2.msra.mxu0 0.0
        %3930 = vmatprep.subr.mxu0 0.0
        %3931 = vmatpush2.msra.mxu0 0.0
        %3932 = vmatprep.subr.mxu0 0.0
        %3933 = vmatpush2.msra.mxu0 0.0
        %3934 = vmatprep.subr.mxu0 0.0
        %3935 = vmatpush2.msra.mxu0 0.0
        %3936 = vmatprep.subr.mxu0 0.0
        %3937 = vmatpush2.msra.mxu0 0.0
        %3938 = vmatprep.subr.mxu0 0.0
        %3939 = vmatpush2.msra.mxu0 0.0
        %3940 = vmatprep.subr.mxu0 0.0
        %3941 = vmatpush2.msra.mxu0 0.0
        %3942 = vmatprep.subr.mxu0 0.0
        %3943 = vmatpush2.msra.mxu0 0.0
        %3944 = vmatprep.subr.mxu0 0.0
        %3945 = vmatpush2.msra.mxu0 0.0
        %3946 = vmatprep.subr.mxu0 0.0
        %3947 = vmatpush2.msra.mxu0 0.0
        %3948 = vmatprep.subr.mxu0 0.0
        %3949 = vmatpush2.msra.mxu0 0.0
        %3950 = vmatprep.subr.mxu0 0.0
        %3951 = vmatpush2.msra.mxu0 0.0
        %3952 = vmatprep.mubr.f32.mxu0 0.0
        %3953 = vmatmul.mubr.f32.gmra.mxu0 %v3877
        %v3954 = vpop.f32.mrf.mxu0
        %v3955 = vadd.f32 0.0, %v3954
        %v3956 = vpop.f32.mrf.mxu0
        %3957 = vmatprep.mubr.f32.mxu0 0.0
        %3958 = vmatmul.mubr.f32.gmra.mxu0 %v3880
        %v3959 = vpop.f32.mrf.mxu0
        %v3960 = vadd.f32 0.0, %v3959
        %v3961 = vpop.f32.mrf.mxu0
        %3962 = vmatprep.mubr.f32.mxu0 0.0
        %3963 = vmatmul.mubr.f32.gmra.mxu0 %v3883
        %v3964 = vpop.f32.mrf.mxu0
        %v3965 = vadd.f32 0.0, %v3964
        %v3966 = vpop.f32.mrf.mxu0
        %3967 = vmatprep.mubr.f32.mxu0 0.0
        %3968 = vmatmul.mubr.f32.gmra.mxu0 %v3886
        %v3969 = vpop.f32.mrf.mxu0
        %v3970 = vadd.f32 0.0, %v3969
        %v3971 = vpop.f32.mrf.mxu0
        %3972 = vdwg.mxu0
        %s3973 = scalar_lea.vmem %s3, 16
        %v3974 = vld [vmem:[%s3973] sm:$0xff]
        %v3976 = vsel %vm491, %v1303, 0
        %v3979 = vsel %vm491, %v2146, 0
        %v3982 = vsel %vm491, %v2989, 0
        %v3985 = vsel %vm491, %v3832, 0
        %3987 = vmatprep.subr.mxu0 0.0
        %3988 = vmatpush1.msra.mxu0 0.0
        %3989 = vmatprep.subr.mxu0 0.0
        %3990 = vmatpush1.msra.mxu0 0.0
        %3991 = vmatprep.subr.mxu0 0.0
        %3992 = vmatpush1.msra.mxu0 0.0
        %3993 = vmatprep.subr.mxu0 0.0
        %3994 = vmatpush1.msra.mxu0 0.0
        %3995 = vmatprep.subr.mxu0 0.0
        %3996 = vmatpush1.msra.mxu0 0.0
        %3997 = vmatprep.subr.mxu0 0.0
        %3998 = vmatpush1.msra.mxu0 0.0
        %3999 = vmatprep.subr.mxu0 0.0
        %4000 = vmatpush1.msra.mxu0 0.0
        %4001 = vmatprep.subr.mxu0 0.0
        %4002 = vmatpush1.msra.mxu0 0.0
        %4003 = vmatprep.subr.mxu0 0.0
        %4004 = vmatpush1.msra.mxu0 0.0
        %4005 = vmatprep.subr.mxu0 0.0
        %4006 = vmatpush1.msra.mxu0 0.0
        %4007 = vmatprep.subr.mxu0 0.0
        %4008 = vmatpush1.msra.mxu0 0.0
        %4009 = vmatprep.subr.mxu0 0.0
        %4010 = vmatpush1.msra.mxu0 0.0
        %4011 = vmatprep.subr.mxu0 0.0
        %4012 = vmatpush1.msra.mxu0 0.0
        %4013 = vmatprep.subr.mxu0 0.0
        %4014 = vmatpush1.msra.mxu0 0.0
        %4015 = vmatprep.subr.mxu0 0.0
        %4016 = vmatpush1.msra.mxu0 0.0
        %4017 = vmatprep.subr.mxu0 0.0
        %4018 = vmatpush1.msra.mxu0 %v3974
        %4019 = vmatprep.subr.mxu0 0.0
        %4020 = vmatpush2.msra.mxu0 0.0
        %4021 = vmatprep.subr.mxu0 0.0
        %4022 = vmatpush2.msra.mxu0 0.0
        %4023 = vmatprep.subr.mxu0 0.0
        %4024 = vmatpush2.msra.mxu0 0.0
        %4025 = vmatprep.subr.mxu0 0.0
        %4026 = vmatpush2.msra.mxu0 0.0
        %4027 = vmatprep.subr.mxu0 0.0
        %4028 = vmatpush2.msra.mxu0 0.0
        %4029 = vmatprep.subr.mxu0 0.0
        %4030 = vmatpush2.msra.mxu0 0.0
        %4031 = vmatprep.subr.mxu0 0.0
        %4032 = vmatpush2.msra.mxu0 0.0
        %4033 = vmatprep.subr.mxu0 0.0
        %4034 = vmatpush2.msra.mxu0 0.0
        %4035 = vmatprep.subr.mxu0 0.0
        %4036 = vmatpush2.msra.mxu0 0.0
        %4037 = vmatprep.subr.mxu0 0.0
        %4038 = vmatpush2.msra.mxu0 0.0
        %4039 = vmatprep.subr.mxu0 0.0
        %4040 = vmatpush2.msra.mxu0 0.0
        %4041 = vmatprep.subr.mxu0 0.0
        %4042 = vmatpush2.msra.mxu0 0.0
        %4043 = vmatprep.subr.mxu0 0.0
        %4044 = vmatpush2.msra.mxu0 0.0
        %4045 = vmatprep.subr.mxu0 0.0
        %4046 = vmatpush2.msra.mxu0 0.0
        %4047 = vmatprep.subr.mxu0 0.0
        %4048 = vmatpush2.msra.mxu0 0.0
        %4049 = vmatprep.subr.mxu0 0.0
        %4050 = vmatpush2.msra.mxu0 0.0
        %4051 = vmatprep.mubr.f32.mxu0 0.0
        %4052 = vmatmul.mubr.f32.gmra.mxu0 %v3976
        %v4053 = vpop.f32.mrf.mxu0
        %v4054 = vadd.f32 0.0, %v4053
        %v4055 = vpop.f32.mrf.mxu0
        %4056 = vmatprep.mubr.f32.mxu0 0.0
        %4057 = vmatmul.mubr.f32.gmra.mxu0 %v3979
        %v4058 = vpop.f32.mrf.mxu0
        %v4059 = vadd.f32 0.0, %v4058
        %v4060 = vpop.f32.mrf.mxu0
        %4061 = vmatprep.mubr.f32.mxu0 0.0
        %4062 = vmatmul.mubr.f32.gmra.mxu0 %v3982
        %v4063 = vpop.f32.mrf.mxu0
        %v4064 = vadd.f32 0.0, %v4063
        %v4065 = vpop.f32.mrf.mxu0
        %4066 = vmatprep.mubr.f32.mxu0 0.0
        %4067 = vmatmul.mubr.f32.gmra.mxu0 %v3985
        %v4068 = vpop.f32.mrf.mxu0
        %v4069 = vadd.f32 0.0, %v4068
        %v4070 = vpop.f32.mrf.mxu0
        %4071 = vdwg.mxu0
        %s4072 = scalar_lea.vmem %s3, 24
        %v4073 = vld [vmem:[%s4072] sm:$0xff]
        %v4075 = vsel %vm491, %v1343, 0
        %v4078 = vsel %vm491, %v2186, 0
        %v4081 = vsel %vm491, %v3029, 0
        %v4084 = vsel %vm491, %v3872, 0
        %4086 = vmatprep.subr.mxu0 0.0
        %4087 = vmatpush1.msra.mxu0 0.0
        %4088 = vmatprep.subr.mxu0 0.0
        %4089 = vmatpush1.msra.mxu0 0.0
        %4090 = vmatprep.subr.mxu0 0.0
        %4091 = vmatpush1.msra.mxu0 0.0
        %4092 = vmatprep.subr.mxu0 0.0
        %4093 = vmatpush1.msra.mxu0 0.0
        %4094 = vmatprep.subr.mxu0 0.0
        %4095 = vmatpush1.msra.mxu0 0.0
        %4096 = vmatprep.subr.mxu0 0.0
        %4097 = vmatpush1.msra.mxu0 0.0
        %4098 = vmatprep.subr.mxu0 0.0
        %4099 = vmatpush1.msra.mxu0 0.0
        %4100 = vmatprep.subr.mxu0 0.0
        %4101 = vmatpush1.msra.mxu0 0.0
        %4102 = vmatprep.subr.mxu0 0.0
        %4103 = vmatpush1.msra.mxu0 0.0
        %4104 = vmatprep.subr.mxu0 0.0
        %4105 = vmatpush1.msra.mxu0 0.0
        %4106 = vmatprep.subr.mxu0 0.0
        %4107 = vmatpush1.msra.mxu0 0.0
        %4108 = vmatprep.subr.mxu0 0.0
        %4109 = vmatpush1.msra.mxu0 0.0
        %4110 = vmatprep.subr.mxu0 0.0
        %4111 = vmatpush1.msra.mxu0 0.0
        %4112 = vmatprep.subr.mxu0 0.0
        %4113 = vmatpush1.msra.mxu0 0.0
        %4114 = vmatprep.subr.mxu0 0.0
        %4115 = vmatpush1.msra.mxu0 0.0
        %4116 = vmatprep.subr.mxu0 0.0
        %4117 = vmatpush1.msra.mxu0 %v4073
        %4118 = vmatprep.subr.mxu0 0.0
        %4119 = vmatpush2.msra.mxu0 0.0
        %4120 = vmatprep.subr.mxu0 0.0
        %4121 = vmatpush2.msra.mxu0 0.0
        %4122 = vmatprep.subr.mxu0 0.0
        %4123 = vmatpush2.msra.mxu0 0.0
        %4124 = vmatprep.subr.mxu0 0.0
        %4125 = vmatpush2.msra.mxu0 0.0
        %4126 = vmatprep.subr.mxu0 0.0
        %4127 = vmatpush2.msra.mxu0 0.0
        %4128 = vmatprep.subr.mxu0 0.0
        %4129 = vmatpush2.msra.mxu0 0.0
        %4130 = vmatprep.subr.mxu0 0.0
        %4131 = vmatpush2.msra.mxu0 0.0
        %4132 = vmatprep.subr.mxu0 0.0
        %4133 = vmatpush2.msra.mxu0 0.0
        %4134 = vmatprep.subr.mxu0 0.0
        %4135 = vmatpush2.msra.mxu0 0.0
        %4136 = vmatprep.subr.mxu0 0.0
        %4137 = vmatpush2.msra.mxu0 0.0
        %4138 = vmatprep.subr.mxu0 0.0
        %4139 = vmatpush2.msra.mxu0 0.0
        %4140 = vmatprep.subr.mxu0 0.0
        %4141 = vmatpush2.msra.mxu0 0.0
        %4142 = vmatprep.subr.mxu0 0.0
        %4143 = vmatpush2.msra.mxu0 0.0
        %4144 = vmatprep.subr.mxu0 0.0
        %4145 = vmatpush2.msra.mxu0 0.0
        %4146 = vmatprep.subr.mxu0 0.0
        %4147 = vmatpush2.msra.mxu0 0.0
        %4148 = vmatprep.subr.mxu0 0.0
        %4149 = vmatpush2.msra.mxu0 0.0
        %4150 = vmatprep.mubr.f32.mxu0 0.0
        %4151 = vmatmul.mubr.f32.gmra.mxu0 %v4075
        %v4152 = vpop.f32.mrf.mxu0
        %v4153 = vadd.f32 0.0, %v4152
        %v4154 = vpop.f32.mrf.mxu0
        %4155 = vmatprep.mubr.f32.mxu0 0.0
        %4156 = vmatmul.mubr.f32.gmra.mxu0 %v4078
        %v4157 = vpop.f32.mrf.mxu0
        %v4158 = vadd.f32 0.0, %v4157
        %v4159 = vpop.f32.mrf.mxu0
        %4160 = vmatprep.mubr.f32.mxu0 0.0
        %4161 = vmatmul.mubr.f32.gmra.mxu0 %v4081
        %v4162 = vpop.f32.mrf.mxu0
        %v4163 = vadd.f32 0.0, %v4162
        %v4164 = vpop.f32.mrf.mxu0
        %4165 = vmatprep.mubr.f32.mxu0 0.0
        %4166 = vmatmul.mubr.f32.gmra.mxu0 %v4084
        %v4167 = vpop.f32.mrf.mxu0
        %v4168 = vadd.f32 0.0, %v4167
        %v4169 = vpop.f32.mrf.mxu0
        %4170 = vdwg.mxu0
        %v4172 = vsel %vm491, %v1223, 0
        %v4175 = vsel %vm491, %v2066, 0
        %v4178 = vsel %vm491, %v2909, 0
        %v4181 = vsel %vm491, %v3752, 0
        %4183 = vmatprep.subr.mxu0 0.0
        %4184 = vmatpush1.msra.mxu0 0.0
        %4185 = vmatprep.subr.mxu0 0.0
        %4186 = vmatpush1.msra.mxu0 0.0
        %4187 = vmatprep.subr.mxu0 0.0
        %4188 = vmatpush1.msra.mxu0 0.0
        %4189 = vmatprep.subr.mxu0 0.0
        %4190 = vmatpush1.msra.mxu0 0.0
        %4191 = vmatprep.subr.mxu0 0.0
        %4192 = vmatpush1.msra.mxu0 0.0
        %4193 = vmatprep.subr.mxu0 0.0
        %4194 = vmatpush1.msra.mxu0 0.0
        %4195 = vmatprep.subr.mxu0 0.0
        %4196 = vmatpush1.msra.mxu0 0.0
        %4197 = vmatprep.subr.mxu0 0.0
        %4198 = vmatpush1.msra.mxu0 0.0
        %4199 = vmatprep.subr.mxu0 0.0
        %4200 = vmatpush1.msra.mxu0 0.0
        %4201 = vmatprep.subr.mxu0 0.0
        %4202 = vmatpush1.msra.mxu0 0.0
        %4203 = vmatprep.subr.mxu0 0.0
        %4204 = vmatpush1.msra.mxu0 0.0
        %4205 = vmatprep.subr.mxu0 0.0
        %4206 = vmatpush1.msra.mxu0 0.0
        %4207 = vmatprep.subr.mxu0 0.0
        %4208 = vmatpush1.msra.mxu0 0.0
        %4209 = vmatprep.subr.mxu0 0.0
        %4210 = vmatpush1.msra.mxu0 0.0
        %4211 = vmatprep.subr.mxu0 0.0
        %4212 = vmatpush1.msra.mxu0 0.0
        %4213 = vmatprep.subr.mxu0 0.0
        %4214 = vmatpush1.msra.mxu0 %v3873
        %4215 = vmatprep.subr.mxu0 0.0
        %4216 = vmatpush2.msra.mxu0 0.0
        %4217 = vmatprep.subr.mxu0 0.0
        %4218 = vmatpush2.msra.mxu0 0.0
        %4219 = vmatprep.subr.mxu0 0.0
        %4220 = vmatpush2.msra.mxu0 0.0
        %4221 = vmatprep.subr.mxu0 0.0
        %4222 = vmatpush2.msra.mxu0 0.0
        %4223 = vmatprep.subr.mxu0 0.0
        %4224 = vmatpush2.msra.mxu0 0.0
        %4225 = vmatprep.subr.mxu0 0.0
        %4226 = vmatpush2.msra.mxu0 0.0
        %4227 = vmatprep.subr.mxu0 0.0
        %4228 = vmatpush2.msra.mxu0 0.0
        %4229 = vmatprep.subr.mxu0 0.0
        %4230 = vmatpush2.msra.mxu0 0.0
        %4231 = vmatprep.subr.mxu0 0.0
        %4232 = vmatpush2.msra.mxu0 0.0
        %4233 = vmatprep.subr.mxu0 0.0
        %4234 = vmatpush2.msra.mxu0 0.0
        %4235 = vmatprep.subr.mxu0 0.0
        %4236 = vmatpush2.msra.mxu0 0.0
        %4237 = vmatprep.subr.mxu0 0.0
        %4238 = vmatpush2.msra.mxu0 0.0
        %4239 = vmatprep.subr.mxu0 0.0
        %4240 = vmatpush2.msra.mxu0 0.0
        %4241 = vmatprep.subr.mxu0 0.0
        %4242 = vmatpush2.msra.mxu0 0.0
        %4243 = vmatprep.subr.mxu0 0.0
        %4244 = vmatpush2.msra.mxu0 0.0
        %4245 = vmatprep.subr.mxu0 0.0
        %4246 = vmatpush2.msra.mxu0 0.0
        %4247 = vmatprep.mubr.f32.mxu0 0.0
        %4248 = vmatmul.mubr.f32.gmra.mxu0 %v4172
        %v4249 = vpop.f32.mrf.mxu0
        %v4250 = vadd.f32 %v3955, %v4249
        %v4251 = vpop.f32.mrf.mxu0
        %4252 = vmatprep.mubr.f32.mxu0 0.0
        %4253 = vmatmul.mubr.f32.gmra.mxu0 %v4175
        %v4254 = vpop.f32.mrf.mxu0
        %v4255 = vadd.f32 %v3960, %v4254
        %v4256 = vpop.f32.mrf.mxu0
        %4257 = vmatprep.mubr.f32.mxu0 0.0
        %4258 = vmatmul.mubr.f32.gmra.mxu0 %v4178
        %v4259 = vpop.f32.mrf.mxu0
        %v4260 = vadd.f32 %v3965, %v4259
        %v4261 = vpop.f32.mrf.mxu0
        %4262 = vmatprep.mubr.f32.mxu0 0.0
        %4263 = vmatmul.mubr.f32.gmra.mxu0 %v4181
        %v4264 = vpop.f32.mrf.mxu0
        %v4265 = vadd.f32 %v3970, %v4264
        %v4266 = vpop.f32.mrf.mxu0
        %4267 = vdwg.mxu0
        %v4268 = vadd.f32 %v4250, %v4054
        %v4269 = vadd.f32 %v4255, %v4059
        %v4270 = vadd.f32 %v4260, %v4064
        %v4271 = vadd.f32 %v4265, %v4069
        %v4272 = vadd.f32 %v4268, %v4153
        %v4273 = vadd.f32 %v4269, %v4158
        %v4274 = vadd.f32 %v4270, %v4163
        %v4275 = vadd.f32 %v4271, %v4168
        %v4276 = vadd.f32 %v271, %v4272
        %v4277 = vadd.f32 %v272, %v4273
        %v4278 = vadd.f32 %v273, %v4274
        %v4279 = vadd.f32 %v274, %v4275
        %v4280 = vsel %vm279, %v4276, 0.0
        %4281 = vadd.xlane.f32.xlu0 %v4280
        %v4282 = vpop.xlane.xlu0 %4281
        %v4283 = vsel %vm279, %v4277, 0.0
        %4284 = vadd.xlane.f32.xlu0 %v4283
        %v4285 = vpop.xlane.xlu0 %4284
        %v4286 = vsel %vm279, %v4278, 0.0
        %4287 = vadd.xlane.f32.xlu0 %v4286
        %v4288 = vpop.xlane.xlu0 %4287
        %v4289 = vsel %vm279, %v4279, 0.0
        %4290 = vadd.xlane.f32.xlu0 %v4289
        %v4291 = vpop.xlane.xlu0 %4290
        %v4292 = vrcp.pop 32.0
        %v4293 = vmul.f32 %v4282, %v4292
        %v4294 = vmul.f32 %v4285, %v4292
        %v4295 = vmul.f32 %v4288, %v4292
        %v4296 = vmul.f32 %v4291, %v4292
        %v4297 = vsub.f32 %v4276, %v4293
        %v4298 = vsub.f32 %v4277, %v4294
        %v4299 = vsub.f32 %v4278, %v4295
        %v4300 = vsub.f32 %v4279, %v4296
        %v4301 = vmul.f32 %v4297, %v4297
        %v4302 = vmul.f32 %v4298, %v4298
        %v4303 = vmul.f32 %v4299, %v4299
        %v4304 = vmul.f32 %v4300, %v4300
        %v4305 = vsel %vm279, %v4301, 0.0
        %4306 = vadd.xlane.f32.xlu0 %v4305
        %v4307 = vpop.xlane.xlu0 %4306
        %v4308 = vsel %vm279, %v4302, 0.0
        %4309 = vadd.xlane.f32.xlu0 %v4308
        %v4310 = vpop.xlane.xlu0 %4309
        %v4311 = vsel %vm279, %v4303, 0.0
        %4312 = vadd.xlane.f32.xlu0 %v4311
        %v4313 = vpop.xlane.xlu0 %4312
        %v4314 = vsel %vm279, %v4304, 0.0
        %4315 = vadd.xlane.f32.xlu0 %v4314
        %v4316 = vpop.xlane.xlu0 %4315
        %v4317 = vmul.f32 %v4307, %v4292
        %v4318 = vmul.f32 %v4310, %v4292
        %v4319 = vmul.f32 %v4313, %v4292
        %v4320 = vmul.f32 %v4316, %v4292
        %v4321 = vadd.f32 %v4317, 1e-05
        %v4322 = vadd.f32 %v4318, 1e-05
        %v4323 = vadd.f32 %v4319, 1e-05
        %v4324 = vadd.f32 %v4320, 1e-05
        %v4325 = vrsqrt.pop %v4321
        %v4326 = vrsqrt.pop %v4322
        %v4327 = vrsqrt.pop %v4323
        %v4328 = vrsqrt.pop %v4324
        %v4329 = vmul.f32 %v4297, %v4325
        %v4330 = vmul.f32 %v4298, %v4326
        %v4331 = vmul.f32 %v4299, %v4327
        %v4332 = vmul.f32 %v4300, %v4328
        %v4333 = vlaneseq
        %v4334 = vshrl.u32 %v4333, 7
        %v4335 = vsub.s32 0, %v4334
        %v4336 = vrot.slane %v270, %v4335
        %v4337 = vmul.f32 %v4329, %v4336
        %v4338 = vmul.f32 %v4330, %v4336
        %v4339 = vmul.f32 %v4331, %v4336
        %v4340 = vmul.f32 %v4332, %v4336
        %v4341 = vlaneseq
        %v4342 = vshrl.u32 %v4341, 7
        %v4343 = vsub.s32 1, %v4342
        %v4344 = vrot.slane %v270, %v4343
        %v4345 = vadd.f32 %v4337, %v4344
        %v4346 = vadd.f32 %v4338, %v4344
        %v4347 = vadd.f32 %v4339, %v4344
        %v4348 = vadd.f32 %v4340, %v4344
        %v4349 = vld [vmem:[#allocation2] sm:$0xff]
        %v4350 = vld [vmem:[#allocation2 + $0x8] sm:$0xff]
        %v4351 = vld [vmem:[#allocation2 + $0x10] sm:$0xff]
        %v4352 = vld [vmem:[#allocation2 + $0x18] sm:$0xff]
        %v4353 = vlaneseq
        %v4354 = vshrl.u32 %v4353, 7
        %v4355 = vsub.s32 2, %v4354
        %v4356 = vrot.slane %v270, %v4355
        %v4358 = vsel %vm279, %v4345, 0
        %v4361 = vsel %vm279, %v4346, 0
        %v4364 = vsel %vm279, %v4347, 0
        %v4367 = vsel %vm279, %v4348, 0
        %4369 = vmatprep.subr.mxu0 0.0
        %4370 = vmatpush1.msra.mxu0 0.0
        %4371 = vmatprep.subr.mxu0 0.0
        %4372 = vmatpush1.msra.mxu0 0.0
        %4373 = vmatprep.subr.mxu0 0.0
        %4374 = vmatpush1.msra.mxu0 0.0
        %4375 = vmatprep.subr.mxu0 0.0
        %4376 = vmatpush1.msra.mxu0 0.0
        %4377 = vmatprep.subr.mxu0 0.0
        %4378 = vmatpush1.msra.mxu0 0.0
        %4379 = vmatprep.subr.mxu0 0.0
        %4380 = vmatpush1.msra.mxu0 0.0
        %4381 = vmatprep.subr.mxu0 0.0
        %4382 = vmatpush1.msra.mxu0 0.0
        %4383 = vmatprep.subr.mxu0 0.0
        %4384 = vmatpush1.msra.mxu0 0.0
        %4385 = vmatprep.subr.mxu0 0.0
        %4386 = vmatpush1.msra.mxu0 0.0
        %4387 = vmatprep.subr.mxu0 0.0
        %4388 = vmatpush1.msra.mxu0 0.0
        %4389 = vmatprep.subr.mxu0 0.0
        %4390 = vmatpush1.msra.mxu0 0.0
        %4391 = vmatprep.subr.mxu0 0.0
        %4392 = vmatpush1.msra.mxu0 0.0
        %4393 = vmatprep.subr.mxu0 0.0
        %4394 = vmatpush1.msra.mxu0 %v4352
        %4395 = vmatprep.subr.mxu0 0.0
        %4396 = vmatpush1.msra.mxu0 %v4351
        %4397 = vmatprep.subr.mxu0 0.0
        %4398 = vmatpush1.msra.mxu0 %v4350
        %4399 = vmatprep.subr.mxu0 0.0
        %4400 = vmatpush1.msra.mxu0 %v4349
        %4401 = vmatprep.subr.mxu0 0.0
        %4402 = vmatpush2.msra.mxu0 0.0
        %4403 = vmatprep.subr.mxu0 0.0
        %4404 = vmatpush2.msra.mxu0 0.0
        %4405 = vmatprep.subr.mxu0 0.0
        %4406 = vmatpush2.msra.mxu0 0.0
        %4407 = vmatprep.subr.mxu0 0.0
        %4408 = vmatpush2.msra.mxu0 0.0
        %4409 = vmatprep.subr.mxu0 0.0
        %4410 = vmatpush2.msra.mxu0 0.0
        %4411 = vmatprep.subr.mxu0 0.0
        %4412 = vmatpush2.msra.mxu0 0.0
        %4413 = vmatprep.subr.mxu0 0.0
        %4414 = vmatpush2.msra.mxu0 0.0
        %4415 = vmatprep.subr.mxu0 0.0
        %4416 = vmatpush2.msra.mxu0 0.0
        %4417 = vmatprep.subr.mxu0 0.0
        %4418 = vmatpush2.msra.mxu0 0.0
        %4419 = vmatprep.subr.mxu0 0.0
        %4420 = vmatpush2.msra.mxu0 0.0
        %4421 = vmatprep.subr.mxu0 0.0
        %4422 = vmatpush2.msra.mxu0 0.0
        %4423 = vmatprep.subr.mxu0 0.0
        %4424 = vmatpush2.msra.mxu0 0.0
        %4425 = vmatprep.subr.mxu0 0.0
        %4426 = vmatpush2.msra.mxu0 0.0
        %4427 = vmatprep.subr.mxu0 0.0
        %4428 = vmatpush2.msra.mxu0 0.0
        %4429 = vmatprep.subr.mxu0 0.0
        %4430 = vmatpush2.msra.mxu0 0.0
        %4431 = vmatprep.subr.mxu0 0.0
        %4432 = vmatpush2.msra.mxu0 0.0
        %4433 = vmatprep.mubr.f32.mxu0 0.0
        %4434 = vmatmul.mubr.f32.gmra.mxu0 %v4358
        %v4435 = vpop.f32.mrf.mxu0
        %v4436 = vadd.f32 %v4356, %v4435
        %v4437 = vpop.f32.mrf.mxu0
        %4438 = vmatprep.mubr.f32.mxu0 0.0
        %4439 = vmatmul.mubr.f32.gmra.mxu0 %v4361
        %v4440 = vpop.f32.mrf.mxu0
        %v4441 = vadd.f32 %v4356, %v4440
        %v4442 = vpop.f32.mrf.mxu0
        %4443 = vmatprep.mubr.f32.mxu0 0.0
        %4444 = vmatmul.mubr.f32.gmra.mxu0 %v4364
        %v4445 = vpop.f32.mrf.mxu0
        %v4446 = vadd.f32 %v4356, %v4445
        %v4447 = vpop.f32.mrf.mxu0
        %4448 = vmatprep.mubr.f32.mxu0 0.0
        %4449 = vmatmul.mubr.f32.gmra.mxu0 %v4367
        %v4450 = vpop.f32.mrf.mxu0
        %v4451 = vadd.f32 %v4356, %v4450
        %v4452 = vpop.f32.mrf.mxu0
        %4453 = vdwg.mxu0
        %v4454 = vadd.f32 %v4436, %v4345
        %v4455 = vadd.f32 %v4441, %v4346
        %v4456 = vadd.f32 %v4446, %v4347
        %v4457 = vadd.f32 %v4451, %v4348
        %v4458 = vsel %vm279, %v4454, 0.0
        %4459 = vadd.xlane.f32.xlu0 %v4458
        %v4460 = vpop.xlane.xlu0 %4459
        %v4461 = vsel %vm279, %v4455, 0.0
        %4462 = vadd.xlane.f32.xlu0 %v4461
        %v4463 = vpop.xlane.xlu0 %4462
        %v4464 = vsel %vm279, %v4456, 0.0
        %4465 = vadd.xlane.f32.xlu0 %v4464
        %v4466 = vpop.xlane.xlu0 %4465
        %v4467 = vsel %vm279, %v4457, 0.0
        %4468 = vadd.xlane.f32.xlu0 %v4467
        %v4469 = vpop.xlane.xlu0 %4468
        %v4470 = vmul.f32 %v4460, %v4292
        %v4471 = vmul.f32 %v4463, %v4292
        %v4472 = vmul.f32 %v4466, %v4292
        %v4473 = vmul.f32 %v4469, %v4292
        %v4474 = vsub.f32 %v4454, %v4470
        %v4475 = vsub.f32 %v4455, %v4471
        %v4476 = vsub.f32 %v4456, %v4472
        %v4477 = vsub.f32 %v4457, %v4473
        %v4478 = vmul.f32 %v4474, %v4474
        %v4479 = vmul.f32 %v4475, %v4475
        %v4480 = vmul.f32 %v4476, %v4476
        %v4481 = vmul.f32 %v4477, %v4477
        %v4482 = vsel %vm279, %v4478, 0.0
        %4483 = vadd.xlane.f32.xlu0 %v4482
        %v4484 = vpop.xlane.xlu0 %4483
        %v4485 = vsel %vm279, %v4479, 0.0
        %4486 = vadd.xlane.f32.xlu0 %v4485
        %v4487 = vpop.xlane.xlu0 %4486
        %v4488 = vsel %vm279, %v4480, 0.0
        %4489 = vadd.xlane.f32.xlu0 %v4488
        %v4490 = vpop.xlane.xlu0 %4489
        %v4491 = vsel %vm279, %v4481, 0.0
        %4492 = vadd.xlane.f32.xlu0 %v4491
        %v4493 = vpop.xlane.xlu0 %4492
        %v4494 = vmul.f32 %v4484, %v4292
        %v4495 = vmul.f32 %v4487, %v4292
        %v4496 = vmul.f32 %v4490, %v4292
        %v4497 = vmul.f32 %v4493, %v4292
        %v4498 = vadd.f32 %v4494, 1e-05
        %v4499 = vadd.f32 %v4495, 1e-05
        %v4500 = vadd.f32 %v4496, 1e-05
        %v4501 = vadd.f32 %v4497, 1e-05
        %v4502 = vrsqrt.pop %v4498
        %v4503 = vrsqrt.pop %v4499
        %v4504 = vrsqrt.pop %v4500
        %v4505 = vrsqrt.pop %v4501
        %v4506 = vmul.f32 %v4474, %v4502
        %v4507 = vmul.f32 %v4475, %v4503
        %v4508 = vmul.f32 %v4476, %v4504
        %v4509 = vmul.f32 %v4477, %v4505
        %v4510 = vlaneseq
        %v4511 = vshrl.u32 %v4510, 7
        %v4512 = vsub.s32 3, %v4511
        %v4513 = vrot.slane %v270, %v4512
        %v4514 = vmul.f32 %v4506, %v4513
        %v4515 = vmul.f32 %v4507, %v4513
        %v4516 = vmul.f32 %v4508, %v4513
        %v4517 = vmul.f32 %v4509, %v4513
        %v4518 = vlaneseq
        %v4519 = vshrl.u32 %v4518, 7
        %v4520 = vsub.s32 4, %v4519
        %v4521 = vrot.slane %v270, %v4520
        %v4522 = vadd.f32 %v4514, %v4521
        %v4523 = vadd.f32 %v4515, %v4521
        %v4524 = vadd.f32 %v4516, %v4521
        %v4525 = vadd.f32 %v4517, %v4521
        %4526 = vst.msk [vmem:[%s268] sm:$0xff] %vm279, %v4522
        %4527 = vst.msk [vmem:[%s268 + $0x8] sm:$0xff] %vm279, %v4523
        %4528 = vst.msk [vmem:[%s268 + $0x10] sm:$0xff] %vm279, %v4524
        %4529 = vst.msk [vmem:[%s268 + $0x18] sm:$0xff] %vm279, %v4525
        %s4530 = smul.u32 4, %s18
        %p4531 = scmp.lt.s32.totalorder %s4530, 7
        %s4532 = scalar_select %p4531, %s4530, 7
        %s4533 = smul.addr %s4532, 8
        %s4534 = scalar_lea.vmem %s6, %s4533
        // Predicated region
        $region49: #{tpu_custom_call.1} parent=43 // pred_check
          %p4535 = pneg %p167
        $region50: #{tpu_custom_call.1} parent=43 // pred_check_branch
          %4537 = sbr.rel (%p4535) target = $region52
        $region51: #{tpu_custom_call.1} parent=43 // pred_region
          %s4538 = smul.u32 4, %s18
        $region52: #{tpu_custom_call.1} parent=43 // pred_fallthru
          _
      $region44: #{tpu_custom_call.1} parent=5 // pred_fallthru
        _
      %p4539 = scmp.le.s32.totalorder 2, %s13
      // Predicated region
      $region53: #{tpu_custom_call.1} parent=5 // pred_check
        %p4540 = pneg %p4539
      $region54: #{tpu_custom_call.1} parent=5 // pred_check_branch
        %4542 = sbr.rel (%p4540) target = $region56
      $region55: #{tpu_custom_call.1} parent=5 // pred_region
        %s4543 = ssub.s32 %s13, 2
        // Predicated region
        $region57: #{tpu_custom_call.1} parent=55 // pred_check
          %p4544 = pneg %p173
        $region58: #{tpu_custom_call.1} parent=55 // pred_check_branch
          %4546 = sbr.rel (%p4544) target = $region60
        $region59: #{tpu_custom_call.1} parent=55 // pred_region
          %s4547 = smul.u32 4, %s19
          %p4548 = scmp.lt.s32.totalorder %s4547, 7
          %s4549 = scalar_select %p4548, %s4547, 7
          %s4550 = smul.addr %s4549, 8
          %s4551 = scalar_lea.vmem %s6, %s4550
        $region60: #{tpu_custom_call.1} parent=55 // pred_fallthru
          _
      $region56: #{tpu_custom_call.1} parent=5 // pred_fallthru
        _
    $region6: #{tpu_custom_call.1} parent=1 // loop_footer
      %s17 = sadd.s32 1, %s13
    $region7: #{tpu_custom_call.1} parent=1 // loop_footer_branch
      %12 = sbr.rel target = $region3
    $region8: #{tpu_custom_call.1} parent=1 // loop_exit
      _
    %4552 = vsyncpa [#allocation3], 1
    %s4553 = scalar_lea.sflag [#allocation3], 1
    %4554 = vsyncpa %s4553, 1

</llo_original>
